<compile_context>
chip_gen: v7x
topology: tpu7x:2x2x1
jax: 0.10.0
libtpu: 0.0.40
codegen_flags: <defaults>
</compile_context>

<pallas_src>
import math
import functools

import jax
import jax.numpy as jnp
from jax.experimental import pallas as pl
from jax.experimental.pallas import tpu as pltpu


# ---------------------------------------------------------------------------
# Fused kernel: the whole decoder in one invocation (no grid).
# ---------------------------------------------------------------------------
def _layernorm(t, gamma, beta, eps):
    mu = jnp.mean(t, axis=-1, keepdims=True)
    var = jnp.mean((t - mu) * (t - mu), axis=-1, keepdims=True)
    return (t - mu) * jax.lax.rsqrt(var + eps) * gamma + beta


def _decoder_kernel(x_ref,
                    wq_ref, bq_ref, wk_ref, bk_ref, wv_ref, bv_ref,
                    wo_ref, bo_ref,
                    g1_ref, be1_ref, g2_ref, be2_ref,
                    w1_ref, bb1_ref, w2_ref, bb2_ref,
                    out_ref,
                    *, num_layers, num_heads, batch, seq, eps):
    f32 = jnp.float32
    x = x_ref[...].astype(f32)                      # (N, D), N = batch * seq

    for l in range(num_layers):                     # static unroll (tiny L)
        # ---------------- multi-head self-attention ------------------------
        # Per-head projection weights were split host-side, so each head's
        # q/k/v arrive as clean (N, Dh) tensors: no lane slicing, no concat.
        # The 1/sqrt(Dh) scale is already folded into Wq / bq.
        attn = None
        for h in range(num_heads):                  # static unroll (H = 4)
            q = jnp.dot(x, wq_ref[l, h], preferred_element_type=f32) + bq_ref[l, h]
            k = jnp.dot(x, wk_ref[l, h], preferred_element_type=f32) + bk_ref[l, h]
            v = jnp.dot(x, wv_ref[l, h], preferred_element_type=f32) + bv_ref[l, h]

            # (N, Dh) -> (B, S, Dh): tile-aligned leading-dim split (S == 8).
            q3 = q.reshape(batch, seq, -1)
            k3 = k.reshape(batch, seq, -1)
            v3 = v.reshape(batch, seq, -1)

            # Scores for all batch rows of this head at once.
            s = jnp.einsum("bqd,bkd->bqk", q3, k3, preferred_element_type=f32)
            s = s - jnp.max(s, axis=-1, keepdims=True)
            e = jnp.exp(s)
            denom = jnp.sum(e, axis=-1, keepdims=True)
            # EUP approximate reciprocal + one Newton step (~f32-exact, no divide).
            r = pl.reciprocal(denom, approx=True)
            r = r * (2.0 - denom * r)
            p_attn = e * r
            o = jnp.einsum("bqk,bkd->bqd", p_attn, v3, preferred_element_type=f32)

            # Distribute the output projection over heads: accumulate directly
            # into the (N, D) result instead of concatenating 8-lane slices.
            contrib = jnp.dot(o.reshape(batch * seq, -1), wo_ref[l, h],
                              preferred_element_type=f32)
            attn = contrib if attn is None else attn + contrib
        a = attn + bo_ref[l]

        # ---------------- add & LayerNorm 1 --------------------------------
        t = _layernorm(x + a, g1_ref[l], be1_ref[l], eps)

        # ---------------- feed-forward --------------------------------------
        h1 = jnp.dot(t, w1_ref[l], preferred_element_type=f32) + bb1_ref[l]
        h1 = jnp.maximum(h1, 0.0)                   # ReLU
        z = jnp.dot(h1, w2_ref[l], preferred_element_type=f32) + bb2_ref[l]

        # ---------------- add & LayerNorm 2 ---------------------------------
        x = _layernorm(t + z, g2_ref[l], be2_ref[l], eps)

    out_ref[...] = x.astype(out_ref.dtype)


# ---------------------------------------------------------------------------
# Host-side parameter packing (PyTorch layout -> kernel layout).
# ---------------------------------------------------------------------------
def pack_decoder_params(layer_params, num_heads):
    """Split per-head, fold the softmax scale into Wq/bq, transpose for x @ W,
    and stack all layers along a leading L axis."""
    D = layer_params[0]["out_proj_w"].shape[0]
    Dh = D // num_heads
    scale = 1.0 / math.sqrt(Dh)

    def split_heads_cols(w_t, b, s=1.0):
        # w_t: (D_in, D_out) used as x @ w_t ; split output columns per head.
        w_h = (w_t * s).reshape(D, num_heads, Dh).transpose(1, 0, 2)   # (H, D, Dh)
        b_h = (b * s).reshape(num_heads, 1, Dh)                        # (H, 1, Dh)
        return w_h, b_h

    def one(p):
        wq, wk, wv = jnp.split(p["in_proj_w"], 3, axis=0)   # (D, D) each (out, in)
        bq, bk, bv = jnp.split(p["in_proj_b"], 3, axis=0)   # (D,)
        wq_h, bq_h = split_heads_cols(wq.T, bq, scale)      # scale folded into Q
        wk_h, bk_h = split_heads_cols(wk.T, bk)
        wv_h, bv_h = split_heads_cols(wv.T, bv)
        wo_h = p["out_proj_w"].T.reshape(num_heads, Dh, D)  # (H, Dh, D)
        return dict(
            wq=wq_h, bq=bq_h, wk=wk_h, bk=bk_h, wv=wv_h, bv=bv_h,
            wo=wo_h, bo=p["out_proj_b"].reshape(1, D),
            g1=p["ln1_w"].reshape(1, D), be1=p["ln1_b"].reshape(1, D),
            g2=p["ln2_w"].reshape(1, D), be2=p["ln2_b"].reshape(1, D),
            w1=p["lin1_w"].T, bb1=p["lin1_b"].reshape(1, -1),
            w2=p["lin2_w"].T, bb2=p["lin2_b"].reshape(1, D),
        )

    per = [one(p) for p in layer_params]
    return {k: jnp.stack([d[k] for d in per], axis=0) for k in per[0]}


@functools.partial(jax.jit, static_argnames=("num_heads", "eps"))
def decoder_pallas(x, packed, *, num_heads, eps=1e-5):
    """Full Decoder forward as a single fused Pallas kernel."""
    B, S, D = x.shape
    L = packed["wq"].shape[0]
    x2d = x.reshape(B * S, D)

    order = ("wq", "bq", "wk", "bk", "wv", "bv", "wo", "bo",
             "g1", "be1", "g2", "be2", "w1", "bb1", "w2", "bb2")
    args = [packed[k] for k in order]

    kernel = functools.partial(
        _decoder_kernel,
        num_layers=L, num_heads=num_heads, batch=B, seq=S, eps=eps)

    y2d = pl.pallas_call(
        kernel,
        out_shape=jax.ShapeDtypeStruct((B * S, D), x.dtype),
        in_specs=[pl.BlockSpec(memory_space=pltpu.MemorySpace.VMEM)
                  for _ in range(1 + len(args))],
        out_specs=pl.BlockSpec(memory_space=pltpu.MemorySpace.VMEM),
    )(x2d, *args)
    return y2d.reshape(B, S, D)


# ----------------------------- reference (pure JAX) -------------------------
def encoder_layer_ref(x, p, *, num_heads, eps=1e-5):
    B, S, D = x.shape
    Dh = D // num_heads
    qkv = x @ p["in_proj_w"].T + p["in_proj_b"]
    q, k, v = qkv[..., :D], qkv[..., D:2 * D], qkv[..., 2 * D:]

    def split_heads(t):  # (B, S, D) -> (B, H, S, Dh)
        return t.reshape(B, S, num_heads, Dh).transpose(0, 2, 1, 3)

    qh, kh, vh = split_heads(q), split_heads(k), split_heads(v)
    s = jnp.einsum("bhqd,bhkd->bhqk", qh, kh) / math.sqrt(Dh)
    p_attn = jax.nn.softmax(s, axis=-1)
    o = jnp.einsum("bhqk,bhkd->bhqd", p_attn, vh).transpose(0, 2, 1, 3).reshape(B, S, D)
    a = o @ p["out_proj_w"].T + p["out_proj_b"]

    def ln(t, g, b):
        mu = jnp.mean(t, axis=-1, keepdims=True)
        var = jnp.mean((t - mu) ** 2, axis=-1, keepdims=True)
        return (t - mu) * jax.lax.rsqrt(var + eps) * g + b

    t = ln(x + a, p["ln1_w"], p["ln1_b"])
    z = jnp.maximum(t @ p["lin1_w"].T + p["lin1_b"], 0.0) @ p["lin2_w"].T + p["lin2_b"]
    return ln(t + z, p["ln2_w"], p["ln2_b"])


def decoder_ref(x, layer_params_list, *, num_heads):
    for p in layer_params_list:
        x = encoder_layer_ref(x, p, num_heads=num_heads)
    return x


# ----------------------------- parameter init -------------------------------
def init_layer_params(key, d_model, dim_ff):
    """Raw per-layer parameters in PyTorch layout."""
    ks = jax.random.split(key, 8)
    sc = 0.05
    return {
        "in_proj_w": jax.random.normal(ks[0], (3 * d_model, d_model), jnp.float32) * sc,
        "in_proj_b": jax.random.normal(ks[1], (3 * d_model,), jnp.float32) * sc,
        "out_proj_w": jax.random.normal(ks[2], (d_model, d_model), jnp.float32) * sc,
        "out_proj_b": jax.random.normal(ks[3], (d_model,), jnp.float32) * sc,
        "lin1_w": jax.random.normal(ks[4], (dim_ff, d_model), jnp.float32) * sc,
        "lin1_b": jax.random.normal(ks[5], (dim_ff,), jnp.float32) * sc,
        "lin2_w": jax.random.normal(ks[6], (d_model, dim_ff), jnp.float32) * sc,
        "lin2_b": jax.random.normal(ks[7], (d_model,), jnp.float32) * sc,
        "ln1_w": jnp.ones((d_model,), jnp.float32),
        "ln1_b": jnp.zeros((d_model,), jnp.float32),
        "ln2_w": jnp.ones((d_model,), jnp.float32),
        "ln2_b": jnp.zeros((d_model,), jnp.float32),
    }


if __name__ == "__main__":
    # config: {'dimension_emg': 32, 'number_heads': 4, 'num_decoders': 2}
    d_model = 32
    num_heads = 4
    num_decoders = 2
    dim_ff = 1024          # EncoderLayer default dim_feedforward
    B, S = 2, 8

    root = jax.random.PRNGKey(0)
    x_key, *layer_keys = jax.random.split(root, num_decoders + 1)
    x = jax.random.normal(x_key, (B, S, d_model), jnp.float32)
    raw_layers = [init_layer_params(k, d_model, dim_ff) for k in layer_keys]

    packed = pack_decoder_params(raw_layers, num_heads)
    out = decoder_pallas(x, packed, num_heads=num_heads)
    out = jax.block_until_ready(out)

    ref = decoder_ref(x, raw_layers, num_heads=num_heads)
    assert out.shape == (B, S, d_model)
    assert jnp.allclose(out, ref, atol=1e-4, rtol=1e-4), "mismatch vs JAX reference"

    print("KERNEL_OK")
</pallas_src>

<mosaic_0001>
module attributes {stable_mosaic.version = 11 : i64} {
  func.func @_decoder_kernel(%arg0: memref<16x32xf32, #tpu.memory_space<vmem>>, %arg1: memref<2x4x32x8xf32, #tpu.memory_space<vmem>>, %arg2: memref<2x4x1x8xf32, #tpu.memory_space<vmem>>, %arg3: memref<2x4x32x8xf32, #tpu.memory_space<vmem>>, %arg4: memref<2x4x1x8xf32, #tpu.memory_space<vmem>>, %arg5: memref<2x4x32x8xf32, #tpu.memory_space<vmem>>, %arg6: memref<2x4x1x8xf32, #tpu.memory_space<vmem>>, %arg7: memref<2x4x8x32xf32, #tpu.memory_space<vmem>>, %arg8: memref<2x1x32xf32, #tpu.memory_space<vmem>>, %arg9: memref<2x1x32xf32, #tpu.memory_space<vmem>>, %arg10: memref<2x1x32xf32, #tpu.memory_space<vmem>>, %arg11: memref<2x1x32xf32, #tpu.memory_space<vmem>>, %arg12: memref<2x1x32xf32, #tpu.memory_space<vmem>>, %arg13: memref<2x32x1024xf32, #tpu.memory_space<vmem>>, %arg14: memref<2x1x1024xf32, #tpu.memory_space<vmem>>, %arg15: memref<2x1024x32xf32, #tpu.memory_space<vmem>>, %arg16: memref<2x1x32xf32, #tpu.memory_space<vmem>>, %arg17: memref<16x32xf32, #tpu.memory_space<vmem>>) attributes {dimension_semantics = [], scalar_prefetch = 0 : i64, scratch_operands = 0 : i64, tpu.core_type = #tpu.core_type<tc>} {
    %c0 = arith.constant 0 : index
    %c0_0 = arith.constant 0 : index
    %0 = vector.load %arg0[%c0, %c0_0] : memref<16x32xf32, #tpu.memory_space<vmem>>, vector<16x32xf32>
    %c0_1 = arith.constant 0 : index
    %c0_2 = arith.constant 0 : index
    %c0_3 = arith.constant 0 : index
    %c0_4 = arith.constant 0 : index
    %1 = vector.load %arg1[%c0_1, %c0_2, %c0_3, %c0_4] : memref<2x4x32x8xf32, #tpu.memory_space<vmem>>, vector<1x1x32x8xf32>
    %2 = vector.shape_cast %1 : vector<1x1x32x8xf32> to vector<32x8xf32>
    %cst = arith.constant dense<0.000000e+00> : vector<16x8xf32>
    %3 = tpu.matmul %0, %2, %cst {dimension_numbers = #tpu.dot_dimension_numbers<[1], [0], [0], [1], [0, 0, 1, 1], [], []>} : vector<16x32xf32>, vector<32x8xf32>, vector<16x8xf32> -> vector<16x8xf32>
    %c0_5 = arith.constant 0 : index
    %c0_6 = arith.constant 0 : index
    %c0_7 = arith.constant 0 : index
    %c0_8 = arith.constant 0 : index
    %4 = vector.load %arg2[%c0_5, %c0_6, %c0_7, %c0_8] : memref<2x4x1x8xf32, #tpu.memory_space<vmem>>, vector<1x1x1x8xf32>
    %5 = vector.shape_cast %4 : vector<1x1x1x8xf32> to vector<1x8xf32>
    %6 = vector.broadcast %5 : vector<1x8xf32> to vector<16x8xf32>
    %7 = arith.addf %3, %6 : vector<16x8xf32>
    %c0_9 = arith.constant 0 : index
    %c0_10 = arith.constant 0 : index
    %c0_11 = arith.constant 0 : index
    %c0_12 = arith.constant 0 : index
    %8 = vector.load %arg3[%c0_9, %c0_10, %c0_11, %c0_12] : memref<2x4x32x8xf32, #tpu.memory_space<vmem>>, vector<1x1x32x8xf32>
    %9 = vector.shape_cast %8 : vector<1x1x32x8xf32> to vector<32x8xf32>
    %cst_13 = arith.constant dense<0.000000e+00> : vector<16x8xf32>
    %10 = tpu.matmul %0, %9, %cst_13 {dimension_numbers = #tpu.dot_dimension_numbers<[1], [0], [0], [1], [0, 0, 1, 1], [], []>} : vector<16x32xf32>, vector<32x8xf32>, vector<16x8xf32> -> vector<16x8xf32>
    %c0_14 = arith.constant 0 : index
    %c0_15 = arith.constant 0 : index
    %c0_16 = arith.constant 0 : index
    %c0_17 = arith.constant 0 : index
    %11 = vector.load %arg4[%c0_14, %c0_15, %c0_16, %c0_17] : memref<2x4x1x8xf32, #tpu.memory_space<vmem>>, vector<1x1x1x8xf32>
    %12 = vector.shape_cast %11 : vector<1x1x1x8xf32> to vector<1x8xf32>
    %13 = vector.broadcast %12 : vector<1x8xf32> to vector<16x8xf32>
    %14 = arith.addf %10, %13 : vector<16x8xf32>
    %c0_18 = arith.constant 0 : index
    %c0_19 = arith.constant 0 : index
    %c0_20 = arith.constant 0 : index
    %c0_21 = arith.constant 0 : index
    %15 = vector.load %arg5[%c0_18, %c0_19, %c0_20, %c0_21] : memref<2x4x32x8xf32, #tpu.memory_space<vmem>>, vector<1x1x32x8xf32>
    %16 = vector.shape_cast %15 : vector<1x1x32x8xf32> to vector<32x8xf32>
    %cst_22 = arith.constant dense<0.000000e+00> : vector<16x8xf32>
    %17 = tpu.matmul %0, %16, %cst_22 {dimension_numbers = #tpu.dot_dimension_numbers<[1], [0], [0], [1], [0, 0, 1, 1], [], []>} : vector<16x32xf32>, vector<32x8xf32>, vector<16x8xf32> -> vector<16x8xf32>
    %c0_23 = arith.constant 0 : index
    %c0_24 = arith.constant 0 : index
    %c0_25 = arith.constant 0 : index
    %c0_26 = arith.constant 0 : index
    %18 = vector.load %arg6[%c0_23, %c0_24, %c0_25, %c0_26] : memref<2x4x1x8xf32, #tpu.memory_space<vmem>>, vector<1x1x1x8xf32>
    %19 = vector.shape_cast %18 : vector<1x1x1x8xf32> to vector<1x8xf32>
    %20 = vector.broadcast %19 : vector<1x8xf32> to vector<16x8xf32>
    %21 = arith.addf %17, %20 : vector<16x8xf32>
    %22 = vector.shape_cast %7 : vector<16x8xf32> to vector<2x8x8xf32>
    %23 = vector.shape_cast %14 : vector<16x8xf32> to vector<2x8x8xf32>
    %24 = vector.shape_cast %21 : vector<16x8xf32> to vector<2x8x8xf32>
    "tpu.trace_start"() <{level = 10 : i32, message = "bqd,bkd->bqk"}> : () -> ()
    %cst_27 = arith.constant dense<0.000000e+00> : vector<2x8x8xf32>
    %25 = tpu.matmul %22, %23, %cst_27 {dimension_numbers = #tpu.dot_dimension_numbers<[2], [2], [1], [1], [0, 0, 0, 1, 1, 1], [0], [0]>} : vector<2x8x8xf32>, vector<2x8x8xf32>, vector<2x8x8xf32> -> vector<2x8x8xf32>
    "tpu.trace_stop"() : () -> ()
    %cst_28 = arith.constant dense<0xFF800000> : vector<2x8xf32>
    %26 = vector.multi_reduction <maximumf>, %25, %cst_28 [2] : vector<2x8x8xf32> to vector<2x8xf32>
    %27 = vector.shape_cast %26 : vector<2x8xf32> to vector<2x8x1xf32>
    %28 = vector.broadcast %27 : vector<2x8x1xf32> to vector<2x8x8xf32>
    %29 = arith.subf %25, %28 : vector<2x8x8xf32>
    %30 = math.exp %29 : vector<2x8x8xf32>
    %cst_29 = arith.constant dense<0.000000e+00> : vector<2x8xf32>
    %31 = vector.multi_reduction <add>, %30, %cst_29 [2] : vector<2x8x8xf32> to vector<2x8xf32>
    %32 = vector.shape_cast %31 : vector<2x8xf32> to vector<2x8x1xf32>
    %33 = tpu.reciprocal %32 {approx = true} : vector<2x8x1xf32> -> vector<2x8x1xf32>
    %34 = arith.mulf %32, %33 : vector<2x8x1xf32>
    %cst_30 = arith.constant 2.000000e+00 : f32
    %35 = vector.broadcast %cst_30 : f32 to vector<2x8x1xf32>
    %36 = arith.subf %35, %34 : vector<2x8x1xf32>
    %37 = arith.mulf %33, %36 : vector<2x8x1xf32>
    %38 = vector.broadcast %37 : vector<2x8x1xf32> to vector<2x8x8xf32>
    %39 = arith.mulf %30, %38 : vector<2x8x8xf32>
    "tpu.trace_start"() <{level = 10 : i32, message = "bqk,bkd->bqd"}> : () -> ()
    %cst_31 = arith.constant dense<0.000000e+00> : vector<2x8x8xf32>
    %40 = tpu.matmul %39, %24, %cst_31 {dimension_numbers = #tpu.dot_dimension_numbers<[2], [1], [1], [2], [0, 0, 0, 1, 1, 2], [0], [0]>} : vector<2x8x8xf32>, vector<2x8x8xf32>, vector<2x8x8xf32> -> vector<2x8x8xf32>
    "tpu.trace_stop"() : () -> ()
    %41 = vector.shape_cast %40 : vector<2x8x8xf32> to vector<16x8xf32>
    %c0_32 = arith.constant 0 : index
    %c0_33 = arith.constant 0 : index
    %c0_34 = arith.constant 0 : index
    %c0_35 = arith.constant 0 : index
    %42 = vector.load %arg7[%c0_32, %c0_33, %c0_34, %c0_35] : memref<2x4x8x32xf32, #tpu.memory_space<vmem>>, vector<1x1x8x32xf32>
    %43 = vector.shape_cast %42 : vector<1x1x8x32xf32> to vector<8x32xf32>
    %cst_36 = arith.constant dense<0.000000e+00> : vector<16x32xf32>
    %44 = tpu.matmul %41, %43, %cst_36 {dimension_numbers = #tpu.dot_dimension_numbers<[1], [0], [0], [1], [0, 0, 1, 1], [], []>} : vector<16x8xf32>, vector<8x32xf32>, vector<16x32xf32> -> vector<16x32xf32>
    %c0_37 = arith.constant 0 : index
    %c1 = arith.constant 1 : index
    %c0_38 = arith.constant 0 : index
    %c0_39 = arith.constant 0 : index
    %45 = vector.load %arg1[%c0_37, %c1, %c0_38, %c0_39] : memref<2x4x32x8xf32, #tpu.memory_space<vmem>>, vector<1x1x32x8xf32>
    %46 = vector.shape_cast %45 : vector<1x1x32x8xf32> to vector<32x8xf32>
    %cst_40 = arith.constant dense<0.000000e+00> : vector<16x8xf32>
    %47 = tpu.matmul %0, %46, %cst_40 {dimension_numbers = #tpu.dot_dimension_numbers<[1], [0], [0], [1], [0, 0, 1, 1], [], []>} : vector<16x32xf32>, vector<32x8xf32>, vector<16x8xf32> -> vector<16x8xf32>
    %c0_41 = arith.constant 0 : index
    %c1_42 = arith.constant 1 : index
    %c0_43 = arith.constant 0 : index
    %c0_44 = arith.constant 0 : index
    %48 = vector.load %arg2[%c0_41, %c1_42, %c0_43, %c0_44] : memref<2x4x1x8xf32, #tpu.memory_space<vmem>>, vector<1x1x1x8xf32>
    %49 = vector.shape_cast %48 : vector<1x1x1x8xf32> to vector<1x8xf32>
    %50 = vector.broadcast %49 : vector<1x8xf32> to vector<16x8xf32>
    %51 = arith.addf %47, %50 : vector<16x8xf32>
    %c0_45 = arith.constant 0 : index
    %c1_46 = arith.constant 1 : index
    %c0_47 = arith.constant 0 : index
    %c0_48 = arith.constant 0 : index
    %52 = vector.load %arg3[%c0_45, %c1_46, %c0_47, %c0_48] : memref<2x4x32x8xf32, #tpu.memory_space<vmem>>, vector<1x1x32x8xf32>
    %53 = vector.shape_cast %52 : vector<1x1x32x8xf32> to vector<32x8xf32>
    %cst_49 = arith.constant dense<0.000000e+00> : vector<16x8xf32>
    %54 = tpu.matmul %0, %53, %cst_49 {dimension_numbers = #tpu.dot_dimension_numbers<[1], [0], [0], [1], [0, 0, 1, 1], [], []>} : vector<16x32xf32>, vector<32x8xf32>, vector<16x8xf32> -> vector<16x8xf32>
    %c0_50 = arith.constant 0 : index
    %c1_51 = arith.constant 1 : index
    %c0_52 = arith.constant 0 : index
    %c0_53 = arith.constant 0 : index
    %55 = vector.load %arg4[%c0_50, %c1_51, %c0_52, %c0_53] : memref<2x4x1x8xf32, #tpu.memory_space<vmem>>, vector<1x1x1x8xf32>
    %56 = vector.shape_cast %55 : vector<1x1x1x8xf32> to vector<1x8xf32>
    %57 = vector.broadcast %56 : vector<1x8xf32> to vector<16x8xf32>
    %58 = arith.addf %54, %57 : vector<16x8xf32>
    %c0_54 = arith.constant 0 : index
    %c1_55 = arith.constant 1 : index
    %c0_56 = arith.constant 0 : index
    %c0_57 = arith.constant 0 : index
    %59 = vector.load %arg5[%c0_54, %c1_55, %c0_56, %c0_57] : memref<2x4x32x8xf32, #tpu.memory_space<vmem>>, vector<1x1x32x8xf32>
    %60 = vector.shape_cast %59 : vector<1x1x32x8xf32> to vector<32x8xf32>
    %cst_58 = arith.constant dense<0.000000e+00> : vector<16x8xf32>
    %61 = tpu.matmul %0, %60, %cst_58 {dimension_numbers = #tpu.dot_dimension_numbers<[1], [0], [0], [1], [0, 0, 1, 1], [], []>} : vector<16x32xf32>, vector<32x8xf32>, vector<16x8xf32> -> vector<16x8xf32>
    %c0_59 = arith.constant 0 : index
    %c1_60 = arith.constant 1 : index
    %c0_61 = arith.constant 0 : index
    %c0_62 = arith.constant 0 : index
    %62 = vector.load %arg6[%c0_59, %c1_60, %c0_61, %c0_62] : memref<2x4x1x8xf32, #tpu.memory_space<vmem>>, vector<1x1x1x8xf32>
    %63 = vector.shape_cast %62 : vector<1x1x1x8xf32> to vector<1x8xf32>
    %64 = vector.broadcast %63 : vector<1x8xf32> to vector<16x8xf32>
    %65 = arith.addf %61, %64 : vector<16x8xf32>
    %66 = vector.shape_cast %51 : vector<16x8xf32> to vector<2x8x8xf32>
    %67 = vector.shape_cast %58 : vector<16x8xf32> to vector<2x8x8xf32>
    %68 = vector.shape_cast %65 : vector<16x8xf32> to vector<2x8x8xf32>
    "tpu.trace_start"() <{level = 10 : i32, message = "bqd,bkd->bqk"}> : () -> ()
    %cst_63 = arith.constant dense<0.000000e+00> : vector<2x8x8xf32>
    %69 = tpu.matmul %66, %67, %cst_63 {dimension_numbers = #tpu.dot_dimension_numbers<[2], [2], [1], [1], [0, 0, 0, 1, 1, 1], [0], [0]>} : vector<2x8x8xf32>, vector<2x8x8xf32>, vector<2x8x8xf32> -> vector<2x8x8xf32>
    "tpu.trace_stop"() : () -> ()
    %cst_64 = arith.constant dense<0xFF800000> : vector<2x8xf32>
    %70 = vector.multi_reduction <maximumf>, %69, %cst_64 [2] : vector<2x8x8xf32> to vector<2x8xf32>
    %71 = vector.shape_cast %70 : vector<2x8xf32> to vector<2x8x1xf32>
    %72 = vector.broadcast %71 : vector<2x8x1xf32> to vector<2x8x8xf32>
    %73 = arith.subf %69, %72 : vector<2x8x8xf32>
    %74 = math.exp %73 : vector<2x8x8xf32>
    %cst_65 = arith.constant dense<0.000000e+00> : vector<2x8xf32>
    %75 = vector.multi_reduction <add>, %74, %cst_65 [2] : vector<2x8x8xf32> to vector<2x8xf32>
    %76 = vector.shape_cast %75 : vector<2x8xf32> to vector<2x8x1xf32>
    %77 = tpu.reciprocal %76 {approx = true} : vector<2x8x1xf32> -> vector<2x8x1xf32>
    %78 = arith.mulf %76, %77 : vector<2x8x1xf32>
    %cst_66 = arith.constant 2.000000e+00 : f32
    %79 = vector.broadcast %cst_66 : f32 to vector<2x8x1xf32>
    %80 = arith.subf %79, %78 : vector<2x8x1xf32>
    %81 = arith.mulf %77, %80 : vector<2x8x1xf32>
    %82 = vector.broadcast %81 : vector<2x8x1xf32> to vector<2x8x8xf32>
    %83 = arith.mulf %74, %82 : vector<2x8x8xf32>
    "tpu.trace_start"() <{level = 10 : i32, message = "bqk,bkd->bqd"}> : () -> ()
    %cst_67 = arith.constant dense<0.000000e+00> : vector<2x8x8xf32>
    %84 = tpu.matmul %83, %68, %cst_67 {dimension_numbers = #tpu.dot_dimension_numbers<[2], [1], [1], [2], [0, 0, 0, 1, 1, 2], [0], [0]>} : vector<2x8x8xf32>, vector<2x8x8xf32>, vector<2x8x8xf32> -> vector<2x8x8xf32>
    "tpu.trace_stop"() : () -> ()
    %85 = vector.shape_cast %84 : vector<2x8x8xf32> to vector<16x8xf32>
    %c0_68 = arith.constant 0 : index
    %c1_69 = arith.constant 1 : index
    %c0_70 = arith.constant 0 : index
    %c0_71 = arith.constant 0 : index
    %86 = vector.load %arg7[%c0_68, %c1_69, %c0_70, %c0_71] : memref<2x4x8x32xf32, #tpu.memory_space<vmem>>, vector<1x1x8x32xf32>
    %87 = vector.shape_cast %86 : vector<1x1x8x32xf32> to vector<8x32xf32>
    %cst_72 = arith.constant dense<0.000000e+00> : vector<16x32xf32>
    %88 = tpu.matmul %85, %87, %cst_72 {dimension_numbers = #tpu.dot_dimension_numbers<[1], [0], [0], [1], [0, 0, 1, 1], [], []>} : vector<16x8xf32>, vector<8x32xf32>, vector<16x32xf32> -> vector<16x32xf32>
    %89 = arith.addf %44, %88 : vector<16x32xf32>
    %c0_73 = arith.constant 0 : index
    %c2 = arith.constant 2 : index
    %c0_74 = arith.constant 0 : index
    %c0_75 = arith.constant 0 : index
    %90 = vector.load %arg1[%c0_73, %c2, %c0_74, %c0_75] : memref<2x4x32x8xf32, #tpu.memory_space<vmem>>, vector<1x1x32x8xf32>
    %91 = vector.shape_cast %90 : vector<1x1x32x8xf32> to vector<32x8xf32>
    %cst_76 = arith.constant dense<0.000000e+00> : vector<16x8xf32>
    %92 = tpu.matmul %0, %91, %cst_76 {dimension_numbers = #tpu.dot_dimension_numbers<[1], [0], [0], [1], [0, 0, 1, 1], [], []>} : vector<16x32xf32>, vector<32x8xf32>, vector<16x8xf32> -> vector<16x8xf32>
    %c0_77 = arith.constant 0 : index
    %c2_78 = arith.constant 2 : index
    %c0_79 = arith.constant 0 : index
    %c0_80 = arith.constant 0 : index
    %93 = vector.load %arg2[%c0_77, %c2_78, %c0_79, %c0_80] : memref<2x4x1x8xf32, #tpu.memory_space<vmem>>, vector<1x1x1x8xf32>
    %94 = vector.shape_cast %93 : vector<1x1x1x8xf32> to vector<1x8xf32>
    %95 = vector.broadcast %94 : vector<1x8xf32> to vector<16x8xf32>
    %96 = arith.addf %92, %95 : vector<16x8xf32>
    %c0_81 = arith.constant 0 : index
    %c2_82 = arith.constant 2 : index
    %c0_83 = arith.constant 0 : index
    %c0_84 = arith.constant 0 : index
    %97 = vector.load %arg3[%c0_81, %c2_82, %c0_83, %c0_84] : memref<2x4x32x8xf32, #tpu.memory_space<vmem>>, vector<1x1x32x8xf32>
    %98 = vector.shape_cast %97 : vector<1x1x32x8xf32> to vector<32x8xf32>
    %cst_85 = arith.constant dense<0.000000e+00> : vector<16x8xf32>
    %99 = tpu.matmul %0, %98, %cst_85 {dimension_numbers = #tpu.dot_dimension_numbers<[1], [0], [0], [1], [0, 0, 1, 1], [], []>} : vector<16x32xf32>, vector<32x8xf32>, vector<16x8xf32> -> vector<16x8xf32>
    %c0_86 = arith.constant 0 : index
    %c2_87 = arith.constant 2 : index
    %c0_88 = arith.constant 0 : index
    %c0_89 = arith.constant 0 : index
    %100 = vector.load %arg4[%c0_86, %c2_87, %c0_88, %c0_89] : memref<2x4x1x8xf32, #tpu.memory_space<vmem>>, vector<1x1x1x8xf32>
    %101 = vector.shape_cast %100 : vector<1x1x1x8xf32> to vector<1x8xf32>
    %102 = vector.broadcast %101 : vector<1x8xf32> to vector<16x8xf32>
    %103 = arith.addf %99, %102 : vector<16x8xf32>
    %c0_90 = arith.constant 0 : index
    %c2_91 = arith.constant 2 : index
    %c0_92 = arith.constant 0 : index
    %c0_93 = arith.constant 0 : index
    %104 = vector.load %arg5[%c0_90, %c2_91, %c0_92, %c0_93] : memref<2x4x32x8xf32, #tpu.memory_space<vmem>>, vector<1x1x32x8xf32>
    %105 = vector.shape_cast %104 : vector<1x1x32x8xf32> to vector<32x8xf32>
    %cst_94 = arith.constant dense<0.000000e+00> : vector<16x8xf32>
    %106 = tpu.matmul %0, %105, %cst_94 {dimension_numbers = #tpu.dot_dimension_numbers<[1], [0], [0], [1], [0, 0, 1, 1], [], []>} : vector<16x32xf32>, vector<32x8xf32>, vector<16x8xf32> -> vector<16x8xf32>
    %c0_95 = arith.constant 0 : index
    %c2_96 = arith.constant 2 : index
    %c0_97 = arith.constant 0 : index
    %c0_98 = arith.constant 0 : index
    %107 = vector.load %arg6[%c0_95, %c2_96, %c0_97, %c0_98] : memref<2x4x1x8xf32, #tpu.memory_space<vmem>>, vector<1x1x1x8xf32>
    %108 = vector.shape_cast %107 : vector<1x1x1x8xf32> to vector<1x8xf32>
    %109 = vector.broadcast %108 : vector<1x8xf32> to vector<16x8xf32>
    %110 = arith.addf %106, %109 : vector<16x8xf32>
    %111 = vector.shape_cast %96 : vector<16x8xf32> to vector<2x8x8xf32>
    %112 = vector.shape_cast %103 : vector<16x8xf32> to vector<2x8x8xf32>
    %113 = vector.shape_cast %110 : vector<16x8xf32> to vector<2x8x8xf32>
    "tpu.trace_start"() <{level = 10 : i32, message = "bqd,bkd->bqk"}> : () -> ()
    %cst_99 = arith.constant dense<0.000000e+00> : vector<2x8x8xf32>
    %114 = tpu.matmul %111, %112, %cst_99 {dimension_numbers = #tpu.dot_dimension_numbers<[2], [2], [1], [1], [0, 0, 0, 1, 1, 1], [0], [0]>} : vector<2x8x8xf32>, vector<2x8x8xf32>, vector<2x8x8xf32> -> vector<2x8x8xf32>
    "tpu.trace_stop"() : () -> ()
    %cst_100 = arith.constant dense<0xFF800000> : vector<2x8xf32>
    %115 = vector.multi_reduction <maximumf>, %114, %cst_100 [2] : vector<2x8x8xf32> to vector<2x8xf32>
    %116 = vector.shape_cast %115 : vector<2x8xf32> to vector<2x8x1xf32>
    %117 = vector.broadcast %116 : vector<2x8x1xf32> to vector<2x8x8xf32>
    %118 = arith.subf %114, %117 : vector<2x8x8xf32>
    %119 = math.exp %118 : vector<2x8x8xf32>
    %cst_101 = arith.constant dense<0.000000e+00> : vector<2x8xf32>
    %120 = vector.multi_reduction <add>, %119, %cst_101 [2] : vector<2x8x8xf32> to vector<2x8xf32>
    %121 = vector.shape_cast %120 : vector<2x8xf32> to vector<2x8x1xf32>
    %122 = tpu.reciprocal %121 {approx = true} : vector<2x8x1xf32> -> vector<2x8x1xf32>
    %123 = arith.mulf %121, %122 : vector<2x8x1xf32>
    %cst_102 = arith.constant 2.000000e+00 : f32
    %124 = vector.broadcast %cst_102 : f32 to vector<2x8x1xf32>
    %125 = arith.subf %124, %123 : vector<2x8x1xf32>
    %126 = arith.mulf %122, %125 : vector<2x8x1xf32>
    %127 = vector.broadcast %126 : vector<2x8x1xf32> to vector<2x8x8xf32>
    %128 = arith.mulf %119, %127 : vector<2x8x8xf32>
    "tpu.trace_start"() <{level = 10 : i32, message = "bqk,bkd->bqd"}> : () -> ()
    %cst_103 = arith.constant dense<0.000000e+00> : vector<2x8x8xf32>
    %129 = tpu.matmul %128, %113, %cst_103 {dimension_numbers = #tpu.dot_dimension_numbers<[2], [1], [1], [2], [0, 0, 0, 1, 1, 2], [0], [0]>} : vector<2x8x8xf32>, vector<2x8x8xf32>, vector<2x8x8xf32> -> vector<2x8x8xf32>
    "tpu.trace_stop"() : () -> ()
    %130 = vector.shape_cast %129 : vector<2x8x8xf32> to vector<16x8xf32>
    %c0_104 = arith.constant 0 : index
    %c2_105 = arith.constant 2 : index
    %c0_106 = arith.constant 0 : index
    %c0_107 = arith.constant 0 : index
    %131 = vector.load %arg7[%c0_104, %c2_105, %c0_106, %c0_107] : memref<2x4x8x32xf32, #tpu.memory_space<vmem>>, vector<1x1x8x32xf32>
    %132 = vector.shape_cast %131 : vector<1x1x8x32xf32> to vector<8x32xf32>
    %cst_108 = arith.constant dense<0.000000e+00> : vector<16x32xf32>
    %133 = tpu.matmul %130, %132, %cst_108 {dimension_numbers = #tpu.dot_dimension_numbers<[1], [0], [0], [1], [0, 0, 1, 1], [], []>} : vector<16x8xf32>, vector<8x32xf32>, vector<16x32xf32> -> vector<16x32xf32>
    %134 = arith.addf %89, %133 : vector<16x32xf32>
    %c0_109 = arith.constant 0 : index
    %c3 = arith.constant 3 : index
    %c0_110 = arith.constant 0 : index
    %c0_111 = arith.constant 0 : index
    %135 = vector.load %arg1[%c0_109, %c3, %c0_110, %c0_111] : memref<2x4x32x8xf32, #tpu.memory_space<vmem>>, vector<1x1x32x8xf32>
    %136 = vector.shape_cast %135 : vector<1x1x32x8xf32> to vector<32x8xf32>
    %cst_112 = arith.constant dense<0.000000e+00> : vector<16x8xf32>
    %137 = tpu.matmul %0, %136, %cst_112 {dimension_numbers = #tpu.dot_dimension_numbers<[1], [0], [0], [1], [0, 0, 1, 1], [], []>} : vector<16x32xf32>, vector<32x8xf32>, vector<16x8xf32> -> vector<16x8xf32>
    %c0_113 = arith.constant 0 : index
    %c3_114 = arith.constant 3 : index
    %c0_115 = arith.constant 0 : index
    %c0_116 = arith.constant 0 : index
    %138 = vector.load %arg2[%c0_113, %c3_114, %c0_115, %c0_116] : memref<2x4x1x8xf32, #tpu.memory_space<vmem>>, vector<1x1x1x8xf32>
    %139 = vector.shape_cast %138 : vector<1x1x1x8xf32> to vector<1x8xf32>
    %140 = vector.broadcast %139 : vector<1x8xf32> to vector<16x8xf32>
    %141 = arith.addf %137, %140 : vector<16x8xf32>
    %c0_117 = arith.constant 0 : index
    %c3_118 = arith.constant 3 : index
    %c0_119 = arith.constant 0 : index
    %c0_120 = arith.constant 0 : index
    %142 = vector.load %arg3[%c0_117, %c3_118, %c0_119, %c0_120] : memref<2x4x32x8xf32, #tpu.memory_space<vmem>>, vector<1x1x32x8xf32>
    %143 = vector.shape_cast %142 : vector<1x1x32x8xf32> to vector<32x8xf32>
    %cst_121 = arith.constant dense<0.000000e+00> : vector<16x8xf32>
    %144 = tpu.matmul %0, %143, %cst_121 {dimension_numbers = #tpu.dot_dimension_numbers<[1], [0], [0], [1], [0, 0, 1, 1], [], []>} : vector<16x32xf32>, vector<32x8xf32>, vector<16x8xf32> -> vector<16x8xf32>
    %c0_122 = arith.constant 0 : index
    %c3_123 = arith.constant 3 : index
    %c0_124 = arith.constant 0 : index
    %c0_125 = arith.constant 0 : index
    %145 = vector.load %arg4[%c0_122, %c3_123, %c0_124, %c0_125] : memref<2x4x1x8xf32, #tpu.memory_space<vmem>>, vector<1x1x1x8xf32>
    %146 = vector.shape_cast %145 : vector<1x1x1x8xf32> to vector<1x8xf32>
    %147 = vector.broadcast %146 : vector<1x8xf32> to vector<16x8xf32>
    %148 = arith.addf %144, %147 : vector<16x8xf32>
    %c0_126 = arith.constant 0 : index
    %c3_127 = arith.constant 3 : index
    %c0_128 = arith.constant 0 : index
    %c0_129 = arith.constant 0 : index
    %149 = vector.load %arg5[%c0_126, %c3_127, %c0_128, %c0_129] : memref<2x4x32x8xf32, #tpu.memory_space<vmem>>, vector<1x1x32x8xf32>
    %150 = vector.shape_cast %149 : vector<1x1x32x8xf32> to vector<32x8xf32>
    %cst_130 = arith.constant dense<0.000000e+00> : vector<16x8xf32>
    %151 = tpu.matmul %0, %150, %cst_130 {dimension_numbers = #tpu.dot_dimension_numbers<[1], [0], [0], [1], [0, 0, 1, 1], [], []>} : vector<16x32xf32>, vector<32x8xf32>, vector<16x8xf32> -> vector<16x8xf32>
    %c0_131 = arith.constant 0 : index
    %c3_132 = arith.constant 3 : index
    %c0_133 = arith.constant 0 : index
    %c0_134 = arith.constant 0 : index
    %152 = vector.load %arg6[%c0_131, %c3_132, %c0_133, %c0_134] : memref<2x4x1x8xf32, #tpu.memory_space<vmem>>, vector<1x1x1x8xf32>
    %153 = vector.shape_cast %152 : vector<1x1x1x8xf32> to vector<1x8xf32>
    %154 = vector.broadcast %153 : vector<1x8xf32> to vector<16x8xf32>
    %155 = arith.addf %151, %154 : vector<16x8xf32>
    %156 = vector.shape_cast %141 : vector<16x8xf32> to vector<2x8x8xf32>
    %157 = vector.shape_cast %148 : vector<16x8xf32> to vector<2x8x8xf32>
    %158 = vector.shape_cast %155 : vector<16x8xf32> to vector<2x8x8xf32>
    "tpu.trace_start"() <{level = 10 : i32, message = "bqd,bkd->bqk"}> : () -> ()
    %cst_135 = arith.constant dense<0.000000e+00> : vector<2x8x8xf32>
    %159 = tpu.matmul %156, %157, %cst_135 {dimension_numbers = #tpu.dot_dimension_numbers<[2], [2], [1], [1], [0, 0, 0, 1, 1, 1], [0], [0]>} : vector<2x8x8xf32>, vector<2x8x8xf32>, vector<2x8x8xf32> -> vector<2x8x8xf32>
    "tpu.trace_stop"() : () -> ()
    %cst_136 = arith.constant dense<0xFF800000> : vector<2x8xf32>
    %160 = vector.multi_reduction <maximumf>, %159, %cst_136 [2] : vector<2x8x8xf32> to vector<2x8xf32>
    %161 = vector.shape_cast %160 : vector<2x8xf32> to vector<2x8x1xf32>
    %162 = vector.broadcast %161 : vector<2x8x1xf32> to vector<2x8x8xf32>
    %163 = arith.subf %159, %162 : vector<2x8x8xf32>
    %164 = math.exp %163 : vector<2x8x8xf32>
    %cst_137 = arith.constant dense<0.000000e+00> : vector<2x8xf32>
    %165 = vector.multi_reduction <add>, %164, %cst_137 [2] : vector<2x8x8xf32> to vector<2x8xf32>
    %166 = vector.shape_cast %165 : vector<2x8xf32> to vector<2x8x1xf32>
    %167 = tpu.reciprocal %166 {approx = true} : vector<2x8x1xf32> -> vector<2x8x1xf32>
    %168 = arith.mulf %166, %167 : vector<2x8x1xf32>
    %cst_138 = arith.constant 2.000000e+00 : f32
    %169 = vector.broadcast %cst_138 : f32 to vector<2x8x1xf32>
    %170 = arith.subf %169, %168 : vector<2x8x1xf32>
    %171 = arith.mulf %167, %170 : vector<2x8x1xf32>
    %172 = vector.broadcast %171 : vector<2x8x1xf32> to vector<2x8x8xf32>
    %173 = arith.mulf %164, %172 : vector<2x8x8xf32>
    "tpu.trace_start"() <{level = 10 : i32, message = "bqk,bkd->bqd"}> : () -> ()
    %cst_139 = arith.constant dense<0.000000e+00> : vector<2x8x8xf32>
    %174 = tpu.matmul %173, %158, %cst_139 {dimension_numbers = #tpu.dot_dimension_numbers<[2], [1], [1], [2], [0, 0, 0, 1, 1, 2], [0], [0]>} : vector<2x8x8xf32>, vector<2x8x8xf32>, vector<2x8x8xf32> -> vector<2x8x8xf32>
    "tpu.trace_stop"() : () -> ()
    %175 = vector.shape_cast %174 : vector<2x8x8xf32> to vector<16x8xf32>
    %c0_140 = arith.constant 0 : index
    %c3_141 = arith.constant 3 : index
    %c0_142 = arith.constant 0 : index
    %c0_143 = arith.constant 0 : index
    %176 = vector.load %arg7[%c0_140, %c3_141, %c0_142, %c0_143] : memref<2x4x8x32xf32, #tpu.memory_space<vmem>>, vector<1x1x8x32xf32>
    %177 = vector.shape_cast %176 : vector<1x1x8x32xf32> to vector<8x32xf32>
    %cst_144 = arith.constant dense<0.000000e+00> : vector<16x32xf32>
    %178 = tpu.matmul %175, %177, %cst_144 {dimension_numbers = #tpu.dot_dimension_numbers<[1], [0], [0], [1], [0, 0, 1, 1], [], []>} : vector<16x8xf32>, vector<8x32xf32>, vector<16x32xf32> -> vector<16x32xf32>
    %179 = arith.addf %134, %178 : vector<16x32xf32>
    %c0_145 = arith.constant 0 : index
    %c0_146 = arith.constant 0 : index
    %c0_147 = arith.constant 0 : index
    %180 = vector.load %arg8[%c0_145, %c0_146, %c0_147] : memref<2x1x32xf32, #tpu.memory_space<vmem>>, vector<1x1x32xf32>
    %181 = vector.shape_cast %180 : vector<1x1x32xf32> to vector<1x32xf32>
    %182 = vector.broadcast %181 : vector<1x32xf32> to vector<16x32xf32>
    %183 = arith.addf %179, %182 : vector<16x32xf32>
    %184 = arith.addf %0, %183 : vector<16x32xf32>
    %c0_148 = arith.constant 0 : index
    %c0_149 = arith.constant 0 : index
    %c0_150 = arith.constant 0 : index
    %185 = vector.load %arg9[%c0_148, %c0_149, %c0_150] : memref<2x1x32xf32, #tpu.memory_space<vmem>>, vector<1x1x32xf32>
    %186 = vector.shape_cast %185 : vector<1x1x32xf32> to vector<1x32xf32>
    %c0_151 = arith.constant 0 : index
    %c0_152 = arith.constant 0 : index
    %c0_153 = arith.constant 0 : index
    %187 = vector.load %arg10[%c0_151, %c0_152, %c0_153] : memref<2x1x32xf32, #tpu.memory_space<vmem>>, vector<1x1x32xf32>
    %188 = vector.shape_cast %187 : vector<1x1x32xf32> to vector<1x32xf32>
    %cst_154 = arith.constant dense<0.000000e+00> : vector<16xf32>
    %189 = vector.multi_reduction <add>, %184, %cst_154 [1] : vector<16x32xf32> to vector<16xf32>
    %190 = vector.shape_cast %189 : vector<16xf32> to vector<16x1xf32>
    %cst_155 = arith.constant 3.200000e+01 : f32
    %191 = vector.broadcast %cst_155 : f32 to vector<16x1xf32>
    %192 = arith.divf %190, %191 : vector<16x1xf32>
    %193 = vector.broadcast %192 : vector<16x1xf32> to vector<16x32xf32>
    %194 = arith.subf %184, %193 : vector<16x32xf32>
    %195 = vector.broadcast %192 : vector<16x1xf32> to vector<16x32xf32>
    %196 = arith.subf %184, %195 : vector<16x32xf32>
    %197 = arith.mulf %194, %196 : vector<16x32xf32>
    %cst_156 = arith.constant dense<0.000000e+00> : vector<16xf32>
    %198 = vector.multi_reduction <add>, %197, %cst_156 [1] : vector<16x32xf32> to vector<16xf32>
    %199 = vector.shape_cast %198 : vector<16xf32> to vector<16x1xf32>
    %cst_157 = arith.constant 3.200000e+01 : f32
    %200 = vector.broadcast %cst_157 : f32 to vector<16x1xf32>
    %201 = arith.divf %199, %200 : vector<16x1xf32>
    %202 = vector.broadcast %192 : vector<16x1xf32> to vector<16x32xf32>
    %203 = arith.subf %184, %202 : vector<16x32xf32>
    %cst_158 = arith.constant 9.99999974E-6 : f32
    %204 = vector.broadcast %cst_158 : f32 to vector<16x1xf32>
    %205 = arith.addf %201, %204 : vector<16x1xf32>
    %206 = math.rsqrt %205 : vector<16x1xf32>
    %207 = vector.broadcast %206 : vector<16x1xf32> to vector<16x32xf32>
    %208 = arith.mulf %203, %207 : vector<16x32xf32>
    %209 = vector.broadcast %186 : vector<1x32xf32> to vector<16x32xf32>
    %210 = arith.mulf %208, %209 : vector<16x32xf32>
    %211 = vector.broadcast %188 : vector<1x32xf32> to vector<16x32xf32>
    %212 = arith.addf %210, %211 : vector<16x32xf32>
    %c0_159 = arith.constant 0 : index
    %c0_160 = arith.constant 0 : index
    %c0_161 = arith.constant 0 : index
    %213 = vector.load %arg13[%c0_159, %c0_160, %c0_161] : memref<2x32x1024xf32, #tpu.memory_space<vmem>>, vector<1x32x1024xf32>
    %214 = vector.shape_cast %213 : vector<1x32x1024xf32> to vector<32x1024xf32>
    %cst_162 = arith.constant dense<0.000000e+00> : vector<16x1024xf32>
    %215 = tpu.matmul %212, %214, %cst_162 {dimension_numbers = #tpu.dot_dimension_numbers<[1], [0], [0], [1], [0, 0, 1, 1], [], []>} : vector<16x32xf32>, vector<32x1024xf32>, vector<16x1024xf32> -> vector<16x1024xf32>
    %c0_163 = arith.constant 0 : index
    %c0_164 = arith.constant 0 : index
    %c0_165 = arith.constant 0 : index
    %216 = vector.load %arg14[%c0_163, %c0_164, %c0_165] : memref<2x1x1024xf32, #tpu.memory_space<vmem>>, vector<1x1x1024xf32>
    %217 = vector.shape_cast %216 : vector<1x1x1024xf32> to vector<1x1024xf32>
    %218 = vector.broadcast %217 : vector<1x1024xf32> to vector<16x1024xf32>
    %219 = arith.addf %215, %218 : vector<16x1024xf32>
    %cst_166 = arith.constant 0.000000e+00 : f32
    %220 = vector.broadcast %cst_166 : f32 to vector<16x1024xf32>
    %221 = arith.maximumf %219, %220 : vector<16x1024xf32>
    %c0_167 = arith.constant 0 : index
    %c0_168 = arith.constant 0 : index
    %c0_169 = arith.constant 0 : index
    %222 = vector.load %arg15[%c0_167, %c0_168, %c0_169] : memref<2x1024x32xf32, #tpu.memory_space<vmem>>, vector<1x1024x32xf32>
    %223 = vector.shape_cast %222 : vector<1x1024x32xf32> to vector<1024x32xf32>
    %cst_170 = arith.constant dense<0.000000e+00> : vector<16x32xf32>
    %224 = tpu.matmul %221, %223, %cst_170 {dimension_numbers = #tpu.dot_dimension_numbers<[1], [0], [0], [1], [0, 0, 1, 1], [], []>} : vector<16x1024xf32>, vector<1024x32xf32>, vector<16x32xf32> -> vector<16x32xf32>
    %c0_171 = arith.constant 0 : index
    %c0_172 = arith.constant 0 : index
    %c0_173 = arith.constant 0 : index
    %225 = vector.load %arg16[%c0_171, %c0_172, %c0_173] : memref<2x1x32xf32, #tpu.memory_space<vmem>>, vector<1x1x32xf32>
    %226 = vector.shape_cast %225 : vector<1x1x32xf32> to vector<1x32xf32>
    %227 = vector.broadcast %226 : vector<1x32xf32> to vector<16x32xf32>
    %228 = arith.addf %224, %227 : vector<16x32xf32>
    %229 = arith.addf %212, %228 : vector<16x32xf32>
    %c0_174 = arith.constant 0 : index
    %c0_175 = arith.constant 0 : index
    %c0_176 = arith.constant 0 : index
    %230 = vector.load %arg11[%c0_174, %c0_175, %c0_176] : memref<2x1x32xf32, #tpu.memory_space<vmem>>, vector<1x1x32xf32>
    %231 = vector.shape_cast %230 : vector<1x1x32xf32> to vector<1x32xf32>
    %c0_177 = arith.constant 0 : index
    %c0_178 = arith.constant 0 : index
    %c0_179 = arith.constant 0 : index
    %232 = vector.load %arg12[%c0_177, %c0_178, %c0_179] : memref<2x1x32xf32, #tpu.memory_space<vmem>>, vector<1x1x32xf32>
    %233 = vector.shape_cast %232 : vector<1x1x32xf32> to vector<1x32xf32>
    %cst_180 = arith.constant dense<0.000000e+00> : vector<16xf32>
    %234 = vector.multi_reduction <add>, %229, %cst_180 [1] : vector<16x32xf32> to vector<16xf32>
    %235 = vector.shape_cast %234 : vector<16xf32> to vector<16x1xf32>
    %cst_181 = arith.constant 3.200000e+01 : f32
    %236 = vector.broadcast %cst_181 : f32 to vector<16x1xf32>
    %237 = arith.divf %235, %236 : vector<16x1xf32>
    %238 = vector.broadcast %237 : vector<16x1xf32> to vector<16x32xf32>
    %239 = arith.subf %229, %238 : vector<16x32xf32>
    %240 = vector.broadcast %237 : vector<16x1xf32> to vector<16x32xf32>
    %241 = arith.subf %229, %240 : vector<16x32xf32>
    %242 = arith.mulf %239, %241 : vector<16x32xf32>
    %cst_182 = arith.constant dense<0.000000e+00> : vector<16xf32>
    %243 = vector.multi_reduction <add>, %242, %cst_182 [1] : vector<16x32xf32> to vector<16xf32>
    %244 = vector.shape_cast %243 : vector<16xf32> to vector<16x1xf32>
    %cst_183 = arith.constant 3.200000e+01 : f32
    %245 = vector.broadcast %cst_183 : f32 to vector<16x1xf32>
    %246 = arith.divf %244, %245 : vector<16x1xf32>
    %247 = vector.broadcast %237 : vector<16x1xf32> to vector<16x32xf32>
    %248 = arith.subf %229, %247 : vector<16x32xf32>
    %cst_184 = arith.constant 9.99999974E-6 : f32
    %249 = vector.broadcast %cst_184 : f32 to vector<16x1xf32>
    %250 = arith.addf %246, %249 : vector<16x1xf32>
    %251 = math.rsqrt %250 : vector<16x1xf32>
    %252 = vector.broadcast %251 : vector<16x1xf32> to vector<16x32xf32>
    %253 = arith.mulf %248, %252 : vector<16x32xf32>
    %254 = vector.broadcast %231 : vector<1x32xf32> to vector<16x32xf32>
    %255 = arith.mulf %253, %254 : vector<16x32xf32>
    %256 = vector.broadcast %233 : vector<1x32xf32> to vector<16x32xf32>
    %257 = arith.addf %255, %256 : vector<16x32xf32>
    %c1_185 = arith.constant 1 : index
    %c0_186 = arith.constant 0 : index
    %c0_187 = arith.constant 0 : index
    %c0_188 = arith.constant 0 : index
    %258 = vector.load %arg1[%c1_185, %c0_186, %c0_187, %c0_188] : memref<2x4x32x8xf32, #tpu.memory_space<vmem>>, vector<1x1x32x8xf32>
    %259 = vector.shape_cast %258 : vector<1x1x32x8xf32> to vector<32x8xf32>
    %cst_189 = arith.constant dense<0.000000e+00> : vector<16x8xf32>
    %260 = tpu.matmul %257, %259, %cst_189 {dimension_numbers = #tpu.dot_dimension_numbers<[1], [0], [0], [1], [0, 0, 1, 1], [], []>} : vector<16x32xf32>, vector<32x8xf32>, vector<16x8xf32> -> vector<16x8xf32>
    %c1_190 = arith.constant 1 : index
    %c0_191 = arith.constant 0 : index
    %c0_192 = arith.constant 0 : index
    %c0_193 = arith.constant 0 : index
    %261 = vector.load %arg2[%c1_190, %c0_191, %c0_192, %c0_193] : memref<2x4x1x8xf32, #tpu.memory_space<vmem>>, vector<1x1x1x8xf32>
    %262 = vector.shape_cast %261 : vector<1x1x1x8xf32> to vector<1x8xf32>
    %263 = vector.broadcast %262 : vector<1x8xf32> to vector<16x8xf32>
    %264 = arith.addf %260, %263 : vector<16x8xf32>
    %c1_194 = arith.constant 1 : index
    %c0_195 = arith.constant 0 : index
    %c0_196 = arith.constant 0 : index
    %c0_197 = arith.constant 0 : index
    %265 = vector.load %arg3[%c1_194, %c0_195, %c0_196, %c0_197] : memref<2x4x32x8xf32, #tpu.memory_space<vmem>>, vector<1x1x32x8xf32>
    %266 = vector.shape_cast %265 : vector<1x1x32x8xf32> to vector<32x8xf32>
    %cst_198 = arith.constant dense<0.000000e+00> : vector<16x8xf32>
    %267 = tpu.matmul %257, %266, %cst_198 {dimension_numbers = #tpu.dot_dimension_numbers<[1], [0], [0], [1], [0, 0, 1, 1], [], []>} : vector<16x32xf32>, vector<32x8xf32>, vector<16x8xf32> -> vector<16x8xf32>
    %c1_199 = arith.constant 1 : index
    %c0_200 = arith.constant 0 : index
    %c0_201 = arith.constant 0 : index
    %c0_202 = arith.constant 0 : index
    %268 = vector.load %arg4[%c1_199, %c0_200, %c0_201, %c0_202] : memref<2x4x1x8xf32, #tpu.memory_space<vmem>>, vector<1x1x1x8xf32>
    %269 = vector.shape_cast %268 : vector<1x1x1x8xf32> to vector<1x8xf32>
    %270 = vector.broadcast %269 : vector<1x8xf32> to vector<16x8xf32>
    %271 = arith.addf %267, %270 : vector<16x8xf32>
    %c1_203 = arith.constant 1 : index
    %c0_204 = arith.constant 0 : index
    %c0_205 = arith.constant 0 : index
    %c0_206 = arith.constant 0 : index
    %272 = vector.load %arg5[%c1_203, %c0_204, %c0_205, %c0_206] : memref<2x4x32x8xf32, #tpu.memory_space<vmem>>, vector<1x1x32x8xf32>
    %273 = vector.shape_cast %272 : vector<1x1x32x8xf32> to vector<32x8xf32>
    %cst_207 = arith.constant dense<0.000000e+00> : vector<16x8xf32>
    %274 = tpu.matmul %257, %273, %cst_207 {dimension_numbers = #tpu.dot_dimension_numbers<[1], [0], [0], [1], [0, 0, 1, 1], [], []>} : vector<16x32xf32>, vector<32x8xf32>, vector<16x8xf32> -> vector<16x8xf32>
    %c1_208 = arith.constant 1 : index
    %c0_209 = arith.constant 0 : index
    %c0_210 = arith.constant 0 : index
    %c0_211 = arith.constant 0 : index
    %275 = vector.load %arg6[%c1_208, %c0_209, %c0_210, %c0_211] : memref<2x4x1x8xf32, #tpu.memory_space<vmem>>, vector<1x1x1x8xf32>
    %276 = vector.shape_cast %275 : vector<1x1x1x8xf32> to vector<1x8xf32>
    %277 = vector.broadcast %276 : vector<1x8xf32> to vector<16x8xf32>
    %278 = arith.addf %274, %277 : vector<16x8xf32>
    %279 = vector.shape_cast %264 : vector<16x8xf32> to vector<2x8x8xf32>
    %280 = vector.shape_cast %271 : vector<16x8xf32> to vector<2x8x8xf32>
    %281 = vector.shape_cast %278 : vector<16x8xf32> to vector<2x8x8xf32>
    "tpu.trace_start"() <{level = 10 : i32, message = "bqd,bkd->bqk"}> : () -> ()
    %cst_212 = arith.constant dense<0.000000e+00> : vector<2x8x8xf32>
    %282 = tpu.matmul %279, %280, %cst_212 {dimension_numbers = #tpu.dot_dimension_numbers<[2], [2], [1], [1], [0, 0, 0, 1, 1, 1], [0], [0]>} : vector<2x8x8xf32>, vector<2x8x8xf32>, vector<2x8x8xf32> -> vector<2x8x8xf32>
    "tpu.trace_stop"() : () -> ()
    %cst_213 = arith.constant dense<0xFF800000> : vector<2x8xf32>
    %283 = vector.multi_reduction <maximumf>, %282, %cst_213 [2] : vector<2x8x8xf32> to vector<2x8xf32>
    %284 = vector.shape_cast %283 : vector<2x8xf32> to vector<2x8x1xf32>
    %285 = vector.broadcast %284 : vector<2x8x1xf32> to vector<2x8x8xf32>
    %286 = arith.subf %282, %285 : vector<2x8x8xf32>
    %287 = math.exp %286 : vector<2x8x8xf32>
    %cst_214 = arith.constant dense<0.000000e+00> : vector<2x8xf32>
    %288 = vector.multi_reduction <add>, %287, %cst_214 [2] : vector<2x8x8xf32> to vector<2x8xf32>
    %289 = vector.shape_cast %288 : vector<2x8xf32> to vector<2x8x1xf32>
    %290 = tpu.reciprocal %289 {approx = true} : vector<2x8x1xf32> -> vector<2x8x1xf32>
    %291 = arith.mulf %289, %290 : vector<2x8x1xf32>
    %cst_215 = arith.constant 2.000000e+00 : f32
    %292 = vector.broadcast %cst_215 : f32 to vector<2x8x1xf32>
    %293 = arith.subf %292, %291 : vector<2x8x1xf32>
    %294 = arith.mulf %290, %293 : vector<2x8x1xf32>
    %295 = vector.broadcast %294 : vector<2x8x1xf32> to vector<2x8x8xf32>
    %296 = arith.mulf %287, %295 : vector<2x8x8xf32>
    "tpu.trace_start"() <{level = 10 : i32, message = "bqk,bkd->bqd"}> : () -> ()
    %cst_216 = arith.constant dense<0.000000e+00> : vector<2x8x8xf32>
    %297 = tpu.matmul %296, %281, %cst_216 {dimension_numbers = #tpu.dot_dimension_numbers<[2], [1], [1], [2], [0, 0, 0, 1, 1, 2], [0], [0]>} : vector<2x8x8xf32>, vector<2x8x8xf32>, vector<2x8x8xf32> -> vector<2x8x8xf32>
    "tpu.trace_stop"() : () -> ()
    %298 = vector.shape_cast %297 : vector<2x8x8xf32> to vector<16x8xf32>
    %c1_217 = arith.constant 1 : index
    %c0_218 = arith.constant 0 : index
    %c0_219 = arith.constant 0 : index
    %c0_220 = arith.constant 0 : index
    %299 = vector.load %arg7[%c1_217, %c0_218, %c0_219, %c0_220] : memref<2x4x8x32xf32, #tpu.memory_space<vmem>>, vector<1x1x8x32xf32>
    %300 = vector.shape_cast %299 : vector<1x1x8x32xf32> to vector<8x32xf32>
    %cst_221 = arith.constant dense<0.000000e+00> : vector<16x32xf32>
    %301 = tpu.matmul %298, %300, %cst_221 {dimension_numbers = #tpu.dot_dimension_numbers<[1], [0], [0], [1], [0, 0, 1, 1], [], []>} : vector<16x8xf32>, vector<8x32xf32>, vector<16x32xf32> -> vector<16x32xf32>
    %c1_222 = arith.constant 1 : index
    %c1_223 = arith.constant 1 : index
    %c0_224 = arith.constant 0 : index
    %c0_225 = arith.constant 0 : index
    %302 = vector.load %arg1[%c1_222, %c1_223, %c0_224, %c0_225] : memref<2x4x32x8xf32, #tpu.memory_space<vmem>>, vector<1x1x32x8xf32>
    %303 = vector.shape_cast %302 : vector<1x1x32x8xf32> to vector<32x8xf32>
    %cst_226 = arith.constant dense<0.000000e+00> : vector<16x8xf32>
    %304 = tpu.matmul %257, %303, %cst_226 {dimension_numbers = #tpu.dot_dimension_numbers<[1], [0], [0], [1], [0, 0, 1, 1], [], []>} : vector<16x32xf32>, vector<32x8xf32>, vector<16x8xf32> -> vector<16x8xf32>
    %c1_227 = arith.constant 1 : index
    %c1_228 = arith.constant 1 : index
    %c0_229 = arith.constant 0 : index
    %c0_230 = arith.constant 0 : index
    %305 = vector.load %arg2[%c1_227, %c1_228, %c0_229, %c0_230] : memref<2x4x1x8xf32, #tpu.memory_space<vmem>>, vector<1x1x1x8xf32>
    %306 = vector.shape_cast %305 : vector<1x1x1x8xf32> to vector<1x8xf32>
    %307 = vector.broadcast %306 : vector<1x8xf32> to vector<16x8xf32>
    %308 = arith.addf %304, %307 : vector<16x8xf32>
    %c1_231 = arith.constant 1 : index
    %c1_232 = arith.constant 1 : index
    %c0_233 = arith.constant 0 : index
    %c0_234 = arith.constant 0 : index
    %309 = vector.load %arg3[%c1_231, %c1_232, %c0_233, %c0_234] : memref<2x4x32x8xf32, #tpu.memory_space<vmem>>, vector<1x1x32x8xf32>
    %310 = vector.shape_cast %309 : vector<1x1x32x8xf32> to vector<32x8xf32>
    %cst_235 = arith.constant dense<0.000000e+00> : vector<16x8xf32>
    %311 = tpu.matmul %257, %310, %cst_235 {dimension_numbers = #tpu.dot_dimension_numbers<[1], [0], [0], [1], [0, 0, 1, 1], [], []>} : vector<16x32xf32>, vector<32x8xf32>, vector<16x8xf32> -> vector<16x8xf32>
    %c1_236 = arith.constant 1 : index
    %c1_237 = arith.constant 1 : index
    %c0_238 = arith.constant 0 : index
    %c0_239 = arith.constant 0 : index
    %312 = vector.load %arg4[%c1_236, %c1_237, %c0_238, %c0_239] : memref<2x4x1x8xf32, #tpu.memory_space<vmem>>, vector<1x1x1x8xf32>
    %313 = vector.shape_cast %312 : vector<1x1x1x8xf32> to vector<1x8xf32>
    %314 = vector.broadcast %313 : vector<1x8xf32> to vector<16x8xf32>
    %315 = arith.addf %311, %314 : vector<16x8xf32>
    %c1_240 = arith.constant 1 : index
    %c1_241 = arith.constant 1 : index
    %c0_242 = arith.constant 0 : index
    %c0_243 = arith.constant 0 : index
    %316 = vector.load %arg5[%c1_240, %c1_241, %c0_242, %c0_243] : memref<2x4x32x8xf32, #tpu.memory_space<vmem>>, vector<1x1x32x8xf32>
    %317 = vector.shape_cast %316 : vector<1x1x32x8xf32> to vector<32x8xf32>
    %cst_244 = arith.constant dense<0.000000e+00> : vector<16x8xf32>
    %318 = tpu.matmul %257, %317, %cst_244 {dimension_numbers = #tpu.dot_dimension_numbers<[1], [0], [0], [1], [0, 0, 1, 1], [], []>} : vector<16x32xf32>, vector<32x8xf32>, vector<16x8xf32> -> vector<16x8xf32>
    %c1_245 = arith.constant 1 : index
    %c1_246 = arith.constant 1 : index
    %c0_247 = arith.constant 0 : index
    %c0_248 = arith.constant 0 : index
    %319 = vector.load %arg6[%c1_245, %c1_246, %c0_247, %c0_248] : memref<2x4x1x8xf32, #tpu.memory_space<vmem>>, vector<1x1x1x8xf32>
    %320 = vector.shape_cast %319 : vector<1x1x1x8xf32> to vector<1x8xf32>
    %321 = vector.broadcast %320 : vector<1x8xf32> to vector<16x8xf32>
    %322 = arith.addf %318, %321 : vector<16x8xf32>
    %323 = vector.shape_cast %308 : vector<16x8xf32> to vector<2x8x8xf32>
    %324 = vector.shape_cast %315 : vector<16x8xf32> to vector<2x8x8xf32>
    %325 = vector.shape_cast %322 : vector<16x8xf32> to vector<2x8x8xf32>
    "tpu.trace_start"() <{level = 10 : i32, message = "bqd,bkd->bqk"}> : () -> ()
    %cst_249 = arith.constant dense<0.000000e+00> : vector<2x8x8xf32>
    %326 = tpu.matmul %323, %324, %cst_249 {dimension_numbers = #tpu.dot_dimension_numbers<[2], [2], [1], [1], [0, 0, 0, 1, 1, 1], [0], [0]>} : vector<2x8x8xf32>, vector<2x8x8xf32>, vector<2x8x8xf32> -> vector<2x8x8xf32>
    "tpu.trace_stop"() : () -> ()
    %cst_250 = arith.constant dense<0xFF800000> : vector<2x8xf32>
    %327 = vector.multi_reduction <maximumf>, %326, %cst_250 [2] : vector<2x8x8xf32> to vector<2x8xf32>
    %328 = vector.shape_cast %327 : vector<2x8xf32> to vector<2x8x1xf32>
    %329 = vector.broadcast %328 : vector<2x8x1xf32> to vector<2x8x8xf32>
    %330 = arith.subf %326, %329 : vector<2x8x8xf32>
    %331 = math.exp %330 : vector<2x8x8xf32>
    %cst_251 = arith.constant dense<0.000000e+00> : vector<2x8xf32>
    %332 = vector.multi_reduction <add>, %331, %cst_251 [2] : vector<2x8x8xf32> to vector<2x8xf32>
    %333 = vector.shape_cast %332 : vector<2x8xf32> to vector<2x8x1xf32>
    %334 = tpu.reciprocal %333 {approx = true} : vector<2x8x1xf32> -> vector<2x8x1xf32>
    %335 = arith.mulf %333, %334 : vector<2x8x1xf32>
    %cst_252 = arith.constant 2.000000e+00 : f32
    %336 = vector.broadcast %cst_252 : f32 to vector<2x8x1xf32>
    %337 = arith.subf %336, %335 : vector<2x8x1xf32>
    %338 = arith.mulf %334, %337 : vector<2x8x1xf32>
    %339 = vector.broadcast %338 : vector<2x8x1xf32> to vector<2x8x8xf32>
    %340 = arith.mulf %331, %339 : vector<2x8x8xf32>
    "tpu.trace_start"() <{level = 10 : i32, message = "bqk,bkd->bqd"}> : () -> ()
    %cst_253 = arith.constant dense<0.000000e+00> : vector<2x8x8xf32>
    %341 = tpu.matmul %340, %325, %cst_253 {dimension_numbers = #tpu.dot_dimension_numbers<[2], [1], [1], [2], [0, 0, 0, 1, 1, 2], [0], [0]>} : vector<2x8x8xf32>, vector<2x8x8xf32>, vector<2x8x8xf32> -> vector<2x8x8xf32>
    "tpu.trace_stop"() : () -> ()
    %342 = vector.shape_cast %341 : vector<2x8x8xf32> to vector<16x8xf32>
    %c1_254 = arith.constant 1 : index
    %c1_255 = arith.constant 1 : index
    %c0_256 = arith.constant 0 : index
    %c0_257 = arith.constant 0 : index
    %343 = vector.load %arg7[%c1_254, %c1_255, %c0_256, %c0_257] : memref<2x4x8x32xf32, #tpu.memory_space<vmem>>, vector<1x1x8x32xf32>
    %344 = vector.shape_cast %343 : vector<1x1x8x32xf32> to vector<8x32xf32>
    %cst_258 = arith.constant dense<0.000000e+00> : vector<16x32xf32>
    %345 = tpu.matmul %342, %344, %cst_258 {dimension_numbers = #tpu.dot_dimension_numbers<[1], [0], [0], [1], [0, 0, 1, 1], [], []>} : vector<16x8xf32>, vector<8x32xf32>, vector<16x32xf32> -> vector<16x32xf32>
    %346 = arith.addf %301, %345 : vector<16x32xf32>
    %c1_259 = arith.constant 1 : index
    %c2_260 = arith.constant 2 : index
    %c0_261 = arith.constant 0 : index
    %c0_262 = arith.constant 0 : index
    %347 = vector.load %arg1[%c1_259, %c2_260, %c0_261, %c0_262] : memref<2x4x32x8xf32, #tpu.memory_space<vmem>>, vector<1x1x32x8xf32>
    %348 = vector.shape_cast %347 : vector<1x1x32x8xf32> to vector<32x8xf32>
    %cst_263 = arith.constant dense<0.000000e+00> : vector<16x8xf32>
    %349 = tpu.matmul %257, %348, %cst_263 {dimension_numbers = #tpu.dot_dimension_numbers<[1], [0], [0], [1], [0, 0, 1, 1], [], []>} : vector<16x32xf32>, vector<32x8xf32>, vector<16x8xf32> -> vector<16x8xf32>
    %c1_264 = arith.constant 1 : index
    %c2_265 = arith.constant 2 : index
    %c0_266 = arith.constant 0 : index
    %c0_267 = arith.constant 0 : index
    %350 = vector.load %arg2[%c1_264, %c2_265, %c0_266, %c0_267] : memref<2x4x1x8xf32, #tpu.memory_space<vmem>>, vector<1x1x1x8xf32>
    %351 = vector.shape_cast %350 : vector<1x1x1x8xf32> to vector<1x8xf32>
    %352 = vector.broadcast %351 : vector<1x8xf32> to vector<16x8xf32>
    %353 = arith.addf %349, %352 : vector<16x8xf32>
    %c1_268 = arith.constant 1 : index
    %c2_269 = arith.constant 2 : index
    %c0_270 = arith.constant 0 : index
    %c0_271 = arith.constant 0 : index
    %354 = vector.load %arg3[%c1_268, %c2_269, %c0_270, %c0_271] : memref<2x4x32x8xf32, #tpu.memory_space<vmem>>, vector<1x1x32x8xf32>
    %355 = vector.shape_cast %354 : vector<1x1x32x8xf32> to vector<32x8xf32>
    %cst_272 = arith.constant dense<0.000000e+00> : vector<16x8xf32>
    %356 = tpu.matmul %257, %355, %cst_272 {dimension_numbers = #tpu.dot_dimension_numbers<[1], [0], [0], [1], [0, 0, 1, 1], [], []>} : vector<16x32xf32>, vector<32x8xf32>, vector<16x8xf32> -> vector<16x8xf32>
    %c1_273 = arith.constant 1 : index
    %c2_274 = arith.constant 2 : index
    %c0_275 = arith.constant 0 : index
    %c0_276 = arith.constant 0 : index
    %357 = vector.load %arg4[%c1_273, %c2_274, %c0_275, %c0_276] : memref<2x4x1x8xf32, #tpu.memory_space<vmem>>, vector<1x1x1x8xf32>
    %358 = vector.shape_cast %357 : vector<1x1x1x8xf32> to vector<1x8xf32>
    %359 = vector.broadcast %358 : vector<1x8xf32> to vector<16x8xf32>
    %360 = arith.addf %356, %359 : vector<16x8xf32>
    %c1_277 = arith.constant 1 : index
    %c2_278 = arith.constant 2 : index
    %c0_279 = arith.constant 0 : index
    %c0_280 = arith.constant 0 : index
    %361 = vector.load %arg5[%c1_277, %c2_278, %c0_279, %c0_280] : memref<2x4x32x8xf32, #tpu.memory_space<vmem>>, vector<1x1x32x8xf32>
    %362 = vector.shape_cast %361 : vector<1x1x32x8xf32> to vector<32x8xf32>
    %cst_281 = arith.constant dense<0.000000e+00> : vector<16x8xf32>
    %363 = tpu.matmul %257, %362, %cst_281 {dimension_numbers = #tpu.dot_dimension_numbers<[1], [0], [0], [1], [0, 0, 1, 1], [], []>} : vector<16x32xf32>, vector<32x8xf32>, vector<16x8xf32> -> vector<16x8xf32>
    %c1_282 = arith.constant 1 : index
    %c2_283 = arith.constant 2 : index
    %c0_284 = arith.constant 0 : index
    %c0_285 = arith.constant 0 : index
    %364 = vector.load %arg6[%c1_282, %c2_283, %c0_284, %c0_285] : memref<2x4x1x8xf32, #tpu.memory_space<vmem>>, vector<1x1x1x8xf32>
    %365 = vector.shape_cast %364 : vector<1x1x1x8xf32> to vector<1x8xf32>
    %366 = vector.broadcast %365 : vector<1x8xf32> to vector<16x8xf32>
    %367 = arith.addf %363, %366 : vector<16x8xf32>
    %368 = vector.shape_cast %353 : vector<16x8xf32> to vector<2x8x8xf32>
    %369 = vector.shape_cast %360 : vector<16x8xf32> to vector<2x8x8xf32>
    %370 = vector.shape_cast %367 : vector<16x8xf32> to vector<2x8x8xf32>
    "tpu.trace_start"() <{level = 10 : i32, message = "bqd,bkd->bqk"}> : () -> ()
    %cst_286 = arith.constant dense<0.000000e+00> : vector<2x8x8xf32>
    %371 = tpu.matmul %368, %369, %cst_286 {dimension_numbers = #tpu.dot_dimension_numbers<[2], [2], [1], [1], [0, 0, 0, 1, 1, 1], [0], [0]>} : vector<2x8x8xf32>, vector<2x8x8xf32>, vector<2x8x8xf32> -> vector<2x8x8xf32>
    "tpu.trace_stop"() : () -> ()
    %cst_287 = arith.constant dense<0xFF800000> : vector<2x8xf32>
    %372 = vector.multi_reduction <maximumf>, %371, %cst_287 [2] : vector<2x8x8xf32> to vector<2x8xf32>
    %373 = vector.shape_cast %372 : vector<2x8xf32> to vector<2x8x1xf32>
    %374 = vector.broadcast %373 : vector<2x8x1xf32> to vector<2x8x8xf32>
    %375 = arith.subf %371, %374 : vector<2x8x8xf32>
    %376 = math.exp %375 : vector<2x8x8xf32>
    %cst_288 = arith.constant dense<0.000000e+00> : vector<2x8xf32>
    %377 = vector.multi_reduction <add>, %376, %cst_288 [2] : vector<2x8x8xf32> to vector<2x8xf32>
    %378 = vector.shape_cast %377 : vector<2x8xf32> to vector<2x8x1xf32>
    %379 = tpu.reciprocal %378 {approx = true} : vector<2x8x1xf32> -> vector<2x8x1xf32>
    %380 = arith.mulf %378, %379 : vector<2x8x1xf32>
    %cst_289 = arith.constant 2.000000e+00 : f32
    %381 = vector.broadcast %cst_289 : f32 to vector<2x8x1xf32>
    %382 = arith.subf %381, %380 : vector<2x8x1xf32>
    %383 = arith.mulf %379, %382 : vector<2x8x1xf32>
    %384 = vector.broadcast %383 : vector<2x8x1xf32> to vector<2x8x8xf32>
    %385 = arith.mulf %376, %384 : vector<2x8x8xf32>
    "tpu.trace_start"() <{level = 10 : i32, message = "bqk,bkd->bqd"}> : () -> ()
    %cst_290 = arith.constant dense<0.000000e+00> : vector<2x8x8xf32>
    %386 = tpu.matmul %385, %370, %cst_290 {dimension_numbers = #tpu.dot_dimension_numbers<[2], [1], [1], [2], [0, 0, 0, 1, 1, 2], [0], [0]>} : vector<2x8x8xf32>, vector<2x8x8xf32>, vector<2x8x8xf32> -> vector<2x8x8xf32>
    "tpu.trace_stop"() : () -> ()
    %387 = vector.shape_cast %386 : vector<2x8x8xf32> to vector<16x8xf32>
    %c1_291 = arith.constant 1 : index
    %c2_292 = arith.constant 2 : index
    %c0_293 = arith.constant 0 : index
    %c0_294 = arith.constant 0 : index
    %388 = vector.load %arg7[%c1_291, %c2_292, %c0_293, %c0_294] : memref<2x4x8x32xf32, #tpu.memory_space<vmem>>, vector<1x1x8x32xf32>
    %389 = vector.shape_cast %388 : vector<1x1x8x32xf32> to vector<8x32xf32>
    %cst_295 = arith.constant dense<0.000000e+00> : vector<16x32xf32>
    %390 = tpu.matmul %387, %389, %cst_295 {dimension_numbers = #tpu.dot_dimension_numbers<[1], [0], [0], [1], [0, 0, 1, 1], [], []>} : vector<16x8xf32>, vector<8x32xf32>, vector<16x32xf32> -> vector<16x32xf32>
    %391 = arith.addf %346, %390 : vector<16x32xf32>
    %c1_296 = arith.constant 1 : index
    %c3_297 = arith.constant 3 : index
    %c0_298 = arith.constant 0 : index
    %c0_299 = arith.constant 0 : index
    %392 = vector.load %arg1[%c1_296, %c3_297, %c0_298, %c0_299] : memref<2x4x32x8xf32, #tpu.memory_space<vmem>>, vector<1x1x32x8xf32>
    %393 = vector.shape_cast %392 : vector<1x1x32x8xf32> to vector<32x8xf32>
    %cst_300 = arith.constant dense<0.000000e+00> : vector<16x8xf32>
    %394 = tpu.matmul %257, %393, %cst_300 {dimension_numbers = #tpu.dot_dimension_numbers<[1], [0], [0], [1], [0, 0, 1, 1], [], []>} : vector<16x32xf32>, vector<32x8xf32>, vector<16x8xf32> -> vector<16x8xf32>
    %c1_301 = arith.constant 1 : index
    %c3_302 = arith.constant 3 : index
    %c0_303 = arith.constant 0 : index
    %c0_304 = arith.constant 0 : index
    %395 = vector.load %arg2[%c1_301, %c3_302, %c0_303, %c0_304] : memref<2x4x1x8xf32, #tpu.memory_space<vmem>>, vector<1x1x1x8xf32>
    %396 = vector.shape_cast %395 : vector<1x1x1x8xf32> to vector<1x8xf32>
    %397 = vector.broadcast %396 : vector<1x8xf32> to vector<16x8xf32>
    %398 = arith.addf %394, %397 : vector<16x8xf32>
    %c1_305 = arith.constant 1 : index
    %c3_306 = arith.constant 3 : index
    %c0_307 = arith.constant 0 : index
    %c0_308 = arith.constant 0 : index
    %399 = vector.load %arg3[%c1_305, %c3_306, %c0_307, %c0_308] : memref<2x4x32x8xf32, #tpu.memory_space<vmem>>, vector<1x1x32x8xf32>
    %400 = vector.shape_cast %399 : vector<1x1x32x8xf32> to vector<32x8xf32>
    %cst_309 = arith.constant dense<0.000000e+00> : vector<16x8xf32>
    %401 = tpu.matmul %257, %400, %cst_309 {dimension_numbers = #tpu.dot_dimension_numbers<[1], [0], [0], [1], [0, 0, 1, 1], [], []>} : vector<16x32xf32>, vector<32x8xf32>, vector<16x8xf32> -> vector<16x8xf32>
    %c1_310 = arith.constant 1 : index
    %c3_311 = arith.constant 3 : index
    %c0_312 = arith.constant 0 : index
    %c0_313 = arith.constant 0 : index
    %402 = vector.load %arg4[%c1_310, %c3_311, %c0_312, %c0_313] : memref<2x4x1x8xf32, #tpu.memory_space<vmem>>, vector<1x1x1x8xf32>
    %403 = vector.shape_cast %402 : vector<1x1x1x8xf32> to vector<1x8xf32>
    %404 = vector.broadcast %403 : vector<1x8xf32> to vector<16x8xf32>
    %405 = arith.addf %401, %404 : vector<16x8xf32>
    %c1_314 = arith.constant 1 : index
    %c3_315 = arith.constant 3 : index
    %c0_316 = arith.constant 0 : index
    %c0_317 = arith.constant 0 : index
    %406 = vector.load %arg5[%c1_314, %c3_315, %c0_316, %c0_317] : memref<2x4x32x8xf32, #tpu.memory_space<vmem>>, vector<1x1x32x8xf32>
    %407 = vector.shape_cast %406 : vector<1x1x32x8xf32> to vector<32x8xf32>
    %cst_318 = arith.constant dense<0.000000e+00> : vector<16x8xf32>
    %408 = tpu.matmul %257, %407, %cst_318 {dimension_numbers = #tpu.dot_dimension_numbers<[1], [0], [0], [1], [0, 0, 1, 1], [], []>} : vector<16x32xf32>, vector<32x8xf32>, vector<16x8xf32> -> vector<16x8xf32>
    %c1_319 = arith.constant 1 : index
    %c3_320 = arith.constant 3 : index
    %c0_321 = arith.constant 0 : index
    %c0_322 = arith.constant 0 : index
    %409 = vector.load %arg6[%c1_319, %c3_320, %c0_321, %c0_322] : memref<2x4x1x8xf32, #tpu.memory_space<vmem>>, vector<1x1x1x8xf32>
    %410 = vector.shape_cast %409 : vector<1x1x1x8xf32> to vector<1x8xf32>
    %411 = vector.broadcast %410 : vector<1x8xf32> to vector<16x8xf32>
    %412 = arith.addf %408, %411 : vector<16x8xf32>
    %413 = vector.shape_cast %398 : vector<16x8xf32> to vector<2x8x8xf32>
    %414 = vector.shape_cast %405 : vector<16x8xf32> to vector<2x8x8xf32>
    %415 = vector.shape_cast %412 : vector<16x8xf32> to vector<2x8x8xf32>
    "tpu.trace_start"() <{level = 10 : i32, message = "bqd,bkd->bqk"}> : () -> ()
    %cst_323 = arith.constant dense<0.000000e+00> : vector<2x8x8xf32>
    %416 = tpu.matmul %413, %414, %cst_323 {dimension_numbers = #tpu.dot_dimension_numbers<[2], [2], [1], [1], [0, 0, 0, 1, 1, 1], [0], [0]>} : vector<2x8x8xf32>, vector<2x8x8xf32>, vector<2x8x8xf32> -> vector<2x8x8xf32>
    "tpu.trace_stop"() : () -> ()
    %cst_324 = arith.constant dense<0xFF800000> : vector<2x8xf32>
    %417 = vector.multi_reduction <maximumf>, %416, %cst_324 [2] : vector<2x8x8xf32> to vector<2x8xf32>
    %418 = vector.shape_cast %417 : vector<2x8xf32> to vector<2x8x1xf32>
    %419 = vector.broadcast %418 : vector<2x8x1xf32> to vector<2x8x8xf32>
    %420 = arith.subf %416, %419 : vector<2x8x8xf32>
    %421 = math.exp %420 : vector<2x8x8xf32>
    %cst_325 = arith.constant dense<0.000000e+00> : vector<2x8xf32>
    %422 = vector.multi_reduction <add>, %421, %cst_325 [2] : vector<2x8x8xf32> to vector<2x8xf32>
    %423 = vector.shape_cast %422 : vector<2x8xf32> to vector<2x8x1xf32>
    %424 = tpu.reciprocal %423 {approx = true} : vector<2x8x1xf32> -> vector<2x8x1xf32>
    %425 = arith.mulf %423, %424 : vector<2x8x1xf32>
    %cst_326 = arith.constant 2.000000e+00 : f32
    %426 = vector.broadcast %cst_326 : f32 to vector<2x8x1xf32>
    %427 = arith.subf %426, %425 : vector<2x8x1xf32>
    %428 = arith.mulf %424, %427 : vector<2x8x1xf32>
    %429 = vector.broadcast %428 : vector<2x8x1xf32> to vector<2x8x8xf32>
    %430 = arith.mulf %421, %429 : vector<2x8x8xf32>
    "tpu.trace_start"() <{level = 10 : i32, message = "bqk,bkd->bqd"}> : () -> ()
    %cst_327 = arith.constant dense<0.000000e+00> : vector<2x8x8xf32>
    %431 = tpu.matmul %430, %415, %cst_327 {dimension_numbers = #tpu.dot_dimension_numbers<[2], [1], [1], [2], [0, 0, 0, 1, 1, 2], [0], [0]>} : vector<2x8x8xf32>, vector<2x8x8xf32>, vector<2x8x8xf32> -> vector<2x8x8xf32>
    "tpu.trace_stop"() : () -> ()
    %432 = vector.shape_cast %431 : vector<2x8x8xf32> to vector<16x8xf32>
    %c1_328 = arith.constant 1 : index
    %c3_329 = arith.constant 3 : index
    %c0_330 = arith.constant 0 : index
    %c0_331 = arith.constant 0 : index
    %433 = vector.load %arg7[%c1_328, %c3_329, %c0_330, %c0_331] : memref<2x4x8x32xf32, #tpu.memory_space<vmem>>, vector<1x1x8x32xf32>
    %434 = vector.shape_cast %433 : vector<1x1x8x32xf32> to vector<8x32xf32>
    %cst_332 = arith.constant dense<0.000000e+00> : vector<16x32xf32>
    %435 = tpu.matmul %432, %434, %cst_332 {dimension_numbers = #tpu.dot_dimension_numbers<[1], [0], [0], [1], [0, 0, 1, 1], [], []>} : vector<16x8xf32>, vector<8x32xf32>, vector<16x32xf32> -> vector<16x32xf32>
    %436 = arith.addf %391, %435 : vector<16x32xf32>
    %c1_333 = arith.constant 1 : index
    %c0_334 = arith.constant 0 : index
    %c0_335 = arith.constant 0 : index
    %437 = vector.load %arg8[%c1_333, %c0_334, %c0_335] : memref<2x1x32xf32, #tpu.memory_space<vmem>>, vector<1x1x32xf32>
    %438 = vector.shape_cast %437 : vector<1x1x32xf32> to vector<1x32xf32>
    %439 = vector.broadcast %438 : vector<1x32xf32> to vector<16x32xf32>
    %440 = arith.addf %436, %439 : vector<16x32xf32>
    %441 = arith.addf %257, %440 : vector<16x32xf32>
    %c1_336 = arith.constant 1 : index
    %c0_337 = arith.constant 0 : index
    %c0_338 = arith.constant 0 : index
    %442 = vector.load %arg9[%c1_336, %c0_337, %c0_338] : memref<2x1x32xf32, #tpu.memory_space<vmem>>, vector<1x1x32xf32>
    %443 = vector.shape_cast %442 : vector<1x1x32xf32> to vector<1x32xf32>
    %c1_339 = arith.constant 1 : index
    %c0_340 = arith.constant 0 : index
    %c0_341 = arith.constant 0 : index
    %444 = vector.load %arg10[%c1_339, %c0_340, %c0_341] : memref<2x1x32xf32, #tpu.memory_space<vmem>>, vector<1x1x32xf32>
    %445 = vector.shape_cast %444 : vector<1x1x32xf32> to vector<1x32xf32>
    %cst_342 = arith.constant dense<0.000000e+00> : vector<16xf32>
    %446 = vector.multi_reduction <add>, %441, %cst_342 [1] : vector<16x32xf32> to vector<16xf32>
    %447 = vector.shape_cast %446 : vector<16xf32> to vector<16x1xf32>
    %cst_343 = arith.constant 3.200000e+01 : f32
    %448 = vector.broadcast %cst_343 : f32 to vector<16x1xf32>
    %449 = arith.divf %447, %448 : vector<16x1xf32>
    %450 = vector.broadcast %449 : vector<16x1xf32> to vector<16x32xf32>
    %451 = arith.subf %441, %450 : vector<16x32xf32>
    %452 = vector.broadcast %449 : vector<16x1xf32> to vector<16x32xf32>
    %453 = arith.subf %441, %452 : vector<16x32xf32>
    %454 = arith.mulf %451, %453 : vector<16x32xf32>
    %cst_344 = arith.constant dense<0.000000e+00> : vector<16xf32>
    %455 = vector.multi_reduction <add>, %454, %cst_344 [1] : vector<16x32xf32> to vector<16xf32>
    %456 = vector.shape_cast %455 : vector<16xf32> to vector<16x1xf32>
    %cst_345 = arith.constant 3.200000e+01 : f32
    %457 = vector.broadcast %cst_345 : f32 to vector<16x1xf32>
    %458 = arith.divf %456, %457 : vector<16x1xf32>
    %459 = vector.broadcast %449 : vector<16x1xf32> to vector<16x32xf32>
    %460 = arith.subf %441, %459 : vector<16x32xf32>
    %cst_346 = arith.constant 9.99999974E-6 : f32
    %461 = vector.broadcast %cst_346 : f32 to vector<16x1xf32>
    %462 = arith.addf %458, %461 : vector<16x1xf32>
    %463 = math.rsqrt %462 : vector<16x1xf32>
    %464 = vector.broadcast %463 : vector<16x1xf32> to vector<16x32xf32>
    %465 = arith.mulf %460, %464 : vector<16x32xf32>
    %466 = vector.broadcast %443 : vector<1x32xf32> to vector<16x32xf32>
    %467 = arith.mulf %465, %466 : vector<16x32xf32>
    %468 = vector.broadcast %445 : vector<1x32xf32> to vector<16x32xf32>
    %469 = arith.addf %467, %468 : vector<16x32xf32>
    %c1_347 = arith.constant 1 : index
    %c0_348 = arith.constant 0 : index
    %c0_349 = arith.constant 0 : index
    %470 = vector.load %arg13[%c1_347, %c0_348, %c0_349] : memref<2x32x1024xf32, #tpu.memory_space<vmem>>, vector<1x32x1024xf32>
    %471 = vector.shape_cast %470 : vector<1x32x1024xf32> to vector<32x1024xf32>
    %cst_350 = arith.constant dense<0.000000e+00> : vector<16x1024xf32>
    %472 = tpu.matmul %469, %471, %cst_350 {dimension_numbers = #tpu.dot_dimension_numbers<[1], [0], [0], [1], [0, 0, 1, 1], [], []>} : vector<16x32xf32>, vector<32x1024xf32>, vector<16x1024xf32> -> vector<16x1024xf32>
    %c1_351 = arith.constant 1 : index
    %c0_352 = arith.constant 0 : index
    %c0_353 = arith.constant 0 : index
    %473 = vector.load %arg14[%c1_351, %c0_352, %c0_353] : memref<2x1x1024xf32, #tpu.memory_space<vmem>>, vector<1x1x1024xf32>
    %474 = vector.shape_cast %473 : vector<1x1x1024xf32> to vector<1x1024xf32>
    %475 = vector.broadcast %474 : vector<1x1024xf32> to vector<16x1024xf32>
    %476 = arith.addf %472, %475 : vector<16x1024xf32>
    %cst_354 = arith.constant 0.000000e+00 : f32
    %477 = vector.broadcast %cst_354 : f32 to vector<16x1024xf32>
    %478 = arith.maximumf %476, %477 : vector<16x1024xf32>
    %c1_355 = arith.constant 1 : index
    %c0_356 = arith.constant 0 : index
    %c0_357 = arith.constant 0 : index
    %479 = vector.load %arg15[%c1_355, %c0_356, %c0_357] : memref<2x1024x32xf32, #tpu.memory_space<vmem>>, vector<1x1024x32xf32>
    %480 = vector.shape_cast %479 : vector<1x1024x32xf32> to vector<1024x32xf32>
    %cst_358 = arith.constant dense<0.000000e+00> : vector<16x32xf32>
    %481 = tpu.matmul %478, %480, %cst_358 {dimension_numbers = #tpu.dot_dimension_numbers<[1], [0], [0], [1], [0, 0, 1, 1], [], []>} : vector<16x1024xf32>, vector<1024x32xf32>, vector<16x32xf32> -> vector<16x32xf32>
    %c1_359 = arith.constant 1 : index
    %c0_360 = arith.constant 0 : index
    %c0_361 = arith.constant 0 : index
    %482 = vector.load %arg16[%c1_359, %c0_360, %c0_361] : memref<2x1x32xf32, #tpu.memory_space<vmem>>, vector<1x1x32xf32>
    %483 = vector.shape_cast %482 : vector<1x1x32xf32> to vector<1x32xf32>
    %484 = vector.broadcast %483 : vector<1x32xf32> to vector<16x32xf32>
    %485 = arith.addf %481, %484 : vector<16x32xf32>
    %486 = arith.addf %469, %485 : vector<16x32xf32>
    %c1_362 = arith.constant 1 : index
    %c0_363 = arith.constant 0 : index
    %c0_364 = arith.constant 0 : index
    %487 = vector.load %arg11[%c1_362, %c0_363, %c0_364] : memref<2x1x32xf32, #tpu.memory_space<vmem>>, vector<1x1x32xf32>
    %488 = vector.shape_cast %487 : vector<1x1x32xf32> to vector<1x32xf32>
    %c1_365 = arith.constant 1 : index
    %c0_366 = arith.constant 0 : index
    %c0_367 = arith.constant 0 : index
    %489 = vector.load %arg12[%c1_365, %c0_366, %c0_367] : memref<2x1x32xf32, #tpu.memory_space<vmem>>, vector<1x1x32xf32>
    %490 = vector.shape_cast %489 : vector<1x1x32xf32> to vector<1x32xf32>
    %cst_368 = arith.constant dense<0.000000e+00> : vector<16xf32>
    %491 = vector.multi_reduction <add>, %486, %cst_368 [1] : vector<16x32xf32> to vector<16xf32>
    %492 = vector.shape_cast %491 : vector<16xf32> to vector<16x1xf32>
    %cst_369 = arith.constant 3.200000e+01 : f32
    %493 = vector.broadcast %cst_369 : f32 to vector<16x1xf32>
    %494 = arith.divf %492, %493 : vector<16x1xf32>
    %495 = vector.broadcast %494 : vector<16x1xf32> to vector<16x32xf32>
    %496 = arith.subf %486, %495 : vector<16x32xf32>
    %497 = vector.broadcast %494 : vector<16x1xf32> to vector<16x32xf32>
    %498 = arith.subf %486, %497 : vector<16x32xf32>
    %499 = arith.mulf %496, %498 : vector<16x32xf32>
    %cst_370 = arith.constant dense<0.000000e+00> : vector<16xf32>
    %500 = vector.multi_reduction <add>, %499, %cst_370 [1] : vector<16x32xf32> to vector<16xf32>
    %501 = vector.shape_cast %500 : vector<16xf32> to vector<16x1xf32>
    %cst_371 = arith.constant 3.200000e+01 : f32
    %502 = vector.broadcast %cst_371 : f32 to vector<16x1xf32>
    %503 = arith.divf %501, %502 : vector<16x1xf32>
    %504 = vector.broadcast %494 : vector<16x1xf32> to vector<16x32xf32>
    %505 = arith.subf %486, %504 : vector<16x32xf32>
    %cst_372 = arith.constant 9.99999974E-6 : f32
    %506 = vector.broadcast %cst_372 : f32 to vector<16x1xf32>
    %507 = arith.addf %503, %506 : vector<16x1xf32>
    %508 = math.rsqrt %507 : vector<16x1xf32>
    %509 = vector.broadcast %508 : vector<16x1xf32> to vector<16x32xf32>
    %510 = arith.mulf %505, %509 : vector<16x32xf32>
    %511 = vector.broadcast %488 : vector<1x32xf32> to vector<16x32xf32>
    %512 = arith.mulf %510, %511 : vector<16x32xf32>
    %513 = vector.broadcast %490 : vector<1x32xf32> to vector<16x32xf32>
    %514 = arith.addf %512, %513 : vector<16x32xf32>
    %c0_373 = arith.constant 0 : index
    %c0_374 = arith.constant 0 : index
    %515 = vector.load %arg17[%c0_373, %c0_374] : memref<16x32xf32, #tpu.memory_space<vmem>>, vector<16x32xf32>
    tpu.vector_store %arg17[%c0_373, %c0_374], %514 {strides = array<i32>} : memref<16x32xf32, #tpu.memory_space<vmem>>, vector<16x32xf32>,
    return
  }
}

</mosaic_0001>

<llo_original>
// kernel: decoder_pallas.1
$region0: #{decoder_pallas.1}
  #allocation0 [shape = 'u32[]', space=smem, size = 0x4, offset = 0x4, fixed_abs, tag = 'smem constant byte address 0x4 - core index']
  #allocation1 [shape = 'u32[144,128]{1,0:T(1,128)}', space=vmem, size = 0x12000, scoped, tag = 'internal scratch']
  %s0 = inlined_call_operand.vmem [shape: f32[16,32], index: 0, kind: input, shape index: {}]
  %s1 = inlined_call_operand.vmem [shape: f32[2,4,32,8], index: 1, kind: input, shape index: {}]
  %s2 = inlined_call_operand.vmem [shape: f32[2,4,1,8], index: 2, kind: input, shape index: {}]
  %s3 = inlined_call_operand.vmem [shape: f32[2,4,32,8], index: 3, kind: input, shape index: {}]
  %s4 = inlined_call_operand.vmem [shape: f32[2,4,1,8], index: 4, kind: input, shape index: {}]
  %s5 = inlined_call_operand.vmem [shape: f32[2,4,32,8], index: 5, kind: input, shape index: {}]
  %s6 = inlined_call_operand.vmem [shape: f32[2,4,1,8], index: 6, kind: input, shape index: {}]
  %s7 = inlined_call_operand.vmem [shape: f32[2,4,8,32], index: 7, kind: input, shape index: {}]
  %s8 = inlined_call_operand.vmem [shape: f32[2,1,32], index: 8, kind: input, shape index: {}]
  %s9 = inlined_call_operand.vmem [shape: f32[2,1,32], index: 9, kind: input, shape index: {}]
  %s10 = inlined_call_operand.vmem [shape: f32[2,1,32], index: 10, kind: input, shape index: {}]
  %s11 = inlined_call_operand.vmem [shape: f32[2,1,32], index: 11, kind: input, shape index: {}]
  %s12 = inlined_call_operand.vmem [shape: f32[2,1,32], index: 12, kind: input, shape index: {}]
  %s13 = inlined_call_operand.vmem [shape: f32[2,32,1024], index: 13, kind: input, shape index: {}]
  %s14 = inlined_call_operand.vmem [shape: f32[2,1,1024], index: 14, kind: input, shape index: {}]
  %s15 = inlined_call_operand.vmem [shape: f32[2,1024,32], index: 15, kind: input, shape index: {}]
  %s16 = inlined_call_operand.vmem [shape: f32[2,1,32], index: 16, kind: input, shape index: {}]
  %s17 = inlined_call_operand.hbm [shape: f32[16,32], index: 17, kind: output, shape index: {}]
  %s18 = sld [smem:[#allocation0]]
  $region78: #{decoder_pallas.1} parent=0
    _
  %s20 = ssub.s32 1, %s18
  %s21 = scalar_select 0, %s20, %s18
  $region1: #{decoder_pallas.1} parent=0
    #allocation2 [shape = 'u8[8192]{0}', space=vmem, size = 0x2000, scoped, tag = 'output window, operand 0, single buffered']
    #allocation3 [shape = 's32[1]{0}', space=sflag, size = 0x4, scoped, tag = 'scoped memory for decoder_pallas.1']
    %22 = vsyncpa [#allocation3], 0
    // Predicated region
    $region2: #{decoder_pallas.1} parent=1 // pred_check
      _
    $region3: #{decoder_pallas.1} parent=1 // pred_check_branch
      %24 = sbr.rel (0) target = $region5
    $region4: #{decoder_pallas.1} parent=1 // pred_region
      _
    $region5: #{decoder_pallas.1} parent=1 // pred_fallthru
      _
    // Predicated region
    $region6: #{decoder_pallas.1} parent=1 // pred_check
      _
    $region7: #{decoder_pallas.1} parent=1 // pred_check_branch
      %26 = sbr.rel (0) target = $region9
    $region8: #{decoder_pallas.1} parent=1 // pred_region
      _
    $region9: #{decoder_pallas.1} parent=1 // pred_fallthru
      _
    // Predicated region
    $region10: #{decoder_pallas.1} parent=1 // pred_check
      _
    $region11: #{decoder_pallas.1} parent=1 // pred_check_branch
      %28 = sbr.rel (0) target = $region13
    $region12: #{decoder_pallas.1} parent=1 // pred_region
      _
    $region13: #{decoder_pallas.1} parent=1 // pred_fallthru
      _
    // Predicated region
    $region14: #{decoder_pallas.1} parent=1 // pred_check
      _
    $region15: #{decoder_pallas.1} parent=1 // pred_check_branch
      %30 = sbr.rel (0) target = $region17
    $region16: #{decoder_pallas.1} parent=1 // pred_region
      _
    $region17: #{decoder_pallas.1} parent=1 // pred_fallthru
      _
    // Predicated region
    $region18: #{decoder_pallas.1} parent=1 // pred_check
      _
    $region19: #{decoder_pallas.1} parent=1 // pred_check_branch
      %32 = sbr.rel (0) target = $region21
    $region20: #{decoder_pallas.1} parent=1 // pred_region
      _
    $region21: #{decoder_pallas.1} parent=1 // pred_fallthru
      _
    // Predicated region
    $region22: #{decoder_pallas.1} parent=1 // pred_check
      _
    $region23: #{decoder_pallas.1} parent=1 // pred_check_branch
      %34 = sbr.rel (0) target = $region25
    $region24: #{decoder_pallas.1} parent=1 // pred_region
      _
    $region25: #{decoder_pallas.1} parent=1 // pred_fallthru
      _
    // Predicated region
    $region26: #{decoder_pallas.1} parent=1 // pred_check
      _
    $region27: #{decoder_pallas.1} parent=1 // pred_check_branch
      %36 = sbr.rel (0) target = $region29
    $region28: #{decoder_pallas.1} parent=1 // pred_region
      _
    $region29: #{decoder_pallas.1} parent=1 // pred_fallthru
      _
    // Predicated region
    $region30: #{decoder_pallas.1} parent=1 // pred_check
      _
    $region31: #{decoder_pallas.1} parent=1 // pred_check_branch
      %38 = sbr.rel (0) target = $region33
    $region32: #{decoder_pallas.1} parent=1 // pred_region
      _
    $region33: #{decoder_pallas.1} parent=1 // pred_fallthru
      _
    // Predicated region
    $region34: #{decoder_pallas.1} parent=1 // pred_check
      _
    $region35: #{decoder_pallas.1} parent=1 // pred_check_branch
      %40 = sbr.rel (0) target = $region37
    $region36: #{decoder_pallas.1} parent=1 // pred_region
      _
    $region37: #{decoder_pallas.1} parent=1 // pred_fallthru
      _
    // Predicated region
    $region38: #{decoder_pallas.1} parent=1 // pred_check
      _
    $region39: #{decoder_pallas.1} parent=1 // pred_check_branch
      %42 = sbr.rel (0) target = $region41
    $region40: #{decoder_pallas.1} parent=1 // pred_region
      _
    $region41: #{decoder_pallas.1} parent=1 // pred_fallthru
      _
    // Predicated region
    $region42: #{decoder_pallas.1} parent=1 // pred_check
      _
    $region43: #{decoder_pallas.1} parent=1 // pred_check_branch
      %44 = sbr.rel (0) target = $region45
    $region44: #{decoder_pallas.1} parent=1 // pred_region
      _
    $region45: #{decoder_pallas.1} parent=1 // pred_fallthru
      _
    // Predicated region
    $region46: #{decoder_pallas.1} parent=1 // pred_check
      _
    $region47: #{decoder_pallas.1} parent=1 // pred_check_branch
      %46 = sbr.rel (0) target = $region49
    $region48: #{decoder_pallas.1} parent=1 // pred_region
      _
    $region49: #{decoder_pallas.1} parent=1 // pred_fallthru
      _
    // Predicated region
    $region50: #{decoder_pallas.1} parent=1 // pred_check
      _
    $region51: #{decoder_pallas.1} parent=1 // pred_check_branch
      %48 = sbr.rel (0) target = $region53
    $region52: #{decoder_pallas.1} parent=1 // pred_region
      _
    $region53: #{decoder_pallas.1} parent=1 // pred_fallthru
      _
    // Predicated region
    $region54: #{decoder_pallas.1} parent=1 // pred_check
      _
    $region55: #{decoder_pallas.1} parent=1 // pred_check_branch
      %50 = sbr.rel (0) target = $region57
    $region56: #{decoder_pallas.1} parent=1 // pred_region
      _
    $region57: #{decoder_pallas.1} parent=1 // pred_fallthru
      _
    // Predicated region
    $region58: #{decoder_pallas.1} parent=1 // pred_check
      _
    $region59: #{decoder_pallas.1} parent=1 // pred_check_branch
      %52 = sbr.rel (0) target = $region61
    $region60: #{decoder_pallas.1} parent=1 // pred_region
      _
    $region61: #{decoder_pallas.1} parent=1 // pred_fallthru
      _
    // Predicated region
    $region62: #{decoder_pallas.1} parent=1 // pred_check
      _
    $region63: #{decoder_pallas.1} parent=1 // pred_check_branch
      %54 = sbr.rel (0) target = $region65
    $region64: #{decoder_pallas.1} parent=1 // pred_region
      _
    $region65: #{decoder_pallas.1} parent=1 // pred_fallthru
      _
    // Predicated region
    $region66: #{decoder_pallas.1} parent=1 // pred_check
      _
    $region67: #{decoder_pallas.1} parent=1 // pred_check_branch
      %56 = sbr.rel (0) target = $region69
    $region68: #{decoder_pallas.1} parent=1 // pred_region
      _
    $region69: #{decoder_pallas.1} parent=1 // pred_fallthru
      _
    %v57 = vld [vmem:[%s0] sm:$0xff]
    %v58 = vld [vmem:[%s0 + $0x8] sm:$0xff]
    %v59 = vld [vmem:[%s1] sm:$0xff]
    %v60 = vld [vmem:[%s1 + $0x8] sm:$0xff]
    %v61 = vld [vmem:[%s1 + $0x10] sm:$0xff]
    %v62 = vld [vmem:[%s1 + $0x18] sm:$0xff]
    %v63 = vld [vmem:[%s2] sm:$0x1]
    %v65 = vlaneseq
    %v66 = vshrl.u32 %v65, 7
    %v67 = vsub.s32 0, %v66
    %v68 = vrot.slane %v63, %v67
    %vm70 = vcmask 261120
    %v72 = vsel %vm70, %v57, 0
    %v75 = vsel %vm70, %v58, 0
    %77 = vmatprep.subr.mxu0 0.0
    %78 = vmatpush1.msra.mxu0 %v59
    %79 = vmatprep.subr.mxu0 0.0
    %80 = vmatpush1.msra.mxu0 %v60
    %81 = vmatprep.subr.mxu0 0.0
    %82 = vmatpush1.msra.mxu0 %v61
    %83 = vmatprep.subr.mxu0 0.0
    %84 = vmatpush1.msra.mxu0 %v62
    %85 = vmatprep.subr.mxu0 0.0
    %86 = vmatpush1.msra.mxu0 0.0
    %87 = vmatprep.subr.mxu0 0.0
    %88 = vmatpush1.msra.mxu0 0.0
    %89 = vmatprep.subr.mxu0 0.0
    %90 = vmatpush1.msra.mxu0 0.0
    %91 = vmatprep.subr.mxu0 0.0
    %92 = vmatpush1.msra.mxu0 0.0
    %93 = vmatprep.subr.mxu0 0.0
    %94 = vmatpush1.msra.mxu0 0.0
    %95 = vmatprep.subr.mxu0 0.0
    %96 = vmatpush1.msra.mxu0 0.0
    %97 = vmatprep.subr.mxu0 0.0
    %98 = vmatpush1.msra.mxu0 0.0
    %99 = vmatprep.subr.mxu0 0.0
    %100 = vmatpush1.msra.mxu0 0.0
    %101 = vmatprep.subr.mxu0 0.0
    %102 = vmatpush1.msra.mxu0 0.0
    %103 = vmatprep.subr.mxu0 0.0
    %104 = vmatpush1.msra.mxu0 0.0
    %105 = vmatprep.subr.mxu0 0.0
    %106 = vmatpush1.msra.mxu0 0.0
    %107 = vmatprep.subr.mxu0 0.0
    %108 = vmatpush1.msra.mxu0 0.0
    %109 = vmatprep.subr.mxu0 0.0
    %110 = vmatpush1.msra.mxu0 0.0
    %111 = vmatprep.subr.mxu0 0.0
    %112 = vmatpush1.msra.mxu0 0.0
    %113 = vmatprep.subr.mxu0 0.0
    %114 = vmatpush1.msra.mxu0 0.0
    %115 = vmatprep.subr.mxu0 0.0
    %116 = vmatpush1.msra.mxu0 0.0
    %117 = vmatprep.subr.mxu0 0.0
    %118 = vmatpush1.msra.mxu0 0.0
    %119 = vmatprep.subr.mxu0 0.0
    %120 = vmatpush1.msra.mxu0 0.0
    %121 = vmatprep.subr.mxu0 0.0
    %122 = vmatpush1.msra.mxu0 0.0
    %123 = vmatprep.subr.mxu0 0.0
    %124 = vmatpush1.msra.mxu0 0.0
    %125 = vmatprep.subr.mxu0 0.0
    %126 = vmatpush1.msra.mxu0 0.0
    %127 = vmatprep.subr.mxu0 0.0
    %128 = vmatpush1.msra.mxu0 0.0
    %129 = vmatprep.subr.mxu0 0.0
    %130 = vmatpush1.msra.mxu0 0.0
    %131 = vmatprep.subr.mxu0 0.0
    %132 = vmatpush1.msra.mxu0 0.0
    %133 = vmatprep.subr.mxu0 0.0
    %134 = vmatpush1.msra.mxu0 0.0
    %135 = vmatprep.subr.mxu0 0.0
    %136 = vmatpush1.msra.mxu0 0.0
    %137 = vmatprep.subr.mxu0 0.0
    %138 = vmatpush1.msra.mxu0 0.0
    %139 = vmatprep.subr.mxu0 0.0
    %140 = vmatpush1.msra.mxu0 0.0
    %141 = vmatprep.mubr.f32.mxu0 0.0
    %142 = vmatmul.mubr.f32.gmra.mrb[0].mxu0 %v72
    %v143 = vpop.f32.mrb[0].mxu0
    %v144 = vadd.f32 %v68, %v143
    %v145 = vpop.f32.mrb[0].mxu0
    %146 = vmatprep.mubr.f32.mxu0 0.0
    %147 = vmatmul.mubr.f32.gmra.mrb[0].mxu0 %v75
    %v148 = vpop.f32.mrb[0].mxu0
    %v149 = vadd.f32 %v68, %v148
    %v150 = vpop.f32.mrb[0].mxu0
    %151 = vdwg.mxu0
    %v152 = vld [vmem:[%s3] sm:$0xff]
    %v153 = vld [vmem:[%s3 + $0x8] sm:$0xff]
    %v154 = vld [vmem:[%s3 + $0x10] sm:$0xff]
    %v155 = vld [vmem:[%s3 + $0x18] sm:$0xff]
    %v156 = vld [vmem:[%s4] sm:$0x1]
    %v158 = vlaneseq
    %v159 = vshrl.u32 %v158, 7
    %v160 = vsub.s32 0, %v159
    %v161 = vrot.slane %v156, %v160
    %163 = vmatprep.subr.mxu0 0.0
    %164 = vmatpush1.msra.mxu0 %v152
    %165 = vmatprep.subr.mxu0 0.0
    %166 = vmatpush1.msra.mxu0 %v153
    %167 = vmatprep.subr.mxu0 0.0
    %168 = vmatpush1.msra.mxu0 %v154
    %169 = vmatprep.subr.mxu0 0.0
    %170 = vmatpush1.msra.mxu0 %v155
    %171 = vmatprep.subr.mxu0 0.0
    %172 = vmatpush1.msra.mxu0 0.0
    %173 = vmatprep.subr.mxu0 0.0
    %174 = vmatpush1.msra.mxu0 0.0
    %175 = vmatprep.subr.mxu0 0.0
    %176 = vmatpush1.msra.mxu0 0.0
    %177 = vmatprep.subr.mxu0 0.0
    %178 = vmatpush1.msra.mxu0 0.0
    %179 = vmatprep.subr.mxu0 0.0
    %180 = vmatpush1.msra.mxu0 0.0
    %181 = vmatprep.subr.mxu0 0.0
    %182 = vmatpush1.msra.mxu0 0.0
    %183 = vmatprep.subr.mxu0 0.0
    %184 = vmatpush1.msra.mxu0 0.0
    %185 = vmatprep.subr.mxu0 0.0
    %186 = vmatpush1.msra.mxu0 0.0
    %187 = vmatprep.subr.mxu0 0.0
    %188 = vmatpush1.msra.mxu0 0.0
    %189 = vmatprep.subr.mxu0 0.0
    %190 = vmatpush1.msra.mxu0 0.0
    %191 = vmatprep.subr.mxu0 0.0
    %192 = vmatpush1.msra.mxu0 0.0
    %193 = vmatprep.subr.mxu0 0.0
    %194 = vmatpush1.msra.mxu0 0.0
    %195 = vmatprep.subr.mxu0 0.0
    %196 = vmatpush1.msra.mxu0 0.0
    %197 = vmatprep.subr.mxu0 0.0
    %198 = vmatpush1.msra.mxu0 0.0
    %199 = vmatprep.subr.mxu0 0.0
    %200 = vmatpush1.msra.mxu0 0.0
    %201 = vmatprep.subr.mxu0 0.0
    %202 = vmatpush1.msra.mxu0 0.0
    %203 = vmatprep.subr.mxu0 0.0
    %204 = vmatpush1.msra.mxu0 0.0
    %205 = vmatprep.subr.mxu0 0.0
    %206 = vmatpush1.msra.mxu0 0.0
    %207 = vmatprep.subr.mxu0 0.0
    %208 = vmatpush1.msra.mxu0 0.0
    %209 = vmatprep.subr.mxu0 0.0
    %210 = vmatpush1.msra.mxu0 0.0
    %211 = vmatprep.subr.mxu0 0.0
    %212 = vmatpush1.msra.mxu0 0.0
    %213 = vmatprep.subr.mxu0 0.0
    %214 = vmatpush1.msra.mxu0 0.0
    %215 = vmatprep.subr.mxu0 0.0
    %216 = vmatpush1.msra.mxu0 0.0
    %217 = vmatprep.subr.mxu0 0.0
    %218 = vmatpush1.msra.mxu0 0.0
    %219 = vmatprep.subr.mxu0 0.0
    %220 = vmatpush1.msra.mxu0 0.0
    %221 = vmatprep.subr.mxu0 0.0
    %222 = vmatpush1.msra.mxu0 0.0
    %223 = vmatprep.subr.mxu0 0.0
    %224 = vmatpush1.msra.mxu0 0.0
    %225 = vmatprep.subr.mxu0 0.0
    %226 = vmatpush1.msra.mxu0 0.0
    %227 = vmatprep.mubr.f32.mxu0 0.0
    %228 = vmatmul.mubr.f32.gmra.mrb[0].mxu0 %v72
    %v229 = vpop.f32.mrb[0].mxu0
    %v230 = vadd.f32 %v161, %v229
    %v231 = vpop.f32.mrb[0].mxu0
    %232 = vmatprep.mubr.f32.mxu0 0.0
    %233 = vmatmul.mubr.f32.gmra.mrb[0].mxu0 %v75
    %v234 = vpop.f32.mrb[0].mxu0
    %v235 = vadd.f32 %v161, %v234
    %v236 = vpop.f32.mrb[0].mxu0
    %237 = vdwg.mxu0
    %v238 = vld [vmem:[%s5] sm:$0xff]
    %v239 = vld [vmem:[%s5 + $0x8] sm:$0xff]
    %v240 = vld [vmem:[%s5 + $0x10] sm:$0xff]
    %v241 = vld [vmem:[%s5 + $0x18] sm:$0xff]
    %v242 = vld [vmem:[%s6] sm:$0x1]
    %v244 = vlaneseq
    %v245 = vshrl.u32 %v244, 7
    %v246 = vsub.s32 0, %v245
    %v247 = vrot.slane %v242, %v246
    %249 = vmatprep.subr.mxu0 0.0
    %250 = vmatpush1.msra.mxu0 %v238
    %251 = vmatprep.subr.mxu0 0.0
    %252 = vmatpush1.msra.mxu0 %v239
    %253 = vmatprep.subr.mxu0 0.0
    %254 = vmatpush1.msra.mxu0 %v240
    %255 = vmatprep.subr.mxu0 0.0
    %256 = vmatpush1.msra.mxu0 %v241
    %257 = vmatprep.subr.mxu0 0.0
    %258 = vmatpush1.msra.mxu0 0.0
    %259 = vmatprep.subr.mxu0 0.0
    %260 = vmatpush1.msra.mxu0 0.0
    %261 = vmatprep.subr.mxu0 0.0
    %262 = vmatpush1.msra.mxu0 0.0
    %263 = vmatprep.subr.mxu0 0.0
    %264 = vmatpush1.msra.mxu0 0.0
    %265 = vmatprep.subr.mxu0 0.0
    %266 = vmatpush1.msra.mxu0 0.0
    %267 = vmatprep.subr.mxu0 0.0
    %268 = vmatpush1.msra.mxu0 0.0
    %269 = vmatprep.subr.mxu0 0.0
    %270 = vmatpush1.msra.mxu0 0.0
    %271 = vmatprep.subr.mxu0 0.0
    %272 = vmatpush1.msra.mxu0 0.0
    %273 = vmatprep.subr.mxu0 0.0
    %274 = vmatpush1.msra.mxu0 0.0
    %275 = vmatprep.subr.mxu0 0.0
    %276 = vmatpush1.msra.mxu0 0.0
    %277 = vmatprep.subr.mxu0 0.0
    %278 = vmatpush1.msra.mxu0 0.0
    %279 = vmatprep.subr.mxu0 0.0
    %280 = vmatpush1.msra.mxu0 0.0
    %281 = vmatprep.subr.mxu0 0.0
    %282 = vmatpush1.msra.mxu0 0.0
    %283 = vmatprep.subr.mxu0 0.0
    %284 = vmatpush1.msra.mxu0 0.0
    %285 = vmatprep.subr.mxu0 0.0
    %286 = vmatpush1.msra.mxu0 0.0
    %287 = vmatprep.subr.mxu0 0.0
    %288 = vmatpush1.msra.mxu0 0.0
    %289 = vmatprep.subr.mxu0 0.0
    %290 = vmatpush1.msra.mxu0 0.0
    %291 = vmatprep.subr.mxu0 0.0
    %292 = vmatpush1.msra.mxu0 0.0
    %293 = vmatprep.subr.mxu0 0.0
    %294 = vmatpush1.msra.mxu0 0.0
    %295 = vmatprep.subr.mxu0 0.0
    %296 = vmatpush1.msra.mxu0 0.0
    %297 = vmatprep.subr.mxu0 0.0
    %298 = vmatpush1.msra.mxu0 0.0
    %299 = vmatprep.subr.mxu0 0.0
    %300 = vmatpush1.msra.mxu0 0.0
    %301 = vmatprep.subr.mxu0 0.0
    %302 = vmatpush1.msra.mxu0 0.0
    %303 = vmatprep.subr.mxu0 0.0
    %304 = vmatpush1.msra.mxu0 0.0
    %305 = vmatprep.subr.mxu0 0.0
    %306 = vmatpush1.msra.mxu0 0.0
    %307 = vmatprep.subr.mxu0 0.0
    %308 = vmatpush1.msra.mxu0 0.0
    %309 = vmatprep.subr.mxu0 0.0
    %310 = vmatpush1.msra.mxu0 0.0
    %311 = vmatprep.subr.mxu0 0.0
    %312 = vmatpush1.msra.mxu0 0.0
    %313 = vmatprep.mubr.f32.mxu0 0.0
    %314 = vmatmul.mubr.f32.gmra.mrb[0].mxu0 %v72
    %v315 = vpop.f32.mrb[0].mxu0
    %v316 = vadd.f32 %v247, %v315
    %v317 = vpop.f32.mrb[0].mxu0
    %318 = vmatprep.mubr.f32.mxu0 0.0
    %319 = vmatmul.mubr.f32.gmra.mrb[0].mxu0 %v75
    %v320 = vpop.f32.mrb[0].mxu0
    %v321 = vadd.f32 %v247, %v320
    %v322 = vpop.f32.mrb[0].mxu0
    %323 = vdwg.mxu0
    %vm324 = vcmask 64512
    %v326 = vsel %vm324, %v144, 0
    %v329 = vsel %vm324, %v230, 0
    %331 = vmatprep.subr.mxu0 0.0
    %332 = vmatpush1.xpose.msra.mxu0 %v329
    %333 = vmatprep.subr.mxu0 0.0
    %334 = vmatpush1.xpose.msra.mxu0 0.0
    %335 = vmatprep.subr.mxu0 0.0
    %336 = vmatpush1.xpose.msra.mxu0 0.0
    %337 = vmatprep.subr.mxu0 0.0
    %338 = vmatpush1.xpose.msra.mxu0 0.0
    %339 = vmatprep.subr.mxu0 0.0
    %340 = vmatpush1.xpose.msra.mxu0 0.0
    %341 = vmatprep.subr.mxu0 0.0
    %342 = vmatpush1.xpose.msra.mxu0 0.0
    %343 = vmatprep.subr.mxu0 0.0
    %344 = vmatpush1.xpose.msra.mxu0 0.0
    %345 = vmatprep.subr.mxu0 0.0
    %346 = vmatpush1.xpose.msra.mxu0 0.0
    %347 = vmatprep.subr.mxu0 0.0
    %348 = vmatpush1.xpose.msra.mxu0 0.0
    %349 = vmatprep.subr.mxu0 0.0
    %350 = vmatpush1.xpose.msra.mxu0 0.0
    %351 = vmatprep.subr.mxu0 0.0
    %352 = vmatpush1.xpose.msra.mxu0 0.0
    %353 = vmatprep.subr.mxu0 0.0
    %354 = vmatpush1.xpose.msra.mxu0 0.0
    %355 = vmatprep.subr.mxu0 0.0
    %356 = vmatpush1.xpose.msra.mxu0 0.0
    %357 = vmatprep.subr.mxu0 0.0
    %358 = vmatpush1.xpose.msra.mxu0 0.0
    %359 = vmatprep.subr.mxu0 0.0
    %360 = vmatpush1.xpose.msra.mxu0 0.0
    %361 = vmatprep.subr.mxu0 0.0
    %362 = vmatpush1.xpose.msra.mxu0 0.0
    %363 = vmatprep.subr.mxu0 0.0
    %364 = vmatpush1.xpose.msra.mxu0 0.0
    %365 = vmatprep.subr.mxu0 0.0
    %366 = vmatpush1.xpose.msra.mxu0 0.0
    %367 = vmatprep.subr.mxu0 0.0
    %368 = vmatpush1.xpose.msra.mxu0 0.0
    %369 = vmatprep.subr.mxu0 0.0
    %370 = vmatpush1.xpose.msra.mxu0 0.0
    %371 = vmatprep.subr.mxu0 0.0
    %372 = vmatpush1.xpose.msra.mxu0 0.0
    %373 = vmatprep.subr.mxu0 0.0
    %374 = vmatpush1.xpose.msra.mxu0 0.0
    %375 = vmatprep.subr.mxu0 0.0
    %376 = vmatpush1.xpose.msra.mxu0 0.0
    %377 = vmatprep.subr.mxu0 0.0
    %378 = vmatpush1.xpose.msra.mxu0 0.0
    %379 = vmatprep.subr.mxu0 0.0
    %380 = vmatpush1.xpose.msra.mxu0 0.0
    %381 = vmatprep.subr.mxu0 0.0
    %382 = vmatpush1.xpose.msra.mxu0 0.0
    %383 = vmatprep.subr.mxu0 0.0
    %384 = vmatpush1.xpose.msra.mxu0 0.0
    %385 = vmatprep.subr.mxu0 0.0
    %386 = vmatpush1.xpose.msra.mxu0 0.0
    %387 = vmatprep.subr.mxu0 0.0
    %388 = vmatpush1.xpose.msra.mxu0 0.0
    %389 = vmatprep.subr.mxu0 0.0
    %390 = vmatpush1.xpose.msra.mxu0 0.0
    %391 = vmatprep.subr.mxu0 0.0
    %392 = vmatpush1.xpose.msra.mxu0 0.0
    %393 = vmatprep.subr.mxu0 0.0
    %394 = vmatpush1.xpose.msra.mxu0 0.0
    %395 = vmatprep.mubr.f32.mxu0 0.0
    %396 = vmatmul.mubr.f32.gmra.mrb[0].mxu0 %v326
    %v397 = vpop.f32.mrb[0].mxu0
    %v398 = vadd.f32 0.0, %v397
    %v399 = vpop.f32.mrb[0].mxu0
    %400 = vdwg.mxu0
    %v402 = vsel %vm324, %v149, 0
    %v405 = vsel %vm324, %v235, 0
    %407 = vmatprep.subr.mxu0 0.0
    %408 = vmatpush1.xpose.msra.mxu0 %v405
    %409 = vmatprep.subr.mxu0 0.0
    %410 = vmatpush1.xpose.msra.mxu0 0.0
    %411 = vmatprep.subr.mxu0 0.0
    %412 = vmatpush1.xpose.msra.mxu0 0.0
    %413 = vmatprep.subr.mxu0 0.0
    %414 = vmatpush1.xpose.msra.mxu0 0.0
    %415 = vmatprep.subr.mxu0 0.0
    %416 = vmatpush1.xpose.msra.mxu0 0.0
    %417 = vmatprep.subr.mxu0 0.0
    %418 = vmatpush1.xpose.msra.mxu0 0.0
    %419 = vmatprep.subr.mxu0 0.0
    %420 = vmatpush1.xpose.msra.mxu0 0.0
    %421 = vmatprep.subr.mxu0 0.0
    %422 = vmatpush1.xpose.msra.mxu0 0.0
    %423 = vmatprep.subr.mxu0 0.0
    %424 = vmatpush1.xpose.msra.mxu0 0.0
    %425 = vmatprep.subr.mxu0 0.0
    %426 = vmatpush1.xpose.msra.mxu0 0.0
    %427 = vmatprep.subr.mxu0 0.0
    %428 = vmatpush1.xpose.msra.mxu0 0.0
    %429 = vmatprep.subr.mxu0 0.0
    %430 = vmatpush1.xpose.msra.mxu0 0.0
    %431 = vmatprep.subr.mxu0 0.0
    %432 = vmatpush1.xpose.msra.mxu0 0.0
    %433 = vmatprep.subr.mxu0 0.0
    %434 = vmatpush1.xpose.msra.mxu0 0.0
    %435 = vmatprep.subr.mxu0 0.0
    %436 = vmatpush1.xpose.msra.mxu0 0.0
    %437 = vmatprep.subr.mxu0 0.0
    %438 = vmatpush1.xpose.msra.mxu0 0.0
    %439 = vmatprep.subr.mxu0 0.0
    %440 = vmatpush1.xpose.msra.mxu0 0.0
    %441 = vmatprep.subr.mxu0 0.0
    %442 = vmatpush1.xpose.msra.mxu0 0.0
    %443 = vmatprep.subr.mxu0 0.0
    %444 = vmatpush1.xpose.msra.mxu0 0.0
    %445 = vmatprep.subr.mxu0 0.0
    %446 = vmatpush1.xpose.msra.mxu0 0.0
    %447 = vmatprep.subr.mxu0 0.0
    %448 = vmatpush1.xpose.msra.mxu0 0.0
    %449 = vmatprep.subr.mxu0 0.0
    %450 = vmatpush1.xpose.msra.mxu0 0.0
    %451 = vmatprep.subr.mxu0 0.0
    %452 = vmatpush1.xpose.msra.mxu0 0.0
    %453 = vmatprep.subr.mxu0 0.0
    %454 = vmatpush1.xpose.msra.mxu0 0.0
    %455 = vmatprep.subr.mxu0 0.0
    %456 = vmatpush1.xpose.msra.mxu0 0.0
    %457 = vmatprep.subr.mxu0 0.0
    %458 = vmatpush1.xpose.msra.mxu0 0.0
    %459 = vmatprep.subr.mxu0 0.0
    %460 = vmatpush1.xpose.msra.mxu0 0.0
    %461 = vmatprep.subr.mxu0 0.0
    %462 = vmatpush1.xpose.msra.mxu0 0.0
    %463 = vmatprep.subr.mxu0 0.0
    %464 = vmatpush1.xpose.msra.mxu0 0.0
    %465 = vmatprep.subr.mxu0 0.0
    %466 = vmatpush1.xpose.msra.mxu0 0.0
    %467 = vmatprep.subr.mxu0 0.0
    %468 = vmatpush1.xpose.msra.mxu0 0.0
    %469 = vmatprep.subr.mxu0 0.0
    %470 = vmatpush1.xpose.msra.mxu0 0.0
    %471 = vmatprep.mubr.f32.mxu0 0.0
    %472 = vmatmul.mubr.f32.gmra.mrb[0].mxu0 %v402
    %v473 = vpop.f32.mrb[0].mxu0
    %v474 = vadd.f32 0.0, %v473
    %v475 = vpop.f32.mrb[0].mxu0
    %476 = vdwg.mxu0
    %v477 = vsel %vm324, %v398, -inf
    %478 = vmax.xlane.f32.xlu0 %v477
    %v479 = vpop.xlane.xlu0 %478
    %v480 = vsel %vm324, %v474, -inf
    %481 = vmax.xlane.f32.xlu0 %v480
    %v482 = vpop.xlane.xlu0 %481
    %v483 = vsub.f32 %v398, %v479
    %v484 = vsub.f32 %v474, %v482
    %v485 = vmul.f32 %v483, 1.442695
    %v486 = vpow.pop %v485
    %v487 = vmul.f32 %v484, 1.442695
    %v488 = vpow.pop %v487
    %v489 = vsel %vm324, %v486, 0.0
    %490 = vadd.xlane.f32.xlu0 %v489
    %v491 = vpop.xlane.xlu0 %490
    %v492 = vsel %vm324, %v488, 0.0
    %493 = vadd.xlane.f32.xlu0 %v492
    %v494 = vpop.xlane.xlu0 %493
    %v495 = vrcp.pop %v491
    %v496 = vrcp.pop %v494
    %v497 = vmul.f32 %v491, %v495
    %v498 = vmul.f32 %v494, %v496
    %v499 = vsub.f32 2.0, %v497
    %v500 = vsub.f32 2.0, %v498
    %v501 = vmul.f32 %v495, %v499
    %v502 = vmul.f32 %v496, %v500
    %v503 = vmul.f32 %v486, %v501
    %v504 = vmul.f32 %v488, %v502
    %v506 = vsel %vm324, %v503, 0
    %508 = vmatprep.subr.mxu0 0.0
    %509 = vmatpush1.msra.mxu0 %v316
    %510 = vmatprep.subr.mxu0 0.0
    %511 = vmatpush1.msra.mxu0 0.0
    %512 = vmatprep.subr.mxu0 0.0
    %513 = vmatpush1.msra.mxu0 0.0
    %514 = vmatprep.subr.mxu0 0.0
    %515 = vmatpush1.msra.mxu0 0.0
    %516 = vmatprep.subr.mxu0 0.0
    %517 = vmatpush1.msra.mxu0 0.0
    %518 = vmatprep.subr.mxu0 0.0
    %519 = vmatpush1.msra.mxu0 0.0
    %520 = vmatprep.subr.mxu0 0.0
    %521 = vmatpush1.msra.mxu0 0.0
    %522 = vmatprep.subr.mxu0 0.0
    %523 = vmatpush1.msra.mxu0 0.0
    %524 = vmatprep.subr.mxu0 0.0
    %525 = vmatpush1.msra.mxu0 0.0
    %526 = vmatprep.subr.mxu0 0.0
    %527 = vmatpush1.msra.mxu0 0.0
    %528 = vmatprep.subr.mxu0 0.0
    %529 = vmatpush1.msra.mxu0 0.0
    %530 = vmatprep.subr.mxu0 0.0
    %531 = vmatpush1.msra.mxu0 0.0
    %532 = vmatprep.subr.mxu0 0.0
    %533 = vmatpush1.msra.mxu0 0.0
    %534 = vmatprep.subr.mxu0 0.0
    %535 = vmatpush1.msra.mxu0 0.0
    %536 = vmatprep.subr.mxu0 0.0
    %537 = vmatpush1.msra.mxu0 0.0
    %538 = vmatprep.subr.mxu0 0.0
    %539 = vmatpush1.msra.mxu0 0.0
    %540 = vmatprep.subr.mxu0 0.0
    %541 = vmatpush1.msra.mxu0 0.0
    %542 = vmatprep.subr.mxu0 0.0
    %543 = vmatpush1.msra.mxu0 0.0
    %544 = vmatprep.subr.mxu0 0.0
    %545 = vmatpush1.msra.mxu0 0.0
    %546 = vmatprep.subr.mxu0 0.0
    %547 = vmatpush1.msra.mxu0 0.0
    %548 = vmatprep.subr.mxu0 0.0
    %549 = vmatpush1.msra.mxu0 0.0
    %550 = vmatprep.subr.mxu0 0.0
    %551 = vmatpush1.msra.mxu0 0.0
    %552 = vmatprep.subr.mxu0 0.0
    %553 = vmatpush1.msra.mxu0 0.0
    %554 = vmatprep.subr.mxu0 0.0
    %555 = vmatpush1.msra.mxu0 0.0
    %556 = vmatprep.subr.mxu0 0.0
    %557 = vmatpush1.msra.mxu0 0.0
    %558 = vmatprep.subr.mxu0 0.0
    %559 = vmatpush1.msra.mxu0 0.0
    %560 = vmatprep.subr.mxu0 0.0
    %561 = vmatpush1.msra.mxu0 0.0
    %562 = vmatprep.subr.mxu0 0.0
    %563 = vmatpush1.msra.mxu0 0.0
    %564 = vmatprep.subr.mxu0 0.0
    %565 = vmatpush1.msra.mxu0 0.0
    %566 = vmatprep.subr.mxu0 0.0
    %567 = vmatpush1.msra.mxu0 0.0
    %568 = vmatprep.subr.mxu0 0.0
    %569 = vmatpush1.msra.mxu0 0.0
    %570 = vmatprep.subr.mxu0 0.0
    %571 = vmatpush1.msra.mxu0 0.0
    %572 = vmatprep.mubr.f32.mxu0 0.0
    %573 = vmatmul.mubr.f32.gmra.mrb[0].mxu0 %v506
    %v574 = vpop.f32.mrb[0].mxu0
    %v575 = vadd.f32 0.0, %v574
    %v576 = vpop.f32.mrb[0].mxu0
    %577 = vdwg.mxu0
    %v579 = vsel %vm324, %v504, 0
    %581 = vmatprep.subr.mxu0 0.0
    %582 = vmatpush1.msra.mxu0 %v321
    %583 = vmatprep.subr.mxu0 0.0
    %584 = vmatpush1.msra.mxu0 0.0
    %585 = vmatprep.subr.mxu0 0.0
    %586 = vmatpush1.msra.mxu0 0.0
    %587 = vmatprep.subr.mxu0 0.0
    %588 = vmatpush1.msra.mxu0 0.0
    %589 = vmatprep.subr.mxu0 0.0
    %590 = vmatpush1.msra.mxu0 0.0
    %591 = vmatprep.subr.mxu0 0.0
    %592 = vmatpush1.msra.mxu0 0.0
    %593 = vmatprep.subr.mxu0 0.0
    %594 = vmatpush1.msra.mxu0 0.0
    %595 = vmatprep.subr.mxu0 0.0
    %596 = vmatpush1.msra.mxu0 0.0
    %597 = vmatprep.subr.mxu0 0.0
    %598 = vmatpush1.msra.mxu0 0.0
    %599 = vmatprep.subr.mxu0 0.0
    %600 = vmatpush1.msra.mxu0 0.0
    %601 = vmatprep.subr.mxu0 0.0
    %602 = vmatpush1.msra.mxu0 0.0
    %603 = vmatprep.subr.mxu0 0.0
    %604 = vmatpush1.msra.mxu0 0.0
    %605 = vmatprep.subr.mxu0 0.0
    %606 = vmatpush1.msra.mxu0 0.0
    %607 = vmatprep.subr.mxu0 0.0
    %608 = vmatpush1.msra.mxu0 0.0
    %609 = vmatprep.subr.mxu0 0.0
    %610 = vmatpush1.msra.mxu0 0.0
    %611 = vmatprep.subr.mxu0 0.0
    %612 = vmatpush1.msra.mxu0 0.0
    %613 = vmatprep.subr.mxu0 0.0
    %614 = vmatpush1.msra.mxu0 0.0
    %615 = vmatprep.subr.mxu0 0.0
    %616 = vmatpush1.msra.mxu0 0.0
    %617 = vmatprep.subr.mxu0 0.0
    %618 = vmatpush1.msra.mxu0 0.0
    %619 = vmatprep.subr.mxu0 0.0
    %620 = vmatpush1.msra.mxu0 0.0
    %621 = vmatprep.subr.mxu0 0.0
    %622 = vmatpush1.msra.mxu0 0.0
    %623 = vmatprep.subr.mxu0 0.0
    %624 = vmatpush1.msra.mxu0 0.0
    %625 = vmatprep.subr.mxu0 0.0
    %626 = vmatpush1.msra.mxu0 0.0
    %627 = vmatprep.subr.mxu0 0.0
    %628 = vmatpush1.msra.mxu0 0.0
    %629 = vmatprep.subr.mxu0 0.0
    %630 = vmatpush1.msra.mxu0 0.0
    %631 = vmatprep.subr.mxu0 0.0
    %632 = vmatpush1.msra.mxu0 0.0
    %633 = vmatprep.subr.mxu0 0.0
    %634 = vmatpush1.msra.mxu0 0.0
    %635 = vmatprep.subr.mxu0 0.0
    %636 = vmatpush1.msra.mxu0 0.0
    %637 = vmatprep.subr.mxu0 0.0
    %638 = vmatpush1.msra.mxu0 0.0
    %639 = vmatprep.subr.mxu0 0.0
    %640 = vmatpush1.msra.mxu0 0.0
    %641 = vmatprep.subr.mxu0 0.0
    %642 = vmatpush1.msra.mxu0 0.0
    %643 = vmatprep.subr.mxu0 0.0
    %644 = vmatpush1.msra.mxu0 0.0
    %645 = vmatprep.mubr.f32.mxu0 0.0
    %646 = vmatmul.mubr.f32.gmra.mrb[0].mxu0 %v579
    %v647 = vpop.f32.mrb[0].mxu0
    %v648 = vadd.f32 0.0, %v647
    %v649 = vpop.f32.mrb[0].mxu0
    %650 = vdwg.mxu0
    %v651 = vld [vmem:[%s7] sm:$0xff]
    %s652 = scalar_lea.vmem %s1, 32
    %v653 = vld [vmem:[%s652] sm:$0xff]
    %v654 = vld [vmem:[%s652 + $0x8] sm:$0xff]
    %v655 = vld [vmem:[%s652 + $0x10] sm:$0xff]
    %v656 = vld [vmem:[%s652 + $0x18] sm:$0xff]
    %s657 = scalar_lea.vmem %s2, 1
    %v658 = vld [vmem:[%s657] sm:$0x1]
    %v660 = vlaneseq
    %v661 = vshrl.u32 %v660, 7
    %v662 = vsub.s32 0, %v661
    %v663 = vrot.slane %v658, %v662
    %665 = vmatprep.subr.mxu0 0.0
    %666 = vmatpush1.msra.mxu0 %v653
    %667 = vmatprep.subr.mxu0 0.0
    %668 = vmatpush1.msra.mxu0 %v654
    %669 = vmatprep.subr.mxu0 0.0
    %670 = vmatpush1.msra.mxu0 %v655
    %671 = vmatprep.subr.mxu0 0.0
    %672 = vmatpush1.msra.mxu0 %v656
    %673 = vmatprep.subr.mxu0 0.0
    %674 = vmatpush1.msra.mxu0 0.0
    %675 = vmatprep.subr.mxu0 0.0
    %676 = vmatpush1.msra.mxu0 0.0
    %677 = vmatprep.subr.mxu0 0.0
    %678 = vmatpush1.msra.mxu0 0.0
    %679 = vmatprep.subr.mxu0 0.0
    %680 = vmatpush1.msra.mxu0 0.0
    %681 = vmatprep.subr.mxu0 0.0
    %682 = vmatpush1.msra.mxu0 0.0
    %683 = vmatprep.subr.mxu0 0.0
    %684 = vmatpush1.msra.mxu0 0.0
    %685 = vmatprep.subr.mxu0 0.0
    %686 = vmatpush1.msra.mxu0 0.0
    %687 = vmatprep.subr.mxu0 0.0
    %688 = vmatpush1.msra.mxu0 0.0
    %689 = vmatprep.subr.mxu0 0.0
    %690 = vmatpush1.msra.mxu0 0.0
    %691 = vmatprep.subr.mxu0 0.0
    %692 = vmatpush1.msra.mxu0 0.0
    %693 = vmatprep.subr.mxu0 0.0
    %694 = vmatpush1.msra.mxu0 0.0
    %695 = vmatprep.subr.mxu0 0.0
    %696 = vmatpush1.msra.mxu0 0.0
    %697 = vmatprep.subr.mxu0 0.0
    %698 = vmatpush1.msra.mxu0 0.0
    %699 = vmatprep.subr.mxu0 0.0
    %700 = vmatpush1.msra.mxu0 0.0
    %701 = vmatprep.subr.mxu0 0.0
    %702 = vmatpush1.msra.mxu0 0.0
    %703 = vmatprep.subr.mxu0 0.0
    %704 = vmatpush1.msra.mxu0 0.0
    %705 = vmatprep.subr.mxu0 0.0
    %706 = vmatpush1.msra.mxu0 0.0
    %707 = vmatprep.subr.mxu0 0.0
    %708 = vmatpush1.msra.mxu0 0.0
    %709 = vmatprep.subr.mxu0 0.0
    %710 = vmatpush1.msra.mxu0 0.0
    %711 = vmatprep.subr.mxu0 0.0
    %712 = vmatpush1.msra.mxu0 0.0
    %713 = vmatprep.subr.mxu0 0.0
    %714 = vmatpush1.msra.mxu0 0.0
    %715 = vmatprep.subr.mxu0 0.0
    %716 = vmatpush1.msra.mxu0 0.0
    %717 = vmatprep.subr.mxu0 0.0
    %718 = vmatpush1.msra.mxu0 0.0
    %719 = vmatprep.subr.mxu0 0.0
    %720 = vmatpush1.msra.mxu0 0.0
    %721 = vmatprep.subr.mxu0 0.0
    %722 = vmatpush1.msra.mxu0 0.0
    %723 = vmatprep.subr.mxu0 0.0
    %724 = vmatpush1.msra.mxu0 0.0
    %725 = vmatprep.subr.mxu0 0.0
    %726 = vmatpush1.msra.mxu0 0.0
    %727 = vmatprep.subr.mxu0 0.0
    %728 = vmatpush1.msra.mxu0 0.0
    %729 = vmatprep.mubr.f32.mxu0 0.0
    %730 = vmatmul.mubr.f32.gmra.mrb[0].mxu0 %v72
    %v731 = vpop.f32.mrb[0].mxu0
    %v732 = vadd.f32 %v663, %v731
    %v733 = vpop.f32.mrb[0].mxu0
    %734 = vmatprep.mubr.f32.mxu0 0.0
    %735 = vmatmul.mubr.f32.gmra.mrb[0].mxu0 %v75
    %v736 = vpop.f32.mrb[0].mxu0
    %v737 = vadd.f32 %v663, %v736
    %v738 = vpop.f32.mrb[0].mxu0
    %739 = vdwg.mxu0
    %s740 = scalar_lea.vmem %s3, 32
    %v741 = vld [vmem:[%s740] sm:$0xff]
    %v742 = vld [vmem:[%s740 + $0x8] sm:$0xff]
    %v743 = vld [vmem:[%s740 + $0x10] sm:$0xff]
    %v744 = vld [vmem:[%s740 + $0x18] sm:$0xff]
    %s745 = scalar_lea.vmem %s4, 1
    %v746 = vld [vmem:[%s745] sm:$0x1]
    %v748 = vlaneseq
    %v749 = vshrl.u32 %v748, 7
    %v750 = vsub.s32 0, %v749
    %v751 = vrot.slane %v746, %v750
    %753 = vmatprep.subr.mxu0 0.0
    %754 = vmatpush1.msra.mxu0 %v741
    %755 = vmatprep.subr.mxu0 0.0
    %756 = vmatpush1.msra.mxu0 %v742
    %757 = vmatprep.subr.mxu0 0.0
    %758 = vmatpush1.msra.mxu0 %v743
    %759 = vmatprep.subr.mxu0 0.0
    %760 = vmatpush1.msra.mxu0 %v744
    %761 = vmatprep.subr.mxu0 0.0
    %762 = vmatpush1.msra.mxu0 0.0
    %763 = vmatprep.subr.mxu0 0.0
    %764 = vmatpush1.msra.mxu0 0.0
    %765 = vmatprep.subr.mxu0 0.0
    %766 = vmatpush1.msra.mxu0 0.0
    %767 = vmatprep.subr.mxu0 0.0
    %768 = vmatpush1.msra.mxu0 0.0
    %769 = vmatprep.subr.mxu0 0.0
    %770 = vmatpush1.msra.mxu0 0.0
    %771 = vmatprep.subr.mxu0 0.0
    %772 = vmatpush1.msra.mxu0 0.0
    %773 = vmatprep.subr.mxu0 0.0
    %774 = vmatpush1.msra.mxu0 0.0
    %775 = vmatprep.subr.mxu0 0.0
    %776 = vmatpush1.msra.mxu0 0.0
    %777 = vmatprep.subr.mxu0 0.0
    %778 = vmatpush1.msra.mxu0 0.0
    %779 = vmatprep.subr.mxu0 0.0
    %780 = vmatpush1.msra.mxu0 0.0
    %781 = vmatprep.subr.mxu0 0.0
    %782 = vmatpush1.msra.mxu0 0.0
    %783 = vmatprep.subr.mxu0 0.0
    %784 = vmatpush1.msra.mxu0 0.0
    %785 = vmatprep.subr.mxu0 0.0
    %786 = vmatpush1.msra.mxu0 0.0
    %787 = vmatprep.subr.mxu0 0.0
    %788 = vmatpush1.msra.mxu0 0.0
    %789 = vmatprep.subr.mxu0 0.0
    %790 = vmatpush1.msra.mxu0 0.0
    %791 = vmatprep.subr.mxu0 0.0
    %792 = vmatpush1.msra.mxu0 0.0
    %793 = vmatprep.subr.mxu0 0.0
    %794 = vmatpush1.msra.mxu0 0.0
    %795 = vmatprep.subr.mxu0 0.0
    %796 = vmatpush1.msra.mxu0 0.0
    %797 = vmatprep.subr.mxu0 0.0
    %798 = vmatpush1.msra.mxu0 0.0
    %799 = vmatprep.subr.mxu0 0.0
    %800 = vmatpush1.msra.mxu0 0.0
    %801 = vmatprep.subr.mxu0 0.0
    %802 = vmatpush1.msra.mxu0 0.0
    %803 = vmatprep.subr.mxu0 0.0
    %804 = vmatpush1.msra.mxu0 0.0
    %805 = vmatprep.subr.mxu0 0.0
    %806 = vmatpush1.msra.mxu0 0.0
    %807 = vmatprep.subr.mxu0 0.0
    %808 = vmatpush1.msra.mxu0 0.0
    %809 = vmatprep.subr.mxu0 0.0
    %810 = vmatpush1.msra.mxu0 0.0
    %811 = vmatprep.subr.mxu0 0.0
    %812 = vmatpush1.msra.mxu0 0.0
    %813 = vmatprep.subr.mxu0 0.0
    %814 = vmatpush1.msra.mxu0 0.0
    %815 = vmatprep.subr.mxu0 0.0
    %816 = vmatpush1.msra.mxu0 0.0
    %817 = vmatprep.mubr.f32.mxu0 0.0
    %818 = vmatmul.mubr.f32.gmra.mrb[0].mxu0 %v72
    %v819 = vpop.f32.mrb[0].mxu0
    %v820 = vadd.f32 %v751, %v819
    %v821 = vpop.f32.mrb[0].mxu0
    %822 = vmatprep.mubr.f32.mxu0 0.0
    %823 = vmatmul.mubr.f32.gmra.mrb[0].mxu0 %v75
    %v824 = vpop.f32.mrb[0].mxu0
    %v825 = vadd.f32 %v751, %v824
    %v826 = vpop.f32.mrb[0].mxu0
    %827 = vdwg.mxu0
    %s828 = scalar_lea.vmem %s5, 32
    %v829 = vld [vmem:[%s828] sm:$0xff]
    %v830 = vld [vmem:[%s828 + $0x8] sm:$0xff]
    %v831 = vld [vmem:[%s828 + $0x10] sm:$0xff]
    %v832 = vld [vmem:[%s828 + $0x18] sm:$0xff]
    %s833 = scalar_lea.vmem %s6, 1
    %v834 = vld [vmem:[%s833] sm:$0x1]
    %v836 = vlaneseq
    %v837 = vshrl.u32 %v836, 7
    %v838 = vsub.s32 0, %v837
    %v839 = vrot.slane %v834, %v838
    %841 = vmatprep.subr.mxu0 0.0
    %842 = vmatpush1.msra.mxu0 %v829
    %843 = vmatprep.subr.mxu0 0.0
    %844 = vmatpush1.msra.mxu0 %v830
    %845 = vmatprep.subr.mxu0 0.0
    %846 = vmatpush1.msra.mxu0 %v831
    %847 = vmatprep.subr.mxu0 0.0
    %848 = vmatpush1.msra.mxu0 %v832
    %849 = vmatprep.subr.mxu0 0.0
    %850 = vmatpush1.msra.mxu0 0.0
    %851 = vmatprep.subr.mxu0 0.0
    %852 = vmatpush1.msra.mxu0 0.0
    %853 = vmatprep.subr.mxu0 0.0
    %854 = vmatpush1.msra.mxu0 0.0
    %855 = vmatprep.subr.mxu0 0.0
    %856 = vmatpush1.msra.mxu0 0.0
    %857 = vmatprep.subr.mxu0 0.0
    %858 = vmatpush1.msra.mxu0 0.0
    %859 = vmatprep.subr.mxu0 0.0
    %860 = vmatpush1.msra.mxu0 0.0
    %861 = vmatprep.subr.mxu0 0.0
    %862 = vmatpush1.msra.mxu0 0.0
    %863 = vmatprep.subr.mxu0 0.0
    %864 = vmatpush1.msra.mxu0 0.0
    %865 = vmatprep.subr.mxu0 0.0
    %866 = vmatpush1.msra.mxu0 0.0
    %867 = vmatprep.subr.mxu0 0.0
    %868 = vmatpush1.msra.mxu0 0.0
    %869 = vmatprep.subr.mxu0 0.0
    %870 = vmatpush1.msra.mxu0 0.0
    %871 = vmatprep.subr.mxu0 0.0
    %872 = vmatpush1.msra.mxu0 0.0
    %873 = vmatprep.subr.mxu0 0.0
    %874 = vmatpush1.msra.mxu0 0.0
    %875 = vmatprep.subr.mxu0 0.0
    %876 = vmatpush1.msra.mxu0 0.0
    %877 = vmatprep.subr.mxu0 0.0
    %878 = vmatpush1.msra.mxu0 0.0
    %879 = vmatprep.subr.mxu0 0.0
    %880 = vmatpush1.msra.mxu0 0.0
    %881 = vmatprep.subr.mxu0 0.0
    %882 = vmatpush1.msra.mxu0 0.0
    %883 = vmatprep.subr.mxu0 0.0
    %884 = vmatpush1.msra.mxu0 0.0
    %885 = vmatprep.subr.mxu0 0.0
    %886 = vmatpush1.msra.mxu0 0.0
    %887 = vmatprep.subr.mxu0 0.0
    %888 = vmatpush1.msra.mxu0 0.0
    %889 = vmatprep.subr.mxu0 0.0
    %890 = vmatpush1.msra.mxu0 0.0
    %891 = vmatprep.subr.mxu0 0.0
    %892 = vmatpush1.msra.mxu0 0.0
    %893 = vmatprep.subr.mxu0 0.0
    %894 = vmatpush1.msra.mxu0 0.0
    %895 = vmatprep.subr.mxu0 0.0
    %896 = vmatpush1.msra.mxu0 0.0
    %897 = vmatprep.subr.mxu0 0.0
    %898 = vmatpush1.msra.mxu0 0.0
    %899 = vmatprep.subr.mxu0 0.0
    %900 = vmatpush1.msra.mxu0 0.0
    %901 = vmatprep.subr.mxu0 0.0
    %902 = vmatpush1.msra.mxu0 0.0
    %903 = vmatprep.subr.mxu0 0.0
    %904 = vmatpush1.msra.mxu0 0.0
    %905 = vmatprep.mubr.f32.mxu0 0.0
    %906 = vmatmul.mubr.f32.gmra.mrb[0].mxu0 %v72
    %v907 = vpop.f32.mrb[0].mxu0
    %v908 = vadd.f32 %v839, %v907
    %v909 = vpop.f32.mrb[0].mxu0
    %910 = vmatprep.mubr.f32.mxu0 0.0
    %911 = vmatmul.mubr.f32.gmra.mrb[0].mxu0 %v75
    %v912 = vpop.f32.mrb[0].mxu0
    %v913 = vadd.f32 %v839, %v912
    %v914 = vpop.f32.mrb[0].mxu0
    %915 = vdwg.mxu0
    %v917 = vsel %vm324, %v732, 0
    %v920 = vsel %vm324, %v820, 0
    %922 = vmatprep.subr.mxu0 0.0
    %923 = vmatpush1.xpose.msra.mxu0 %v920
    %924 = vmatprep.subr.mxu0 0.0
    %925 = vmatpush1.xpose.msra.mxu0 0.0
    %926 = vmatprep.subr.mxu0 0.0
    %927 = vmatpush1.xpose.msra.mxu0 0.0
    %928 = vmatprep.subr.mxu0 0.0
    %929 = vmatpush1.xpose.msra.mxu0 0.0
    %930 = vmatprep.subr.mxu0 0.0
    %931 = vmatpush1.xpose.msra.mxu0 0.0
    %932 = vmatprep.subr.mxu0 0.0
    %933 = vmatpush1.xpose.msra.mxu0 0.0
    %934 = vmatprep.subr.mxu0 0.0
    %935 = vmatpush1.xpose.msra.mxu0 0.0
    %936 = vmatprep.subr.mxu0 0.0
    %937 = vmatpush1.xpose.msra.mxu0 0.0
    %938 = vmatprep.subr.mxu0 0.0
    %939 = vmatpush1.xpose.msra.mxu0 0.0
    %940 = vmatprep.subr.mxu0 0.0
    %941 = vmatpush1.xpose.msra.mxu0 0.0
    %942 = vmatprep.subr.mxu0 0.0
    %943 = vmatpush1.xpose.msra.mxu0 0.0
    %944 = vmatprep.subr.mxu0 0.0
    %945 = vmatpush1.xpose.msra.mxu0 0.0
    %946 = vmatprep.subr.mxu0 0.0
    %947 = vmatpush1.xpose.msra.mxu0 0.0
    %948 = vmatprep.subr.mxu0 0.0
    %949 = vmatpush1.xpose.msra.mxu0 0.0
    %950 = vmatprep.subr.mxu0 0.0
    %951 = vmatpush1.xpose.msra.mxu0 0.0
    %952 = vmatprep.subr.mxu0 0.0
    %953 = vmatpush1.xpose.msra.mxu0 0.0
    %954 = vmatprep.subr.mxu0 0.0
    %955 = vmatpush1.xpose.msra.mxu0 0.0
    %956 = vmatprep.subr.mxu0 0.0
    %957 = vmatpush1.xpose.msra.mxu0 0.0
    %958 = vmatprep.subr.mxu0 0.0
    %959 = vmatpush1.xpose.msra.mxu0 0.0
    %960 = vmatprep.subr.mxu0 0.0
    %961 = vmatpush1.xpose.msra.mxu0 0.0
    %962 = vmatprep.subr.mxu0 0.0
    %963 = vmatpush1.xpose.msra.mxu0 0.0
    %964 = vmatprep.subr.mxu0 0.0
    %965 = vmatpush1.xpose.msra.mxu0 0.0
    %966 = vmatprep.subr.mxu0 0.0
    %967 = vmatpush1.xpose.msra.mxu0 0.0
    %968 = vmatprep.subr.mxu0 0.0
    %969 = vmatpush1.xpose.msra.mxu0 0.0
    %970 = vmatprep.subr.mxu0 0.0
    %971 = vmatpush1.xpose.msra.mxu0 0.0
    %972 = vmatprep.subr.mxu0 0.0
    %973 = vmatpush1.xpose.msra.mxu0 0.0
    %974 = vmatprep.subr.mxu0 0.0
    %975 = vmatpush1.xpose.msra.mxu0 0.0
    %976 = vmatprep.subr.mxu0 0.0
    %977 = vmatpush1.xpose.msra.mxu0 0.0
    %978 = vmatprep.subr.mxu0 0.0
    %979 = vmatpush1.xpose.msra.mxu0 0.0
    %980 = vmatprep.subr.mxu0 0.0
    %981 = vmatpush1.xpose.msra.mxu0 0.0
    %982 = vmatprep.subr.mxu0 0.0
    %983 = vmatpush1.xpose.msra.mxu0 0.0
    %984 = vmatprep.subr.mxu0 0.0
    %985 = vmatpush1.xpose.msra.mxu0 0.0
    %986 = vmatprep.mubr.f32.mxu0 0.0
    %987 = vmatmul.mubr.f32.gmra.mrb[0].mxu0 %v917
    %v988 = vpop.f32.mrb[0].mxu0
    %v989 = vadd.f32 0.0, %v988
    %v990 = vpop.f32.mrb[0].mxu0
    %991 = vdwg.mxu0
    %v993 = vsel %vm324, %v737, 0
    %v996 = vsel %vm324, %v825, 0
    %998 = vmatprep.subr.mxu0 0.0
    %999 = vmatpush1.xpose.msra.mxu0 %v996
    %1000 = vmatprep.subr.mxu0 0.0
    %1001 = vmatpush1.xpose.msra.mxu0 0.0
    %1002 = vmatprep.subr.mxu0 0.0
    %1003 = vmatpush1.xpose.msra.mxu0 0.0
    %1004 = vmatprep.subr.mxu0 0.0
    %1005 = vmatpush1.xpose.msra.mxu0 0.0
    %1006 = vmatprep.subr.mxu0 0.0
    %1007 = vmatpush1.xpose.msra.mxu0 0.0
    %1008 = vmatprep.subr.mxu0 0.0
    %1009 = vmatpush1.xpose.msra.mxu0 0.0
    %1010 = vmatprep.subr.mxu0 0.0
    %1011 = vmatpush1.xpose.msra.mxu0 0.0
    %1012 = vmatprep.subr.mxu0 0.0
    %1013 = vmatpush1.xpose.msra.mxu0 0.0
    %1014 = vmatprep.subr.mxu0 0.0
    %1015 = vmatpush1.xpose.msra.mxu0 0.0
    %1016 = vmatprep.subr.mxu0 0.0
    %1017 = vmatpush1.xpose.msra.mxu0 0.0
    %1018 = vmatprep.subr.mxu0 0.0
    %1019 = vmatpush1.xpose.msra.mxu0 0.0
    %1020 = vmatprep.subr.mxu0 0.0
    %1021 = vmatpush1.xpose.msra.mxu0 0.0
    %1022 = vmatprep.subr.mxu0 0.0
    %1023 = vmatpush1.xpose.msra.mxu0 0.0
    %1024 = vmatprep.subr.mxu0 0.0
    %1025 = vmatpush1.xpose.msra.mxu0 0.0
    %1026 = vmatprep.subr.mxu0 0.0
    %1027 = vmatpush1.xpose.msra.mxu0 0.0
    %1028 = vmatprep.subr.mxu0 0.0
    %1029 = vmatpush1.xpose.msra.mxu0 0.0
    %1030 = vmatprep.subr.mxu0 0.0
    %1031 = vmatpush1.xpose.msra.mxu0 0.0
    %1032 = vmatprep.subr.mxu0 0.0
    %1033 = vmatpush1.xpose.msra.mxu0 0.0
    %1034 = vmatprep.subr.mxu0 0.0
    %1035 = vmatpush1.xpose.msra.mxu0 0.0
    %1036 = vmatprep.subr.mxu0 0.0
    %1037 = vmatpush1.xpose.msra.mxu0 0.0
    %1038 = vmatprep.subr.mxu0 0.0
    %1039 = vmatpush1.xpose.msra.mxu0 0.0
    %1040 = vmatprep.subr.mxu0 0.0
    %1041 = vmatpush1.xpose.msra.mxu0 0.0
    %1042 = vmatprep.subr.mxu0 0.0
    %1043 = vmatpush1.xpose.msra.mxu0 0.0
    %1044 = vmatprep.subr.mxu0 0.0
    %1045 = vmatpush1.xpose.msra.mxu0 0.0
    %1046 = vmatprep.subr.mxu0 0.0
    %1047 = vmatpush1.xpose.msra.mxu0 0.0
    %1048 = vmatprep.subr.mxu0 0.0
    %1049 = vmatpush1.xpose.msra.mxu0 0.0
    %1050 = vmatprep.subr.mxu0 0.0
    %1051 = vmatpush1.xpose.msra.mxu0 0.0
    %1052 = vmatprep.subr.mxu0 0.0
    %1053 = vmatpush1.xpose.msra.mxu0 0.0
    %1054 = vmatprep.subr.mxu0 0.0
    %1055 = vmatpush1.xpose.msra.mxu0 0.0
    %1056 = vmatprep.subr.mxu0 0.0
    %1057 = vmatpush1.xpose.msra.mxu0 0.0
    %1058 = vmatprep.subr.mxu0 0.0
    %1059 = vmatpush1.xpose.msra.mxu0 0.0
    %1060 = vmatprep.subr.mxu0 0.0
    %1061 = vmatpush1.xpose.msra.mxu0 0.0
    %1062 = vmatprep.mubr.f32.mxu0 0.0
    %1063 = vmatmul.mubr.f32.gmra.mrb[0].mxu0 %v993
    %v1064 = vpop.f32.mrb[0].mxu0
    %v1065 = vadd.f32 0.0, %v1064
    %v1066 = vpop.f32.mrb[0].mxu0
    %1067 = vdwg.mxu0
    %v1068 = vsel %vm324, %v989, -inf
    %1069 = vmax.xlane.f32.xlu0 %v1068
    %v1070 = vpop.xlane.xlu0 %1069
    %v1071 = vsel %vm324, %v1065, -inf
    %1072 = vmax.xlane.f32.xlu0 %v1071
    %v1073 = vpop.xlane.xlu0 %1072
    %v1074 = vsub.f32 %v989, %v1070
    %v1075 = vsub.f32 %v1065, %v1073
    %v1076 = vmul.f32 %v1074, 1.442695
    %v1077 = vpow.pop %v1076
    %v1078 = vmul.f32 %v1075, 1.442695
    %v1079 = vpow.pop %v1078
    %v1080 = vsel %vm324, %v1077, 0.0
    %1081 = vadd.xlane.f32.xlu0 %v1080
    %v1082 = vpop.xlane.xlu0 %1081
    %v1083 = vsel %vm324, %v1079, 0.0
    %1084 = vadd.xlane.f32.xlu0 %v1083
    %v1085 = vpop.xlane.xlu0 %1084
    %v1086 = vrcp.pop %v1082
    %v1087 = vrcp.pop %v1085
    %v1088 = vmul.f32 %v1082, %v1086
    %v1089 = vmul.f32 %v1085, %v1087
    %v1090 = vsub.f32 2.0, %v1088
    %v1091 = vsub.f32 2.0, %v1089
    %v1092 = vmul.f32 %v1086, %v1090
    %v1093 = vmul.f32 %v1087, %v1091
    %v1094 = vmul.f32 %v1077, %v1092
    %v1095 = vmul.f32 %v1079, %v1093
    %v1097 = vsel %vm324, %v1094, 0
    %1099 = vmatprep.subr.mxu0 0.0
    %1100 = vmatpush1.msra.mxu0 %v908
    %1101 = vmatprep.subr.mxu0 0.0
    %1102 = vmatpush1.msra.mxu0 0.0
    %1103 = vmatprep.subr.mxu0 0.0
    %1104 = vmatpush1.msra.mxu0 0.0
    %1105 = vmatprep.subr.mxu0 0.0
    %1106 = vmatpush1.msra.mxu0 0.0
    %1107 = vmatprep.subr.mxu0 0.0
    %1108 = vmatpush1.msra.mxu0 0.0
    %1109 = vmatprep.subr.mxu0 0.0
    %1110 = vmatpush1.msra.mxu0 0.0
    %1111 = vmatprep.subr.mxu0 0.0
    %1112 = vmatpush1.msra.mxu0 0.0
    %1113 = vmatprep.subr.mxu0 0.0
    %1114 = vmatpush1.msra.mxu0 0.0
    %1115 = vmatprep.subr.mxu0 0.0
    %1116 = vmatpush1.msra.mxu0 0.0
    %1117 = vmatprep.subr.mxu0 0.0
    %1118 = vmatpush1.msra.mxu0 0.0
    %1119 = vmatprep.subr.mxu0 0.0
    %1120 = vmatpush1.msra.mxu0 0.0
    %1121 = vmatprep.subr.mxu0 0.0
    %1122 = vmatpush1.msra.mxu0 0.0
    %1123 = vmatprep.subr.mxu0 0.0
    %1124 = vmatpush1.msra.mxu0 0.0
    %1125 = vmatprep.subr.mxu0 0.0
    %1126 = vmatpush1.msra.mxu0 0.0
    %1127 = vmatprep.subr.mxu0 0.0
    %1128 = vmatpush1.msra.mxu0 0.0
    %1129 = vmatprep.subr.mxu0 0.0
    %1130 = vmatpush1.msra.mxu0 0.0
    %1131 = vmatprep.subr.mxu0 0.0
    %1132 = vmatpush1.msra.mxu0 0.0
    %1133 = vmatprep.subr.mxu0 0.0
    %1134 = vmatpush1.msra.mxu0 0.0
    %1135 = vmatprep.subr.mxu0 0.0
    %1136 = vmatpush1.msra.mxu0 0.0
    %1137 = vmatprep.subr.mxu0 0.0
    %1138 = vmatpush1.msra.mxu0 0.0
    %1139 = vmatprep.subr.mxu0 0.0
    %1140 = vmatpush1.msra.mxu0 0.0
    %1141 = vmatprep.subr.mxu0 0.0
    %1142 = vmatpush1.msra.mxu0 0.0
    %1143 = vmatprep.subr.mxu0 0.0
    %1144 = vmatpush1.msra.mxu0 0.0
    %1145 = vmatprep.subr.mxu0 0.0
    %1146 = vmatpush1.msra.mxu0 0.0
    %1147 = vmatprep.subr.mxu0 0.0
    %1148 = vmatpush1.msra.mxu0 0.0
    %1149 = vmatprep.subr.mxu0 0.0
    %1150 = vmatpush1.msra.mxu0 0.0
    %1151 = vmatprep.subr.mxu0 0.0
    %1152 = vmatpush1.msra.mxu0 0.0
    %1153 = vmatprep.subr.mxu0 0.0
    %1154 = vmatpush1.msra.mxu0 0.0
    %1155 = vmatprep.subr.mxu0 0.0
    %1156 = vmatpush1.msra.mxu0 0.0
    %1157 = vmatprep.subr.mxu0 0.0
    %1158 = vmatpush1.msra.mxu0 0.0
    %1159 = vmatprep.subr.mxu0 0.0
    %1160 = vmatpush1.msra.mxu0 0.0
    %1161 = vmatprep.subr.mxu0 0.0
    %1162 = vmatpush1.msra.mxu0 0.0
    %1163 = vmatprep.mubr.f32.mxu0 0.0
    %1164 = vmatmul.mubr.f32.gmra.mrb[0].mxu0 %v1097
    %v1165 = vpop.f32.mrb[0].mxu0
    %v1166 = vadd.f32 0.0, %v1165
    %v1167 = vpop.f32.mrb[0].mxu0
    %1168 = vdwg.mxu0
    %v1170 = vsel %vm324, %v1095, 0
    %1172 = vmatprep.subr.mxu0 0.0
    %1173 = vmatpush1.msra.mxu0 %v913
    %1174 = vmatprep.subr.mxu0 0.0
    %1175 = vmatpush1.msra.mxu0 0.0
    %1176 = vmatprep.subr.mxu0 0.0
    %1177 = vmatpush1.msra.mxu0 0.0
    %1178 = vmatprep.subr.mxu0 0.0
    %1179 = vmatpush1.msra.mxu0 0.0
    %1180 = vmatprep.subr.mxu0 0.0
    %1181 = vmatpush1.msra.mxu0 0.0
    %1182 = vmatprep.subr.mxu0 0.0
    %1183 = vmatpush1.msra.mxu0 0.0
    %1184 = vmatprep.subr.mxu0 0.0
    %1185 = vmatpush1.msra.mxu0 0.0
    %1186 = vmatprep.subr.mxu0 0.0
    %1187 = vmatpush1.msra.mxu0 0.0
    %1188 = vmatprep.subr.mxu0 0.0
    %1189 = vmatpush1.msra.mxu0 0.0
    %1190 = vmatprep.subr.mxu0 0.0
    %1191 = vmatpush1.msra.mxu0 0.0
    %1192 = vmatprep.subr.mxu0 0.0
    %1193 = vmatpush1.msra.mxu0 0.0
    %1194 = vmatprep.subr.mxu0 0.0
    %1195 = vmatpush1.msra.mxu0 0.0
    %1196 = vmatprep.subr.mxu0 0.0
    %1197 = vmatpush1.msra.mxu0 0.0
    %1198 = vmatprep.subr.mxu0 0.0
    %1199 = vmatpush1.msra.mxu0 0.0
    %1200 = vmatprep.subr.mxu0 0.0
    %1201 = vmatpush1.msra.mxu0 0.0
    %1202 = vmatprep.subr.mxu0 0.0
    %1203 = vmatpush1.msra.mxu0 0.0
    %1204 = vmatprep.subr.mxu0 0.0
    %1205 = vmatpush1.msra.mxu0 0.0
    %1206 = vmatprep.subr.mxu0 0.0
    %1207 = vmatpush1.msra.mxu0 0.0
    %1208 = vmatprep.subr.mxu0 0.0
    %1209 = vmatpush1.msra.mxu0 0.0
    %1210 = vmatprep.subr.mxu0 0.0
    %1211 = vmatpush1.msra.mxu0 0.0
    %1212 = vmatprep.subr.mxu0 0.0
    %1213 = vmatpush1.msra.mxu0 0.0
    %1214 = vmatprep.subr.mxu0 0.0
    %1215 = vmatpush1.msra.mxu0 0.0
    %1216 = vmatprep.subr.mxu0 0.0
    %1217 = vmatpush1.msra.mxu0 0.0
    %1218 = vmatprep.subr.mxu0 0.0
    %1219 = vmatpush1.msra.mxu0 0.0
    %1220 = vmatprep.subr.mxu0 0.0
    %1221 = vmatpush1.msra.mxu0 0.0
    %1222 = vmatprep.subr.mxu0 0.0
    %1223 = vmatpush1.msra.mxu0 0.0
    %1224 = vmatprep.subr.mxu0 0.0
    %1225 = vmatpush1.msra.mxu0 0.0
    %1226 = vmatprep.subr.mxu0 0.0
    %1227 = vmatpush1.msra.mxu0 0.0
    %1228 = vmatprep.subr.mxu0 0.0
    %1229 = vmatpush1.msra.mxu0 0.0
    %1230 = vmatprep.subr.mxu0 0.0
    %1231 = vmatpush1.msra.mxu0 0.0
    %1232 = vmatprep.subr.mxu0 0.0
    %1233 = vmatpush1.msra.mxu0 0.0
    %1234 = vmatprep.subr.mxu0 0.0
    %1235 = vmatpush1.msra.mxu0 0.0
    %1236 = vmatprep.mubr.f32.mxu0 0.0
    %1237 = vmatmul.mubr.f32.gmra.mrb[0].mxu0 %v1170
    %v1238 = vpop.f32.mrb[0].mxu0
    %v1239 = vadd.f32 0.0, %v1238
    %v1240 = vpop.f32.mrb[0].mxu0
    %1241 = vdwg.mxu0
    %s1242 = scalar_lea.vmem %s7, 8
    %v1243 = vld [vmem:[%s1242] sm:$0xff]
    %v1245 = vsel %vm324, %v1166, 0
    %v1248 = vsel %vm324, %v1239, 0
    %1250 = vmatprep.subr.mxu0 0.0
    %1251 = vmatpush1.msra.mxu0 %v1243
    %1252 = vmatprep.subr.mxu0 0.0
    %1253 = vmatpush1.msra.mxu0 0.0
    %1254 = vmatprep.subr.mxu0 0.0
    %1255 = vmatpush1.msra.mxu0 0.0
    %1256 = vmatprep.subr.mxu0 0.0
    %1257 = vmatpush1.msra.mxu0 0.0
    %1258 = vmatprep.subr.mxu0 0.0
    %1259 = vmatpush1.msra.mxu0 0.0
    %1260 = vmatprep.subr.mxu0 0.0
    %1261 = vmatpush1.msra.mxu0 0.0
    %1262 = vmatprep.subr.mxu0 0.0
    %1263 = vmatpush1.msra.mxu0 0.0
    %1264 = vmatprep.subr.mxu0 0.0
    %1265 = vmatpush1.msra.mxu0 0.0
    %1266 = vmatprep.subr.mxu0 0.0
    %1267 = vmatpush1.msra.mxu0 0.0
    %1268 = vmatprep.subr.mxu0 0.0
    %1269 = vmatpush1.msra.mxu0 0.0
    %1270 = vmatprep.subr.mxu0 0.0
    %1271 = vmatpush1.msra.mxu0 0.0
    %1272 = vmatprep.subr.mxu0 0.0
    %1273 = vmatpush1.msra.mxu0 0.0
    %1274 = vmatprep.subr.mxu0 0.0
    %1275 = vmatpush1.msra.mxu0 0.0
    %1276 = vmatprep.subr.mxu0 0.0
    %1277 = vmatpush1.msra.mxu0 0.0
    %1278 = vmatprep.subr.mxu0 0.0
    %1279 = vmatpush1.msra.mxu0 0.0
    %1280 = vmatprep.subr.mxu0 0.0
    %1281 = vmatpush1.msra.mxu0 0.0
    %1282 = vmatprep.subr.mxu0 0.0
    %1283 = vmatpush1.msra.mxu0 0.0
    %1284 = vmatprep.subr.mxu0 0.0
    %1285 = vmatpush1.msra.mxu0 0.0
    %1286 = vmatprep.subr.mxu0 0.0
    %1287 = vmatpush1.msra.mxu0 0.0
    %1288 = vmatprep.subr.mxu0 0.0
    %1289 = vmatpush1.msra.mxu0 0.0
    %1290 = vmatprep.subr.mxu0 0.0
    %1291 = vmatpush1.msra.mxu0 0.0
    %1292 = vmatprep.subr.mxu0 0.0
    %1293 = vmatpush1.msra.mxu0 0.0
    %1294 = vmatprep.subr.mxu0 0.0
    %1295 = vmatpush1.msra.mxu0 0.0
    %1296 = vmatprep.subr.mxu0 0.0
    %1297 = vmatpush1.msra.mxu0 0.0
    %1298 = vmatprep.subr.mxu0 0.0
    %1299 = vmatpush1.msra.mxu0 0.0
    %1300 = vmatprep.subr.mxu0 0.0
    %1301 = vmatpush1.msra.mxu0 0.0
    %1302 = vmatprep.subr.mxu0 0.0
    %1303 = vmatpush1.msra.mxu0 0.0
    %1304 = vmatprep.subr.mxu0 0.0
    %1305 = vmatpush1.msra.mxu0 0.0
    %1306 = vmatprep.subr.mxu0 0.0
    %1307 = vmatpush1.msra.mxu0 0.0
    %1308 = vmatprep.subr.mxu0 0.0
    %1309 = vmatpush1.msra.mxu0 0.0
    %1310 = vmatprep.subr.mxu0 0.0
    %1311 = vmatpush1.msra.mxu0 0.0
    %1312 = vmatprep.subr.mxu0 0.0
    %1313 = vmatpush1.msra.mxu0 0.0
    %1314 = vmatprep.mubr.f32.mxu0 0.0
    %1315 = vmatmul.mubr.f32.gmra.mrb[0].mxu0 %v1245
    %v1316 = vpop.f32.mrb[0].mxu0
    %v1317 = vadd.f32 0.0, %v1316
    %v1318 = vpop.f32.mrb[0].mxu0
    %1319 = vmatprep.mubr.f32.mxu0 0.0
    %1320 = vmatmul.mubr.f32.gmra.mrb[0].mxu0 %v1248
    %v1321 = vpop.f32.mrb[0].mxu0
    %v1322 = vadd.f32 0.0, %v1321
    %v1323 = vpop.f32.mrb[0].mxu0
    %1324 = vdwg.mxu0
    %v1326 = vsel %vm324, %v575, 0
    %v1329 = vsel %vm324, %v648, 0
    %1331 = vmatprep.subr.mxu0 0.0
    %1332 = vmatpush1.msra.mxu0 %v651
    %1333 = vmatprep.subr.mxu0 0.0
    %1334 = vmatpush1.msra.mxu0 0.0
    %1335 = vmatprep.subr.mxu0 0.0
    %1336 = vmatpush1.msra.mxu0 0.0
    %1337 = vmatprep.subr.mxu0 0.0
    %1338 = vmatpush1.msra.mxu0 0.0
    %1339 = vmatprep.subr.mxu0 0.0
    %1340 = vmatpush1.msra.mxu0 0.0
    %1341 = vmatprep.subr.mxu0 0.0
    %1342 = vmatpush1.msra.mxu0 0.0
    %1343 = vmatprep.subr.mxu0 0.0
    %1344 = vmatpush1.msra.mxu0 0.0
    %1345 = vmatprep.subr.mxu0 0.0
    %1346 = vmatpush1.msra.mxu0 0.0
    %1347 = vmatprep.subr.mxu0 0.0
    %1348 = vmatpush1.msra.mxu0 0.0
    %1349 = vmatprep.subr.mxu0 0.0
    %1350 = vmatpush1.msra.mxu0 0.0
    %1351 = vmatprep.subr.mxu0 0.0
    %1352 = vmatpush1.msra.mxu0 0.0
    %1353 = vmatprep.subr.mxu0 0.0
    %1354 = vmatpush1.msra.mxu0 0.0
    %1355 = vmatprep.subr.mxu0 0.0
    %1356 = vmatpush1.msra.mxu0 0.0
    %1357 = vmatprep.subr.mxu0 0.0
    %1358 = vmatpush1.msra.mxu0 0.0
    %1359 = vmatprep.subr.mxu0 0.0
    %1360 = vmatpush1.msra.mxu0 0.0
    %1361 = vmatprep.subr.mxu0 0.0
    %1362 = vmatpush1.msra.mxu0 0.0
    %1363 = vmatprep.subr.mxu0 0.0
    %1364 = vmatpush1.msra.mxu0 0.0
    %1365 = vmatprep.subr.mxu0 0.0
    %1366 = vmatpush1.msra.mxu0 0.0
    %1367 = vmatprep.subr.mxu0 0.0
    %1368 = vmatpush1.msra.mxu0 0.0
    %1369 = vmatprep.subr.mxu0 0.0
    %1370 = vmatpush1.msra.mxu0 0.0
    %1371 = vmatprep.subr.mxu0 0.0
    %1372 = vmatpush1.msra.mxu0 0.0
    %1373 = vmatprep.subr.mxu0 0.0
    %1374 = vmatpush1.msra.mxu0 0.0
    %1375 = vmatprep.subr.mxu0 0.0
    %1376 = vmatpush1.msra.mxu0 0.0
    %1377 = vmatprep.subr.mxu0 0.0
    %1378 = vmatpush1.msra.mxu0 0.0
    %1379 = vmatprep.subr.mxu0 0.0
    %1380 = vmatpush1.msra.mxu0 0.0
    %1381 = vmatprep.subr.mxu0 0.0
    %1382 = vmatpush1.msra.mxu0 0.0
    %1383 = vmatprep.subr.mxu0 0.0
    %1384 = vmatpush1.msra.mxu0 0.0
    %1385 = vmatprep.subr.mxu0 0.0
    %1386 = vmatpush1.msra.mxu0 0.0
    %1387 = vmatprep.subr.mxu0 0.0
    %1388 = vmatpush1.msra.mxu0 0.0
    %1389 = vmatprep.subr.mxu0 0.0
    %1390 = vmatpush1.msra.mxu0 0.0
    %1391 = vmatprep.subr.mxu0 0.0
    %1392 = vmatpush1.msra.mxu0 0.0
    %1393 = vmatprep.subr.mxu0 0.0
    %1394 = vmatpush1.msra.mxu0 0.0
    %1395 = vmatprep.mubr.f32.mxu0 0.0
    %1396 = vmatmul.mubr.f32.gmra.mrb[0].mxu0 %v1326
    %v1397 = vpop.f32.mrb[0].mxu0
    %v1398 = vadd.f32 %v1317, %v1397
    %v1399 = vpop.f32.mrb[0].mxu0
    %1400 = vmatprep.mubr.f32.mxu0 0.0
    %1401 = vmatmul.mubr.f32.gmra.mrb[0].mxu0 %v1329
    %v1402 = vpop.f32.mrb[0].mxu0
    %v1403 = vadd.f32 %v1322, %v1402
    %v1404 = vpop.f32.mrb[0].mxu0
    %1405 = vdwg.mxu0
    %s1406 = scalar_lea.vmem %s1, 64
    %v1407 = vld [vmem:[%s1406] sm:$0xff]
    %v1408 = vld [vmem:[%s1406 + $0x8] sm:$0xff]
    %v1409 = vld [vmem:[%s1406 + $0x10] sm:$0xff]
    %v1410 = vld [vmem:[%s1406 + $0x18] sm:$0xff]
    %s1411 = scalar_lea.vmem %s2, 2
    %v1412 = vld [vmem:[%s1411] sm:$0x1]
    %v1414 = vlaneseq
    %v1415 = vshrl.u32 %v1414, 7
    %v1416 = vsub.s32 0, %v1415
    %v1417 = vrot.slane %v1412, %v1416
    %1419 = vmatprep.subr.mxu0 0.0
    %1420 = vmatpush1.msra.mxu0 %v1407
    %1421 = vmatprep.subr.mxu0 0.0
    %1422 = vmatpush1.msra.mxu0 %v1408
    %1423 = vmatprep.subr.mxu0 0.0
    %1424 = vmatpush1.msra.mxu0 %v1409
    %1425 = vmatprep.subr.mxu0 0.0
    %1426 = vmatpush1.msra.mxu0 %v1410
    %1427 = vmatprep.subr.mxu0 0.0
    %1428 = vmatpush1.msra.mxu0 0.0
    %1429 = vmatprep.subr.mxu0 0.0
    %1430 = vmatpush1.msra.mxu0 0.0
    %1431 = vmatprep.subr.mxu0 0.0
    %1432 = vmatpush1.msra.mxu0 0.0
    %1433 = vmatprep.subr.mxu0 0.0
    %1434 = vmatpush1.msra.mxu0 0.0
    %1435 = vmatprep.subr.mxu0 0.0
    %1436 = vmatpush1.msra.mxu0 0.0
    %1437 = vmatprep.subr.mxu0 0.0
    %1438 = vmatpush1.msra.mxu0 0.0
    %1439 = vmatprep.subr.mxu0 0.0
    %1440 = vmatpush1.msra.mxu0 0.0
    %1441 = vmatprep.subr.mxu0 0.0
    %1442 = vmatpush1.msra.mxu0 0.0
    %1443 = vmatprep.subr.mxu0 0.0
    %1444 = vmatpush1.msra.mxu0 0.0
    %1445 = vmatprep.subr.mxu0 0.0
    %1446 = vmatpush1.msra.mxu0 0.0
    %1447 = vmatprep.subr.mxu0 0.0
    %1448 = vmatpush1.msra.mxu0 0.0
    %1449 = vmatprep.subr.mxu0 0.0
    %1450 = vmatpush1.msra.mxu0 0.0
    %1451 = vmatprep.subr.mxu0 0.0
    %1452 = vmatpush1.msra.mxu0 0.0
    %1453 = vmatprep.subr.mxu0 0.0
    %1454 = vmatpush1.msra.mxu0 0.0
    %1455 = vmatprep.subr.mxu0 0.0
    %1456 = vmatpush1.msra.mxu0 0.0
    %1457 = vmatprep.subr.mxu0 0.0
    %1458 = vmatpush1.msra.mxu0 0.0
    %1459 = vmatprep.subr.mxu0 0.0
    %1460 = vmatpush1.msra.mxu0 0.0
    %1461 = vmatprep.subr.mxu0 0.0
    %1462 = vmatpush1.msra.mxu0 0.0
    %1463 = vmatprep.subr.mxu0 0.0
    %1464 = vmatpush1.msra.mxu0 0.0
    %1465 = vmatprep.subr.mxu0 0.0
    %1466 = vmatpush1.msra.mxu0 0.0
    %1467 = vmatprep.subr.mxu0 0.0
    %1468 = vmatpush1.msra.mxu0 0.0
    %1469 = vmatprep.subr.mxu0 0.0
    %1470 = vmatpush1.msra.mxu0 0.0
    %1471 = vmatprep.subr.mxu0 0.0
    %1472 = vmatpush1.msra.mxu0 0.0
    %1473 = vmatprep.subr.mxu0 0.0
    %1474 = vmatpush1.msra.mxu0 0.0
    %1475 = vmatprep.subr.mxu0 0.0
    %1476 = vmatpush1.msra.mxu0 0.0
    %1477 = vmatprep.subr.mxu0 0.0
    %1478 = vmatpush1.msra.mxu0 0.0
    %1479 = vmatprep.subr.mxu0 0.0
    %1480 = vmatpush1.msra.mxu0 0.0
    %1481 = vmatprep.subr.mxu0 0.0
    %1482 = vmatpush1.msra.mxu0 0.0
    %1483 = vmatprep.mubr.f32.mxu0 0.0
    %1484 = vmatmul.mubr.f32.gmra.mrb[0].mxu0 %v72
    %v1485 = vpop.f32.mrb[0].mxu0
    %v1486 = vadd.f32 %v1417, %v1485
    %v1487 = vpop.f32.mrb[0].mxu0
    %1488 = vmatprep.mubr.f32.mxu0 0.0
    %1489 = vmatmul.mubr.f32.gmra.mrb[0].mxu0 %v75
    %v1490 = vpop.f32.mrb[0].mxu0
    %v1491 = vadd.f32 %v1417, %v1490
    %v1492 = vpop.f32.mrb[0].mxu0
    %1493 = vdwg.mxu0
    %s1494 = scalar_lea.vmem %s3, 64
    %v1495 = vld [vmem:[%s1494] sm:$0xff]
    %v1496 = vld [vmem:[%s1494 + $0x8] sm:$0xff]
    %v1497 = vld [vmem:[%s1494 + $0x10] sm:$0xff]
    %v1498 = vld [vmem:[%s1494 + $0x18] sm:$0xff]
    %s1499 = scalar_lea.vmem %s4, 2
    %v1500 = vld [vmem:[%s1499] sm:$0x1]
    %v1502 = vlaneseq
    %v1503 = vshrl.u32 %v1502, 7
    %v1504 = vsub.s32 0, %v1503
    %v1505 = vrot.slane %v1500, %v1504
    %1507 = vmatprep.subr.mxu0 0.0
    %1508 = vmatpush1.msra.mxu0 %v1495
    %1509 = vmatprep.subr.mxu0 0.0
    %1510 = vmatpush1.msra.mxu0 %v1496
    %1511 = vmatprep.subr.mxu0 0.0
    %1512 = vmatpush1.msra.mxu0 %v1497
    %1513 = vmatprep.subr.mxu0 0.0
    %1514 = vmatpush1.msra.mxu0 %v1498
    %1515 = vmatprep.subr.mxu0 0.0
    %1516 = vmatpush1.msra.mxu0 0.0
    %1517 = vmatprep.subr.mxu0 0.0
    %1518 = vmatpush1.msra.mxu0 0.0
    %1519 = vmatprep.subr.mxu0 0.0
    %1520 = vmatpush1.msra.mxu0 0.0
    %1521 = vmatprep.subr.mxu0 0.0
    %1522 = vmatpush1.msra.mxu0 0.0
    %1523 = vmatprep.subr.mxu0 0.0
    %1524 = vmatpush1.msra.mxu0 0.0
    %1525 = vmatprep.subr.mxu0 0.0
    %1526 = vmatpush1.msra.mxu0 0.0
    %1527 = vmatprep.subr.mxu0 0.0
    %1528 = vmatpush1.msra.mxu0 0.0
    %1529 = vmatprep.subr.mxu0 0.0
    %1530 = vmatpush1.msra.mxu0 0.0
    %1531 = vmatprep.subr.mxu0 0.0
    %1532 = vmatpush1.msra.mxu0 0.0
    %1533 = vmatprep.subr.mxu0 0.0
    %1534 = vmatpush1.msra.mxu0 0.0
    %1535 = vmatprep.subr.mxu0 0.0
    %1536 = vmatpush1.msra.mxu0 0.0
    %1537 = vmatprep.subr.mxu0 0.0
    %1538 = vmatpush1.msra.mxu0 0.0
    %1539 = vmatprep.subr.mxu0 0.0
    %1540 = vmatpush1.msra.mxu0 0.0
    %1541 = vmatprep.subr.mxu0 0.0
    %1542 = vmatpush1.msra.mxu0 0.0
    %1543 = vmatprep.subr.mxu0 0.0
    %1544 = vmatpush1.msra.mxu0 0.0
    %1545 = vmatprep.subr.mxu0 0.0
    %1546 = vmatpush1.msra.mxu0 0.0
    %1547 = vmatprep.subr.mxu0 0.0
    %1548 = vmatpush1.msra.mxu0 0.0
    %1549 = vmatprep.subr.mxu0 0.0
    %1550 = vmatpush1.msra.mxu0 0.0
    %1551 = vmatprep.subr.mxu0 0.0
    %1552 = vmatpush1.msra.mxu0 0.0
    %1553 = vmatprep.subr.mxu0 0.0
    %1554 = vmatpush1.msra.mxu0 0.0
    %1555 = vmatprep.subr.mxu0 0.0
    %1556 = vmatpush1.msra.mxu0 0.0
    %1557 = vmatprep.subr.mxu0 0.0
    %1558 = vmatpush1.msra.mxu0 0.0
    %1559 = vmatprep.subr.mxu0 0.0
    %1560 = vmatpush1.msra.mxu0 0.0
    %1561 = vmatprep.subr.mxu0 0.0
    %1562 = vmatpush1.msra.mxu0 0.0
    %1563 = vmatprep.subr.mxu0 0.0
    %1564 = vmatpush1.msra.mxu0 0.0
    %1565 = vmatprep.subr.mxu0 0.0
    %1566 = vmatpush1.msra.mxu0 0.0
    %1567 = vmatprep.subr.mxu0 0.0
    %1568 = vmatpush1.msra.mxu0 0.0
    %1569 = vmatprep.subr.mxu0 0.0
    %1570 = vmatpush1.msra.mxu0 0.0
    %1571 = vmatprep.mubr.f32.mxu0 0.0
    %1572 = vmatmul.mubr.f32.gmra.mrb[0].mxu0 %v72
    %v1573 = vpop.f32.mrb[0].mxu0
    %v1574 = vadd.f32 %v1505, %v1573
    %v1575 = vpop.f32.mrb[0].mxu0
    %1576 = vmatprep.mubr.f32.mxu0 0.0
    %1577 = vmatmul.mubr.f32.gmra.mrb[0].mxu0 %v75
    %v1578 = vpop.f32.mrb[0].mxu0
    %v1579 = vadd.f32 %v1505, %v1578
    %v1580 = vpop.f32.mrb[0].mxu0
    %1581 = vdwg.mxu0
    %s1582 = scalar_lea.vmem %s5, 64
    %v1583 = vld [vmem:[%s1582] sm:$0xff]
    %v1584 = vld [vmem:[%s1582 + $0x8] sm:$0xff]
    %v1585 = vld [vmem:[%s1582 + $0x10] sm:$0xff]
    %v1586 = vld [vmem:[%s1582 + $0x18] sm:$0xff]
    %s1587 = scalar_lea.vmem %s6, 2
    %v1588 = vld [vmem:[%s1587] sm:$0x1]
    %v1590 = vlaneseq
    %v1591 = vshrl.u32 %v1590, 7
    %v1592 = vsub.s32 0, %v1591
    %v1593 = vrot.slane %v1588, %v1592
    %1595 = vmatprep.subr.mxu0 0.0
    %1596 = vmatpush1.msra.mxu0 %v1583
    %1597 = vmatprep.subr.mxu0 0.0
    %1598 = vmatpush1.msra.mxu0 %v1584
    %1599 = vmatprep.subr.mxu0 0.0
    %1600 = vmatpush1.msra.mxu0 %v1585
    %1601 = vmatprep.subr.mxu0 0.0
    %1602 = vmatpush1.msra.mxu0 %v1586
    %1603 = vmatprep.subr.mxu0 0.0
    %1604 = vmatpush1.msra.mxu0 0.0
    %1605 = vmatprep.subr.mxu0 0.0
    %1606 = vmatpush1.msra.mxu0 0.0
    %1607 = vmatprep.subr.mxu0 0.0
    %1608 = vmatpush1.msra.mxu0 0.0
    %1609 = vmatprep.subr.mxu0 0.0
    %1610 = vmatpush1.msra.mxu0 0.0
    %1611 = vmatprep.subr.mxu0 0.0
    %1612 = vmatpush1.msra.mxu0 0.0
    %1613 = vmatprep.subr.mxu0 0.0
    %1614 = vmatpush1.msra.mxu0 0.0
    %1615 = vmatprep.subr.mxu0 0.0
    %1616 = vmatpush1.msra.mxu0 0.0
    %1617 = vmatprep.subr.mxu0 0.0
    %1618 = vmatpush1.msra.mxu0 0.0
    %1619 = vmatprep.subr.mxu0 0.0
    %1620 = vmatpush1.msra.mxu0 0.0
    %1621 = vmatprep.subr.mxu0 0.0
    %1622 = vmatpush1.msra.mxu0 0.0
    %1623 = vmatprep.subr.mxu0 0.0
    %1624 = vmatpush1.msra.mxu0 0.0
    %1625 = vmatprep.subr.mxu0 0.0
    %1626 = vmatpush1.msra.mxu0 0.0
    %1627 = vmatprep.subr.mxu0 0.0
    %1628 = vmatpush1.msra.mxu0 0.0
    %1629 = vmatprep.subr.mxu0 0.0
    %1630 = vmatpush1.msra.mxu0 0.0
    %1631 = vmatprep.subr.mxu0 0.0
    %1632 = vmatpush1.msra.mxu0 0.0
    %1633 = vmatprep.subr.mxu0 0.0
    %1634 = vmatpush1.msra.mxu0 0.0
    %1635 = vmatprep.subr.mxu0 0.0
    %1636 = vmatpush1.msra.mxu0 0.0
    %1637 = vmatprep.subr.mxu0 0.0
    %1638 = vmatpush1.msra.mxu0 0.0
    %1639 = vmatprep.subr.mxu0 0.0
    %1640 = vmatpush1.msra.mxu0 0.0
    %1641 = vmatprep.subr.mxu0 0.0
    %1642 = vmatpush1.msra.mxu0 0.0
    %1643 = vmatprep.subr.mxu0 0.0
    %1644 = vmatpush1.msra.mxu0 0.0
    %1645 = vmatprep.subr.mxu0 0.0
    %1646 = vmatpush1.msra.mxu0 0.0
    %1647 = vmatprep.subr.mxu0 0.0
    %1648 = vmatpush1.msra.mxu0 0.0
    %1649 = vmatprep.subr.mxu0 0.0
    %1650 = vmatpush1.msra.mxu0 0.0
    %1651 = vmatprep.subr.mxu0 0.0
    %1652 = vmatpush1.msra.mxu0 0.0
    %1653 = vmatprep.subr.mxu0 0.0
    %1654 = vmatpush1.msra.mxu0 0.0
    %1655 = vmatprep.subr.mxu0 0.0
    %1656 = vmatpush1.msra.mxu0 0.0
    %1657 = vmatprep.subr.mxu0 0.0
    %1658 = vmatpush1.msra.mxu0 0.0
    %1659 = vmatprep.mubr.f32.mxu0 0.0
    %1660 = vmatmul.mubr.f32.gmra.mrb[0].mxu0 %v72
    %v1661 = vpop.f32.mrb[0].mxu0
    %v1662 = vadd.f32 %v1593, %v1661
    %v1663 = vpop.f32.mrb[0].mxu0
    %1664 = vmatprep.mubr.f32.mxu0 0.0
    %1665 = vmatmul.mubr.f32.gmra.mrb[0].mxu0 %v75
    %v1666 = vpop.f32.mrb[0].mxu0
    %v1667 = vadd.f32 %v1593, %v1666
    %v1668 = vpop.f32.mrb[0].mxu0
    %1669 = vdwg.mxu0
    %v1671 = vsel %vm324, %v1486, 0
    %v1674 = vsel %vm324, %v1574, 0
    %1676 = vmatprep.subr.mxu0 0.0
    %1677 = vmatpush1.xpose.msra.mxu0 %v1674
    %1678 = vmatprep.subr.mxu0 0.0
    %1679 = vmatpush1.xpose.msra.mxu0 0.0
    %1680 = vmatprep.subr.mxu0 0.0
    %1681 = vmatpush1.xpose.msra.mxu0 0.0
    %1682 = vmatprep.subr.mxu0 0.0
    %1683 = vmatpush1.xpose.msra.mxu0 0.0
    %1684 = vmatprep.subr.mxu0 0.0
    %1685 = vmatpush1.xpose.msra.mxu0 0.0
    %1686 = vmatprep.subr.mxu0 0.0
    %1687 = vmatpush1.xpose.msra.mxu0 0.0
    %1688 = vmatprep.subr.mxu0 0.0
    %1689 = vmatpush1.xpose.msra.mxu0 0.0
    %1690 = vmatprep.subr.mxu0 0.0
    %1691 = vmatpush1.xpose.msra.mxu0 0.0
    %1692 = vmatprep.subr.mxu0 0.0
    %1693 = vmatpush1.xpose.msra.mxu0 0.0
    %1694 = vmatprep.subr.mxu0 0.0
    %1695 = vmatpush1.xpose.msra.mxu0 0.0
    %1696 = vmatprep.subr.mxu0 0.0
    %1697 = vmatpush1.xpose.msra.mxu0 0.0
    %1698 = vmatprep.subr.mxu0 0.0
    %1699 = vmatpush1.xpose.msra.mxu0 0.0
    %1700 = vmatprep.subr.mxu0 0.0
    %1701 = vmatpush1.xpose.msra.mxu0 0.0
    %1702 = vmatprep.subr.mxu0 0.0
    %1703 = vmatpush1.xpose.msra.mxu0 0.0
    %1704 = vmatprep.subr.mxu0 0.0
    %1705 = vmatpush1.xpose.msra.mxu0 0.0
    %1706 = vmatprep.subr.mxu0 0.0
    %1707 = vmatpush1.xpose.msra.mxu0 0.0
    %1708 = vmatprep.subr.mxu0 0.0
    %1709 = vmatpush1.xpose.msra.mxu0 0.0
    %1710 = vmatprep.subr.mxu0 0.0
    %1711 = vmatpush1.xpose.msra.mxu0 0.0
    %1712 = vmatprep.subr.mxu0 0.0
    %1713 = vmatpush1.xpose.msra.mxu0 0.0
    %1714 = vmatprep.subr.mxu0 0.0
    %1715 = vmatpush1.xpose.msra.mxu0 0.0
    %1716 = vmatprep.subr.mxu0 0.0
    %1717 = vmatpush1.xpose.msra.mxu0 0.0
    %1718 = vmatprep.subr.mxu0 0.0
    %1719 = vmatpush1.xpose.msra.mxu0 0.0
    %1720 = vmatprep.subr.mxu0 0.0
    %1721 = vmatpush1.xpose.msra.mxu0 0.0
    %1722 = vmatprep.subr.mxu0 0.0
    %1723 = vmatpush1.xpose.msra.mxu0 0.0
    %1724 = vmatprep.subr.mxu0 0.0
    %1725 = vmatpush1.xpose.msra.mxu0 0.0
    %1726 = vmatprep.subr.mxu0 0.0
    %1727 = vmatpush1.xpose.msra.mxu0 0.0
    %1728 = vmatprep.subr.mxu0 0.0
    %1729 = vmatpush1.xpose.msra.mxu0 0.0
    %1730 = vmatprep.subr.mxu0 0.0
    %1731 = vmatpush1.xpose.msra.mxu0 0.0
    %1732 = vmatprep.subr.mxu0 0.0
    %1733 = vmatpush1.xpose.msra.mxu0 0.0
    %1734 = vmatprep.subr.mxu0 0.0
    %1735 = vmatpush1.xpose.msra.mxu0 0.0
    %1736 = vmatprep.subr.mxu0 0.0
    %1737 = vmatpush1.xpose.msra.mxu0 0.0
    %1738 = vmatprep.subr.mxu0 0.0
    %1739 = vmatpush1.xpose.msra.mxu0 0.0
    %1740 = vmatprep.mubr.f32.mxu0 0.0
    %1741 = vmatmul.mubr.f32.gmra.mrb[0].mxu0 %v1671
    %v1742 = vpop.f32.mrb[0].mxu0
    %v1743 = vadd.f32 0.0, %v1742
    %v1744 = vpop.f32.mrb[0].mxu0
    %1745 = vdwg.mxu0
    %v1747 = vsel %vm324, %v1491, 0
    %v1750 = vsel %vm324, %v1579, 0
    %1752 = vmatprep.subr.mxu0 0.0
    %1753 = vmatpush1.xpose.msra.mxu0 %v1750
    %1754 = vmatprep.subr.mxu0 0.0
    %1755 = vmatpush1.xpose.msra.mxu0 0.0
    %1756 = vmatprep.subr.mxu0 0.0
    %1757 = vmatpush1.xpose.msra.mxu0 0.0
    %1758 = vmatprep.subr.mxu0 0.0
    %1759 = vmatpush1.xpose.msra.mxu0 0.0
    %1760 = vmatprep.subr.mxu0 0.0
    %1761 = vmatpush1.xpose.msra.mxu0 0.0
    %1762 = vmatprep.subr.mxu0 0.0
    %1763 = vmatpush1.xpose.msra.mxu0 0.0
    %1764 = vmatprep.subr.mxu0 0.0
    %1765 = vmatpush1.xpose.msra.mxu0 0.0
    %1766 = vmatprep.subr.mxu0 0.0
    %1767 = vmatpush1.xpose.msra.mxu0 0.0
    %1768 = vmatprep.subr.mxu0 0.0
    %1769 = vmatpush1.xpose.msra.mxu0 0.0
    %1770 = vmatprep.subr.mxu0 0.0
    %1771 = vmatpush1.xpose.msra.mxu0 0.0
    %1772 = vmatprep.subr.mxu0 0.0
    %1773 = vmatpush1.xpose.msra.mxu0 0.0
    %1774 = vmatprep.subr.mxu0 0.0
    %1775 = vmatpush1.xpose.msra.mxu0 0.0
    %1776 = vmatprep.subr.mxu0 0.0
    %1777 = vmatpush1.xpose.msra.mxu0 0.0
    %1778 = vmatprep.subr.mxu0 0.0
    %1779 = vmatpush1.xpose.msra.mxu0 0.0
    %1780 = vmatprep.subr.mxu0 0.0
    %1781 = vmatpush1.xpose.msra.mxu0 0.0
    %1782 = vmatprep.subr.mxu0 0.0
    %1783 = vmatpush1.xpose.msra.mxu0 0.0
    %1784 = vmatprep.subr.mxu0 0.0
    %1785 = vmatpush1.xpose.msra.mxu0 0.0
    %1786 = vmatprep.subr.mxu0 0.0
    %1787 = vmatpush1.xpose.msra.mxu0 0.0
    %1788 = vmatprep.subr.mxu0 0.0
    %1789 = vmatpush1.xpose.msra.mxu0 0.0
    %1790 = vmatprep.subr.mxu0 0.0
    %1791 = vmatpush1.xpose.msra.mxu0 0.0
    %1792 = vmatprep.subr.mxu0 0.0
    %1793 = vmatpush1.xpose.msra.mxu0 0.0
    %1794 = vmatprep.subr.mxu0 0.0
    %1795 = vmatpush1.xpose.msra.mxu0 0.0
    %1796 = vmatprep.subr.mxu0 0.0
    %1797 = vmatpush1.xpose.msra.mxu0 0.0
    %1798 = vmatprep.subr.mxu0 0.0
    %1799 = vmatpush1.xpose.msra.mxu0 0.0
    %1800 = vmatprep.subr.mxu0 0.0
    %1801 = vmatpush1.xpose.msra.mxu0 0.0
    %1802 = vmatprep.subr.mxu0 0.0
    %1803 = vmatpush1.xpose.msra.mxu0 0.0
    %1804 = vmatprep.subr.mxu0 0.0
    %1805 = vmatpush1.xpose.msra.mxu0 0.0
    %1806 = vmatprep.subr.mxu0 0.0
    %1807 = vmatpush1.xpose.msra.mxu0 0.0
    %1808 = vmatprep.subr.mxu0 0.0
    %1809 = vmatpush1.xpose.msra.mxu0 0.0
    %1810 = vmatprep.subr.mxu0 0.0
    %1811 = vmatpush1.xpose.msra.mxu0 0.0
    %1812 = vmatprep.subr.mxu0 0.0
    %1813 = vmatpush1.xpose.msra.mxu0 0.0
    %1814 = vmatprep.subr.mxu0 0.0
    %1815 = vmatpush1.xpose.msra.mxu0 0.0
    %1816 = vmatprep.mubr.f32.mxu0 0.0
    %1817 = vmatmul.mubr.f32.gmra.mrb[0].mxu0 %v1747
    %v1818 = vpop.f32.mrb[0].mxu0
    %v1819 = vadd.f32 0.0, %v1818
    %v1820 = vpop.f32.mrb[0].mxu0
    %1821 = vdwg.mxu0
    %v1822 = vsel %vm324, %v1743, -inf
    %1823 = vmax.xlane.f32.xlu0 %v1822
    %v1824 = vpop.xlane.xlu0 %1823
    %v1825 = vsel %vm324, %v1819, -inf
    %1826 = vmax.xlane.f32.xlu0 %v1825
    %v1827 = vpop.xlane.xlu0 %1826
    %v1828 = vsub.f32 %v1743, %v1824
    %v1829 = vsub.f32 %v1819, %v1827
    %v1830 = vmul.f32 %v1828, 1.442695
    %v1831 = vpow.pop %v1830
    %v1832 = vmul.f32 %v1829, 1.442695
    %v1833 = vpow.pop %v1832
    %v1834 = vsel %vm324, %v1831, 0.0
    %1835 = vadd.xlane.f32.xlu0 %v1834
    %v1836 = vpop.xlane.xlu0 %1835
    %v1837 = vsel %vm324, %v1833, 0.0
    %1838 = vadd.xlane.f32.xlu0 %v1837
    %v1839 = vpop.xlane.xlu0 %1838
    %v1840 = vrcp.pop %v1836
    %v1841 = vrcp.pop %v1839
    %v1842 = vmul.f32 %v1836, %v1840
    %v1843 = vmul.f32 %v1839, %v1841
    %v1844 = vsub.f32 2.0, %v1842
    %v1845 = vsub.f32 2.0, %v1843
    %v1846 = vmul.f32 %v1840, %v1844
    %v1847 = vmul.f32 %v1841, %v1845
    %v1848 = vmul.f32 %v1831, %v1846
    %v1849 = vmul.f32 %v1833, %v1847
    %v1851 = vsel %vm324, %v1848, 0
    %1853 = vmatprep.subr.mxu0 0.0
    %1854 = vmatpush1.msra.mxu0 %v1662
    %1855 = vmatprep.subr.mxu0 0.0
    %1856 = vmatpush1.msra.mxu0 0.0
    %1857 = vmatprep.subr.mxu0 0.0
    %1858 = vmatpush1.msra.mxu0 0.0
    %1859 = vmatprep.subr.mxu0 0.0
    %1860 = vmatpush1.msra.mxu0 0.0
    %1861 = vmatprep.subr.mxu0 0.0
    %1862 = vmatpush1.msra.mxu0 0.0
    %1863 = vmatprep.subr.mxu0 0.0
    %1864 = vmatpush1.msra.mxu0 0.0
    %1865 = vmatprep.subr.mxu0 0.0
    %1866 = vmatpush1.msra.mxu0 0.0
    %1867 = vmatprep.subr.mxu0 0.0
    %1868 = vmatpush1.msra.mxu0 0.0
    %1869 = vmatprep.subr.mxu0 0.0
    %1870 = vmatpush1.msra.mxu0 0.0
    %1871 = vmatprep.subr.mxu0 0.0
    %1872 = vmatpush1.msra.mxu0 0.0
    %1873 = vmatprep.subr.mxu0 0.0
    %1874 = vmatpush1.msra.mxu0 0.0
    %1875 = vmatprep.subr.mxu0 0.0
    %1876 = vmatpush1.msra.mxu0 0.0
    %1877 = vmatprep.subr.mxu0 0.0
    %1878 = vmatpush1.msra.mxu0 0.0
    %1879 = vmatprep.subr.mxu0 0.0
    %1880 = vmatpush1.msra.mxu0 0.0
    %1881 = vmatprep.subr.mxu0 0.0
    %1882 = vmatpush1.msra.mxu0 0.0
    %1883 = vmatprep.subr.mxu0 0.0
    %1884 = vmatpush1.msra.mxu0 0.0
    %1885 = vmatprep.subr.mxu0 0.0
    %1886 = vmatpush1.msra.mxu0 0.0
    %1887 = vmatprep.subr.mxu0 0.0
    %1888 = vmatpush1.msra.mxu0 0.0
    %1889 = vmatprep.subr.mxu0 0.0
    %1890 = vmatpush1.msra.mxu0 0.0
    %1891 = vmatprep.subr.mxu0 0.0
    %1892 = vmatpush1.msra.mxu0 0.0
    %1893 = vmatprep.subr.mxu0 0.0
    %1894 = vmatpush1.msra.mxu0 0.0
    %1895 = vmatprep.subr.mxu0 0.0
    %1896 = vmatpush1.msra.mxu0 0.0
    %1897 = vmatprep.subr.mxu0 0.0
    %1898 = vmatpush1.msra.mxu0 0.0
    %1899 = vmatprep.subr.mxu0 0.0
    %1900 = vmatpush1.msra.mxu0 0.0
    %1901 = vmatprep.subr.mxu0 0.0
    %1902 = vmatpush1.msra.mxu0 0.0
    %1903 = vmatprep.subr.mxu0 0.0
    %1904 = vmatpush1.msra.mxu0 0.0
    %1905 = vmatprep.subr.mxu0 0.0
    %1906 = vmatpush1.msra.mxu0 0.0
    %1907 = vmatprep.subr.mxu0 0.0
    %1908 = vmatpush1.msra.mxu0 0.0
    %1909 = vmatprep.subr.mxu0 0.0
    %1910 = vmatpush1.msra.mxu0 0.0
    %1911 = vmatprep.subr.mxu0 0.0
    %1912 = vmatpush1.msra.mxu0 0.0
    %1913 = vmatprep.subr.mxu0 0.0
    %1914 = vmatpush1.msra.mxu0 0.0
    %1915 = vmatprep.subr.mxu0 0.0
    %1916 = vmatpush1.msra.mxu0 0.0
    %1917 = vmatprep.mubr.f32.mxu0 0.0
    %1918 = vmatmul.mubr.f32.gmra.mrb[0].mxu0 %v1851
    %v1919 = vpop.f32.mrb[0].mxu0
    %v1920 = vadd.f32 0.0, %v1919
    %v1921 = vpop.f32.mrb[0].mxu0
    %1922 = vdwg.mxu0
    %v1924 = vsel %vm324, %v1849, 0
    %1926 = vmatprep.subr.mxu0 0.0
    %1927 = vmatpush1.msra.mxu0 %v1667
    %1928 = vmatprep.subr.mxu0 0.0
    %1929 = vmatpush1.msra.mxu0 0.0
    %1930 = vmatprep.subr.mxu0 0.0
    %1931 = vmatpush1.msra.mxu0 0.0
    %1932 = vmatprep.subr.mxu0 0.0
    %1933 = vmatpush1.msra.mxu0 0.0
    %1934 = vmatprep.subr.mxu0 0.0
    %1935 = vmatpush1.msra.mxu0 0.0
    %1936 = vmatprep.subr.mxu0 0.0
    %1937 = vmatpush1.msra.mxu0 0.0
    %1938 = vmatprep.subr.mxu0 0.0
    %1939 = vmatpush1.msra.mxu0 0.0
    %1940 = vmatprep.subr.mxu0 0.0
    %1941 = vmatpush1.msra.mxu0 0.0
    %1942 = vmatprep.subr.mxu0 0.0
    %1943 = vmatpush1.msra.mxu0 0.0
    %1944 = vmatprep.subr.mxu0 0.0
    %1945 = vmatpush1.msra.mxu0 0.0
    %1946 = vmatprep.subr.mxu0 0.0
    %1947 = vmatpush1.msra.mxu0 0.0
    %1948 = vmatprep.subr.mxu0 0.0
    %1949 = vmatpush1.msra.mxu0 0.0
    %1950 = vmatprep.subr.mxu0 0.0
    %1951 = vmatpush1.msra.mxu0 0.0
    %1952 = vmatprep.subr.mxu0 0.0
    %1953 = vmatpush1.msra.mxu0 0.0
    %1954 = vmatprep.subr.mxu0 0.0
    %1955 = vmatpush1.msra.mxu0 0.0
    %1956 = vmatprep.subr.mxu0 0.0
    %1957 = vmatpush1.msra.mxu0 0.0
    %1958 = vmatprep.subr.mxu0 0.0
    %1959 = vmatpush1.msra.mxu0 0.0
    %1960 = vmatprep.subr.mxu0 0.0
    %1961 = vmatpush1.msra.mxu0 0.0
    %1962 = vmatprep.subr.mxu0 0.0
    %1963 = vmatpush1.msra.mxu0 0.0
    %1964 = vmatprep.subr.mxu0 0.0
    %1965 = vmatpush1.msra.mxu0 0.0
    %1966 = vmatprep.subr.mxu0 0.0
    %1967 = vmatpush1.msra.mxu0 0.0
    %1968 = vmatprep.subr.mxu0 0.0
    %1969 = vmatpush1.msra.mxu0 0.0
    %1970 = vmatprep.subr.mxu0 0.0
    %1971 = vmatpush1.msra.mxu0 0.0
    %1972 = vmatprep.subr.mxu0 0.0
    %1973 = vmatpush1.msra.mxu0 0.0
    %1974 = vmatprep.subr.mxu0 0.0
    %1975 = vmatpush1.msra.mxu0 0.0
    %1976 = vmatprep.subr.mxu0 0.0
    %1977 = vmatpush1.msra.mxu0 0.0
    %1978 = vmatprep.subr.mxu0 0.0
    %1979 = vmatpush1.msra.mxu0 0.0
    %1980 = vmatprep.subr.mxu0 0.0
    %1981 = vmatpush1.msra.mxu0 0.0
    %1982 = vmatprep.subr.mxu0 0.0
    %1983 = vmatpush1.msra.mxu0 0.0
    %1984 = vmatprep.subr.mxu0 0.0
    %1985 = vmatpush1.msra.mxu0 0.0
    %1986 = vmatprep.subr.mxu0 0.0
    %1987 = vmatpush1.msra.mxu0 0.0
    %1988 = vmatprep.subr.mxu0 0.0
    %1989 = vmatpush1.msra.mxu0 0.0
    %1990 = vmatprep.mubr.f32.mxu0 0.0
    %1991 = vmatmul.mubr.f32.gmra.mrb[0].mxu0 %v1924
    %v1992 = vpop.f32.mrb[0].mxu0
    %v1993 = vadd.f32 0.0, %v1992
    %v1994 = vpop.f32.mrb[0].mxu0
    %1995 = vdwg.mxu0
    %s1996 = scalar_lea.vmem %s7, 16
    %v1997 = vld [vmem:[%s1996] sm:$0xff]
    %v1999 = vsel %vm324, %v1920, 0
    %v2002 = vsel %vm324, %v1993, 0
    %2004 = vmatprep.subr.mxu0 0.0
    %2005 = vmatpush1.msra.mxu0 %v1997
    %2006 = vmatprep.subr.mxu0 0.0
    %2007 = vmatpush1.msra.mxu0 0.0
    %2008 = vmatprep.subr.mxu0 0.0
    %2009 = vmatpush1.msra.mxu0 0.0
    %2010 = vmatprep.subr.mxu0 0.0
    %2011 = vmatpush1.msra.mxu0 0.0
    %2012 = vmatprep.subr.mxu0 0.0
    %2013 = vmatpush1.msra.mxu0 0.0
    %2014 = vmatprep.subr.mxu0 0.0
    %2015 = vmatpush1.msra.mxu0 0.0
    %2016 = vmatprep.subr.mxu0 0.0
    %2017 = vmatpush1.msra.mxu0 0.0
    %2018 = vmatprep.subr.mxu0 0.0
    %2019 = vmatpush1.msra.mxu0 0.0
    %2020 = vmatprep.subr.mxu0 0.0
    %2021 = vmatpush1.msra.mxu0 0.0
    %2022 = vmatprep.subr.mxu0 0.0
    %2023 = vmatpush1.msra.mxu0 0.0
    %2024 = vmatprep.subr.mxu0 0.0
    %2025 = vmatpush1.msra.mxu0 0.0
    %2026 = vmatprep.subr.mxu0 0.0
    %2027 = vmatpush1.msra.mxu0 0.0
    %2028 = vmatprep.subr.mxu0 0.0
    %2029 = vmatpush1.msra.mxu0 0.0
    %2030 = vmatprep.subr.mxu0 0.0
    %2031 = vmatpush1.msra.mxu0 0.0
    %2032 = vmatprep.subr.mxu0 0.0
    %2033 = vmatpush1.msra.mxu0 0.0
    %2034 = vmatprep.subr.mxu0 0.0
    %2035 = vmatpush1.msra.mxu0 0.0
    %2036 = vmatprep.subr.mxu0 0.0
    %2037 = vmatpush1.msra.mxu0 0.0
    %2038 = vmatprep.subr.mxu0 0.0
    %2039 = vmatpush1.msra.mxu0 0.0
    %2040 = vmatprep.subr.mxu0 0.0
    %2041 = vmatpush1.msra.mxu0 0.0
    %2042 = vmatprep.subr.mxu0 0.0
    %2043 = vmatpush1.msra.mxu0 0.0
    %2044 = vmatprep.subr.mxu0 0.0
    %2045 = vmatpush1.msra.mxu0 0.0
    %2046 = vmatprep.subr.mxu0 0.0
    %2047 = vmatpush1.msra.mxu0 0.0
    %2048 = vmatprep.subr.mxu0 0.0
    %2049 = vmatpush1.msra.mxu0 0.0
    %2050 = vmatprep.subr.mxu0 0.0
    %2051 = vmatpush1.msra.mxu0 0.0
    %2052 = vmatprep.subr.mxu0 0.0
    %2053 = vmatpush1.msra.mxu0 0.0
    %2054 = vmatprep.subr.mxu0 0.0
    %2055 = vmatpush1.msra.mxu0 0.0
    %2056 = vmatprep.subr.mxu0 0.0
    %2057 = vmatpush1.msra.mxu0 0.0
    %2058 = vmatprep.subr.mxu0 0.0
    %2059 = vmatpush1.msra.mxu0 0.0
    %2060 = vmatprep.subr.mxu0 0.0
    %2061 = vmatpush1.msra.mxu0 0.0
    %2062 = vmatprep.subr.mxu0 0.0
    %2063 = vmatpush1.msra.mxu0 0.0
    %2064 = vmatprep.subr.mxu0 0.0
    %2065 = vmatpush1.msra.mxu0 0.0
    %2066 = vmatprep.subr.mxu0 0.0
    %2067 = vmatpush1.msra.mxu0 0.0
    %2068 = vmatprep.mubr.f32.mxu0 0.0
    %2069 = vmatmul.mubr.f32.gmra.mrb[0].mxu0 %v1999
    %v2070 = vpop.f32.mrb[0].mxu0
    %v2071 = vadd.f32 0.0, %v2070
    %v2072 = vpop.f32.mrb[0].mxu0
    %2073 = vmatprep.mubr.f32.mxu0 0.0
    %2074 = vmatmul.mubr.f32.gmra.mrb[0].mxu0 %v2002
    %v2075 = vpop.f32.mrb[0].mxu0
    %v2076 = vadd.f32 0.0, %v2075
    %v2077 = vpop.f32.mrb[0].mxu0
    %2078 = vdwg.mxu0
    %v2079 = vadd.f32 %v1398, %v2071
    %v2080 = vadd.f32 %v1403, %v2076
    %s2081 = scalar_lea.vmem %s1, 96
    %v2082 = vld [vmem:[%s2081] sm:$0xff]
    %v2083 = vld [vmem:[%s2081 + $0x8] sm:$0xff]
    %v2084 = vld [vmem:[%s2081 + $0x10] sm:$0xff]
    %v2085 = vld [vmem:[%s2081 + $0x18] sm:$0xff]
    %s2086 = scalar_lea.vmem %s2, 3
    %v2087 = vld [vmem:[%s2086] sm:$0x1]
    %v2089 = vlaneseq
    %v2090 = vshrl.u32 %v2089, 7
    %v2091 = vsub.s32 0, %v2090
    %v2092 = vrot.slane %v2087, %v2091
    %2094 = vmatprep.subr.mxu0 0.0
    %2095 = vmatpush1.msra.mxu0 %v2082
    %2096 = vmatprep.subr.mxu0 0.0
    %2097 = vmatpush1.msra.mxu0 %v2083
    %2098 = vmatprep.subr.mxu0 0.0
    %2099 = vmatpush1.msra.mxu0 %v2084
    %2100 = vmatprep.subr.mxu0 0.0
    %2101 = vmatpush1.msra.mxu0 %v2085
    %2102 = vmatprep.subr.mxu0 0.0
    %2103 = vmatpush1.msra.mxu0 0.0
    %2104 = vmatprep.subr.mxu0 0.0
    %2105 = vmatpush1.msra.mxu0 0.0
    %2106 = vmatprep.subr.mxu0 0.0
    %2107 = vmatpush1.msra.mxu0 0.0
    %2108 = vmatprep.subr.mxu0 0.0
    %2109 = vmatpush1.msra.mxu0 0.0
    %2110 = vmatprep.subr.mxu0 0.0
    %2111 = vmatpush1.msra.mxu0 0.0
    %2112 = vmatprep.subr.mxu0 0.0
    %2113 = vmatpush1.msra.mxu0 0.0
    %2114 = vmatprep.subr.mxu0 0.0
    %2115 = vmatpush1.msra.mxu0 0.0
    %2116 = vmatprep.subr.mxu0 0.0
    %2117 = vmatpush1.msra.mxu0 0.0
    %2118 = vmatprep.subr.mxu0 0.0
    %2119 = vmatpush1.msra.mxu0 0.0
    %2120 = vmatprep.subr.mxu0 0.0
    %2121 = vmatpush1.msra.mxu0 0.0
    %2122 = vmatprep.subr.mxu0 0.0
    %2123 = vmatpush1.msra.mxu0 0.0
    %2124 = vmatprep.subr.mxu0 0.0
    %2125 = vmatpush1.msra.mxu0 0.0
    %2126 = vmatprep.subr.mxu0 0.0
    %2127 = vmatpush1.msra.mxu0 0.0
    %2128 = vmatprep.subr.mxu0 0.0
    %2129 = vmatpush1.msra.mxu0 0.0
    %2130 = vmatprep.subr.mxu0 0.0
    %2131 = vmatpush1.msra.mxu0 0.0
    %2132 = vmatprep.subr.mxu0 0.0
    %2133 = vmatpush1.msra.mxu0 0.0
    %2134 = vmatprep.subr.mxu0 0.0
    %2135 = vmatpush1.msra.mxu0 0.0
    %2136 = vmatprep.subr.mxu0 0.0
    %2137 = vmatpush1.msra.mxu0 0.0
    %2138 = vmatprep.subr.mxu0 0.0
    %2139 = vmatpush1.msra.mxu0 0.0
    %2140 = vmatprep.subr.mxu0 0.0
    %2141 = vmatpush1.msra.mxu0 0.0
    %2142 = vmatprep.subr.mxu0 0.0
    %2143 = vmatpush1.msra.mxu0 0.0
    %2144 = vmatprep.subr.mxu0 0.0
    %2145 = vmatpush1.msra.mxu0 0.0
    %2146 = vmatprep.subr.mxu0 0.0
    %2147 = vmatpush1.msra.mxu0 0.0
    %2148 = vmatprep.subr.mxu0 0.0
    %2149 = vmatpush1.msra.mxu0 0.0
    %2150 = vmatprep.subr.mxu0 0.0
    %2151 = vmatpush1.msra.mxu0 0.0
    %2152 = vmatprep.subr.mxu0 0.0
    %2153 = vmatpush1.msra.mxu0 0.0
    %2154 = vmatprep.subr.mxu0 0.0
    %2155 = vmatpush1.msra.mxu0 0.0
    %2156 = vmatprep.subr.mxu0 0.0
    %2157 = vmatpush1.msra.mxu0 0.0
    %2158 = vmatprep.mubr.f32.mxu0 0.0
    %2159 = vmatmul.mubr.f32.gmra.mrb[0].mxu0 %v72
    %v2160 = vpop.f32.mrb[0].mxu0
    %v2161 = vadd.f32 %v2092, %v2160
    %v2162 = vpop.f32.mrb[0].mxu0
    %2163 = vmatprep.mubr.f32.mxu0 0.0
    %2164 = vmatmul.mubr.f32.gmra.mrb[0].mxu0 %v75
    %v2165 = vpop.f32.mrb[0].mxu0
    %v2166 = vadd.f32 %v2092, %v2165
    %v2167 = vpop.f32.mrb[0].mxu0
    %2168 = vdwg.mxu0
    %s2169 = scalar_lea.vmem %s3, 96
    %v2170 = vld [vmem:[%s2169] sm:$0xff]
    %v2171 = vld [vmem:[%s2169 + $0x8] sm:$0xff]
    %v2172 = vld [vmem:[%s2169 + $0x10] sm:$0xff]
    %v2173 = vld [vmem:[%s2169 + $0x18] sm:$0xff]
    %s2174 = scalar_lea.vmem %s4, 3
    %v2175 = vld [vmem:[%s2174] sm:$0x1]
    %v2177 = vlaneseq
    %v2178 = vshrl.u32 %v2177, 7
    %v2179 = vsub.s32 0, %v2178
    %v2180 = vrot.slane %v2175, %v2179
    %2182 = vmatprep.subr.mxu0 0.0
    %2183 = vmatpush1.msra.mxu0 %v2170
    %2184 = vmatprep.subr.mxu0 0.0
    %2185 = vmatpush1.msra.mxu0 %v2171
    %2186 = vmatprep.subr.mxu0 0.0
    %2187 = vmatpush1.msra.mxu0 %v2172
    %2188 = vmatprep.subr.mxu0 0.0
    %2189 = vmatpush1.msra.mxu0 %v2173
    %2190 = vmatprep.subr.mxu0 0.0
    %2191 = vmatpush1.msra.mxu0 0.0
    %2192 = vmatprep.subr.mxu0 0.0
    %2193 = vmatpush1.msra.mxu0 0.0
    %2194 = vmatprep.subr.mxu0 0.0
    %2195 = vmatpush1.msra.mxu0 0.0
    %2196 = vmatprep.subr.mxu0 0.0
    %2197 = vmatpush1.msra.mxu0 0.0
    %2198 = vmatprep.subr.mxu0 0.0
    %2199 = vmatpush1.msra.mxu0 0.0
    %2200 = vmatprep.subr.mxu0 0.0
    %2201 = vmatpush1.msra.mxu0 0.0
    %2202 = vmatprep.subr.mxu0 0.0
    %2203 = vmatpush1.msra.mxu0 0.0
    %2204 = vmatprep.subr.mxu0 0.0
    %2205 = vmatpush1.msra.mxu0 0.0
    %2206 = vmatprep.subr.mxu0 0.0
    %2207 = vmatpush1.msra.mxu0 0.0
    %2208 = vmatprep.subr.mxu0 0.0
    %2209 = vmatpush1.msra.mxu0 0.0
    %2210 = vmatprep.subr.mxu0 0.0
    %2211 = vmatpush1.msra.mxu0 0.0
    %2212 = vmatprep.subr.mxu0 0.0
    %2213 = vmatpush1.msra.mxu0 0.0
    %2214 = vmatprep.subr.mxu0 0.0
    %2215 = vmatpush1.msra.mxu0 0.0
    %2216 = vmatprep.subr.mxu0 0.0
    %2217 = vmatpush1.msra.mxu0 0.0
    %2218 = vmatprep.subr.mxu0 0.0
    %2219 = vmatpush1.msra.mxu0 0.0
    %2220 = vmatprep.subr.mxu0 0.0
    %2221 = vmatpush1.msra.mxu0 0.0
    %2222 = vmatprep.subr.mxu0 0.0
    %2223 = vmatpush1.msra.mxu0 0.0
    %2224 = vmatprep.subr.mxu0 0.0
    %2225 = vmatpush1.msra.mxu0 0.0
    %2226 = vmatprep.subr.mxu0 0.0
    %2227 = vmatpush1.msra.mxu0 0.0
    %2228 = vmatprep.subr.mxu0 0.0
    %2229 = vmatpush1.msra.mxu0 0.0
    %2230 = vmatprep.subr.mxu0 0.0
    %2231 = vmatpush1.msra.mxu0 0.0
    %2232 = vmatprep.subr.mxu0 0.0
    %2233 = vmatpush1.msra.mxu0 0.0
    %2234 = vmatprep.subr.mxu0 0.0
    %2235 = vmatpush1.msra.mxu0 0.0
    %2236 = vmatprep.subr.mxu0 0.0
    %2237 = vmatpush1.msra.mxu0 0.0
    %2238 = vmatprep.subr.mxu0 0.0
    %2239 = vmatpush1.msra.mxu0 0.0
    %2240 = vmatprep.subr.mxu0 0.0
    %2241 = vmatpush1.msra.mxu0 0.0
    %2242 = vmatprep.subr.mxu0 0.0
    %2243 = vmatpush1.msra.mxu0 0.0
    %2244 = vmatprep.subr.mxu0 0.0
    %2245 = vmatpush1.msra.mxu0 0.0
    %2246 = vmatprep.mubr.f32.mxu0 0.0
    %2247 = vmatmul.mubr.f32.gmra.mrb[0].mxu0 %v72
    %v2248 = vpop.f32.mrb[0].mxu0
    %v2249 = vadd.f32 %v2180, %v2248
    %v2250 = vpop.f32.mrb[0].mxu0
    %2251 = vmatprep.mubr.f32.mxu0 0.0
    %2252 = vmatmul.mubr.f32.gmra.mrb[0].mxu0 %v75
    %v2253 = vpop.f32.mrb[0].mxu0
    %v2254 = vadd.f32 %v2180, %v2253
    %v2255 = vpop.f32.mrb[0].mxu0
    %2256 = vdwg.mxu0
    %s2257 = scalar_lea.vmem %s5, 96
    %v2258 = vld [vmem:[%s2257] sm:$0xff]
    %v2259 = vld [vmem:[%s2257 + $0x8] sm:$0xff]
    %v2260 = vld [vmem:[%s2257 + $0x10] sm:$0xff]
    %v2261 = vld [vmem:[%s2257 + $0x18] sm:$0xff]
    %s2262 = scalar_lea.vmem %s6, 3
    %v2263 = vld [vmem:[%s2262] sm:$0x1]
    %v2265 = vlaneseq
    %v2266 = vshrl.u32 %v2265, 7
    %v2267 = vsub.s32 0, %v2266
    %v2268 = vrot.slane %v2263, %v2267
    %2270 = vmatprep.subr.mxu0 0.0
    %2271 = vmatpush1.msra.mxu0 %v2258
    %2272 = vmatprep.subr.mxu0 0.0
    %2273 = vmatpush1.msra.mxu0 %v2259
    %2274 = vmatprep.subr.mxu0 0.0
    %2275 = vmatpush1.msra.mxu0 %v2260
    %2276 = vmatprep.subr.mxu0 0.0
    %2277 = vmatpush1.msra.mxu0 %v2261
    %2278 = vmatprep.subr.mxu0 0.0
    %2279 = vmatpush1.msra.mxu0 0.0
    %2280 = vmatprep.subr.mxu0 0.0
    %2281 = vmatpush1.msra.mxu0 0.0
    %2282 = vmatprep.subr.mxu0 0.0
    %2283 = vmatpush1.msra.mxu0 0.0
    %2284 = vmatprep.subr.mxu0 0.0
    %2285 = vmatpush1.msra.mxu0 0.0
    %2286 = vmatprep.subr.mxu0 0.0
    %2287 = vmatpush1.msra.mxu0 0.0
    %2288 = vmatprep.subr.mxu0 0.0
    %2289 = vmatpush1.msra.mxu0 0.0
    %2290 = vmatprep.subr.mxu0 0.0
    %2291 = vmatpush1.msra.mxu0 0.0
    %2292 = vmatprep.subr.mxu0 0.0
    %2293 = vmatpush1.msra.mxu0 0.0
    %2294 = vmatprep.subr.mxu0 0.0
    %2295 = vmatpush1.msra.mxu0 0.0
    %2296 = vmatprep.subr.mxu0 0.0
    %2297 = vmatpush1.msra.mxu0 0.0
    %2298 = vmatprep.subr.mxu0 0.0
    %2299 = vmatpush1.msra.mxu0 0.0
    %2300 = vmatprep.subr.mxu0 0.0
    %2301 = vmatpush1.msra.mxu0 0.0
    %2302 = vmatprep.subr.mxu0 0.0
    %2303 = vmatpush1.msra.mxu0 0.0
    %2304 = vmatprep.subr.mxu0 0.0
    %2305 = vmatpush1.msra.mxu0 0.0
    %2306 = vmatprep.subr.mxu0 0.0
    %2307 = vmatpush1.msra.mxu0 0.0
    %2308 = vmatprep.subr.mxu0 0.0
    %2309 = vmatpush1.msra.mxu0 0.0
    %2310 = vmatprep.subr.mxu0 0.0
    %2311 = vmatpush1.msra.mxu0 0.0
    %2312 = vmatprep.subr.mxu0 0.0
    %2313 = vmatpush1.msra.mxu0 0.0
    %2314 = vmatprep.subr.mxu0 0.0
    %2315 = vmatpush1.msra.mxu0 0.0
    %2316 = vmatprep.subr.mxu0 0.0
    %2317 = vmatpush1.msra.mxu0 0.0
    %2318 = vmatprep.subr.mxu0 0.0
    %2319 = vmatpush1.msra.mxu0 0.0
    %2320 = vmatprep.subr.mxu0 0.0
    %2321 = vmatpush1.msra.mxu0 0.0
    %2322 = vmatprep.subr.mxu0 0.0
    %2323 = vmatpush1.msra.mxu0 0.0
    %2324 = vmatprep.subr.mxu0 0.0
    %2325 = vmatpush1.msra.mxu0 0.0
    %2326 = vmatprep.subr.mxu0 0.0
    %2327 = vmatpush1.msra.mxu0 0.0
    %2328 = vmatprep.subr.mxu0 0.0
    %2329 = vmatpush1.msra.mxu0 0.0
    %2330 = vmatprep.subr.mxu0 0.0
    %2331 = vmatpush1.msra.mxu0 0.0
    %2332 = vmatprep.subr.mxu0 0.0
    %2333 = vmatpush1.msra.mxu0 0.0
    %2334 = vmatprep.mubr.f32.mxu0 0.0
    %2335 = vmatmul.mubr.f32.gmra.mrb[0].mxu0 %v72
    %v2336 = vpop.f32.mrb[0].mxu0
    %v2337 = vadd.f32 %v2268, %v2336
    %v2338 = vpop.f32.mrb[0].mxu0
    %2339 = vmatprep.mubr.f32.mxu0 0.0
    %2340 = vmatmul.mubr.f32.gmra.mrb[0].mxu0 %v75
    %v2341 = vpop.f32.mrb[0].mxu0
    %v2342 = vadd.f32 %v2268, %v2341
    %v2343 = vpop.f32.mrb[0].mxu0
    %2344 = vdwg.mxu0
    %v2346 = vsel %vm324, %v2161, 0
    %v2349 = vsel %vm324, %v2249, 0
    %2351 = vmatprep.subr.mxu0 0.0
    %2352 = vmatpush1.xpose.msra.mxu0 %v2349
    %2353 = vmatprep.subr.mxu0 0.0
    %2354 = vmatpush1.xpose.msra.mxu0 0.0
    %2355 = vmatprep.subr.mxu0 0.0
    %2356 = vmatpush1.xpose.msra.mxu0 0.0
    %2357 = vmatprep.subr.mxu0 0.0
    %2358 = vmatpush1.xpose.msra.mxu0 0.0
    %2359 = vmatprep.subr.mxu0 0.0
    %2360 = vmatpush1.xpose.msra.mxu0 0.0
    %2361 = vmatprep.subr.mxu0 0.0
    %2362 = vmatpush1.xpose.msra.mxu0 0.0
    %2363 = vmatprep.subr.mxu0 0.0
    %2364 = vmatpush1.xpose.msra.mxu0 0.0
    %2365 = vmatprep.subr.mxu0 0.0
    %2366 = vmatpush1.xpose.msra.mxu0 0.0
    %2367 = vmatprep.subr.mxu0 0.0
    %2368 = vmatpush1.xpose.msra.mxu0 0.0
    %2369 = vmatprep.subr.mxu0 0.0
    %2370 = vmatpush1.xpose.msra.mxu0 0.0
    %2371 = vmatprep.subr.mxu0 0.0
    %2372 = vmatpush1.xpose.msra.mxu0 0.0
    %2373 = vmatprep.subr.mxu0 0.0
    %2374 = vmatpush1.xpose.msra.mxu0 0.0
    %2375 = vmatprep.subr.mxu0 0.0
    %2376 = vmatpush1.xpose.msra.mxu0 0.0
    %2377 = vmatprep.subr.mxu0 0.0
    %2378 = vmatpush1.xpose.msra.mxu0 0.0
    %2379 = vmatprep.subr.mxu0 0.0
    %2380 = vmatpush1.xpose.msra.mxu0 0.0
    %2381 = vmatprep.subr.mxu0 0.0
    %2382 = vmatpush1.xpose.msra.mxu0 0.0
    %2383 = vmatprep.subr.mxu0 0.0
    %2384 = vmatpush1.xpose.msra.mxu0 0.0
    %2385 = vmatprep.subr.mxu0 0.0
    %2386 = vmatpush1.xpose.msra.mxu0 0.0
    %2387 = vmatprep.subr.mxu0 0.0
    %2388 = vmatpush1.xpose.msra.mxu0 0.0
    %2389 = vmatprep.subr.mxu0 0.0
    %2390 = vmatpush1.xpose.msra.mxu0 0.0
    %2391 = vmatprep.subr.mxu0 0.0
    %2392 = vmatpush1.xpose.msra.mxu0 0.0
    %2393 = vmatprep.subr.mxu0 0.0
    %2394 = vmatpush1.xpose.msra.mxu0 0.0
    %2395 = vmatprep.subr.mxu0 0.0
    %2396 = vmatpush1.xpose.msra.mxu0 0.0
    %2397 = vmatprep.subr.mxu0 0.0
    %2398 = vmatpush1.xpose.msra.mxu0 0.0
    %2399 = vmatprep.subr.mxu0 0.0
    %2400 = vmatpush1.xpose.msra.mxu0 0.0
    %2401 = vmatprep.subr.mxu0 0.0
    %2402 = vmatpush1.xpose.msra.mxu0 0.0
    %2403 = vmatprep.subr.mxu0 0.0
    %2404 = vmatpush1.xpose.msra.mxu0 0.0
    %2405 = vmatprep.subr.mxu0 0.0
    %2406 = vmatpush1.xpose.msra.mxu0 0.0
    %2407 = vmatprep.subr.mxu0 0.0
    %2408 = vmatpush1.xpose.msra.mxu0 0.0
    %2409 = vmatprep.subr.mxu0 0.0
    %2410 = vmatpush1.xpose.msra.mxu0 0.0
    %2411 = vmatprep.subr.mxu0 0.0
    %2412 = vmatpush1.xpose.msra.mxu0 0.0
    %2413 = vmatprep.subr.mxu0 0.0
    %2414 = vmatpush1.xpose.msra.mxu0 0.0
    %2415 = vmatprep.mubr.f32.mxu0 0.0
    %2416 = vmatmul.mubr.f32.gmra.mrb[0].mxu0 %v2346
    %v2417 = vpop.f32.mrb[0].mxu0
    %v2418 = vadd.f32 0.0, %v2417
    %v2419 = vpop.f32.mrb[0].mxu0
    %2420 = vdwg.mxu0
    %v2422 = vsel %vm324, %v2166, 0
    %v2425 = vsel %vm324, %v2254, 0
    %2427 = vmatprep.subr.mxu0 0.0
    %2428 = vmatpush1.xpose.msra.mxu0 %v2425
    %2429 = vmatprep.subr.mxu0 0.0
    %2430 = vmatpush1.xpose.msra.mxu0 0.0
    %2431 = vmatprep.subr.mxu0 0.0
    %2432 = vmatpush1.xpose.msra.mxu0 0.0
    %2433 = vmatprep.subr.mxu0 0.0
    %2434 = vmatpush1.xpose.msra.mxu0 0.0
    %2435 = vmatprep.subr.mxu0 0.0
    %2436 = vmatpush1.xpose.msra.mxu0 0.0
    %2437 = vmatprep.subr.mxu0 0.0
    %2438 = vmatpush1.xpose.msra.mxu0 0.0
    %2439 = vmatprep.subr.mxu0 0.0
    %2440 = vmatpush1.xpose.msra.mxu0 0.0
    %2441 = vmatprep.subr.mxu0 0.0
    %2442 = vmatpush1.xpose.msra.mxu0 0.0
    %2443 = vmatprep.subr.mxu0 0.0
    %2444 = vmatpush1.xpose.msra.mxu0 0.0
    %2445 = vmatprep.subr.mxu0 0.0
    %2446 = vmatpush1.xpose.msra.mxu0 0.0
    %2447 = vmatprep.subr.mxu0 0.0
    %2448 = vmatpush1.xpose.msra.mxu0 0.0
    %2449 = vmatprep.subr.mxu0 0.0
    %2450 = vmatpush1.xpose.msra.mxu0 0.0
    %2451 = vmatprep.subr.mxu0 0.0
    %2452 = vmatpush1.xpose.msra.mxu0 0.0
    %2453 = vmatprep.subr.mxu0 0.0
    %2454 = vmatpush1.xpose.msra.mxu0 0.0
    %2455 = vmatprep.subr.mxu0 0.0
    %2456 = vmatpush1.xpose.msra.mxu0 0.0
    %2457 = vmatprep.subr.mxu0 0.0
    %2458 = vmatpush1.xpose.msra.mxu0 0.0
    %2459 = vmatprep.subr.mxu0 0.0
    %2460 = vmatpush1.xpose.msra.mxu0 0.0
    %2461 = vmatprep.subr.mxu0 0.0
    %2462 = vmatpush1.xpose.msra.mxu0 0.0
    %2463 = vmatprep.subr.mxu0 0.0
    %2464 = vmatpush1.xpose.msra.mxu0 0.0
    %2465 = vmatprep.subr.mxu0 0.0
    %2466 = vmatpush1.xpose.msra.mxu0 0.0
    %2467 = vmatprep.subr.mxu0 0.0
    %2468 = vmatpush1.xpose.msra.mxu0 0.0
    %2469 = vmatprep.subr.mxu0 0.0
    %2470 = vmatpush1.xpose.msra.mxu0 0.0
    %2471 = vmatprep.subr.mxu0 0.0
    %2472 = vmatpush1.xpose.msra.mxu0 0.0
    %2473 = vmatprep.subr.mxu0 0.0
    %2474 = vmatpush1.xpose.msra.mxu0 0.0
    %2475 = vmatprep.subr.mxu0 0.0
    %2476 = vmatpush1.xpose.msra.mxu0 0.0
    %2477 = vmatprep.subr.mxu0 0.0
    %2478 = vmatpush1.xpose.msra.mxu0 0.0
    %2479 = vmatprep.subr.mxu0 0.0
    %2480 = vmatpush1.xpose.msra.mxu0 0.0
    %2481 = vmatprep.subr.mxu0 0.0
    %2482 = vmatpush1.xpose.msra.mxu0 0.0
    %2483 = vmatprep.subr.mxu0 0.0
    %2484 = vmatpush1.xpose.msra.mxu0 0.0
    %2485 = vmatprep.subr.mxu0 0.0
    %2486 = vmatpush1.xpose.msra.mxu0 0.0
    %2487 = vmatprep.subr.mxu0 0.0
    %2488 = vmatpush1.xpose.msra.mxu0 0.0
    %2489 = vmatprep.subr.mxu0 0.0
    %2490 = vmatpush1.xpose.msra.mxu0 0.0
    %2491 = vmatprep.mubr.f32.mxu0 0.0
    %2492 = vmatmul.mubr.f32.gmra.mrb[0].mxu0 %v2422
    %v2493 = vpop.f32.mrb[0].mxu0
    %v2494 = vadd.f32 0.0, %v2493
    %v2495 = vpop.f32.mrb[0].mxu0
    %2496 = vdwg.mxu0
    %v2497 = vsel %vm324, %v2418, -inf
    %2498 = vmax.xlane.f32.xlu0 %v2497
    %v2499 = vpop.xlane.xlu0 %2498
    %v2500 = vsel %vm324, %v2494, -inf
    %2501 = vmax.xlane.f32.xlu0 %v2500
    %v2502 = vpop.xlane.xlu0 %2501
    %v2503 = vsub.f32 %v2418, %v2499
    %v2504 = vsub.f32 %v2494, %v2502
    %v2505 = vmul.f32 %v2503, 1.442695
    %v2506 = vpow.pop %v2505
    %v2507 = vmul.f32 %v2504, 1.442695
    %v2508 = vpow.pop %v2507
    %v2509 = vsel %vm324, %v2506, 0.0
    %2510 = vadd.xlane.f32.xlu0 %v2509
    %v2511 = vpop.xlane.xlu0 %2510
    %v2512 = vsel %vm324, %v2508, 0.0
    %2513 = vadd.xlane.f32.xlu0 %v2512
    %v2514 = vpop.xlane.xlu0 %2513
    %v2515 = vrcp.pop %v2511
    %v2516 = vrcp.pop %v2514
    %v2517 = vmul.f32 %v2511, %v2515
    %v2518 = vmul.f32 %v2514, %v2516
    %v2519 = vsub.f32 2.0, %v2517
    %v2520 = vsub.f32 2.0, %v2518
    %v2521 = vmul.f32 %v2515, %v2519
    %v2522 = vmul.f32 %v2516, %v2520
    %v2523 = vmul.f32 %v2506, %v2521
    %v2524 = vmul.f32 %v2508, %v2522
    %v2526 = vsel %vm324, %v2523, 0
    %2528 = vmatprep.subr.mxu0 0.0
    %2529 = vmatpush1.msra.mxu0 %v2337
    %2530 = vmatprep.subr.mxu0 0.0
    %2531 = vmatpush1.msra.mxu0 0.0
    %2532 = vmatprep.subr.mxu0 0.0
    %2533 = vmatpush1.msra.mxu0 0.0
    %2534 = vmatprep.subr.mxu0 0.0
    %2535 = vmatpush1.msra.mxu0 0.0
    %2536 = vmatprep.subr.mxu0 0.0
    %2537 = vmatpush1.msra.mxu0 0.0
    %2538 = vmatprep.subr.mxu0 0.0
    %2539 = vmatpush1.msra.mxu0 0.0
    %2540 = vmatprep.subr.mxu0 0.0
    %2541 = vmatpush1.msra.mxu0 0.0
    %2542 = vmatprep.subr.mxu0 0.0
    %2543 = vmatpush1.msra.mxu0 0.0
    %2544 = vmatprep.subr.mxu0 0.0
    %2545 = vmatpush1.msra.mxu0 0.0
    %2546 = vmatprep.subr.mxu0 0.0
    %2547 = vmatpush1.msra.mxu0 0.0
    %2548 = vmatprep.subr.mxu0 0.0
    %2549 = vmatpush1.msra.mxu0 0.0
    %2550 = vmatprep.subr.mxu0 0.0
    %2551 = vmatpush1.msra.mxu0 0.0
    %2552 = vmatprep.subr.mxu0 0.0
    %2553 = vmatpush1.msra.mxu0 0.0
    %2554 = vmatprep.subr.mxu0 0.0
    %2555 = vmatpush1.msra.mxu0 0.0
    %2556 = vmatprep.subr.mxu0 0.0
    %2557 = vmatpush1.msra.mxu0 0.0
    %2558 = vmatprep.subr.mxu0 0.0
    %2559 = vmatpush1.msra.mxu0 0.0
    %2560 = vmatprep.subr.mxu0 0.0
    %2561 = vmatpush1.msra.mxu0 0.0
    %2562 = vmatprep.subr.mxu0 0.0
    %2563 = vmatpush1.msra.mxu0 0.0
    %2564 = vmatprep.subr.mxu0 0.0
    %2565 = vmatpush1.msra.mxu0 0.0
    %2566 = vmatprep.subr.mxu0 0.0
    %2567 = vmatpush1.msra.mxu0 0.0
    %2568 = vmatprep.subr.mxu0 0.0
    %2569 = vmatpush1.msra.mxu0 0.0
    %2570 = vmatprep.subr.mxu0 0.0
    %2571 = vmatpush1.msra.mxu0 0.0
    %2572 = vmatprep.subr.mxu0 0.0
    %2573 = vmatpush1.msra.mxu0 0.0
    %2574 = vmatprep.subr.mxu0 0.0
    %2575 = vmatpush1.msra.mxu0 0.0
    %2576 = vmatprep.subr.mxu0 0.0
    %2577 = vmatpush1.msra.mxu0 0.0
    %2578 = vmatprep.subr.mxu0 0.0
    %2579 = vmatpush1.msra.mxu0 0.0
    %2580 = vmatprep.subr.mxu0 0.0
    %2581 = vmatpush1.msra.mxu0 0.0
    %2582 = vmatprep.subr.mxu0 0.0
    %2583 = vmatpush1.msra.mxu0 0.0
    %2584 = vmatprep.subr.mxu0 0.0
    %2585 = vmatpush1.msra.mxu0 0.0
    %2586 = vmatprep.subr.mxu0 0.0
    %2587 = vmatpush1.msra.mxu0 0.0
    %2588 = vmatprep.subr.mxu0 0.0
    %2589 = vmatpush1.msra.mxu0 0.0
    %2590 = vmatprep.subr.mxu0 0.0
    %2591 = vmatpush1.msra.mxu0 0.0
    %2592 = vmatprep.mubr.f32.mxu0 0.0
    %2593 = vmatmul.mubr.f32.gmra.mrb[0].mxu0 %v2526
    %v2594 = vpop.f32.mrb[0].mxu0
    %v2595 = vadd.f32 0.0, %v2594
    %v2596 = vpop.f32.mrb[0].mxu0
    %2597 = vdwg.mxu0
    %v2599 = vsel %vm324, %v2524, 0
    %2601 = vmatprep.subr.mxu0 0.0
    %2602 = vmatpush1.msra.mxu0 %v2342
    %2603 = vmatprep.subr.mxu0 0.0
    %2604 = vmatpush1.msra.mxu0 0.0
    %2605 = vmatprep.subr.mxu0 0.0
    %2606 = vmatpush1.msra.mxu0 0.0
    %2607 = vmatprep.subr.mxu0 0.0
    %2608 = vmatpush1.msra.mxu0 0.0
    %2609 = vmatprep.subr.mxu0 0.0
    %2610 = vmatpush1.msra.mxu0 0.0
    %2611 = vmatprep.subr.mxu0 0.0
    %2612 = vmatpush1.msra.mxu0 0.0
    %2613 = vmatprep.subr.mxu0 0.0
    %2614 = vmatpush1.msra.mxu0 0.0
    %2615 = vmatprep.subr.mxu0 0.0
    %2616 = vmatpush1.msra.mxu0 0.0
    %2617 = vmatprep.subr.mxu0 0.0
    %2618 = vmatpush1.msra.mxu0 0.0
    %2619 = vmatprep.subr.mxu0 0.0
    %2620 = vmatpush1.msra.mxu0 0.0
    %2621 = vmatprep.subr.mxu0 0.0
    %2622 = vmatpush1.msra.mxu0 0.0
    %2623 = vmatprep.subr.mxu0 0.0
    %2624 = vmatpush1.msra.mxu0 0.0
    %2625 = vmatprep.subr.mxu0 0.0
    %2626 = vmatpush1.msra.mxu0 0.0
    %2627 = vmatprep.subr.mxu0 0.0
    %2628 = vmatpush1.msra.mxu0 0.0
    %2629 = vmatprep.subr.mxu0 0.0
    %2630 = vmatpush1.msra.mxu0 0.0
    %2631 = vmatprep.subr.mxu0 0.0
    %2632 = vmatpush1.msra.mxu0 0.0
    %2633 = vmatprep.subr.mxu0 0.0
    %2634 = vmatpush1.msra.mxu0 0.0
    %2635 = vmatprep.subr.mxu0 0.0
    %2636 = vmatpush1.msra.mxu0 0.0
    %2637 = vmatprep.subr.mxu0 0.0
    %2638 = vmatpush1.msra.mxu0 0.0
    %2639 = vmatprep.subr.mxu0 0.0
    %2640 = vmatpush1.msra.mxu0 0.0
    %2641 = vmatprep.subr.mxu0 0.0
    %2642 = vmatpush1.msra.mxu0 0.0
    %2643 = vmatprep.subr.mxu0 0.0
    %2644 = vmatpush1.msra.mxu0 0.0
    %2645 = vmatprep.subr.mxu0 0.0
    %2646 = vmatpush1.msra.mxu0 0.0
    %2647 = vmatprep.subr.mxu0 0.0
    %2648 = vmatpush1.msra.mxu0 0.0
    %2649 = vmatprep.subr.mxu0 0.0
    %2650 = vmatpush1.msra.mxu0 0.0
    %2651 = vmatprep.subr.mxu0 0.0
    %2652 = vmatpush1.msra.mxu0 0.0
    %2653 = vmatprep.subr.mxu0 0.0
    %2654 = vmatpush1.msra.mxu0 0.0
    %2655 = vmatprep.subr.mxu0 0.0
    %2656 = vmatpush1.msra.mxu0 0.0
    %2657 = vmatprep.subr.mxu0 0.0
    %2658 = vmatpush1.msra.mxu0 0.0
    %2659 = vmatprep.subr.mxu0 0.0
    %2660 = vmatpush1.msra.mxu0 0.0
    %2661 = vmatprep.subr.mxu0 0.0
    %2662 = vmatpush1.msra.mxu0 0.0
    %2663 = vmatprep.subr.mxu0 0.0
    %2664 = vmatpush1.msra.mxu0 0.0
    %2665 = vmatprep.mubr.f32.mxu0 0.0
    %2666 = vmatmul.mubr.f32.gmra.mrb[0].mxu0 %v2599
    %v2667 = vpop.f32.mrb[0].mxu0
    %v2668 = vadd.f32 0.0, %v2667
    %v2669 = vpop.f32.mrb[0].mxu0
    %2670 = vdwg.mxu0
    %s2671 = scalar_lea.vmem %s7, 24
    %v2672 = vld [vmem:[%s2671] sm:$0xff]
    %v2674 = vsel %vm324, %v2595, 0
    %v2677 = vsel %vm324, %v2668, 0
    %2679 = vmatprep.subr.mxu0 0.0
    %2680 = vmatpush1.msra.mxu0 %v2672
    %2681 = vmatprep.subr.mxu0 0.0
    %2682 = vmatpush1.msra.mxu0 0.0
    %2683 = vmatprep.subr.mxu0 0.0
    %2684 = vmatpush1.msra.mxu0 0.0
    %2685 = vmatprep.subr.mxu0 0.0
    %2686 = vmatpush1.msra.mxu0 0.0
    %2687 = vmatprep.subr.mxu0 0.0
    %2688 = vmatpush1.msra.mxu0 0.0
    %2689 = vmatprep.subr.mxu0 0.0
    %2690 = vmatpush1.msra.mxu0 0.0
    %2691 = vmatprep.subr.mxu0 0.0
    %2692 = vmatpush1.msra.mxu0 0.0
    %2693 = vmatprep.subr.mxu0 0.0
    %2694 = vmatpush1.msra.mxu0 0.0
    %2695 = vmatprep.subr.mxu0 0.0
    %2696 = vmatpush1.msra.mxu0 0.0
    %2697 = vmatprep.subr.mxu0 0.0
    %2698 = vmatpush1.msra.mxu0 0.0
    %2699 = vmatprep.subr.mxu0 0.0
    %2700 = vmatpush1.msra.mxu0 0.0
    %2701 = vmatprep.subr.mxu0 0.0
    %2702 = vmatpush1.msra.mxu0 0.0
    %2703 = vmatprep.subr.mxu0 0.0
    %2704 = vmatpush1.msra.mxu0 0.0
    %2705 = vmatprep.subr.mxu0 0.0
    %2706 = vmatpush1.msra.mxu0 0.0
    %2707 = vmatprep.subr.mxu0 0.0
    %2708 = vmatpush1.msra.mxu0 0.0
    %2709 = vmatprep.subr.mxu0 0.0
    %2710 = vmatpush1.msra.mxu0 0.0
    %2711 = vmatprep.subr.mxu0 0.0
    %2712 = vmatpush1.msra.mxu0 0.0
    %2713 = vmatprep.subr.mxu0 0.0
    %2714 = vmatpush1.msra.mxu0 0.0
    %2715 = vmatprep.subr.mxu0 0.0
    %2716 = vmatpush1.msra.mxu0 0.0
    %2717 = vmatprep.subr.mxu0 0.0
    %2718 = vmatpush1.msra.mxu0 0.0
    %2719 = vmatprep.subr.mxu0 0.0
    %2720 = vmatpush1.msra.mxu0 0.0
    %2721 = vmatprep.subr.mxu0 0.0
    %2722 = vmatpush1.msra.mxu0 0.0
    %2723 = vmatprep.subr.mxu0 0.0
    %2724 = vmatpush1.msra.mxu0 0.0
    %2725 = vmatprep.subr.mxu0 0.0
    %2726 = vmatpush1.msra.mxu0 0.0
    %2727 = vmatprep.subr.mxu0 0.0
    %2728 = vmatpush1.msra.mxu0 0.0
    %2729 = vmatprep.subr.mxu0 0.0
    %2730 = vmatpush1.msra.mxu0 0.0
    %2731 = vmatprep.subr.mxu0 0.0
    %2732 = vmatpush1.msra.mxu0 0.0
    %2733 = vmatprep.subr.mxu0 0.0
    %2734 = vmatpush1.msra.mxu0 0.0
    %2735 = vmatprep.subr.mxu0 0.0
    %2736 = vmatpush1.msra.mxu0 0.0
    %2737 = vmatprep.subr.mxu0 0.0
    %2738 = vmatpush1.msra.mxu0 0.0
    %2739 = vmatprep.subr.mxu0 0.0
    %2740 = vmatpush1.msra.mxu0 0.0
    %2741 = vmatprep.subr.mxu0 0.0
    %2742 = vmatpush1.msra.mxu0 0.0
    %2743 = vmatprep.mubr.f32.mxu0 0.0
    %2744 = vmatmul.mubr.f32.gmra.mrb[0].mxu0 %v2674
    %v2745 = vpop.f32.mrb[0].mxu0
    %v2746 = vadd.f32 0.0, %v2745
    %v2747 = vpop.f32.mrb[0].mxu0
    %2748 = vmatprep.mubr.f32.mxu0 0.0
    %2749 = vmatmul.mubr.f32.gmra.mrb[0].mxu0 %v2677
    %v2750 = vpop.f32.mrb[0].mxu0
    %v2751 = vadd.f32 0.0, %v2750
    %v2752 = vpop.f32.mrb[0].mxu0
    %2753 = vdwg.mxu0
    %v2754 = vadd.f32 %v2079, %v2746
    %v2755 = vadd.f32 %v2080, %v2751
    %v2756 = vld [vmem:[%s8] sm:$0x1]
    %v2758 = vlaneseq
    %v2759 = vshrl.u32 %v2758, 7
    %v2760 = vsub.s32 0, %v2759
    %v2761 = vrot.slane %v2756, %v2760
    %v2763 = vadd.f32 %v2754, %v2761
    %v2764 = vadd.f32 %v2755, %v2761
    %v2765 = vadd.f32 %v57, %v2763
    %v2766 = vadd.f32 %v58, %v2764
    %v2767 = vld [vmem:[%s9] sm:$0x1]
    %v2768 = vld [vmem:[%s10] sm:$0x1]
    %v2769 = vsel %vm70, %v2765, 0.0
    %2770 = vadd.xlane.f32.xlu0 %v2769
    %v2771 = vpop.xlane.xlu0 %2770
    %v2772 = vsel %vm70, %v2766, 0.0
    %2773 = vadd.xlane.f32.xlu0 %v2772
    %v2774 = vpop.xlane.xlu0 %2773
    %v2775 = vrcp.pop 32.0
    %v2776 = vmul.f32 %v2771, %v2775
    %v2777 = vmul.f32 %v2774, %v2775
    %v2778 = vsub.f32 %v2765, %v2776
    %v2779 = vsub.f32 %v2766, %v2777
    %v2780 = vmul.f32 %v2778, %v2778
    %v2781 = vmul.f32 %v2779, %v2779
    %v2782 = vsel %vm70, %v2780, 0.0
    %2783 = vadd.xlane.f32.xlu0 %v2782
    %v2784 = vpop.xlane.xlu0 %2783
    %v2785 = vsel %vm70, %v2781, 0.0
    %2786 = vadd.xlane.f32.xlu0 %v2785
    %v2787 = vpop.xlane.xlu0 %2786
    %v2788 = vmul.f32 %v2784, %v2775
    %v2789 = vmul.f32 %v2787, %v2775
    %v2790 = vadd.f32 %v2788, 1e-05
    %v2791 = vadd.f32 %v2789, 1e-05
    %v2792 = vrsqrt.pop %v2790
    %v2793 = vrsqrt.pop %v2791
    %v2794 = vmul.f32 %v2778, %v2792
    %v2795 = vmul.f32 %v2779, %v2793
    %v2797 = vlaneseq
    %v2798 = vshrl.u32 %v2797, 7
    %v2799 = vsub.s32 0, %v2798
    %v2800 = vrot.slane %v2767, %v2799
    %v2802 = vmul.f32 %v2794, %v2800
    %v2803 = vmul.f32 %v2795, %v2800
    %v2805 = vlaneseq
    %v2806 = vshrl.u32 %v2805, 7
    %v2807 = vsub.s32 0, %v2806
    %v2808 = vrot.slane %v2768, %v2807
    %v2810 = vadd.f32 %v2802, %v2808
    %v2811 = vadd.f32 %v2803, %v2808
    %v2812 = vld [vmem:[%s13] sm:$0xff]
    %v2813 = vld [vmem:[%s13 + $0x8] sm:$0xff]
    %v2814 = vld [vmem:[%s13 + $0x10] sm:$0xff]
    %v2815 = vld [vmem:[%s13 + $0x18] sm:$0xff]
    %v2816 = vld [vmem:[%s13 + $0x20] sm:$0xff]
    %v2817 = vld [vmem:[%s13 + $0x28] sm:$0xff]
    %v2818 = vld [vmem:[%s13 + $0x30] sm:$0xff]
    %v2819 = vld [vmem:[%s13 + $0x38] sm:$0xff]
    %v2820 = vld [vmem:[%s13 + $0x40] sm:$0xff]
    %v2821 = vld [vmem:[%s13 + $0x48] sm:$0xff]
    %v2822 = vld [vmem:[%s13 + $0x50] sm:$0xff]
    %v2823 = vld [vmem:[%s13 + $0x58] sm:$0xff]
    %v2824 = vld [vmem:[%s13 + $0x60] sm:$0xff]
    %v2825 = vld [vmem:[%s13 + $0x68] sm:$0xff]
    %v2826 = vld [vmem:[%s13 + $0x70] sm:$0xff]
    %v2827 = vld [vmem:[%s13 + $0x78] sm:$0xff]
    %v2828 = vld [vmem:[%s13 + $0x80] sm:$0xff]
    %v2829 = vld [vmem:[%s13 + $0x88] sm:$0xff]
    %v2830 = vld [vmem:[%s13 + $0x90] sm:$0xff]
    %v2831 = vld [vmem:[%s13 + $0x98] sm:$0xff]
    %v2832 = vld [vmem:[%s13 + $0xa0] sm:$0xff]
    %v2833 = vld [vmem:[%s13 + $0xa8] sm:$0xff]
    %v2834 = vld [vmem:[%s13 + $0xb0] sm:$0xff]
    %v2835 = vld [vmem:[%s13 + $0xb8] sm:$0xff]
    %v2836 = vld [vmem:[%s13 + $0xc0] sm:$0xff]
    %v2837 = vld [vmem:[%s13 + $0xc8] sm:$0xff]
    %v2838 = vld [vmem:[%s13 + $0xd0] sm:$0xff]
    %v2839 = vld [vmem:[%s13 + $0xd8] sm:$0xff]
    %v2840 = vld [vmem:[%s13 + $0xe0] sm:$0xff]
    %v2841 = vld [vmem:[%s13 + $0xe8] sm:$0xff]
    %v2842 = vld [vmem:[%s13 + $0xf0] sm:$0xff]
    %v2843 = vld [vmem:[%s13 + $0xf8] sm:$0xff]
    %v2844 = vld [vmem:[%s14] sm:$0xff]
    %v2846 = vlaneseq
    %v2847 = vshrl.u32 %v2846, 7
    %v2848 = vsub.s32 0, %v2847
    %v2849 = vrot.slane %v2844, %v2848
    %v2850 = vlaneseq
    %v2851 = vshrl.u32 %v2850, 7
    %v2852 = vsub.s32 1, %v2851
    %v2853 = vrot.slane %v2844, %v2852
    %v2854 = vlaneseq
    %v2855 = vshrl.u32 %v2854, 7
    %v2856 = vsub.s32 2, %v2855
    %v2857 = vrot.slane %v2844, %v2856
    %v2858 = vlaneseq
    %v2859 = vshrl.u32 %v2858, 7
    %v2860 = vsub.s32 3, %v2859
    %v2861 = vrot.slane %v2844, %v2860
    %v2862 = vlaneseq
    %v2863 = vshrl.u32 %v2862, 7
    %v2864 = vsub.s32 4, %v2863
    %v2865 = vrot.slane %v2844, %v2864
    %v2866 = vlaneseq
    %v2867 = vshrl.u32 %v2866, 7
    %v2868 = vsub.s32 5, %v2867
    %v2869 = vrot.slane %v2844, %v2868
    %v2870 = vlaneseq
    %v2871 = vshrl.u32 %v2870, 7
    %v2872 = vsub.s32 6, %v2871
    %v2873 = vrot.slane %v2844, %v2872
    %v2874 = vlaneseq
    %v2875 = vshrl.u32 %v2874, 7
    %v2876 = vsub.s32 7, %v2875
    %v2877 = vrot.slane %v2844, %v2876
    %v2887 = vsel %vm70, %v2810, 0
    %v2890 = vsel %vm70, %v2811, 0
    %2892 = vmatprep.subr.mxu0 %v2813
    %2893 = vmatpush1.msra.mxu0 %v2812
    %2894 = vmatprep.subr.mxu0 %v2821
    %2895 = vmatpush1.msra.mxu0 %v2820
    %2896 = vmatprep.subr.mxu0 %v2829
    %2897 = vmatpush1.msra.mxu0 %v2828
    %2898 = vmatprep.subr.mxu0 %v2837
    %2899 = vmatpush1.msra.mxu0 %v2836
    %2900 = vmatprep.subr.mxu0 0.0
    %2901 = vmatpush1.msra.mxu0 0.0
    %2902 = vmatprep.subr.mxu0 0.0
    %2903 = vmatpush1.msra.mxu0 0.0
    %2904 = vmatprep.subr.mxu0 0.0
    %2905 = vmatpush1.msra.mxu0 0.0
    %2906 = vmatprep.subr.mxu0 0.0
    %2907 = vmatpush1.msra.mxu0 0.0
    %2908 = vmatprep.subr.mxu0 0.0
    %2909 = vmatpush1.msra.mxu0 0.0
    %2910 = vmatprep.subr.mxu0 0.0
    %2911 = vmatpush1.msra.mxu0 0.0
    %2912 = vmatprep.subr.mxu0 0.0
    %2913 = vmatpush1.msra.mxu0 0.0
    %2914 = vmatprep.subr.mxu0 0.0
    %2915 = vmatpush1.msra.mxu0 0.0
    %2916 = vmatprep.subr.mxu0 0.0
    %2917 = vmatpush1.msra.mxu0 0.0
    %2918 = vmatprep.subr.mxu0 0.0
    %2919 = vmatpush1.msra.mxu0 0.0
    %2920 = vmatprep.subr.mxu0 0.0
    %2921 = vmatpush1.msra.mxu0 0.0
    %2922 = vmatprep.subr.mxu0 0.0
    %2923 = vmatpush1.msra.mxu0 0.0
    %2924 = vmatprep.subr.mxu0 0.0
    %2925 = vmatpush1.msra.mxu0 0.0
    %2926 = vmatprep.subr.mxu0 0.0
    %2927 = vmatpush1.msra.mxu0 0.0
    %2928 = vmatprep.subr.mxu0 0.0
    %2929 = vmatpush1.msra.mxu0 0.0
    %2930 = vmatprep.subr.mxu0 0.0
    %2931 = vmatpush1.msra.mxu0 0.0
    %2932 = vmatprep.subr.mxu0 0.0
    %2933 = vmatpush1.msra.mxu0 0.0
    %2934 = vmatprep.subr.mxu0 0.0
    %2935 = vmatpush1.msra.mxu0 0.0
    %2936 = vmatprep.subr.mxu0 0.0
    %2937 = vmatpush1.msra.mxu0 0.0
    %2938 = vmatprep.subr.mxu0 0.0
    %2939 = vmatpush1.msra.mxu0 0.0
    %2940 = vmatprep.subr.mxu0 0.0
    %2941 = vmatpush1.msra.mxu0 0.0
    %2942 = vmatprep.subr.mxu0 0.0
    %2943 = vmatpush1.msra.mxu0 0.0
    %2944 = vmatprep.subr.mxu0 0.0
    %2945 = vmatpush1.msra.mxu0 0.0
    %2946 = vmatprep.subr.mxu0 0.0
    %2947 = vmatpush1.msra.mxu0 0.0
    %2948 = vmatprep.subr.mxu0 0.0
    %2949 = vmatpush1.msra.mxu0 0.0
    %2950 = vmatprep.subr.mxu0 0.0
    %2951 = vmatpush1.msra.mxu0 0.0
    %2952 = vmatprep.subr.mxu0 0.0
    %2953 = vmatpush1.msra.mxu0 0.0
    %2954 = vmatprep.subr.mxu0 0.0
    %2955 = vmatpush1.msra.mxu0 0.0
    %2956 = vmatprep.mubr.f32.mxu0 0.0
    %2957 = vmatmul.mubr.f32.gmra.mrb[0].mxu0 %v2887
    %v2958 = vpop.f32.mrb[0].mxu0
    %v2959 = vadd.f32 %v2849, %v2958
    %v2960 = vpop.f32.mrb[0].mxu0
    %v2961 = vadd.f32 %v2853, %v2960
    %2962 = vmatprep.mubr.f32.mxu0 0.0
    %2963 = vmatmul.mubr.f32.gmra.mrb[0].mxu0 %v2890
    %v2964 = vpop.f32.mrb[0].mxu0
    %v2965 = vadd.f32 %v2849, %v2964
    %v2966 = vpop.f32.mrb[0].mxu0
    %v2967 = vadd.f32 %v2853, %v2966
    %2968 = vdwg.mxu0
    %2969 = vmatprep.subr.mxu0 %v2815
    %2970 = vmatpush1.msra.mxu0 %v2814
    %2971 = vmatprep.subr.mxu0 %v2823
    %2972 = vmatpush1.msra.mxu0 %v2822
    %2973 = vmatprep.subr.mxu0 %v2831
    %2974 = vmatpush1.msra.mxu0 %v2830
    %2975 = vmatprep.subr.mxu0 %v2839
    %2976 = vmatpush1.msra.mxu0 %v2838
    %2977 = vmatprep.subr.mxu0 0.0
    %2978 = vmatpush1.msra.mxu0 0.0
    %2979 = vmatprep.subr.mxu0 0.0
    %2980 = vmatpush1.msra.mxu0 0.0
    %2981 = vmatprep.subr.mxu0 0.0
    %2982 = vmatpush1.msra.mxu0 0.0
    %2983 = vmatprep.subr.mxu0 0.0
    %2984 = vmatpush1.msra.mxu0 0.0
    %2985 = vmatprep.subr.mxu0 0.0
    %2986 = vmatpush1.msra.mxu0 0.0
    %2987 = vmatprep.subr.mxu0 0.0
    %2988 = vmatpush1.msra.mxu0 0.0
    %2989 = vmatprep.subr.mxu0 0.0
    %2990 = vmatpush1.msra.mxu0 0.0
    %2991 = vmatprep.subr.mxu0 0.0
    %2992 = vmatpush1.msra.mxu0 0.0
    %2993 = vmatprep.subr.mxu0 0.0
    %2994 = vmatpush1.msra.mxu0 0.0
    %2995 = vmatprep.subr.mxu0 0.0
    %2996 = vmatpush1.msra.mxu0 0.0
    %2997 = vmatprep.subr.mxu0 0.0
    %2998 = vmatpush1.msra.mxu0 0.0
    %2999 = vmatprep.subr.mxu0 0.0
    %3000 = vmatpush1.msra.mxu0 0.0
    %3001 = vmatprep.subr.mxu0 0.0
    %3002 = vmatpush1.msra.mxu0 0.0
    %3003 = vmatprep.subr.mxu0 0.0
    %3004 = vmatpush1.msra.mxu0 0.0
    %3005 = vmatprep.subr.mxu0 0.0
    %3006 = vmatpush1.msra.mxu0 0.0
    %3007 = vmatprep.subr.mxu0 0.0
    %3008 = vmatpush1.msra.mxu0 0.0
    %3009 = vmatprep.subr.mxu0 0.0
    %3010 = vmatpush1.msra.mxu0 0.0
    %3011 = vmatprep.subr.mxu0 0.0
    %3012 = vmatpush1.msra.mxu0 0.0
    %3013 = vmatprep.subr.mxu0 0.0
    %3014 = vmatpush1.msra.mxu0 0.0
    %3015 = vmatprep.subr.mxu0 0.0
    %3016 = vmatpush1.msra.mxu0 0.0
    %3017 = vmatprep.subr.mxu0 0.0
    %3018 = vmatpush1.msra.mxu0 0.0
    %3019 = vmatprep.subr.mxu0 0.0
    %3020 = vmatpush1.msra.mxu0 0.0
    %3021 = vmatprep.subr.mxu0 0.0
    %3022 = vmatpush1.msra.mxu0 0.0
    %3023 = vmatprep.subr.mxu0 0.0
    %3024 = vmatpush1.msra.mxu0 0.0
    %3025 = vmatprep.subr.mxu0 0.0
    %3026 = vmatpush1.msra.mxu0 0.0
    %3027 = vmatprep.subr.mxu0 0.0
    %3028 = vmatpush1.msra.mxu0 0.0
    %3029 = vmatprep.subr.mxu0 0.0
    %3030 = vmatpush1.msra.mxu0 0.0
    %3031 = vmatprep.subr.mxu0 0.0
    %3032 = vmatpush1.msra.mxu0 0.0
    %3033 = vmatprep.mubr.f32.mxu0 0.0
    %3034 = vmatmul.mubr.f32.gmra.mrb[0].mxu0 %v2887
    %v3035 = vpop.f32.mrb[0].mxu0
    %v3036 = vadd.f32 %v2857, %v3035
    %v3037 = vpop.f32.mrb[0].mxu0
    %v3038 = vadd.f32 %v2861, %v3037
    %3039 = vmatprep.mubr.f32.mxu0 0.0
    %3040 = vmatmul.mubr.f32.gmra.mrb[0].mxu0 %v2890
    %v3041 = vpop.f32.mrb[0].mxu0
    %v3042 = vadd.f32 %v2857, %v3041
    %v3043 = vpop.f32.mrb[0].mxu0
    %v3044 = vadd.f32 %v2861, %v3043
    %3045 = vdwg.mxu0
    %3046 = vmatprep.subr.mxu0 %v2817
    %3047 = vmatpush1.msra.mxu0 %v2816
    %3048 = vmatprep.subr.mxu0 %v2825
    %3049 = vmatpush1.msra.mxu0 %v2824
    %3050 = vmatprep.subr.mxu0 %v2833
    %3051 = vmatpush1.msra.mxu0 %v2832
    %3052 = vmatprep.subr.mxu0 %v2841
    %3053 = vmatpush1.msra.mxu0 %v2840
    %3054 = vmatprep.subr.mxu0 0.0
    %3055 = vmatpush1.msra.mxu0 0.0
    %3056 = vmatprep.subr.mxu0 0.0
    %3057 = vmatpush1.msra.mxu0 0.0
    %3058 = vmatprep.subr.mxu0 0.0
    %3059 = vmatpush1.msra.mxu0 0.0
    %3060 = vmatprep.subr.mxu0 0.0
    %3061 = vmatpush1.msra.mxu0 0.0
    %3062 = vmatprep.subr.mxu0 0.0
    %3063 = vmatpush1.msra.mxu0 0.0
    %3064 = vmatprep.subr.mxu0 0.0
    %3065 = vmatpush1.msra.mxu0 0.0
    %3066 = vmatprep.subr.mxu0 0.0
    %3067 = vmatpush1.msra.mxu0 0.0
    %3068 = vmatprep.subr.mxu0 0.0
    %3069 = vmatpush1.msra.mxu0 0.0
    %3070 = vmatprep.subr.mxu0 0.0
    %3071 = vmatpush1.msra.mxu0 0.0
    %3072 = vmatprep.subr.mxu0 0.0
    %3073 = vmatpush1.msra.mxu0 0.0
    %3074 = vmatprep.subr.mxu0 0.0
    %3075 = vmatpush1.msra.mxu0 0.0
    %3076 = vmatprep.subr.mxu0 0.0
    %3077 = vmatpush1.msra.mxu0 0.0
    %3078 = vmatprep.subr.mxu0 0.0
    %3079 = vmatpush1.msra.mxu0 0.0
    %3080 = vmatprep.subr.mxu0 0.0
    %3081 = vmatpush1.msra.mxu0 0.0
    %3082 = vmatprep.subr.mxu0 0.0
    %3083 = vmatpush1.msra.mxu0 0.0
    %3084 = vmatprep.subr.mxu0 0.0
    %3085 = vmatpush1.msra.mxu0 0.0
    %3086 = vmatprep.subr.mxu0 0.0
    %3087 = vmatpush1.msra.mxu0 0.0
    %3088 = vmatprep.subr.mxu0 0.0
    %3089 = vmatpush1.msra.mxu0 0.0
    %3090 = vmatprep.subr.mxu0 0.0
    %3091 = vmatpush1.msra.mxu0 0.0
    %3092 = vmatprep.subr.mxu0 0.0
    %3093 = vmatpush1.msra.mxu0 0.0
    %3094 = vmatprep.subr.mxu0 0.0
    %3095 = vmatpush1.msra.mxu0 0.0
    %3096 = vmatprep.subr.mxu0 0.0
    %3097 = vmatpush1.msra.mxu0 0.0
    %3098 = vmatprep.subr.mxu0 0.0
    %3099 = vmatpush1.msra.mxu0 0.0
    %3100 = vmatprep.subr.mxu0 0.0
    %3101 = vmatpush1.msra.mxu0 0.0
    %3102 = vmatprep.subr.mxu0 0.0
    %3103 = vmatpush1.msra.mxu0 0.0
    %3104 = vmatprep.subr.mxu0 0.0
    %3105 = vmatpush1.msra.mxu0 0.0
    %3106 = vmatprep.subr.mxu0 0.0
    %3107 = vmatpush1.msra.mxu0 0.0
    %3108 = vmatprep.subr.mxu0 0.0
    %3109 = vmatpush1.msra.mxu0 0.0
    %3110 = vmatprep.mubr.f32.mxu0 0.0
    %3111 = vmatmul.mubr.f32.gmra.mrb[0].mxu0 %v2887
    %v3112 = vpop.f32.mrb[0].mxu0
    %v3113 = vadd.f32 %v2865, %v3112
    %v3114 = vpop.f32.mrb[0].mxu0
    %v3115 = vadd.f32 %v2869, %v3114
    %3116 = vmatprep.mubr.f32.mxu0 0.0
    %3117 = vmatmul.mubr.f32.gmra.mrb[0].mxu0 %v2890
    %v3118 = vpop.f32.mrb[0].mxu0
    %v3119 = vadd.f32 %v2865, %v3118
    %v3120 = vpop.f32.mrb[0].mxu0
    %v3121 = vadd.f32 %v2869, %v3120
    %3122 = vdwg.mxu0
    %3123 = vmatprep.subr.mxu0 %v2819
    %3124 = vmatpush1.msra.mxu0 %v2818
    %3125 = vmatprep.subr.mxu0 %v2827
    %3126 = vmatpush1.msra.mxu0 %v2826
    %3127 = vmatprep.subr.mxu0 %v2835
    %3128 = vmatpush1.msra.mxu0 %v2834
    %3129 = vmatprep.subr.mxu0 %v2843
    %3130 = vmatpush1.msra.mxu0 %v2842
    %3131 = vmatprep.subr.mxu0 0.0
    %3132 = vmatpush1.msra.mxu0 0.0
    %3133 = vmatprep.subr.mxu0 0.0
    %3134 = vmatpush1.msra.mxu0 0.0
    %3135 = vmatprep.subr.mxu0 0.0
    %3136 = vmatpush1.msra.mxu0 0.0
    %3137 = vmatprep.subr.mxu0 0.0
    %3138 = vmatpush1.msra.mxu0 0.0
    %3139 = vmatprep.subr.mxu0 0.0
    %3140 = vmatpush1.msra.mxu0 0.0
    %3141 = vmatprep.subr.mxu0 0.0
    %3142 = vmatpush1.msra.mxu0 0.0
    %3143 = vmatprep.subr.mxu0 0.0
    %3144 = vmatpush1.msra.mxu0 0.0
    %3145 = vmatprep.subr.mxu0 0.0
    %3146 = vmatpush1.msra.mxu0 0.0
    %3147 = vmatprep.subr.mxu0 0.0
    %3148 = vmatpush1.msra.mxu0 0.0
    %3149 = vmatprep.subr.mxu0 0.0
    %3150 = vmatpush1.msra.mxu0 0.0
    %3151 = vmatprep.subr.mxu0 0.0
    %3152 = vmatpush1.msra.mxu0 0.0
    %3153 = vmatprep.subr.mxu0 0.0
    %3154 = vmatpush1.msra.mxu0 0.0
    %3155 = vmatprep.subr.mxu0 0.0
    %3156 = vmatpush1.msra.mxu0 0.0
    %3157 = vmatprep.subr.mxu0 0.0
    %3158 = vmatpush1.msra.mxu0 0.0
    %3159 = vmatprep.subr.mxu0 0.0
    %3160 = vmatpush1.msra.mxu0 0.0
    %3161 = vmatprep.subr.mxu0 0.0
    %3162 = vmatpush1.msra.mxu0 0.0
    %3163 = vmatprep.subr.mxu0 0.0
    %3164 = vmatpush1.msra.mxu0 0.0
    %3165 = vmatprep.subr.mxu0 0.0
    %3166 = vmatpush1.msra.mxu0 0.0
    %3167 = vmatprep.subr.mxu0 0.0
    %3168 = vmatpush1.msra.mxu0 0.0
    %3169 = vmatprep.subr.mxu0 0.0
    %3170 = vmatpush1.msra.mxu0 0.0
    %3171 = vmatprep.subr.mxu0 0.0
    %3172 = vmatpush1.msra.mxu0 0.0
    %3173 = vmatprep.subr.mxu0 0.0
    %3174 = vmatpush1.msra.mxu0 0.0
    %3175 = vmatprep.subr.mxu0 0.0
    %3176 = vmatpush1.msra.mxu0 0.0
    %3177 = vmatprep.subr.mxu0 0.0
    %3178 = vmatpush1.msra.mxu0 0.0
    %3179 = vmatprep.subr.mxu0 0.0
    %3180 = vmatpush1.msra.mxu0 0.0
    %3181 = vmatprep.subr.mxu0 0.0
    %3182 = vmatpush1.msra.mxu0 0.0
    %3183 = vmatprep.subr.mxu0 0.0
    %3184 = vmatpush1.msra.mxu0 0.0
    %3185 = vmatprep.subr.mxu0 0.0
    %3186 = vmatpush1.msra.mxu0 0.0
    %3187 = vmatprep.mubr.f32.mxu0 0.0
    %3188 = vmatmul.mubr.f32.gmra.mrb[0].mxu0 %v2887
    %v3189 = vpop.f32.mrb[0].mxu0
    %v3190 = vadd.f32 %v2873, %v3189
    %v3191 = vpop.f32.mrb[0].mxu0
    %v3192 = vadd.f32 %v2877, %v3191
    %3193 = vmatprep.mubr.f32.mxu0 0.0
    %3194 = vmatmul.mubr.f32.gmra.mrb[0].mxu0 %v2890
    %v3195 = vpop.f32.mrb[0].mxu0
    %v3196 = vadd.f32 %v2873, %v3195
    %v3197 = vpop.f32.mrb[0].mxu0
    %v3198 = vadd.f32 %v2877, %v3197
    %3199 = vdwg.mxu0
    %v3200 = vmax.f32 %v2959, 0.0
    %v3201 = vmax.f32 %v2961, 0.0
    %v3202 = vmax.f32 %v3036, 0.0
    %v3203 = vmax.f32 %v3038, 0.0
    %v3204 = vmax.f32 %v3113, 0.0
    %v3205 = vmax.f32 %v3115, 0.0
    %v3206 = vmax.f32 %v3190, 0.0
    %v3207 = vmax.f32 %v3192, 0.0
    %v3208 = vmax.f32 %v2965, 0.0
    %v3209 = vmax.f32 %v2967, 0.0
    %v3210 = vmax.f32 %v3042, 0.0
    %v3211 = vmax.f32 %v3044, 0.0
    %v3212 = vmax.f32 %v3119, 0.0
    %v3213 = vmax.f32 %v3121, 0.0
    %v3214 = vmax.f32 %v3196, 0.0
    %v3215 = vmax.f32 %v3198, 0.0
    %v3216 = vld [vmem:[%s15] sm:$0xff]
    %v3217 = vld [vmem:[%s15 + $0x8] sm:$0xff]
    %v3218 = vld [vmem:[%s15 + $0x10] sm:$0xff]
    %v3219 = vld [vmem:[%s15 + $0x18] sm:$0xff]
    %v3220 = vld [vmem:[%s15 + $0x20] sm:$0xff]
    %v3221 = vld [vmem:[%s15 + $0x28] sm:$0xff]
    %v3222 = vld [vmem:[%s15 + $0x30] sm:$0xff]
    %v3223 = vld [vmem:[%s15 + $0x38] sm:$0xff]
    %v3224 = vld [vmem:[%s15 + $0x40] sm:$0xff]
    %v3225 = vld [vmem:[%s15 + $0x48] sm:$0xff]
    %v3226 = vld [vmem:[%s15 + $0x50] sm:$0xff]
    %v3227 = vld [vmem:[%s15 + $0x58] sm:$0xff]
    %v3228 = vld [vmem:[%s15 + $0x60] sm:$0xff]
    %v3229 = vld [vmem:[%s15 + $0x68] sm:$0xff]
    %v3230 = vld [vmem:[%s15 + $0x70] sm:$0xff]
    %v3231 = vld [vmem:[%s15 + $0x78] sm:$0xff]
    %v3232 = vld [vmem:[%s15 + $0x80] sm:$0xff]
    %v3233 = vld [vmem:[%s15 + $0x88] sm:$0xff]
    %v3234 = vld [vmem:[%s15 + $0x90] sm:$0xff]
    %v3235 = vld [vmem:[%s15 + $0x98] sm:$0xff]
    %v3236 = vld [vmem:[%s15 + $0xa0] sm:$0xff]
    %v3237 = vld [vmem:[%s15 + $0xa8] sm:$0xff]
    %v3238 = vld [vmem:[%s15 + $0xb0] sm:$0xff]
    %v3239 = vld [vmem:[%s15 + $0xb8] sm:$0xff]
    %v3240 = vld [vmem:[%s15 + $0xc0] sm:$0xff]
    %v3241 = vld [vmem:[%s15 + $0xc8] sm:$0xff]
    %v3242 = vld [vmem:[%s15 + $0xd0] sm:$0xff]
    %v3243 = vld [vmem:[%s15 + $0xd8] sm:$0xff]
    %v3244 = vld [vmem:[%s15 + $0xe0] sm:$0xff]
    %v3245 = vld [vmem:[%s15 + $0xe8] sm:$0xff]
    %v3246 = vld [vmem:[%s15 + $0xf0] sm:$0xff]
    %v3247 = vld [vmem:[%s15 + $0xf8] sm:$0xff]
    %v3248 = vld [vmem:[%s15 + $0x100] sm:$0xff]
    %v3249 = vld [vmem:[%s15 + $0x108] sm:$0xff]
    %v3250 = vld [vmem:[%s15 + $0x110] sm:$0xff]
    %v3251 = vld [vmem:[%s15 + $0x118] sm:$0xff]
    %v3252 = vld [vmem:[%s15 + $0x120] sm:$0xff]
    %v3253 = vld [vmem:[%s15 + $0x128] sm:$0xff]
    %v3254 = vld [vmem:[%s15 + $0x130] sm:$0xff]
    %v3255 = vld [vmem:[%s15 + $0x138] sm:$0xff]
    %v3256 = vld [vmem:[%s15 + $0x140] sm:$0xff]
    %v3257 = vld [vmem:[%s15 + $0x148] sm:$0xff]
    %v3258 = vld [vmem:[%s15 + $0x150] sm:$0xff]
    %v3259 = vld [vmem:[%s15 + $0x158] sm:$0xff]
    %v3260 = vld [vmem:[%s15 + $0x160] sm:$0xff]
    %v3261 = vld [vmem:[%s15 + $0x168] sm:$0xff]
    %v3262 = vld [vmem:[%s15 + $0x170] sm:$0xff]
    %v3263 = vld [vmem:[%s15 + $0x178] sm:$0xff]
    %v3264 = vld [vmem:[%s15 + $0x180] sm:$0xff]
    %v3265 = vld [vmem:[%s15 + $0x188] sm:$0xff]
    %v3266 = vld [vmem:[%s15 + $0x190] sm:$0xff]
    %v3267 = vld [vmem:[%s15 + $0x198] sm:$0xff]
    %v3268 = vld [vmem:[%s15 + $0x1a0] sm:$0xff]
    %v3269 = vld [vmem:[%s15 + $0x1a8] sm:$0xff]
    %v3270 = vld [vmem:[%s15 + $0x1b0] sm:$0xff]
    %v3271 = vld [vmem:[%s15 + $0x1b8] sm:$0xff]
    %v3272 = vld [vmem:[%s15 + $0x1c0] sm:$0xff]
    %v3273 = vld [vmem:[%s15 + $0x1c8] sm:$0xff]
    %v3274 = vld [vmem:[%s15 + $0x1d0] sm:$0xff]
    %v3275 = vld [vmem:[%s15 + $0x1d8] sm:$0xff]
    %v3276 = vld [vmem:[%s15 + $0x1e0] sm:$0xff]
    %v3277 = vld [vmem:[%s15 + $0x1e8] sm:$0xff]
    %v3278 = vld [vmem:[%s15 + $0x1f0] sm:$0xff]
    %v3279 = vld [vmem:[%s15 + $0x1f8] sm:$0xff]
    %v3280 = vld [vmem:[%s15 + $0x200] sm:$0xff]
    %v3281 = vld [vmem:[%s15 + $0x208] sm:$0xff]
    %v3282 = vld [vmem:[%s15 + $0x210] sm:$0xff]
    %v3283 = vld [vmem:[%s15 + $0x218] sm:$0xff]
    %v3284 = vld [vmem:[%s15 + $0x220] sm:$0xff]
    %v3285 = vld [vmem:[%s15 + $0x228] sm:$0xff]
    %v3286 = vld [vmem:[%s15 + $0x230] sm:$0xff]
    %v3287 = vld [vmem:[%s15 + $0x238] sm:$0xff]
    %v3288 = vld [vmem:[%s15 + $0x240] sm:$0xff]
    %v3289 = vld [vmem:[%s15 + $0x248] sm:$0xff]
    %v3290 = vld [vmem:[%s15 + $0x250] sm:$0xff]
    %v3291 = vld [vmem:[%s15 + $0x258] sm:$0xff]
    %v3292 = vld [vmem:[%s15 + $0x260] sm:$0xff]
    %v3293 = vld [vmem:[%s15 + $0x268] sm:$0xff]
    %v3294 = vld [vmem:[%s15 + $0x270] sm:$0xff]
    %v3295 = vld [vmem:[%s15 + $0x278] sm:$0xff]
    %v3296 = vld [vmem:[%s15 + $0x280] sm:$0xff]
    %v3297 = vld [vmem:[%s15 + $0x288] sm:$0xff]
    %v3298 = vld [vmem:[%s15 + $0x290] sm:$0xff]
    %v3299 = vld [vmem:[%s15 + $0x298] sm:$0xff]
    %v3300 = vld [vmem:[%s15 + $0x2a0] sm:$0xff]
    %v3301 = vld [vmem:[%s15 + $0x2a8] sm:$0xff]
    %v3302 = vld [vmem:[%s15 + $0x2b0] sm:$0xff]
    %v3303 = vld [vmem:[%s15 + $0x2b8] sm:$0xff]
    %v3304 = vld [vmem:[%s15 + $0x2c0] sm:$0xff]
    %v3305 = vld [vmem:[%s15 + $0x2c8] sm:$0xff]
    %v3306 = vld [vmem:[%s15 + $0x2d0] sm:$0xff]
    %v3307 = vld [vmem:[%s15 + $0x2d8] sm:$0xff]
    %v3308 = vld [vmem:[%s15 + $0x2e0] sm:$0xff]
    %v3309 = vld [vmem:[%s15 + $0x2e8] sm:$0xff]
    %v3310 = vld [vmem:[%s15 + $0x2f0] sm:$0xff]
    %v3311 = vld [vmem:[%s15 + $0x2f8] sm:$0xff]
    %v3312 = vld [vmem:[%s15 + $0x300] sm:$0xff]
    %v3313 = vld [vmem:[%s15 + $0x308] sm:$0xff]
    %v3314 = vld [vmem:[%s15 + $0x310] sm:$0xff]
    %v3315 = vld [vmem:[%s15 + $0x318] sm:$0xff]
    %v3316 = vld [vmem:[%s15 + $0x320] sm:$0xff]
    %v3317 = vld [vmem:[%s15 + $0x328] sm:$0xff]
    %v3318 = vld [vmem:[%s15 + $0x330] sm:$0xff]
    %v3319 = vld [vmem:[%s15 + $0x338] sm:$0xff]
    %v3320 = vld [vmem:[%s15 + $0x340] sm:$0xff]
    %v3321 = vld [vmem:[%s15 + $0x348] sm:$0xff]
    %v3322 = vld [vmem:[%s15 + $0x350] sm:$0xff]
    %v3323 = vld [vmem:[%s15 + $0x358] sm:$0xff]
    %v3324 = vld [vmem:[%s15 + $0x360] sm:$0xff]
    %v3325 = vld [vmem:[%s15 + $0x368] sm:$0xff]
    %v3326 = vld [vmem:[%s15 + $0x370] sm:$0xff]
    %v3327 = vld [vmem:[%s15 + $0x378] sm:$0xff]
    %v3328 = vld [vmem:[%s15 + $0x380] sm:$0xff]
    %v3329 = vld [vmem:[%s15 + $0x388] sm:$0xff]
    %v3330 = vld [vmem:[%s15 + $0x390] sm:$0xff]
    %v3331 = vld [vmem:[%s15 + $0x398] sm:$0xff]
    %v3332 = vld [vmem:[%s15 + $0x3a0] sm:$0xff]
    %v3333 = vld [vmem:[%s15 + $0x3a8] sm:$0xff]
    %v3334 = vld [vmem:[%s15 + $0x3b0] sm:$0xff]
    %v3335 = vld [vmem:[%s15 + $0x3b8] sm:$0xff]
    %v3336 = vld [vmem:[%s15 + $0x3c0] sm:$0xff]
    %v3337 = vld [vmem:[%s15 + $0x3c8] sm:$0xff]
    %v3338 = vld [vmem:[%s15 + $0x3d0] sm:$0xff]
    %v3339 = vld [vmem:[%s15 + $0x3d8] sm:$0xff]
    %v3340 = vld [vmem:[%s15 + $0x3e0] sm:$0xff]
    %v3341 = vld [vmem:[%s15 + $0x3e8] sm:$0xff]
    %v3342 = vld [vmem:[%s15 + $0x3f0] sm:$0xff]
    %v3343 = vld [vmem:[%s15 + $0x3f8] sm:$0xff]
    %v3344 = vld [vmem:[%s16] sm:$0x1]
    %v3346 = vlaneseq
    %v3347 = vshrl.u32 %v3346, 7
    %v3348 = vsub.s32 0, %v3347
    %v3349 = vrot.slane %v3344, %v3348
    %3351 = vmatprep.subr.mxu0 0.0
    %3352 = vmatpush1.msra.mxu0 %v3216
    %3353 = vmatprep.subr.mxu0 0.0
    %3354 = vmatpush1.msra.mxu0 %v3217
    %3355 = vmatprep.subr.mxu0 0.0
    %3356 = vmatpush1.msra.mxu0 %v3218
    %3357 = vmatprep.subr.mxu0 0.0
    %3358 = vmatpush1.msra.mxu0 %v3219
    %3359 = vmatprep.subr.mxu0 0.0
    %3360 = vmatpush1.msra.mxu0 %v3220
    %3361 = vmatprep.subr.mxu0 0.0
    %3362 = vmatpush1.msra.mxu0 %v3221
    %3363 = vmatprep.subr.mxu0 0.0
    %3364 = vmatpush1.msra.mxu0 %v3222
    %3365 = vmatprep.subr.mxu0 0.0
    %3366 = vmatpush1.msra.mxu0 %v3223
    %3367 = vmatprep.subr.mxu0 0.0
    %3368 = vmatpush1.msra.mxu0 %v3224
    %3369 = vmatprep.subr.mxu0 0.0
    %3370 = vmatpush1.msra.mxu0 %v3225
    %3371 = vmatprep.subr.mxu0 0.0
    %3372 = vmatpush1.msra.mxu0 %v3226
    %3373 = vmatprep.subr.mxu0 0.0
    %3374 = vmatpush1.msra.mxu0 %v3227
    %3375 = vmatprep.subr.mxu0 0.0
    %3376 = vmatpush1.msra.mxu0 %v3228
    %3377 = vmatprep.subr.mxu0 0.0
    %3378 = vmatpush1.msra.mxu0 %v3229
    %3379 = vmatprep.subr.mxu0 0.0
    %3380 = vmatpush1.msra.mxu0 %v3230
    %3381 = vmatprep.subr.mxu0 0.0
    %3382 = vmatpush1.msra.mxu0 %v3231
    %3383 = vmatprep.subr.mxu0 0.0
    %3384 = vmatpush1.msra.mxu0 %v3232
    %3385 = vmatprep.subr.mxu0 0.0
    %3386 = vmatpush1.msra.mxu0 %v3233
    %3387 = vmatprep.subr.mxu0 0.0
    %3388 = vmatpush1.msra.mxu0 %v3234
    %3389 = vmatprep.subr.mxu0 0.0
    %3390 = vmatpush1.msra.mxu0 %v3235
    %3391 = vmatprep.subr.mxu0 0.0
    %3392 = vmatpush1.msra.mxu0 %v3236
    %3393 = vmatprep.subr.mxu0 0.0
    %3394 = vmatpush1.msra.mxu0 %v3237
    %3395 = vmatprep.subr.mxu0 0.0
    %3396 = vmatpush1.msra.mxu0 %v3238
    %3397 = vmatprep.subr.mxu0 0.0
    %3398 = vmatpush1.msra.mxu0 %v3239
    %3399 = vmatprep.subr.mxu0 0.0
    %3400 = vmatpush1.msra.mxu0 %v3240
    %3401 = vmatprep.subr.mxu0 0.0
    %3402 = vmatpush1.msra.mxu0 %v3241
    %3403 = vmatprep.subr.mxu0 0.0
    %3404 = vmatpush1.msra.mxu0 %v3242
    %3405 = vmatprep.subr.mxu0 0.0
    %3406 = vmatpush1.msra.mxu0 %v3243
    %3407 = vmatprep.subr.mxu0 0.0
    %3408 = vmatpush1.msra.mxu0 %v3244
    %3409 = vmatprep.subr.mxu0 0.0
    %3410 = vmatpush1.msra.mxu0 %v3245
    %3411 = vmatprep.subr.mxu0 0.0
    %3412 = vmatpush1.msra.mxu0 %v3246
    %3413 = vmatprep.subr.mxu0 0.0
    %3414 = vmatpush1.msra.mxu0 %v3247
    %3415 = vmatprep.mubr.f32.mxu0 %v3201
    %3416 = vmatmul.mubr.f32.gmra.mrb[0].mxu0 %v3200
    %v3417 = vpop.f32.mrb[0].mxu0
    %v3418 = vadd.f32 %v3349, %v3417
    %v3419 = vpop.f32.mrb[0].mxu0
    %3420 = vmatprep.mubr.f32.mxu0 %v3209
    %3421 = vmatmul.mubr.f32.gmra.mrb[0].mxu0 %v3208
    %v3422 = vpop.f32.mrb[0].mxu0
    %v3423 = vadd.f32 %v3349, %v3422
    %v3424 = vpop.f32.mrb[0].mxu0
    %3425 = vdwg.mxu0
    %3426 = vmatprep.subr.mxu0 0.0
    %3427 = vmatpush1.msra.mxu0 %v3248
    %3428 = vmatprep.subr.mxu0 0.0
    %3429 = vmatpush1.msra.mxu0 %v3249
    %3430 = vmatprep.subr.mxu0 0.0
    %3431 = vmatpush1.msra.mxu0 %v3250
    %3432 = vmatprep.subr.mxu0 0.0
    %3433 = vmatpush1.msra.mxu0 %v3251
    %3434 = vmatprep.subr.mxu0 0.0
    %3435 = vmatpush1.msra.mxu0 %v3252
    %3436 = vmatprep.subr.mxu0 0.0
    %3437 = vmatpush1.msra.mxu0 %v3253
    %3438 = vmatprep.subr.mxu0 0.0
    %3439 = vmatpush1.msra.mxu0 %v3254
    %3440 = vmatprep.subr.mxu0 0.0
    %3441 = vmatpush1.msra.mxu0 %v3255
    %3442 = vmatprep.subr.mxu0 0.0
    %3443 = vmatpush1.msra.mxu0 %v3256
    %3444 = vmatprep.subr.mxu0 0.0
    %3445 = vmatpush1.msra.mxu0 %v3257
    %3446 = vmatprep.subr.mxu0 0.0
    %3447 = vmatpush1.msra.mxu0 %v3258
    %3448 = vmatprep.subr.mxu0 0.0
    %3449 = vmatpush1.msra.mxu0 %v3259
    %3450 = vmatprep.subr.mxu0 0.0
    %3451 = vmatpush1.msra.mxu0 %v3260
    %3452 = vmatprep.subr.mxu0 0.0
    %3453 = vmatpush1.msra.mxu0 %v3261
    %3454 = vmatprep.subr.mxu0 0.0
    %3455 = vmatpush1.msra.mxu0 %v3262
    %3456 = vmatprep.subr.mxu0 0.0
    %3457 = vmatpush1.msra.mxu0 %v3263
    %3458 = vmatprep.subr.mxu0 0.0
    %3459 = vmatpush1.msra.mxu0 %v3264
    %3460 = vmatprep.subr.mxu0 0.0
    %3461 = vmatpush1.msra.mxu0 %v3265
    %3462 = vmatprep.subr.mxu0 0.0
    %3463 = vmatpush1.msra.mxu0 %v3266
    %3464 = vmatprep.subr.mxu0 0.0
    %3465 = vmatpush1.msra.mxu0 %v3267
    %3466 = vmatprep.subr.mxu0 0.0
    %3467 = vmatpush1.msra.mxu0 %v3268
    %3468 = vmatprep.subr.mxu0 0.0
    %3469 = vmatpush1.msra.mxu0 %v3269
    %3470 = vmatprep.subr.mxu0 0.0
    %3471 = vmatpush1.msra.mxu0 %v3270
    %3472 = vmatprep.subr.mxu0 0.0
    %3473 = vmatpush1.msra.mxu0 %v3271
    %3474 = vmatprep.subr.mxu0 0.0
    %3475 = vmatpush1.msra.mxu0 %v3272
    %3476 = vmatprep.subr.mxu0 0.0
    %3477 = vmatpush1.msra.mxu0 %v3273
    %3478 = vmatprep.subr.mxu0 0.0
    %3479 = vmatpush1.msra.mxu0 %v3274
    %3480 = vmatprep.subr.mxu0 0.0
    %3481 = vmatpush1.msra.mxu0 %v3275
    %3482 = vmatprep.subr.mxu0 0.0
    %3483 = vmatpush1.msra.mxu0 %v3276
    %3484 = vmatprep.subr.mxu0 0.0
    %3485 = vmatpush1.msra.mxu0 %v3277
    %3486 = vmatprep.subr.mxu0 0.0
    %3487 = vmatpush1.msra.mxu0 %v3278
    %3488 = vmatprep.subr.mxu0 0.0
    %3489 = vmatpush1.msra.mxu0 %v3279
    %3490 = vmatprep.mubr.f32.mxu0 %v3203
    %3491 = vmatmul.mubr.f32.gmra.mrb[0].mxu0 %v3202
    %v3492 = vpop.f32.mrb[0].mxu0
    %v3493 = vadd.f32 %v3418, %v3492
    %v3494 = vpop.f32.mrb[0].mxu0
    %3495 = vmatprep.mubr.f32.mxu0 %v3211
    %3496 = vmatmul.mubr.f32.gmra.mrb[0].mxu0 %v3210
    %v3497 = vpop.f32.mrb[0].mxu0
    %v3498 = vadd.f32 %v3423, %v3497
    %v3499 = vpop.f32.mrb[0].mxu0
    %3500 = vdwg.mxu0
    %3501 = vmatprep.subr.mxu0 0.0
    %3502 = vmatpush1.msra.mxu0 %v3280
    %3503 = vmatprep.subr.mxu0 0.0
    %3504 = vmatpush1.msra.mxu0 %v3281
    %3505 = vmatprep.subr.mxu0 0.0
    %3506 = vmatpush1.msra.mxu0 %v3282
    %3507 = vmatprep.subr.mxu0 0.0
    %3508 = vmatpush1.msra.mxu0 %v3283
    %3509 = vmatprep.subr.mxu0 0.0
    %3510 = vmatpush1.msra.mxu0 %v3284
    %3511 = vmatprep.subr.mxu0 0.0
    %3512 = vmatpush1.msra.mxu0 %v3285
    %3513 = vmatprep.subr.mxu0 0.0
    %3514 = vmatpush1.msra.mxu0 %v3286
    %3515 = vmatprep.subr.mxu0 0.0
    %3516 = vmatpush1.msra.mxu0 %v3287
    %3517 = vmatprep.subr.mxu0 0.0
    %3518 = vmatpush1.msra.mxu0 %v3288
    %3519 = vmatprep.subr.mxu0 0.0
    %3520 = vmatpush1.msra.mxu0 %v3289
    %3521 = vmatprep.subr.mxu0 0.0
    %3522 = vmatpush1.msra.mxu0 %v3290
    %3523 = vmatprep.subr.mxu0 0.0
    %3524 = vmatpush1.msra.mxu0 %v3291
    %3525 = vmatprep.subr.mxu0 0.0
    %3526 = vmatpush1.msra.mxu0 %v3292
    %3527 = vmatprep.subr.mxu0 0.0
    %3528 = vmatpush1.msra.mxu0 %v3293
    %3529 = vmatprep.subr.mxu0 0.0
    %3530 = vmatpush1.msra.mxu0 %v3294
    %3531 = vmatprep.subr.mxu0 0.0
    %3532 = vmatpush1.msra.mxu0 %v3295
    %3533 = vmatprep.subr.mxu0 0.0
    %3534 = vmatpush1.msra.mxu0 %v3296
    %3535 = vmatprep.subr.mxu0 0.0
    %3536 = vmatpush1.msra.mxu0 %v3297
    %3537 = vmatprep.subr.mxu0 0.0
    %3538 = vmatpush1.msra.mxu0 %v3298
    %3539 = vmatprep.subr.mxu0 0.0
    %3540 = vmatpush1.msra.mxu0 %v3299
    %3541 = vmatprep.subr.mxu0 0.0
    %3542 = vmatpush1.msra.mxu0 %v3300
    %3543 = vmatprep.subr.mxu0 0.0
    %3544 = vmatpush1.msra.mxu0 %v3301
    %3545 = vmatprep.subr.mxu0 0.0
    %3546 = vmatpush1.msra.mxu0 %v3302
    %3547 = vmatprep.subr.mxu0 0.0
    %3548 = vmatpush1.msra.mxu0 %v3303
    %3549 = vmatprep.subr.mxu0 0.0
    %3550 = vmatpush1.msra.mxu0 %v3304
    %3551 = vmatprep.subr.mxu0 0.0
    %3552 = vmatpush1.msra.mxu0 %v3305
    %3553 = vmatprep.subr.mxu0 0.0
    %3554 = vmatpush1.msra.mxu0 %v3306
    %3555 = vmatprep.subr.mxu0 0.0
    %3556 = vmatpush1.msra.mxu0 %v3307
    %3557 = vmatprep.subr.mxu0 0.0
    %3558 = vmatpush1.msra.mxu0 %v3308
    %3559 = vmatprep.subr.mxu0 0.0
    %3560 = vmatpush1.msra.mxu0 %v3309
    %3561 = vmatprep.subr.mxu0 0.0
    %3562 = vmatpush1.msra.mxu0 %v3310
    %3563 = vmatprep.subr.mxu0 0.0
    %3564 = vmatpush1.msra.mxu0 %v3311
    %3565 = vmatprep.mubr.f32.mxu0 %v3205
    %3566 = vmatmul.mubr.f32.gmra.mrb[0].mxu0 %v3204
    %v3567 = vpop.f32.mrb[0].mxu0
    %v3568 = vadd.f32 %v3493, %v3567
    %v3569 = vpop.f32.mrb[0].mxu0
    %3570 = vmatprep.mubr.f32.mxu0 %v3213
    %3571 = vmatmul.mubr.f32.gmra.mrb[0].mxu0 %v3212
    %v3572 = vpop.f32.mrb[0].mxu0
    %v3573 = vadd.f32 %v3498, %v3572
    %v3574 = vpop.f32.mrb[0].mxu0
    %3575 = vdwg.mxu0
    %3576 = vmatprep.subr.mxu0 0.0
    %3577 = vmatpush1.msra.mxu0 %v3312
    %3578 = vmatprep.subr.mxu0 0.0
    %3579 = vmatpush1.msra.mxu0 %v3313
    %3580 = vmatprep.subr.mxu0 0.0
    %3581 = vmatpush1.msra.mxu0 %v3314
    %3582 = vmatprep.subr.mxu0 0.0
    %3583 = vmatpush1.msra.mxu0 %v3315
    %3584 = vmatprep.subr.mxu0 0.0
    %3585 = vmatpush1.msra.mxu0 %v3316
    %3586 = vmatprep.subr.mxu0 0.0
    %3587 = vmatpush1.msra.mxu0 %v3317
    %3588 = vmatprep.subr.mxu0 0.0
    %3589 = vmatpush1.msra.mxu0 %v3318
    %3590 = vmatprep.subr.mxu0 0.0
    %3591 = vmatpush1.msra.mxu0 %v3319
    %3592 = vmatprep.subr.mxu0 0.0
    %3593 = vmatpush1.msra.mxu0 %v3320
    %3594 = vmatprep.subr.mxu0 0.0
    %3595 = vmatpush1.msra.mxu0 %v3321
    %3596 = vmatprep.subr.mxu0 0.0
    %3597 = vmatpush1.msra.mxu0 %v3322
    %3598 = vmatprep.subr.mxu0 0.0
    %3599 = vmatpush1.msra.mxu0 %v3323
    %3600 = vmatprep.subr.mxu0 0.0
    %3601 = vmatpush1.msra.mxu0 %v3324
    %3602 = vmatprep.subr.mxu0 0.0
    %3603 = vmatpush1.msra.mxu0 %v3325
    %3604 = vmatprep.subr.mxu0 0.0
    %3605 = vmatpush1.msra.mxu0 %v3326
    %3606 = vmatprep.subr.mxu0 0.0
    %3607 = vmatpush1.msra.mxu0 %v3327
    %3608 = vmatprep.subr.mxu0 0.0
    %3609 = vmatpush1.msra.mxu0 %v3328
    %3610 = vmatprep.subr.mxu0 0.0
    %3611 = vmatpush1.msra.mxu0 %v3329
    %3612 = vmatprep.subr.mxu0 0.0
    %3613 = vmatpush1.msra.mxu0 %v3330
    %3614 = vmatprep.subr.mxu0 0.0
    %3615 = vmatpush1.msra.mxu0 %v3331
    %3616 = vmatprep.subr.mxu0 0.0
    %3617 = vmatpush1.msra.mxu0 %v3332
    %3618 = vmatprep.subr.mxu0 0.0
    %3619 = vmatpush1.msra.mxu0 %v3333
    %3620 = vmatprep.subr.mxu0 0.0
    %3621 = vmatpush1.msra.mxu0 %v3334
    %3622 = vmatprep.subr.mxu0 0.0
    %3623 = vmatpush1.msra.mxu0 %v3335
    %3624 = vmatprep.subr.mxu0 0.0
    %3625 = vmatpush1.msra.mxu0 %v3336
    %3626 = vmatprep.subr.mxu0 0.0
    %3627 = vmatpush1.msra.mxu0 %v3337
    %3628 = vmatprep.subr.mxu0 0.0
    %3629 = vmatpush1.msra.mxu0 %v3338
    %3630 = vmatprep.subr.mxu0 0.0
    %3631 = vmatpush1.msra.mxu0 %v3339
    %3632 = vmatprep.subr.mxu0 0.0
    %3633 = vmatpush1.msra.mxu0 %v3340
    %3634 = vmatprep.subr.mxu0 0.0
    %3635 = vmatpush1.msra.mxu0 %v3341
    %3636 = vmatprep.subr.mxu0 0.0
    %3637 = vmatpush1.msra.mxu0 %v3342
    %3638 = vmatprep.subr.mxu0 0.0
    %3639 = vmatpush1.msra.mxu0 %v3343
    %3640 = vmatprep.mubr.f32.mxu0 %v3207
    %3641 = vmatmul.mubr.f32.gmra.mrb[0].mxu0 %v3206
    %v3642 = vpop.f32.mrb[0].mxu0
    %v3643 = vadd.f32 %v3568, %v3642
    %v3644 = vpop.f32.mrb[0].mxu0
    %3645 = vmatprep.mubr.f32.mxu0 %v3215
    %3646 = vmatmul.mubr.f32.gmra.mrb[0].mxu0 %v3214
    %v3647 = vpop.f32.mrb[0].mxu0
    %v3648 = vadd.f32 %v3573, %v3647
    %v3649 = vpop.f32.mrb[0].mxu0
    %3650 = vdwg.mxu0
    %v3651 = vadd.f32 %v2810, %v3643
    %v3652 = vadd.f32 %v2811, %v3648
    %v3653 = vld [vmem:[%s11] sm:$0x1]
    %v3654 = vld [vmem:[%s12] sm:$0x1]
    %v3655 = vsel %vm70, %v3651, 0.0
    %3656 = vadd.xlane.f32.xlu0 %v3655
    %v3657 = vpop.xlane.xlu0 %3656
    %v3658 = vsel %vm70, %v3652, 0.0
    %3659 = vadd.xlane.f32.xlu0 %v3658
    %v3660 = vpop.xlane.xlu0 %3659
    %v3661 = vmul.f32 %v3657, %v2775
    %v3662 = vmul.f32 %v3660, %v2775
    %v3663 = vsub.f32 %v3651, %v3661
    %v3664 = vsub.f32 %v3652, %v3662
    %v3665 = vmul.f32 %v3663, %v3663
    %v3666 = vmul.f32 %v3664, %v3664
    %v3667 = vsel %vm70, %v3665, 0.0
    %3668 = vadd.xlane.f32.xlu0 %v3667
    %v3669 = vpop.xlane.xlu0 %3668
    %v3670 = vsel %vm70, %v3666, 0.0
    %3671 = vadd.xlane.f32.xlu0 %v3670
    %v3672 = vpop.xlane.xlu0 %3671
    %v3673 = vmul.f32 %v3669, %v2775
    %v3674 = vmul.f32 %v3672, %v2775
    %v3675 = vadd.f32 %v3673, 1e-05
    %v3676 = vadd.f32 %v3674, 1e-05
    %v3677 = vrsqrt.pop %v3675
    %v3678 = vrsqrt.pop %v3676
    %v3679 = vmul.f32 %v3663, %v3677
    %v3680 = vmul.f32 %v3664, %v3678
    %v3682 = vlaneseq
    %v3683 = vshrl.u32 %v3682, 7
    %v3684 = vsub.s32 0, %v3683
    %v3685 = vrot.slane %v3653, %v3684
    %v3687 = vmul.f32 %v3679, %v3685
    %v3688 = vmul.f32 %v3680, %v3685
    %v3690 = vlaneseq
    %v3691 = vshrl.u32 %v3690, 7
    %v3692 = vsub.s32 0, %v3691
    %v3693 = vrot.slane %v3654, %v3692
    %v3695 = vadd.f32 %v3687, %v3693
    %v3696 = vadd.f32 %v3688, %v3693
    %s3697 = scalar_lea.vmem %s1, 128
    %v3698 = vld [vmem:[%s3697] sm:$0xff]
    %v3699 = vld [vmem:[%s3697 + $0x8] sm:$0xff]
    %v3700 = vld [vmem:[%s3697 + $0x10] sm:$0xff]
    %v3701 = vld [vmem:[%s3697 + $0x18] sm:$0xff]
    %s3702 = scalar_lea.vmem %s2, 4
    %v3703 = vld [vmem:[%s3702] sm:$0x1]
    %v3705 = vlaneseq
    %v3706 = vshrl.u32 %v3705, 7
    %v3707 = vsub.s32 0, %v3706
    %v3708 = vrot.slane %v3703, %v3707
    %v3711 = vsel %vm70, %v3695, 0
    %v3714 = vsel %vm70, %v3696, 0
    %3716 = vmatprep.subr.mxu0 0.0
    %3717 = vmatpush1.msra.mxu0 %v3698
    %3718 = vmatprep.subr.mxu0 0.0
    %3719 = vmatpush1.msra.mxu0 %v3699
    %3720 = vmatprep.subr.mxu0 0.0
    %3721 = vmatpush1.msra.mxu0 %v3700
    %3722 = vmatprep.subr.mxu0 0.0
    %3723 = vmatpush1.msra.mxu0 %v3701
    %3724 = vmatprep.subr.mxu0 0.0
    %3725 = vmatpush1.msra.mxu0 0.0
    %3726 = vmatprep.subr.mxu0 0.0
    %3727 = vmatpush1.msra.mxu0 0.0
    %3728 = vmatprep.subr.mxu0 0.0
    %3729 = vmatpush1.msra.mxu0 0.0
    %3730 = vmatprep.subr.mxu0 0.0
    %3731 = vmatpush1.msra.mxu0 0.0
    %3732 = vmatprep.subr.mxu0 0.0
    %3733 = vmatpush1.msra.mxu0 0.0
    %3734 = vmatprep.subr.mxu0 0.0
    %3735 = vmatpush1.msra.mxu0 0.0
    %3736 = vmatprep.subr.mxu0 0.0
    %3737 = vmatpush1.msra.mxu0 0.0
    %3738 = vmatprep.subr.mxu0 0.0
    %3739 = vmatpush1.msra.mxu0 0.0
    %3740 = vmatprep.subr.mxu0 0.0
    %3741 = vmatpush1.msra.mxu0 0.0
    %3742 = vmatprep.subr.mxu0 0.0
    %3743 = vmatpush1.msra.mxu0 0.0
    %3744 = vmatprep.subr.mxu0 0.0
    %3745 = vmatpush1.msra.mxu0 0.0
    %3746 = vmatprep.subr.mxu0 0.0
    %3747 = vmatpush1.msra.mxu0 0.0
    %3748 = vmatprep.subr.mxu0 0.0
    %3749 = vmatpush1.msra.mxu0 0.0
    %3750 = vmatprep.subr.mxu0 0.0
    %3751 = vmatpush1.msra.mxu0 0.0
    %3752 = vmatprep.subr.mxu0 0.0
    %3753 = vmatpush1.msra.mxu0 0.0
    %3754 = vmatprep.subr.mxu0 0.0
    %3755 = vmatpush1.msra.mxu0 0.0
    %3756 = vmatprep.subr.mxu0 0.0
    %3757 = vmatpush1.msra.mxu0 0.0
    %3758 = vmatprep.subr.mxu0 0.0
    %3759 = vmatpush1.msra.mxu0 0.0
    %3760 = vmatprep.subr.mxu0 0.0
    %3761 = vmatpush1.msra.mxu0 0.0
    %3762 = vmatprep.subr.mxu0 0.0
    %3763 = vmatpush1.msra.mxu0 0.0
    %3764 = vmatprep.subr.mxu0 0.0
    %3765 = vmatpush1.msra.mxu0 0.0
    %3766 = vmatprep.subr.mxu0 0.0
    %3767 = vmatpush1.msra.mxu0 0.0
    %3768 = vmatprep.subr.mxu0 0.0
    %3769 = vmatpush1.msra.mxu0 0.0
    %3770 = vmatprep.subr.mxu0 0.0
    %3771 = vmatpush1.msra.mxu0 0.0
    %3772 = vmatprep.subr.mxu0 0.0
    %3773 = vmatpush1.msra.mxu0 0.0
    %3774 = vmatprep.subr.mxu0 0.0
    %3775 = vmatpush1.msra.mxu0 0.0
    %3776 = vmatprep.subr.mxu0 0.0
    %3777 = vmatpush1.msra.mxu0 0.0
    %3778 = vmatprep.subr.mxu0 0.0
    %3779 = vmatpush1.msra.mxu0 0.0
    %3780 = vmatprep.mubr.f32.mxu0 0.0
    %3781 = vmatmul.mubr.f32.gmra.mrb[0].mxu0 %v3711
    %v3782 = vpop.f32.mrb[0].mxu0
    %v3783 = vadd.f32 %v3708, %v3782
    %v3784 = vpop.f32.mrb[0].mxu0
    %3785 = vmatprep.mubr.f32.mxu0 0.0
    %3786 = vmatmul.mubr.f32.gmra.mrb[0].mxu0 %v3714
    %v3787 = vpop.f32.mrb[0].mxu0
    %v3788 = vadd.f32 %v3708, %v3787
    %v3789 = vpop.f32.mrb[0].mxu0
    %3790 = vdwg.mxu0
    %s3791 = scalar_lea.vmem %s3, 128
    %v3792 = vld [vmem:[%s3791] sm:$0xff]
    %v3793 = vld [vmem:[%s3791 + $0x8] sm:$0xff]
    %v3794 = vld [vmem:[%s3791 + $0x10] sm:$0xff]
    %v3795 = vld [vmem:[%s3791 + $0x18] sm:$0xff]
    %s3796 = scalar_lea.vmem %s4, 4
    %v3797 = vld [vmem:[%s3796] sm:$0x1]
    %v3799 = vlaneseq
    %v3800 = vshrl.u32 %v3799, 7
    %v3801 = vsub.s32 0, %v3800
    %v3802 = vrot.slane %v3797, %v3801
    %3804 = vmatprep.subr.mxu0 0.0
    %3805 = vmatpush1.msra.mxu0 %v3792
    %3806 = vmatprep.subr.mxu0 0.0
    %3807 = vmatpush1.msra.mxu0 %v3793
    %3808 = vmatprep.subr.mxu0 0.0
    %3809 = vmatpush1.msra.mxu0 %v3794
    %3810 = vmatprep.subr.mxu0 0.0
    %3811 = vmatpush1.msra.mxu0 %v3795
    %3812 = vmatprep.subr.mxu0 0.0
    %3813 = vmatpush1.msra.mxu0 0.0
    %3814 = vmatprep.subr.mxu0 0.0
    %3815 = vmatpush1.msra.mxu0 0.0
    %3816 = vmatprep.subr.mxu0 0.0
    %3817 = vmatpush1.msra.mxu0 0.0
    %3818 = vmatprep.subr.mxu0 0.0
    %3819 = vmatpush1.msra.mxu0 0.0
    %3820 = vmatprep.subr.mxu0 0.0
    %3821 = vmatpush1.msra.mxu0 0.0
    %3822 = vmatprep.subr.mxu0 0.0
    %3823 = vmatpush1.msra.mxu0 0.0
    %3824 = vmatprep.subr.mxu0 0.0
    %3825 = vmatpush1.msra.mxu0 0.0
    %3826 = vmatprep.subr.mxu0 0.0
    %3827 = vmatpush1.msra.mxu0 0.0
    %3828 = vmatprep.subr.mxu0 0.0
    %3829 = vmatpush1.msra.mxu0 0.0
    %3830 = vmatprep.subr.mxu0 0.0
    %3831 = vmatpush1.msra.mxu0 0.0
    %3832 = vmatprep.subr.mxu0 0.0
    %3833 = vmatpush1.msra.mxu0 0.0
    %3834 = vmatprep.subr.mxu0 0.0
    %3835 = vmatpush1.msra.mxu0 0.0
    %3836 = vmatprep.subr.mxu0 0.0
    %3837 = vmatpush1.msra.mxu0 0.0
    %3838 = vmatprep.subr.mxu0 0.0
    %3839 = vmatpush1.msra.mxu0 0.0
    %3840 = vmatprep.subr.mxu0 0.0
    %3841 = vmatpush1.msra.mxu0 0.0
    %3842 = vmatprep.subr.mxu0 0.0
    %3843 = vmatpush1.msra.mxu0 0.0
    %3844 = vmatprep.subr.mxu0 0.0
    %3845 = vmatpush1.msra.mxu0 0.0
    %3846 = vmatprep.subr.mxu0 0.0
    %3847 = vmatpush1.msra.mxu0 0.0
    %3848 = vmatprep.subr.mxu0 0.0
    %3849 = vmatpush1.msra.mxu0 0.0
    %3850 = vmatprep.subr.mxu0 0.0
    %3851 = vmatpush1.msra.mxu0 0.0
    %3852 = vmatprep.subr.mxu0 0.0
    %3853 = vmatpush1.msra.mxu0 0.0
    %3854 = vmatprep.subr.mxu0 0.0
    %3855 = vmatpush1.msra.mxu0 0.0
    %3856 = vmatprep.subr.mxu0 0.0
    %3857 = vmatpush1.msra.mxu0 0.0
    %3858 = vmatprep.subr.mxu0 0.0
    %3859 = vmatpush1.msra.mxu0 0.0
    %3860 = vmatprep.subr.mxu0 0.0
    %3861 = vmatpush1.msra.mxu0 0.0
    %3862 = vmatprep.subr.mxu0 0.0
    %3863 = vmatpush1.msra.mxu0 0.0
    %3864 = vmatprep.subr.mxu0 0.0
    %3865 = vmatpush1.msra.mxu0 0.0
    %3866 = vmatprep.subr.mxu0 0.0
    %3867 = vmatpush1.msra.mxu0 0.0
    %3868 = vmatprep.mubr.f32.mxu0 0.0
    %3869 = vmatmul.mubr.f32.gmra.mrb[0].mxu0 %v3711
    %v3870 = vpop.f32.mrb[0].mxu0
    %v3871 = vadd.f32 %v3802, %v3870
    %v3872 = vpop.f32.mrb[0].mxu0
    %3873 = vmatprep.mubr.f32.mxu0 0.0
    %3874 = vmatmul.mubr.f32.gmra.mrb[0].mxu0 %v3714
    %v3875 = vpop.f32.mrb[0].mxu0
    %v3876 = vadd.f32 %v3802, %v3875
    %v3877 = vpop.f32.mrb[0].mxu0
    %3878 = vdwg.mxu0
    %s3879 = scalar_lea.vmem %s5, 128
    %v3880 = vld [vmem:[%s3879] sm:$0xff]
    %v3881 = vld [vmem:[%s3879 + $0x8] sm:$0xff]
    %v3882 = vld [vmem:[%s3879 + $0x10] sm:$0xff]
    %v3883 = vld [vmem:[%s3879 + $0x18] sm:$0xff]
    %s3884 = scalar_lea.vmem %s6, 4
    %v3885 = vld [vmem:[%s3884] sm:$0x1]
    %v3887 = vlaneseq
    %v3888 = vshrl.u32 %v3887, 7
    %v3889 = vsub.s32 0, %v3888
    %v3890 = vrot.slane %v3885, %v3889
    %3892 = vmatprep.subr.mxu0 0.0
    %3893 = vmatpush1.msra.mxu0 %v3880
    %3894 = vmatprep.subr.mxu0 0.0
    %3895 = vmatpush1.msra.mxu0 %v3881
    %3896 = vmatprep.subr.mxu0 0.0
    %3897 = vmatpush1.msra.mxu0 %v3882
    %3898 = vmatprep.subr.mxu0 0.0
    %3899 = vmatpush1.msra.mxu0 %v3883
    %3900 = vmatprep.subr.mxu0 0.0
    %3901 = vmatpush1.msra.mxu0 0.0
    %3902 = vmatprep.subr.mxu0 0.0
    %3903 = vmatpush1.msra.mxu0 0.0
    %3904 = vmatprep.subr.mxu0 0.0
    %3905 = vmatpush1.msra.mxu0 0.0
    %3906 = vmatprep.subr.mxu0 0.0
    %3907 = vmatpush1.msra.mxu0 0.0
    %3908 = vmatprep.subr.mxu0 0.0
    %3909 = vmatpush1.msra.mxu0 0.0
    %3910 = vmatprep.subr.mxu0 0.0
    %3911 = vmatpush1.msra.mxu0 0.0
    %3912 = vmatprep.subr.mxu0 0.0
    %3913 = vmatpush1.msra.mxu0 0.0
    %3914 = vmatprep.subr.mxu0 0.0
    %3915 = vmatpush1.msra.mxu0 0.0
    %3916 = vmatprep.subr.mxu0 0.0
    %3917 = vmatpush1.msra.mxu0 0.0
    %3918 = vmatprep.subr.mxu0 0.0
    %3919 = vmatpush1.msra.mxu0 0.0
    %3920 = vmatprep.subr.mxu0 0.0
    %3921 = vmatpush1.msra.mxu0 0.0
    %3922 = vmatprep.subr.mxu0 0.0
    %3923 = vmatpush1.msra.mxu0 0.0
    %3924 = vmatprep.subr.mxu0 0.0
    %3925 = vmatpush1.msra.mxu0 0.0
    %3926 = vmatprep.subr.mxu0 0.0
    %3927 = vmatpush1.msra.mxu0 0.0
    %3928 = vmatprep.subr.mxu0 0.0
    %3929 = vmatpush1.msra.mxu0 0.0
    %3930 = vmatprep.subr.mxu0 0.0
    %3931 = vmatpush1.msra.mxu0 0.0
    %3932 = vmatprep.subr.mxu0 0.0
    %3933 = vmatpush1.msra.mxu0 0.0
    %3934 = vmatprep.subr.mxu0 0.0
    %3935 = vmatpush1.msra.mxu0 0.0
    %3936 = vmatprep.subr.mxu0 0.0
    %3937 = vmatpush1.msra.mxu0 0.0
    %3938 = vmatprep.subr.mxu0 0.0
    %3939 = vmatpush1.msra.mxu0 0.0
    %3940 = vmatprep.subr.mxu0 0.0
    %3941 = vmatpush1.msra.mxu0 0.0
    %3942 = vmatprep.subr.mxu0 0.0
    %3943 = vmatpush1.msra.mxu0 0.0
    %3944 = vmatprep.subr.mxu0 0.0
    %3945 = vmatpush1.msra.mxu0 0.0
    %3946 = vmatprep.subr.mxu0 0.0
    %3947 = vmatpush1.msra.mxu0 0.0
    %3948 = vmatprep.subr.mxu0 0.0
    %3949 = vmatpush1.msra.mxu0 0.0
    %3950 = vmatprep.subr.mxu0 0.0
    %3951 = vmatpush1.msra.mxu0 0.0
    %3952 = vmatprep.subr.mxu0 0.0
    %3953 = vmatpush1.msra.mxu0 0.0
    %3954 = vmatprep.subr.mxu0 0.0
    %3955 = vmatpush1.msra.mxu0 0.0
    %3956 = vmatprep.mubr.f32.mxu0 0.0
    %3957 = vmatmul.mubr.f32.gmra.mrb[0].mxu0 %v3711
    %v3958 = vpop.f32.mrb[0].mxu0
    %v3959 = vadd.f32 %v3890, %v3958
    %v3960 = vpop.f32.mrb[0].mxu0
    %3961 = vmatprep.mubr.f32.mxu0 0.0
    %3962 = vmatmul.mubr.f32.gmra.mrb[0].mxu0 %v3714
    %v3963 = vpop.f32.mrb[0].mxu0
    %v3964 = vadd.f32 %v3890, %v3963
    %v3965 = vpop.f32.mrb[0].mxu0
    %3966 = vdwg.mxu0
    %v3968 = vsel %vm324, %v3783, 0
    %v3971 = vsel %vm324, %v3871, 0
    %3973 = vmatprep.subr.mxu0 0.0
    %3974 = vmatpush1.xpose.msra.mxu0 %v3971
    %3975 = vmatprep.subr.mxu0 0.0
    %3976 = vmatpush1.xpose.msra.mxu0 0.0
    %3977 = vmatprep.subr.mxu0 0.0
    %3978 = vmatpush1.xpose.msra.mxu0 0.0
    %3979 = vmatprep.subr.mxu0 0.0
    %3980 = vmatpush1.xpose.msra.mxu0 0.0
    %3981 = vmatprep.subr.mxu0 0.0
    %3982 = vmatpush1.xpose.msra.mxu0 0.0
    %3983 = vmatprep.subr.mxu0 0.0
    %3984 = vmatpush1.xpose.msra.mxu0 0.0
    %3985 = vmatprep.subr.mxu0 0.0
    %3986 = vmatpush1.xpose.msra.mxu0 0.0
    %3987 = vmatprep.subr.mxu0 0.0
    %3988 = vmatpush1.xpose.msra.mxu0 0.0
    %3989 = vmatprep.subr.mxu0 0.0
    %3990 = vmatpush1.xpose.msra.mxu0 0.0
    %3991 = vmatprep.subr.mxu0 0.0
    %3992 = vmatpush1.xpose.msra.mxu0 0.0
    %3993 = vmatprep.subr.mxu0 0.0
    %3994 = vmatpush1.xpose.msra.mxu0 0.0
    %3995 = vmatprep.subr.mxu0 0.0
    %3996 = vmatpush1.xpose.msra.mxu0 0.0
    %3997 = vmatprep.subr.mxu0 0.0
    %3998 = vmatpush1.xpose.msra.mxu0 0.0
    %3999 = vmatprep.subr.mxu0 0.0
    %4000 = vmatpush1.xpose.msra.mxu0 0.0
    %4001 = vmatprep.subr.mxu0 0.0
    %4002 = vmatpush1.xpose.msra.mxu0 0.0
    %4003 = vmatprep.subr.mxu0 0.0
    %4004 = vmatpush1.xpose.msra.mxu0 0.0
    %4005 = vmatprep.subr.mxu0 0.0
    %4006 = vmatpush1.xpose.msra.mxu0 0.0
    %4007 = vmatprep.subr.mxu0 0.0
    %4008 = vmatpush1.xpose.msra.mxu0 0.0
    %4009 = vmatprep.subr.mxu0 0.0
    %4010 = vmatpush1.xpose.msra.mxu0 0.0
    %4011 = vmatprep.subr.mxu0 0.0
    %4012 = vmatpush1.xpose.msra.mxu0 0.0
    %4013 = vmatprep.subr.mxu0 0.0
    %4014 = vmatpush1.xpose.msra.mxu0 0.0
    %4015 = vmatprep.subr.mxu0 0.0
    %4016 = vmatpush1.xpose.msra.mxu0 0.0
    %4017 = vmatprep.subr.mxu0 0.0
    %4018 = vmatpush1.xpose.msra.mxu0 0.0
    %4019 = vmatprep.subr.mxu0 0.0
    %4020 = vmatpush1.xpose.msra.mxu0 0.0
    %4021 = vmatprep.subr.mxu0 0.0
    %4022 = vmatpush1.xpose.msra.mxu0 0.0
    %4023 = vmatprep.subr.mxu0 0.0
    %4024 = vmatpush1.xpose.msra.mxu0 0.0
    %4025 = vmatprep.subr.mxu0 0.0
    %4026 = vmatpush1.xpose.msra.mxu0 0.0
    %4027 = vmatprep.subr.mxu0 0.0
    %4028 = vmatpush1.xpose.msra.mxu0 0.0
    %4029 = vmatprep.subr.mxu0 0.0
    %4030 = vmatpush1.xpose.msra.mxu0 0.0
    %4031 = vmatprep.subr.mxu0 0.0
    %4032 = vmatpush1.xpose.msra.mxu0 0.0
    %4033 = vmatprep.subr.mxu0 0.0
    %4034 = vmatpush1.xpose.msra.mxu0 0.0
    %4035 = vmatprep.subr.mxu0 0.0
    %4036 = vmatpush1.xpose.msra.mxu0 0.0
    %4037 = vmatprep.mubr.f32.mxu0 0.0
    %4038 = vmatmul.mubr.f32.gmra.mrb[0].mxu0 %v3968
    %v4039 = vpop.f32.mrb[0].mxu0
    %v4040 = vadd.f32 0.0, %v4039
    %v4041 = vpop.f32.mrb[0].mxu0
    %4042 = vdwg.mxu0
    %v4044 = vsel %vm324, %v3788, 0
    %v4047 = vsel %vm324, %v3876, 0
    %4049 = vmatprep.subr.mxu0 0.0
    %4050 = vmatpush1.xpose.msra.mxu0 %v4047
    %4051 = vmatprep.subr.mxu0 0.0
    %4052 = vmatpush1.xpose.msra.mxu0 0.0
    %4053 = vmatprep.subr.mxu0 0.0
    %4054 = vmatpush1.xpose.msra.mxu0 0.0
    %4055 = vmatprep.subr.mxu0 0.0
    %4056 = vmatpush1.xpose.msra.mxu0 0.0
    %4057 = vmatprep.subr.mxu0 0.0
    %4058 = vmatpush1.xpose.msra.mxu0 0.0
    %4059 = vmatprep.subr.mxu0 0.0
    %4060 = vmatpush1.xpose.msra.mxu0 0.0
    %4061 = vmatprep.subr.mxu0 0.0
    %4062 = vmatpush1.xpose.msra.mxu0 0.0
    %4063 = vmatprep.subr.mxu0 0.0
    %4064 = vmatpush1.xpose.msra.mxu0 0.0
    %4065 = vmatprep.subr.mxu0 0.0
    %4066 = vmatpush1.xpose.msra.mxu0 0.0
    %4067 = vmatprep.subr.mxu0 0.0
    %4068 = vmatpush1.xpose.msra.mxu0 0.0
    %4069 = vmatprep.subr.mxu0 0.0
    %4070 = vmatpush1.xpose.msra.mxu0 0.0
    %4071 = vmatprep.subr.mxu0 0.0
    %4072 = vmatpush1.xpose.msra.mxu0 0.0
    %4073 = vmatprep.subr.mxu0 0.0
    %4074 = vmatpush1.xpose.msra.mxu0 0.0
    %4075 = vmatprep.subr.mxu0 0.0
    %4076 = vmatpush1.xpose.msra.mxu0 0.0
    %4077 = vmatprep.subr.mxu0 0.0
    %4078 = vmatpush1.xpose.msra.mxu0 0.0
    %4079 = vmatprep.subr.mxu0 0.0
    %4080 = vmatpush1.xpose.msra.mxu0 0.0
    %4081 = vmatprep.subr.mxu0 0.0
    %4082 = vmatpush1.xpose.msra.mxu0 0.0
    %4083 = vmatprep.subr.mxu0 0.0
    %4084 = vmatpush1.xpose.msra.mxu0 0.0
    %4085 = vmatprep.subr.mxu0 0.0
    %4086 = vmatpush1.xpose.msra.mxu0 0.0
    %4087 = vmatprep.subr.mxu0 0.0
    %4088 = vmatpush1.xpose.msra.mxu0 0.0
    %4089 = vmatprep.subr.mxu0 0.0
    %4090 = vmatpush1.xpose.msra.mxu0 0.0
    %4091 = vmatprep.subr.mxu0 0.0
    %4092 = vmatpush1.xpose.msra.mxu0 0.0
    %4093 = vmatprep.subr.mxu0 0.0
    %4094 = vmatpush1.xpose.msra.mxu0 0.0
    %4095 = vmatprep.subr.mxu0 0.0
    %4096 = vmatpush1.xpose.msra.mxu0 0.0
    %4097 = vmatprep.subr.mxu0 0.0
    %4098 = vmatpush1.xpose.msra.mxu0 0.0
    %4099 = vmatprep.subr.mxu0 0.0
    %4100 = vmatpush1.xpose.msra.mxu0 0.0
    %4101 = vmatprep.subr.mxu0 0.0
    %4102 = vmatpush1.xpose.msra.mxu0 0.0
    %4103 = vmatprep.subr.mxu0 0.0
    %4104 = vmatpush1.xpose.msra.mxu0 0.0
    %4105 = vmatprep.subr.mxu0 0.0
    %4106 = vmatpush1.xpose.msra.mxu0 0.0
    %4107 = vmatprep.subr.mxu0 0.0
    %4108 = vmatpush1.xpose.msra.mxu0 0.0
    %4109 = vmatprep.subr.mxu0 0.0
    %4110 = vmatpush1.xpose.msra.mxu0 0.0
    %4111 = vmatprep.subr.mxu0 0.0
    %4112 = vmatpush1.xpose.msra.mxu0 0.0
    %4113 = vmatprep.mubr.f32.mxu0 0.0
    %4114 = vmatmul.mubr.f32.gmra.mrb[0].mxu0 %v4044
    %v4115 = vpop.f32.mrb[0].mxu0
    %v4116 = vadd.f32 0.0, %v4115
    %v4117 = vpop.f32.mrb[0].mxu0
    %4118 = vdwg.mxu0
    %v4119 = vsel %vm324, %v4040, -inf
    %4120 = vmax.xlane.f32.xlu0 %v4119
    %v4121 = vpop.xlane.xlu0 %4120
    %v4122 = vsel %vm324, %v4116, -inf
    %4123 = vmax.xlane.f32.xlu0 %v4122
    %v4124 = vpop.xlane.xlu0 %4123
    %v4125 = vsub.f32 %v4040, %v4121
    %v4126 = vsub.f32 %v4116, %v4124
    %v4127 = vmul.f32 %v4125, 1.442695
    %v4128 = vpow.pop %v4127
    %v4129 = vmul.f32 %v4126, 1.442695
    %v4130 = vpow.pop %v4129
    %v4131 = vsel %vm324, %v4128, 0.0
    %4132 = vadd.xlane.f32.xlu0 %v4131
    %v4133 = vpop.xlane.xlu0 %4132
    %v4134 = vsel %vm324, %v4130, 0.0
    %4135 = vadd.xlane.f32.xlu0 %v4134
    %v4136 = vpop.xlane.xlu0 %4135
    %v4137 = vrcp.pop %v4133
    %v4138 = vrcp.pop %v4136
    %v4139 = vmul.f32 %v4133, %v4137
    %v4140 = vmul.f32 %v4136, %v4138
    %v4141 = vsub.f32 2.0, %v4139
    %v4142 = vsub.f32 2.0, %v4140
    %v4143 = vmul.f32 %v4137, %v4141
    %v4144 = vmul.f32 %v4138, %v4142
    %v4145 = vmul.f32 %v4128, %v4143
    %v4146 = vmul.f32 %v4130, %v4144
    %v4148 = vsel %vm324, %v4145, 0
    %4150 = vmatprep.subr.mxu0 0.0
    %4151 = vmatpush1.msra.mxu0 %v3959
    %4152 = vmatprep.subr.mxu0 0.0
    %4153 = vmatpush1.msra.mxu0 0.0
    %4154 = vmatprep.subr.mxu0 0.0
    %4155 = vmatpush1.msra.mxu0 0.0
    %4156 = vmatprep.subr.mxu0 0.0
    %4157 = vmatpush1.msra.mxu0 0.0
    %4158 = vmatprep.subr.mxu0 0.0
    %4159 = vmatpush1.msra.mxu0 0.0
    %4160 = vmatprep.subr.mxu0 0.0
    %4161 = vmatpush1.msra.mxu0 0.0
    %4162 = vmatprep.subr.mxu0 0.0
    %4163 = vmatpush1.msra.mxu0 0.0
    %4164 = vmatprep.subr.mxu0 0.0
    %4165 = vmatpush1.msra.mxu0 0.0
    %4166 = vmatprep.subr.mxu0 0.0
    %4167 = vmatpush1.msra.mxu0 0.0
    %4168 = vmatprep.subr.mxu0 0.0
    %4169 = vmatpush1.msra.mxu0 0.0
    %4170 = vmatprep.subr.mxu0 0.0
    %4171 = vmatpush1.msra.mxu0 0.0
    %4172 = vmatprep.subr.mxu0 0.0
    %4173 = vmatpush1.msra.mxu0 0.0
    %4174 = vmatprep.subr.mxu0 0.0
    %4175 = vmatpush1.msra.mxu0 0.0
    %4176 = vmatprep.subr.mxu0 0.0
    %4177 = vmatpush1.msra.mxu0 0.0
    %4178 = vmatprep.subr.mxu0 0.0
    %4179 = vmatpush1.msra.mxu0 0.0
    %4180 = vmatprep.subr.mxu0 0.0
    %4181 = vmatpush1.msra.mxu0 0.0
    %4182 = vmatprep.subr.mxu0 0.0
    %4183 = vmatpush1.msra.mxu0 0.0
    %4184 = vmatprep.subr.mxu0 0.0
    %4185 = vmatpush1.msra.mxu0 0.0
    %4186 = vmatprep.subr.mxu0 0.0
    %4187 = vmatpush1.msra.mxu0 0.0
    %4188 = vmatprep.subr.mxu0 0.0
    %4189 = vmatpush1.msra.mxu0 0.0
    %4190 = vmatprep.subr.mxu0 0.0
    %4191 = vmatpush1.msra.mxu0 0.0
    %4192 = vmatprep.subr.mxu0 0.0
    %4193 = vmatpush1.msra.mxu0 0.0
    %4194 = vmatprep.subr.mxu0 0.0
    %4195 = vmatpush1.msra.mxu0 0.0
    %4196 = vmatprep.subr.mxu0 0.0
    %4197 = vmatpush1.msra.mxu0 0.0
    %4198 = vmatprep.subr.mxu0 0.0
    %4199 = vmatpush1.msra.mxu0 0.0
    %4200 = vmatprep.subr.mxu0 0.0
    %4201 = vmatpush1.msra.mxu0 0.0
    %4202 = vmatprep.subr.mxu0 0.0
    %4203 = vmatpush1.msra.mxu0 0.0
    %4204 = vmatprep.subr.mxu0 0.0
    %4205 = vmatpush1.msra.mxu0 0.0
    %4206 = vmatprep.subr.mxu0 0.0
    %4207 = vmatpush1.msra.mxu0 0.0
    %4208 = vmatprep.subr.mxu0 0.0
    %4209 = vmatpush1.msra.mxu0 0.0
    %4210 = vmatprep.subr.mxu0 0.0
    %4211 = vmatpush1.msra.mxu0 0.0
    %4212 = vmatprep.subr.mxu0 0.0
    %4213 = vmatpush1.msra.mxu0 0.0
    %4214 = vmatprep.mubr.f32.mxu0 0.0
    %4215 = vmatmul.mubr.f32.gmra.mrb[0].mxu0 %v4148
    %v4216 = vpop.f32.mrb[0].mxu0
    %v4217 = vadd.f32 0.0, %v4216
    %v4218 = vpop.f32.mrb[0].mxu0
    %4219 = vdwg.mxu0
    %v4221 = vsel %vm324, %v4146, 0
    %4223 = vmatprep.subr.mxu0 0.0
    %4224 = vmatpush1.msra.mxu0 %v3964
    %4225 = vmatprep.subr.mxu0 0.0
    %4226 = vmatpush1.msra.mxu0 0.0
    %4227 = vmatprep.subr.mxu0 0.0
    %4228 = vmatpush1.msra.mxu0 0.0
    %4229 = vmatprep.subr.mxu0 0.0
    %4230 = vmatpush1.msra.mxu0 0.0
    %4231 = vmatprep.subr.mxu0 0.0
    %4232 = vmatpush1.msra.mxu0 0.0
    %4233 = vmatprep.subr.mxu0 0.0
    %4234 = vmatpush1.msra.mxu0 0.0
    %4235 = vmatprep.subr.mxu0 0.0
    %4236 = vmatpush1.msra.mxu0 0.0
    %4237 = vmatprep.subr.mxu0 0.0
    %4238 = vmatpush1.msra.mxu0 0.0
    %4239 = vmatprep.subr.mxu0 0.0
    %4240 = vmatpush1.msra.mxu0 0.0
    %4241 = vmatprep.subr.mxu0 0.0
    %4242 = vmatpush1.msra.mxu0 0.0
    %4243 = vmatprep.subr.mxu0 0.0
    %4244 = vmatpush1.msra.mxu0 0.0
    %4245 = vmatprep.subr.mxu0 0.0
    %4246 = vmatpush1.msra.mxu0 0.0
    %4247 = vmatprep.subr.mxu0 0.0
    %4248 = vmatpush1.msra.mxu0 0.0
    %4249 = vmatprep.subr.mxu0 0.0
    %4250 = vmatpush1.msra.mxu0 0.0
    %4251 = vmatprep.subr.mxu0 0.0
    %4252 = vmatpush1.msra.mxu0 0.0
    %4253 = vmatprep.subr.mxu0 0.0
    %4254 = vmatpush1.msra.mxu0 0.0
    %4255 = vmatprep.subr.mxu0 0.0
    %4256 = vmatpush1.msra.mxu0 0.0
    %4257 = vmatprep.subr.mxu0 0.0
    %4258 = vmatpush1.msra.mxu0 0.0
    %4259 = vmatprep.subr.mxu0 0.0
    %4260 = vmatpush1.msra.mxu0 0.0
    %4261 = vmatprep.subr.mxu0 0.0
    %4262 = vmatpush1.msra.mxu0 0.0
    %4263 = vmatprep.subr.mxu0 0.0
    %4264 = vmatpush1.msra.mxu0 0.0
    %4265 = vmatprep.subr.mxu0 0.0
    %4266 = vmatpush1.msra.mxu0 0.0
    %4267 = vmatprep.subr.mxu0 0.0
    %4268 = vmatpush1.msra.mxu0 0.0
    %4269 = vmatprep.subr.mxu0 0.0
    %4270 = vmatpush1.msra.mxu0 0.0
    %4271 = vmatprep.subr.mxu0 0.0
    %4272 = vmatpush1.msra.mxu0 0.0
    %4273 = vmatprep.subr.mxu0 0.0
    %4274 = vmatpush1.msra.mxu0 0.0
    %4275 = vmatprep.subr.mxu0 0.0
    %4276 = vmatpush1.msra.mxu0 0.0
    %4277 = vmatprep.subr.mxu0 0.0
    %4278 = vmatpush1.msra.mxu0 0.0
    %4279 = vmatprep.subr.mxu0 0.0
    %4280 = vmatpush1.msra.mxu0 0.0
    %4281 = vmatprep.subr.mxu0 0.0
    %4282 = vmatpush1.msra.mxu0 0.0
    %4283 = vmatprep.subr.mxu0 0.0
    %4284 = vmatpush1.msra.mxu0 0.0
    %4285 = vmatprep.subr.mxu0 0.0
    %4286 = vmatpush1.msra.mxu0 0.0
    %4287 = vmatprep.mubr.f32.mxu0 0.0
    %4288 = vmatmul.mubr.f32.gmra.mrb[0].mxu0 %v4221
    %v4289 = vpop.f32.mrb[0].mxu0
    %v4290 = vadd.f32 0.0, %v4289
    %v4291 = vpop.f32.mrb[0].mxu0
    %4292 = vdwg.mxu0
    %s4293 = scalar_lea.vmem %s7, 32
    %v4294 = vld [vmem:[%s4293] sm:$0xff]
    %s4295 = scalar_lea.vmem %s1, 160
    %v4296 = vld [vmem:[%s4295] sm:$0xff]
    %v4297 = vld [vmem:[%s4295 + $0x8] sm:$0xff]
    %v4298 = vld [vmem:[%s4295 + $0x10] sm:$0xff]
    %v4299 = vld [vmem:[%s4295 + $0x18] sm:$0xff]
    %s4300 = scalar_lea.vmem %s2, 5
    %v4301 = vld [vmem:[%s4300] sm:$0x1]
    %v4303 = vlaneseq
    %v4304 = vshrl.u32 %v4303, 7
    %v4305 = vsub.s32 0, %v4304
    %v4306 = vrot.slane %v4301, %v4305
    %4308 = vmatprep.subr.mxu0 0.0
    %4309 = vmatpush1.msra.mxu0 %v4296
    %4310 = vmatprep.subr.mxu0 0.0
    %4311 = vmatpush1.msra.mxu0 %v4297
    %4312 = vmatprep.subr.mxu0 0.0
    %4313 = vmatpush1.msra.mxu0 %v4298
    %4314 = vmatprep.subr.mxu0 0.0
    %4315 = vmatpush1.msra.mxu0 %v4299
    %4316 = vmatprep.subr.mxu0 0.0
    %4317 = vmatpush1.msra.mxu0 0.0
    %4318 = vmatprep.subr.mxu0 0.0
    %4319 = vmatpush1.msra.mxu0 0.0
    %4320 = vmatprep.subr.mxu0 0.0
    %4321 = vmatpush1.msra.mxu0 0.0
    %4322 = vmatprep.subr.mxu0 0.0
    %4323 = vmatpush1.msra.mxu0 0.0
    %4324 = vmatprep.subr.mxu0 0.0
    %4325 = vmatpush1.msra.mxu0 0.0
    %4326 = vmatprep.subr.mxu0 0.0
    %4327 = vmatpush1.msra.mxu0 0.0
    %4328 = vmatprep.subr.mxu0 0.0
    %4329 = vmatpush1.msra.mxu0 0.0
    %4330 = vmatprep.subr.mxu0 0.0
    %4331 = vmatpush1.msra.mxu0 0.0
    %4332 = vmatprep.subr.mxu0 0.0
    %4333 = vmatpush1.msra.mxu0 0.0
    %4334 = vmatprep.subr.mxu0 0.0
    %4335 = vmatpush1.msra.mxu0 0.0
    %4336 = vmatprep.subr.mxu0 0.0
    %4337 = vmatpush1.msra.mxu0 0.0
    %4338 = vmatprep.subr.mxu0 0.0
    %4339 = vmatpush1.msra.mxu0 0.0
    %4340 = vmatprep.subr.mxu0 0.0
    %4341 = vmatpush1.msra.mxu0 0.0
    %4342 = vmatprep.subr.mxu0 0.0
    %4343 = vmatpush1.msra.mxu0 0.0
    %4344 = vmatprep.subr.mxu0 0.0
    %4345 = vmatpush1.msra.mxu0 0.0
    %4346 = vmatprep.subr.mxu0 0.0
    %4347 = vmatpush1.msra.mxu0 0.0
    %4348 = vmatprep.subr.mxu0 0.0
    %4349 = vmatpush1.msra.mxu0 0.0
    %4350 = vmatprep.subr.mxu0 0.0
    %4351 = vmatpush1.msra.mxu0 0.0
    %4352 = vmatprep.subr.mxu0 0.0
    %4353 = vmatpush1.msra.mxu0 0.0
    %4354 = vmatprep.subr.mxu0 0.0
    %4355 = vmatpush1.msra.mxu0 0.0
    %4356 = vmatprep.subr.mxu0 0.0
    %4357 = vmatpush1.msra.mxu0 0.0
    %4358 = vmatprep.subr.mxu0 0.0
    %4359 = vmatpush1.msra.mxu0 0.0
    %4360 = vmatprep.subr.mxu0 0.0
    %4361 = vmatpush1.msra.mxu0 0.0
    %4362 = vmatprep.subr.mxu0 0.0
    %4363 = vmatpush1.msra.mxu0 0.0
    %4364 = vmatprep.subr.mxu0 0.0
    %4365 = vmatpush1.msra.mxu0 0.0
    %4366 = vmatprep.subr.mxu0 0.0
    %4367 = vmatpush1.msra.mxu0 0.0
    %4368 = vmatprep.subr.mxu0 0.0
    %4369 = vmatpush1.msra.mxu0 0.0
    %4370 = vmatprep.subr.mxu0 0.0
    %4371 = vmatpush1.msra.mxu0 0.0
    %4372 = vmatprep.mubr.f32.mxu0 0.0
    %4373 = vmatmul.mubr.f32.gmra.mrb[0].mxu0 %v3711
    %v4374 = vpop.f32.mrb[0].mxu0
    %v4375 = vadd.f32 %v4306, %v4374
    %v4376 = vpop.f32.mrb[0].mxu0
    %4377 = vmatprep.mubr.f32.mxu0 0.0
    %4378 = vmatmul.mubr.f32.gmra.mrb[0].mxu0 %v3714
    %v4379 = vpop.f32.mrb[0].mxu0
    %v4380 = vadd.f32 %v4306, %v4379
    %v4381 = vpop.f32.mrb[0].mxu0
    %4382 = vdwg.mxu0
    %s4383 = scalar_lea.vmem %s3, 160
    %v4384 = vld [vmem:[%s4383] sm:$0xff]
    %v4385 = vld [vmem:[%s4383 + $0x8] sm:$0xff]
    %v4386 = vld [vmem:[%s4383 + $0x10] sm:$0xff]
    %v4387 = vld [vmem:[%s4383 + $0x18] sm:$0xff]
    %s4388 = scalar_lea.vmem %s4, 5
    %v4389 = vld [vmem:[%s4388] sm:$0x1]
    %v4391 = vlaneseq
    %v4392 = vshrl.u32 %v4391, 7
    %v4393 = vsub.s32 0, %v4392
    %v4394 = vrot.slane %v4389, %v4393
    %4396 = vmatprep.subr.mxu0 0.0
    %4397 = vmatpush1.msra.mxu0 %v4384
    %4398 = vmatprep.subr.mxu0 0.0
    %4399 = vmatpush1.msra.mxu0 %v4385
    %4400 = vmatprep.subr.mxu0 0.0
    %4401 = vmatpush1.msra.mxu0 %v4386
    %4402 = vmatprep.subr.mxu0 0.0
    %4403 = vmatpush1.msra.mxu0 %v4387
    %4404 = vmatprep.subr.mxu0 0.0
    %4405 = vmatpush1.msra.mxu0 0.0
    %4406 = vmatprep.subr.mxu0 0.0
    %4407 = vmatpush1.msra.mxu0 0.0
    %4408 = vmatprep.subr.mxu0 0.0
    %4409 = vmatpush1.msra.mxu0 0.0
    %4410 = vmatprep.subr.mxu0 0.0
    %4411 = vmatpush1.msra.mxu0 0.0
    %4412 = vmatprep.subr.mxu0 0.0
    %4413 = vmatpush1.msra.mxu0 0.0
    %4414 = vmatprep.subr.mxu0 0.0
    %4415 = vmatpush1.msra.mxu0 0.0
    %4416 = vmatprep.subr.mxu0 0.0
    %4417 = vmatpush1.msra.mxu0 0.0
    %4418 = vmatprep.subr.mxu0 0.0
    %4419 = vmatpush1.msra.mxu0 0.0
    %4420 = vmatprep.subr.mxu0 0.0
    %4421 = vmatpush1.msra.mxu0 0.0
    %4422 = vmatprep.subr.mxu0 0.0
    %4423 = vmatpush1.msra.mxu0 0.0
    %4424 = vmatprep.subr.mxu0 0.0
    %4425 = vmatpush1.msra.mxu0 0.0
    %4426 = vmatprep.subr.mxu0 0.0
    %4427 = vmatpush1.msra.mxu0 0.0
    %4428 = vmatprep.subr.mxu0 0.0
    %4429 = vmatpush1.msra.mxu0 0.0
    %4430 = vmatprep.subr.mxu0 0.0
    %4431 = vmatpush1.msra.mxu0 0.0
    %4432 = vmatprep.subr.mxu0 0.0
    %4433 = vmatpush1.msra.mxu0 0.0
    %4434 = vmatprep.subr.mxu0 0.0
    %4435 = vmatpush1.msra.mxu0 0.0
    %4436 = vmatprep.subr.mxu0 0.0
    %4437 = vmatpush1.msra.mxu0 0.0
    %4438 = vmatprep.subr.mxu0 0.0
    %4439 = vmatpush1.msra.mxu0 0.0
    %4440 = vmatprep.subr.mxu0 0.0
    %4441 = vmatpush1.msra.mxu0 0.0
    %4442 = vmatprep.subr.mxu0 0.0
    %4443 = vmatpush1.msra.mxu0 0.0
    %4444 = vmatprep.subr.mxu0 0.0
    %4445 = vmatpush1.msra.mxu0 0.0
    %4446 = vmatprep.subr.mxu0 0.0
    %4447 = vmatpush1.msra.mxu0 0.0
    %4448 = vmatprep.subr.mxu0 0.0
    %4449 = vmatpush1.msra.mxu0 0.0
    %4450 = vmatprep.subr.mxu0 0.0
    %4451 = vmatpush1.msra.mxu0 0.0
    %4452 = vmatprep.subr.mxu0 0.0
    %4453 = vmatpush1.msra.mxu0 0.0
    %4454 = vmatprep.subr.mxu0 0.0
    %4455 = vmatpush1.msra.mxu0 0.0
    %4456 = vmatprep.subr.mxu0 0.0
    %4457 = vmatpush1.msra.mxu0 0.0
    %4458 = vmatprep.subr.mxu0 0.0
    %4459 = vmatpush1.msra.mxu0 0.0
    %4460 = vmatprep.mubr.f32.mxu0 0.0
    %4461 = vmatmul.mubr.f32.gmra.mrb[0].mxu0 %v3711
    %v4462 = vpop.f32.mrb[0].mxu0
    %v4463 = vadd.f32 %v4394, %v4462
    %v4464 = vpop.f32.mrb[0].mxu0
    %4465 = vmatprep.mubr.f32.mxu0 0.0
    %4466 = vmatmul.mubr.f32.gmra.mrb[0].mxu0 %v3714
    %v4467 = vpop.f32.mrb[0].mxu0
    %v4468 = vadd.f32 %v4394, %v4467
    %v4469 = vpop.f32.mrb[0].mxu0
    %4470 = vdwg.mxu0
    %s4471 = scalar_lea.vmem %s5, 160
    %v4472 = vld [vmem:[%s4471] sm:$0xff]
    %v4473 = vld [vmem:[%s4471 + $0x8] sm:$0xff]
    %v4474 = vld [vmem:[%s4471 + $0x10] sm:$0xff]
    %v4475 = vld [vmem:[%s4471 + $0x18] sm:$0xff]
    %s4476 = scalar_lea.vmem %s6, 5
    %v4477 = vld [vmem:[%s4476] sm:$0x1]
    %v4479 = vlaneseq
    %v4480 = vshrl.u32 %v4479, 7
    %v4481 = vsub.s32 0, %v4480
    %v4482 = vrot.slane %v4477, %v4481
    %4484 = vmatprep.subr.mxu0 0.0
    %4485 = vmatpush1.msra.mxu0 %v4472
    %4486 = vmatprep.subr.mxu0 0.0
    %4487 = vmatpush1.msra.mxu0 %v4473
    %4488 = vmatprep.subr.mxu0 0.0
    %4489 = vmatpush1.msra.mxu0 %v4474
    %4490 = vmatprep.subr.mxu0 0.0
    %4491 = vmatpush1.msra.mxu0 %v4475
    %4492 = vmatprep.subr.mxu0 0.0
    %4493 = vmatpush1.msra.mxu0 0.0
    %4494 = vmatprep.subr.mxu0 0.0
    %4495 = vmatpush1.msra.mxu0 0.0
    %4496 = vmatprep.subr.mxu0 0.0
    %4497 = vmatpush1.msra.mxu0 0.0
    %4498 = vmatprep.subr.mxu0 0.0
    %4499 = vmatpush1.msra.mxu0 0.0
    %4500 = vmatprep.subr.mxu0 0.0
    %4501 = vmatpush1.msra.mxu0 0.0
    %4502 = vmatprep.subr.mxu0 0.0
    %4503 = vmatpush1.msra.mxu0 0.0
    %4504 = vmatprep.subr.mxu0 0.0
    %4505 = vmatpush1.msra.mxu0 0.0
    %4506 = vmatprep.subr.mxu0 0.0
    %4507 = vmatpush1.msra.mxu0 0.0
    %4508 = vmatprep.subr.mxu0 0.0
    %4509 = vmatpush1.msra.mxu0 0.0
    %4510 = vmatprep.subr.mxu0 0.0
    %4511 = vmatpush1.msra.mxu0 0.0
    %4512 = vmatprep.subr.mxu0 0.0
    %4513 = vmatpush1.msra.mxu0 0.0
    %4514 = vmatprep.subr.mxu0 0.0
    %4515 = vmatpush1.msra.mxu0 0.0
    %4516 = vmatprep.subr.mxu0 0.0
    %4517 = vmatpush1.msra.mxu0 0.0
    %4518 = vmatprep.subr.mxu0 0.0
    %4519 = vmatpush1.msra.mxu0 0.0
    %4520 = vmatprep.subr.mxu0 0.0
    %4521 = vmatpush1.msra.mxu0 0.0
    %4522 = vmatprep.subr.mxu0 0.0
    %4523 = vmatpush1.msra.mxu0 0.0
    %4524 = vmatprep.subr.mxu0 0.0
    %4525 = vmatpush1.msra.mxu0 0.0
    %4526 = vmatprep.subr.mxu0 0.0
    %4527 = vmatpush1.msra.mxu0 0.0
    %4528 = vmatprep.subr.mxu0 0.0
    %4529 = vmatpush1.msra.mxu0 0.0
    %4530 = vmatprep.subr.mxu0 0.0
    %4531 = vmatpush1.msra.mxu0 0.0
    %4532 = vmatprep.subr.mxu0 0.0
    %4533 = vmatpush1.msra.mxu0 0.0
    %4534 = vmatprep.subr.mxu0 0.0
    %4535 = vmatpush1.msra.mxu0 0.0
    %4536 = vmatprep.subr.mxu0 0.0
    %4537 = vmatpush1.msra.mxu0 0.0
    %4538 = vmatprep.subr.mxu0 0.0
    %4539 = vmatpush1.msra.mxu0 0.0
    %4540 = vmatprep.subr.mxu0 0.0
    %4541 = vmatpush1.msra.mxu0 0.0
    %4542 = vmatprep.subr.mxu0 0.0
    %4543 = vmatpush1.msra.mxu0 0.0
    %4544 = vmatprep.subr.mxu0 0.0
    %4545 = vmatpush1.msra.mxu0 0.0
    %4546 = vmatprep.subr.mxu0 0.0
    %4547 = vmatpush1.msra.mxu0 0.0
    %4548 = vmatprep.mubr.f32.mxu0 0.0
    %4549 = vmatmul.mubr.f32.gmra.mrb[0].mxu0 %v3711
    %v4550 = vpop.f32.mrb[0].mxu0
    %v4551 = vadd.f32 %v4482, %v4550
    %v4552 = vpop.f32.mrb[0].mxu0
    %4553 = vmatprep.mubr.f32.mxu0 0.0
    %4554 = vmatmul.mubr.f32.gmra.mrb[0].mxu0 %v3714
    %v4555 = vpop.f32.mrb[0].mxu0
    %v4556 = vadd.f32 %v4482, %v4555
    %v4557 = vpop.f32.mrb[0].mxu0
    %4558 = vdwg.mxu0
    %v4560 = vsel %vm324, %v4375, 0
    %v4563 = vsel %vm324, %v4463, 0
    %4565 = vmatprep.subr.mxu0 0.0
    %4566 = vmatpush1.xpose.msra.mxu0 %v4563
    %4567 = vmatprep.subr.mxu0 0.0
    %4568 = vmatpush1.xpose.msra.mxu0 0.0
    %4569 = vmatprep.subr.mxu0 0.0
    %4570 = vmatpush1.xpose.msra.mxu0 0.0
    %4571 = vmatprep.subr.mxu0 0.0
    %4572 = vmatpush1.xpose.msra.mxu0 0.0
    %4573 = vmatprep.subr.mxu0 0.0
    %4574 = vmatpush1.xpose.msra.mxu0 0.0
    %4575 = vmatprep.subr.mxu0 0.0
    %4576 = vmatpush1.xpose.msra.mxu0 0.0
    %4577 = vmatprep.subr.mxu0 0.0
    %4578 = vmatpush1.xpose.msra.mxu0 0.0
    %4579 = vmatprep.subr.mxu0 0.0
    %4580 = vmatpush1.xpose.msra.mxu0 0.0
    %4581 = vmatprep.subr.mxu0 0.0
    %4582 = vmatpush1.xpose.msra.mxu0 0.0
    %4583 = vmatprep.subr.mxu0 0.0
    %4584 = vmatpush1.xpose.msra.mxu0 0.0
    %4585 = vmatprep.subr.mxu0 0.0
    %4586 = vmatpush1.xpose.msra.mxu0 0.0
    %4587 = vmatprep.subr.mxu0 0.0
    %4588 = vmatpush1.xpose.msra.mxu0 0.0
    %4589 = vmatprep.subr.mxu0 0.0
    %4590 = vmatpush1.xpose.msra.mxu0 0.0
    %4591 = vmatprep.subr.mxu0 0.0
    %4592 = vmatpush1.xpose.msra.mxu0 0.0
    %4593 = vmatprep.subr.mxu0 0.0
    %4594 = vmatpush1.xpose.msra.mxu0 0.0
    %4595 = vmatprep.subr.mxu0 0.0
    %4596 = vmatpush1.xpose.msra.mxu0 0.0
    %4597 = vmatprep.subr.mxu0 0.0
    %4598 = vmatpush1.xpose.msra.mxu0 0.0
    %4599 = vmatprep.subr.mxu0 0.0
    %4600 = vmatpush1.xpose.msra.mxu0 0.0
    %4601 = vmatprep.subr.mxu0 0.0
    %4602 = vmatpush1.xpose.msra.mxu0 0.0
    %4603 = vmatprep.subr.mxu0 0.0
    %4604 = vmatpush1.xpose.msra.mxu0 0.0
    %4605 = vmatprep.subr.mxu0 0.0
    %4606 = vmatpush1.xpose.msra.mxu0 0.0
    %4607 = vmatprep.subr.mxu0 0.0
    %4608 = vmatpush1.xpose.msra.mxu0 0.0
    %4609 = vmatprep.subr.mxu0 0.0
    %4610 = vmatpush1.xpose.msra.mxu0 0.0
    %4611 = vmatprep.subr.mxu0 0.0
    %4612 = vmatpush1.xpose.msra.mxu0 0.0
    %4613 = vmatprep.subr.mxu0 0.0
    %4614 = vmatpush1.xpose.msra.mxu0 0.0
    %4615 = vmatprep.subr.mxu0 0.0
    %4616 = vmatpush1.xpose.msra.mxu0 0.0
    %4617 = vmatprep.subr.mxu0 0.0
    %4618 = vmatpush1.xpose.msra.mxu0 0.0
    %4619 = vmatprep.subr.mxu0 0.0
    %4620 = vmatpush1.xpose.msra.mxu0 0.0
    %4621 = vmatprep.subr.mxu0 0.0
    %4622 = vmatpush1.xpose.msra.mxu0 0.0
    %4623 = vmatprep.subr.mxu0 0.0
    %4624 = vmatpush1.xpose.msra.mxu0 0.0
    %4625 = vmatprep.subr.mxu0 0.0
    %4626 = vmatpush1.xpose.msra.mxu0 0.0
    %4627 = vmatprep.subr.mxu0 0.0
    %4628 = vmatpush1.xpose.msra.mxu0 0.0
    %4629 = vmatprep.mubr.f32.mxu0 0.0
    %4630 = vmatmul.mubr.f32.gmra.mrb[0].mxu0 %v4560
    %v4631 = vpop.f32.mrb[0].mxu0
    %v4632 = vadd.f32 0.0, %v4631
    %v4633 = vpop.f32.mrb[0].mxu0
    %4634 = vdwg.mxu0
    %v4636 = vsel %vm324, %v4380, 0
    %v4639 = vsel %vm324, %v4468, 0
    %4641 = vmatprep.subr.mxu0 0.0
    %4642 = vmatpush1.xpose.msra.mxu0 %v4639
    %4643 = vmatprep.subr.mxu0 0.0
    %4644 = vmatpush1.xpose.msra.mxu0 0.0
    %4645 = vmatprep.subr.mxu0 0.0
    %4646 = vmatpush1.xpose.msra.mxu0 0.0
    %4647 = vmatprep.subr.mxu0 0.0
    %4648 = vmatpush1.xpose.msra.mxu0 0.0
    %4649 = vmatprep.subr.mxu0 0.0
    %4650 = vmatpush1.xpose.msra.mxu0 0.0
    %4651 = vmatprep.subr.mxu0 0.0
    %4652 = vmatpush1.xpose.msra.mxu0 0.0
    %4653 = vmatprep.subr.mxu0 0.0
    %4654 = vmatpush1.xpose.msra.mxu0 0.0
    %4655 = vmatprep.subr.mxu0 0.0
    %4656 = vmatpush1.xpose.msra.mxu0 0.0
    %4657 = vmatprep.subr.mxu0 0.0
    %4658 = vmatpush1.xpose.msra.mxu0 0.0
    %4659 = vmatprep.subr.mxu0 0.0
    %4660 = vmatpush1.xpose.msra.mxu0 0.0
    %4661 = vmatprep.subr.mxu0 0.0
    %4662 = vmatpush1.xpose.msra.mxu0 0.0
    %4663 = vmatprep.subr.mxu0 0.0
    %4664 = vmatpush1.xpose.msra.mxu0 0.0
    %4665 = vmatprep.subr.mxu0 0.0
    %4666 = vmatpush1.xpose.msra.mxu0 0.0
    %4667 = vmatprep.subr.mxu0 0.0
    %4668 = vmatpush1.xpose.msra.mxu0 0.0
    %4669 = vmatprep.subr.mxu0 0.0
    %4670 = vmatpush1.xpose.msra.mxu0 0.0
    %4671 = vmatprep.subr.mxu0 0.0
    %4672 = vmatpush1.xpose.msra.mxu0 0.0
    %4673 = vmatprep.subr.mxu0 0.0
    %4674 = vmatpush1.xpose.msra.mxu0 0.0
    %4675 = vmatprep.subr.mxu0 0.0
    %4676 = vmatpush1.xpose.msra.mxu0 0.0
    %4677 = vmatprep.subr.mxu0 0.0
    %4678 = vmatpush1.xpose.msra.mxu0 0.0
    %4679 = vmatprep.subr.mxu0 0.0
    %4680 = vmatpush1.xpose.msra.mxu0 0.0
    %4681 = vmatprep.subr.mxu0 0.0
    %4682 = vmatpush1.xpose.msra.mxu0 0.0
    %4683 = vmatprep.subr.mxu0 0.0
    %4684 = vmatpush1.xpose.msra.mxu0 0.0
    %4685 = vmatprep.subr.mxu0 0.0
    %4686 = vmatpush1.xpose.msra.mxu0 0.0
    %4687 = vmatprep.subr.mxu0 0.0
    %4688 = vmatpush1.xpose.msra.mxu0 0.0
    %4689 = vmatprep.subr.mxu0 0.0
    %4690 = vmatpush1.xpose.msra.mxu0 0.0
    %4691 = vmatprep.subr.mxu0 0.0
    %4692 = vmatpush1.xpose.msra.mxu0 0.0
    %4693 = vmatprep.subr.mxu0 0.0
    %4694 = vmatpush1.xpose.msra.mxu0 0.0
    %4695 = vmatprep.subr.mxu0 0.0
    %4696 = vmatpush1.xpose.msra.mxu0 0.0
    %4697 = vmatprep.subr.mxu0 0.0
    %4698 = vmatpush1.xpose.msra.mxu0 0.0
    %4699 = vmatprep.subr.mxu0 0.0
    %4700 = vmatpush1.xpose.msra.mxu0 0.0
    %4701 = vmatprep.subr.mxu0 0.0
    %4702 = vmatpush1.xpose.msra.mxu0 0.0
    %4703 = vmatprep.subr.mxu0 0.0
    %4704 = vmatpush1.xpose.msra.mxu0 0.0
    %4705 = vmatprep.mubr.f32.mxu0 0.0
    %4706 = vmatmul.mubr.f32.gmra.mrb[0].mxu0 %v4636
    %v4707 = vpop.f32.mrb[0].mxu0
    %v4708 = vadd.f32 0.0, %v4707
    %v4709 = vpop.f32.mrb[0].mxu0
    %4710 = vdwg.mxu0
    %v4711 = vsel %vm324, %v4632, -inf
    %4712 = vmax.xlane.f32.xlu0 %v4711
    %v4713 = vpop.xlane.xlu0 %4712
    %v4714 = vsel %vm324, %v4708, -inf
    %4715 = vmax.xlane.f32.xlu0 %v4714
    %v4716 = vpop.xlane.xlu0 %4715
    %v4717 = vsub.f32 %v4632, %v4713
    %v4718 = vsub.f32 %v4708, %v4716
    %v4719 = vmul.f32 %v4717, 1.442695
    %v4720 = vpow.pop %v4719
    %v4721 = vmul.f32 %v4718, 1.442695
    %v4722 = vpow.pop %v4721
    %v4723 = vsel %vm324, %v4720, 0.0
    %4724 = vadd.xlane.f32.xlu0 %v4723
    %v4725 = vpop.xlane.xlu0 %4724
    %v4726 = vsel %vm324, %v4722, 0.0
    %4727 = vadd.xlane.f32.xlu0 %v4726
    %v4728 = vpop.xlane.xlu0 %4727
    %v4729 = vrcp.pop %v4725
    %v4730 = vrcp.pop %v4728
    %v4731 = vmul.f32 %v4725, %v4729
    %v4732 = vmul.f32 %v4728, %v4730
    %v4733 = vsub.f32 2.0, %v4731
    %v4734 = vsub.f32 2.0, %v4732
    %v4735 = vmul.f32 %v4729, %v4733
    %v4736 = vmul.f32 %v4730, %v4734
    %v4737 = vmul.f32 %v4720, %v4735
    %v4738 = vmul.f32 %v4722, %v4736
    %v4740 = vsel %vm324, %v4737, 0
    %4742 = vmatprep.subr.mxu0 0.0
    %4743 = vmatpush1.msra.mxu0 %v4551
    %4744 = vmatprep.subr.mxu0 0.0
    %4745 = vmatpush1.msra.mxu0 0.0
    %4746 = vmatprep.subr.mxu0 0.0
    %4747 = vmatpush1.msra.mxu0 0.0
    %4748 = vmatprep.subr.mxu0 0.0
    %4749 = vmatpush1.msra.mxu0 0.0
    %4750 = vmatprep.subr.mxu0 0.0
    %4751 = vmatpush1.msra.mxu0 0.0
    %4752 = vmatprep.subr.mxu0 0.0
    %4753 = vmatpush1.msra.mxu0 0.0
    %4754 = vmatprep.subr.mxu0 0.0
    %4755 = vmatpush1.msra.mxu0 0.0
    %4756 = vmatprep.subr.mxu0 0.0
    %4757 = vmatpush1.msra.mxu0 0.0
    %4758 = vmatprep.subr.mxu0 0.0
    %4759 = vmatpush1.msra.mxu0 0.0
    %4760 = vmatprep.subr.mxu0 0.0
    %4761 = vmatpush1.msra.mxu0 0.0
    %4762 = vmatprep.subr.mxu0 0.0
    %4763 = vmatpush1.msra.mxu0 0.0
    %4764 = vmatprep.subr.mxu0 0.0
    %4765 = vmatpush1.msra.mxu0 0.0
    %4766 = vmatprep.subr.mxu0 0.0
    %4767 = vmatpush1.msra.mxu0 0.0
    %4768 = vmatprep.subr.mxu0 0.0
    %4769 = vmatpush1.msra.mxu0 0.0
    %4770 = vmatprep.subr.mxu0 0.0
    %4771 = vmatpush1.msra.mxu0 0.0
    %4772 = vmatprep.subr.mxu0 0.0
    %4773 = vmatpush1.msra.mxu0 0.0
    %4774 = vmatprep.subr.mxu0 0.0
    %4775 = vmatpush1.msra.mxu0 0.0
    %4776 = vmatprep.subr.mxu0 0.0
    %4777 = vmatpush1.msra.mxu0 0.0
    %4778 = vmatprep.subr.mxu0 0.0
    %4779 = vmatpush1.msra.mxu0 0.0
    %4780 = vmatprep.subr.mxu0 0.0
    %4781 = vmatpush1.msra.mxu0 0.0
    %4782 = vmatprep.subr.mxu0 0.0
    %4783 = vmatpush1.msra.mxu0 0.0
    %4784 = vmatprep.subr.mxu0 0.0
    %4785 = vmatpush1.msra.mxu0 0.0
    %4786 = vmatprep.subr.mxu0 0.0
    %4787 = vmatpush1.msra.mxu0 0.0
    %4788 = vmatprep.subr.mxu0 0.0
    %4789 = vmatpush1.msra.mxu0 0.0
    %4790 = vmatprep.subr.mxu0 0.0
    %4791 = vmatpush1.msra.mxu0 0.0
    %4792 = vmatprep.subr.mxu0 0.0
    %4793 = vmatpush1.msra.mxu0 0.0
    %4794 = vmatprep.subr.mxu0 0.0
    %4795 = vmatpush1.msra.mxu0 0.0
    %4796 = vmatprep.subr.mxu0 0.0
    %4797 = vmatpush1.msra.mxu0 0.0
    %4798 = vmatprep.subr.mxu0 0.0
    %4799 = vmatpush1.msra.mxu0 0.0
    %4800 = vmatprep.subr.mxu0 0.0
    %4801 = vmatpush1.msra.mxu0 0.0
    %4802 = vmatprep.subr.mxu0 0.0
    %4803 = vmatpush1.msra.mxu0 0.0
    %4804 = vmatprep.subr.mxu0 0.0
    %4805 = vmatpush1.msra.mxu0 0.0
    %4806 = vmatprep.mubr.f32.mxu0 0.0
    %4807 = vmatmul.mubr.f32.gmra.mrb[0].mxu0 %v4740
    %v4808 = vpop.f32.mrb[0].mxu0
    %v4809 = vadd.f32 0.0, %v4808
    %v4810 = vpop.f32.mrb[0].mxu0
    %4811 = vdwg.mxu0
    %v4813 = vsel %vm324, %v4738, 0
    %4815 = vmatprep.subr.mxu0 0.0
    %4816 = vmatpush1.msra.mxu0 %v4556
    %4817 = vmatprep.subr.mxu0 0.0
    %4818 = vmatpush1.msra.mxu0 0.0
    %4819 = vmatprep.subr.mxu0 0.0
    %4820 = vmatpush1.msra.mxu0 0.0
    %4821 = vmatprep.subr.mxu0 0.0
    %4822 = vmatpush1.msra.mxu0 0.0
    %4823 = vmatprep.subr.mxu0 0.0
    %4824 = vmatpush1.msra.mxu0 0.0
    %4825 = vmatprep.subr.mxu0 0.0
    %4826 = vmatpush1.msra.mxu0 0.0
    %4827 = vmatprep.subr.mxu0 0.0
    %4828 = vmatpush1.msra.mxu0 0.0
    %4829 = vmatprep.subr.mxu0 0.0
    %4830 = vmatpush1.msra.mxu0 0.0
    %4831 = vmatprep.subr.mxu0 0.0
    %4832 = vmatpush1.msra.mxu0 0.0
    %4833 = vmatprep.subr.mxu0 0.0
    %4834 = vmatpush1.msra.mxu0 0.0
    %4835 = vmatprep.subr.mxu0 0.0
    %4836 = vmatpush1.msra.mxu0 0.0
    %4837 = vmatprep.subr.mxu0 0.0
    %4838 = vmatpush1.msra.mxu0 0.0
    %4839 = vmatprep.subr.mxu0 0.0
    %4840 = vmatpush1.msra.mxu0 0.0
    %4841 = vmatprep.subr.mxu0 0.0
    %4842 = vmatpush1.msra.mxu0 0.0
    %4843 = vmatprep.subr.mxu0 0.0
    %4844 = vmatpush1.msra.mxu0 0.0
    %4845 = vmatprep.subr.mxu0 0.0
    %4846 = vmatpush1.msra.mxu0 0.0
    %4847 = vmatprep.subr.mxu0 0.0
    %4848 = vmatpush1.msra.mxu0 0.0
    %4849 = vmatprep.subr.mxu0 0.0
    %4850 = vmatpush1.msra.mxu0 0.0
    %4851 = vmatprep.subr.mxu0 0.0
    %4852 = vmatpush1.msra.mxu0 0.0
    %4853 = vmatprep.subr.mxu0 0.0
    %4854 = vmatpush1.msra.mxu0 0.0
    %4855 = vmatprep.subr.mxu0 0.0
    %4856 = vmatpush1.msra.mxu0 0.0
    %4857 = vmatprep.subr.mxu0 0.0
    %4858 = vmatpush1.msra.mxu0 0.0
    %4859 = vmatprep.subr.mxu0 0.0
    %4860 = vmatpush1.msra.mxu0 0.0
    %4861 = vmatprep.subr.mxu0 0.0
    %4862 = vmatpush1.msra.mxu0 0.0
    %4863 = vmatprep.subr.mxu0 0.0
    %4864 = vmatpush1.msra.mxu0 0.0
    %4865 = vmatprep.subr.mxu0 0.0
    %4866 = vmatpush1.msra.mxu0 0.0
    %4867 = vmatprep.subr.mxu0 0.0
    %4868 = vmatpush1.msra.mxu0 0.0
    %4869 = vmatprep.subr.mxu0 0.0
    %4870 = vmatpush1.msra.mxu0 0.0
    %4871 = vmatprep.subr.mxu0 0.0
    %4872 = vmatpush1.msra.mxu0 0.0
    %4873 = vmatprep.subr.mxu0 0.0
    %4874 = vmatpush1.msra.mxu0 0.0
    %4875 = vmatprep.subr.mxu0 0.0
    %4876 = vmatpush1.msra.mxu0 0.0
    %4877 = vmatprep.subr.mxu0 0.0
    %4878 = vmatpush1.msra.mxu0 0.0
    %4879 = vmatprep.mubr.f32.mxu0 0.0
    %4880 = vmatmul.mubr.f32.gmra.mrb[0].mxu0 %v4813
    %v4881 = vpop.f32.mrb[0].mxu0
    %v4882 = vadd.f32 0.0, %v4881
    %v4883 = vpop.f32.mrb[0].mxu0
    %4884 = vdwg.mxu0
    %s4885 = scalar_lea.vmem %s7, 40
    %v4886 = vld [vmem:[%s4885] sm:$0xff]
    %v4888 = vsel %vm324, %v4809, 0
    %v4891 = vsel %vm324, %v4882, 0
    %4893 = vmatprep.subr.mxu0 0.0
    %4894 = vmatpush1.msra.mxu0 %v4886
    %4895 = vmatprep.subr.mxu0 0.0
    %4896 = vmatpush1.msra.mxu0 0.0
    %4897 = vmatprep.subr.mxu0 0.0
    %4898 = vmatpush1.msra.mxu0 0.0
    %4899 = vmatprep.subr.mxu0 0.0
    %4900 = vmatpush1.msra.mxu0 0.0
    %4901 = vmatprep.subr.mxu0 0.0
    %4902 = vmatpush1.msra.mxu0 0.0
    %4903 = vmatprep.subr.mxu0 0.0
    %4904 = vmatpush1.msra.mxu0 0.0
    %4905 = vmatprep.subr.mxu0 0.0
    %4906 = vmatpush1.msra.mxu0 0.0
    %4907 = vmatprep.subr.mxu0 0.0
    %4908 = vmatpush1.msra.mxu0 0.0
    %4909 = vmatprep.subr.mxu0 0.0
    %4910 = vmatpush1.msra.mxu0 0.0
    %4911 = vmatprep.subr.mxu0 0.0
    %4912 = vmatpush1.msra.mxu0 0.0
    %4913 = vmatprep.subr.mxu0 0.0
    %4914 = vmatpush1.msra.mxu0 0.0
    %4915 = vmatprep.subr.mxu0 0.0
    %4916 = vmatpush1.msra.mxu0 0.0
    %4917 = vmatprep.subr.mxu0 0.0
    %4918 = vmatpush1.msra.mxu0 0.0
    %4919 = vmatprep.subr.mxu0 0.0
    %4920 = vmatpush1.msra.mxu0 0.0
    %4921 = vmatprep.subr.mxu0 0.0
    %4922 = vmatpush1.msra.mxu0 0.0
    %4923 = vmatprep.subr.mxu0 0.0
    %4924 = vmatpush1.msra.mxu0 0.0
    %4925 = vmatprep.subr.mxu0 0.0
    %4926 = vmatpush1.msra.mxu0 0.0
    %4927 = vmatprep.subr.mxu0 0.0
    %4928 = vmatpush1.msra.mxu0 0.0
    %4929 = vmatprep.subr.mxu0 0.0
    %4930 = vmatpush1.msra.mxu0 0.0
    %4931 = vmatprep.subr.mxu0 0.0
    %4932 = vmatpush1.msra.mxu0 0.0
    %4933 = vmatprep.subr.mxu0 0.0
    %4934 = vmatpush1.msra.mxu0 0.0
    %4935 = vmatprep.subr.mxu0 0.0
    %4936 = vmatpush1.msra.mxu0 0.0
    %4937 = vmatprep.subr.mxu0 0.0
    %4938 = vmatpush1.msra.mxu0 0.0
    %4939 = vmatprep.subr.mxu0 0.0
    %4940 = vmatpush1.msra.mxu0 0.0
    %4941 = vmatprep.subr.mxu0 0.0
    %4942 = vmatpush1.msra.mxu0 0.0
    %4943 = vmatprep.subr.mxu0 0.0
    %4944 = vmatpush1.msra.mxu0 0.0
    %4945 = vmatprep.subr.mxu0 0.0
    %4946 = vmatpush1.msra.mxu0 0.0
    %4947 = vmatprep.subr.mxu0 0.0
    %4948 = vmatpush1.msra.mxu0 0.0
    %4949 = vmatprep.subr.mxu0 0.0
    %4950 = vmatpush1.msra.mxu0 0.0
    %4951 = vmatprep.subr.mxu0 0.0
    %4952 = vmatpush1.msra.mxu0 0.0
    %4953 = vmatprep.subr.mxu0 0.0
    %4954 = vmatpush1.msra.mxu0 0.0
    %4955 = vmatprep.subr.mxu0 0.0
    %4956 = vmatpush1.msra.mxu0 0.0
    %4957 = vmatprep.mubr.f32.mxu0 0.0
    %4958 = vmatmul.mubr.f32.gmra.mrb[0].mxu0 %v4888
    %v4959 = vpop.f32.mrb[0].mxu0
    %v4960 = vadd.f32 0.0, %v4959
    %v4961 = vpop.f32.mrb[0].mxu0
    %4962 = vmatprep.mubr.f32.mxu0 0.0
    %4963 = vmatmul.mubr.f32.gmra.mrb[0].mxu0 %v4891
    %v4964 = vpop.f32.mrb[0].mxu0
    %v4965 = vadd.f32 0.0, %v4964
    %v4966 = vpop.f32.mrb[0].mxu0
    %4967 = vdwg.mxu0
    %v4969 = vsel %vm324, %v4217, 0
    %v4972 = vsel %vm324, %v4290, 0
    %4974 = vmatprep.subr.mxu0 0.0
    %4975 = vmatpush1.msra.mxu0 %v4294
    %4976 = vmatprep.subr.mxu0 0.0
    %4977 = vmatpush1.msra.mxu0 0.0
    %4978 = vmatprep.subr.mxu0 0.0
    %4979 = vmatpush1.msra.mxu0 0.0
    %4980 = vmatprep.subr.mxu0 0.0
    %4981 = vmatpush1.msra.mxu0 0.0
    %4982 = vmatprep.subr.mxu0 0.0
    %4983 = vmatpush1.msra.mxu0 0.0
    %4984 = vmatprep.subr.mxu0 0.0
    %4985 = vmatpush1.msra.mxu0 0.0
    %4986 = vmatprep.subr.mxu0 0.0
    %4987 = vmatpush1.msra.mxu0 0.0
    %4988 = vmatprep.subr.mxu0 0.0
    %4989 = vmatpush1.msra.mxu0 0.0
    %4990 = vmatprep.subr.mxu0 0.0
    %4991 = vmatpush1.msra.mxu0 0.0
    %4992 = vmatprep.subr.mxu0 0.0
    %4993 = vmatpush1.msra.mxu0 0.0
    %4994 = vmatprep.subr.mxu0 0.0
    %4995 = vmatpush1.msra.mxu0 0.0
    %4996 = vmatprep.subr.mxu0 0.0
    %4997 = vmatpush1.msra.mxu0 0.0
    %4998 = vmatprep.subr.mxu0 0.0
    %4999 = vmatpush1.msra.mxu0 0.0
    %5000 = vmatprep.subr.mxu0 0.0
    %5001 = vmatpush1.msra.mxu0 0.0
    %5002 = vmatprep.subr.mxu0 0.0
    %5003 = vmatpush1.msra.mxu0 0.0
    %5004 = vmatprep.subr.mxu0 0.0
    %5005 = vmatpush1.msra.mxu0 0.0
    %5006 = vmatprep.subr.mxu0 0.0
    %5007 = vmatpush1.msra.mxu0 0.0
    %5008 = vmatprep.subr.mxu0 0.0
    %5009 = vmatpush1.msra.mxu0 0.0
    %5010 = vmatprep.subr.mxu0 0.0
    %5011 = vmatpush1.msra.mxu0 0.0
    %5012 = vmatprep.subr.mxu0 0.0
    %5013 = vmatpush1.msra.mxu0 0.0
    %5014 = vmatprep.subr.mxu0 0.0
    %5015 = vmatpush1.msra.mxu0 0.0
    %5016 = vmatprep.subr.mxu0 0.0
    %5017 = vmatpush1.msra.mxu0 0.0
    %5018 = vmatprep.subr.mxu0 0.0
    %5019 = vmatpush1.msra.mxu0 0.0
    %5020 = vmatprep.subr.mxu0 0.0
    %5021 = vmatpush1.msra.mxu0 0.0
    %5022 = vmatprep.subr.mxu0 0.0
    %5023 = vmatpush1.msra.mxu0 0.0
    %5024 = vmatprep.subr.mxu0 0.0
    %5025 = vmatpush1.msra.mxu0 0.0
    %5026 = vmatprep.subr.mxu0 0.0
    %5027 = vmatpush1.msra.mxu0 0.0
    %5028 = vmatprep.subr.mxu0 0.0
    %5029 = vmatpush1.msra.mxu0 0.0
    %5030 = vmatprep.subr.mxu0 0.0
    %5031 = vmatpush1.msra.mxu0 0.0
    %5032 = vmatprep.subr.mxu0 0.0
    %5033 = vmatpush1.msra.mxu0 0.0
    %5034 = vmatprep.subr.mxu0 0.0
    %5035 = vmatpush1.msra.mxu0 0.0
    %5036 = vmatprep.subr.mxu0 0.0
    %5037 = vmatpush1.msra.mxu0 0.0
    %5038 = vmatprep.mubr.f32.mxu0 0.0
    %5039 = vmatmul.mubr.f32.gmra.mrb[0].mxu0 %v4969
    %v5040 = vpop.f32.mrb[0].mxu0
    %v5041 = vadd.f32 %v4960, %v5040
    %v5042 = vpop.f32.mrb[0].mxu0
    %5043 = vmatprep.mubr.f32.mxu0 0.0
    %5044 = vmatmul.mubr.f32.gmra.mrb[0].mxu0 %v4972
    %v5045 = vpop.f32.mrb[0].mxu0
    %v5046 = vadd.f32 %v4965, %v5045
    %v5047 = vpop.f32.mrb[0].mxu0
    %5048 = vdwg.mxu0
    %s5049 = scalar_lea.vmem %s1, 192
    %v5050 = vld [vmem:[%s5049] sm:$0xff]
    %v5051 = vld [vmem:[%s5049 + $0x8] sm:$0xff]
    %v5052 = vld [vmem:[%s5049 + $0x10] sm:$0xff]
    %v5053 = vld [vmem:[%s5049 + $0x18] sm:$0xff]
    %s5054 = scalar_lea.vmem %s2, 6
    %v5055 = vld [vmem:[%s5054] sm:$0x1]
    %v5057 = vlaneseq
    %v5058 = vshrl.u32 %v5057, 7
    %v5059 = vsub.s32 0, %v5058
    %v5060 = vrot.slane %v5055, %v5059
    %5062 = vmatprep.subr.mxu0 0.0
    %5063 = vmatpush1.msra.mxu0 %v5050
    %5064 = vmatprep.subr.mxu0 0.0
    %5065 = vmatpush1.msra.mxu0 %v5051
    %5066 = vmatprep.subr.mxu0 0.0
    %5067 = vmatpush1.msra.mxu0 %v5052
    %5068 = vmatprep.subr.mxu0 0.0
    %5069 = vmatpush1.msra.mxu0 %v5053
    %5070 = vmatprep.subr.mxu0 0.0
    %5071 = vmatpush1.msra.mxu0 0.0
    %5072 = vmatprep.subr.mxu0 0.0
    %5073 = vmatpush1.msra.mxu0 0.0
    %5074 = vmatprep.subr.mxu0 0.0
    %5075 = vmatpush1.msra.mxu0 0.0
    %5076 = vmatprep.subr.mxu0 0.0
    %5077 = vmatpush1.msra.mxu0 0.0
    %5078 = vmatprep.subr.mxu0 0.0
    %5079 = vmatpush1.msra.mxu0 0.0
    %5080 = vmatprep.subr.mxu0 0.0
    %5081 = vmatpush1.msra.mxu0 0.0
    %5082 = vmatprep.subr.mxu0 0.0
    %5083 = vmatpush1.msra.mxu0 0.0
    %5084 = vmatprep.subr.mxu0 0.0
    %5085 = vmatpush1.msra.mxu0 0.0
    %5086 = vmatprep.subr.mxu0 0.0
    %5087 = vmatpush1.msra.mxu0 0.0
    %5088 = vmatprep.subr.mxu0 0.0
    %5089 = vmatpush1.msra.mxu0 0.0
    %5090 = vmatprep.subr.mxu0 0.0
    %5091 = vmatpush1.msra.mxu0 0.0
    %5092 = vmatprep.subr.mxu0 0.0
    %5093 = vmatpush1.msra.mxu0 0.0
    %5094 = vmatprep.subr.mxu0 0.0
    %5095 = vmatpush1.msra.mxu0 0.0
    %5096 = vmatprep.subr.mxu0 0.0
    %5097 = vmatpush1.msra.mxu0 0.0
    %5098 = vmatprep.subr.mxu0 0.0
    %5099 = vmatpush1.msra.mxu0 0.0
    %5100 = vmatprep.subr.mxu0 0.0
    %5101 = vmatpush1.msra.mxu0 0.0
    %5102 = vmatprep.subr.mxu0 0.0
    %5103 = vmatpush1.msra.mxu0 0.0
    %5104 = vmatprep.subr.mxu0 0.0
    %5105 = vmatpush1.msra.mxu0 0.0
    %5106 = vmatprep.subr.mxu0 0.0
    %5107 = vmatpush1.msra.mxu0 0.0
    %5108 = vmatprep.subr.mxu0 0.0
    %5109 = vmatpush1.msra.mxu0 0.0
    %5110 = vmatprep.subr.mxu0 0.0
    %5111 = vmatpush1.msra.mxu0 0.0
    %5112 = vmatprep.subr.mxu0 0.0
    %5113 = vmatpush1.msra.mxu0 0.0
    %5114 = vmatprep.subr.mxu0 0.0
    %5115 = vmatpush1.msra.mxu0 0.0
    %5116 = vmatprep.subr.mxu0 0.0
    %5117 = vmatpush1.msra.mxu0 0.0
    %5118 = vmatprep.subr.mxu0 0.0
    %5119 = vmatpush1.msra.mxu0 0.0
    %5120 = vmatprep.subr.mxu0 0.0
    %5121 = vmatpush1.msra.mxu0 0.0
    %5122 = vmatprep.subr.mxu0 0.0
    %5123 = vmatpush1.msra.mxu0 0.0
    %5124 = vmatprep.subr.mxu0 0.0
    %5125 = vmatpush1.msra.mxu0 0.0
    %5126 = vmatprep.mubr.f32.mxu0 0.0
    %5127 = vmatmul.mubr.f32.gmra.mrb[0].mxu0 %v3711
    %v5128 = vpop.f32.mrb[0].mxu0
    %v5129 = vadd.f32 %v5060, %v5128
    %v5130 = vpop.f32.mrb[0].mxu0
    %5131 = vmatprep.mubr.f32.mxu0 0.0
    %5132 = vmatmul.mubr.f32.gmra.mrb[0].mxu0 %v3714
    %v5133 = vpop.f32.mrb[0].mxu0
    %v5134 = vadd.f32 %v5060, %v5133
    %v5135 = vpop.f32.mrb[0].mxu0
    %5136 = vdwg.mxu0
    %s5137 = scalar_lea.vmem %s3, 192
    %v5138 = vld [vmem:[%s5137] sm:$0xff]
    %v5139 = vld [vmem:[%s5137 + $0x8] sm:$0xff]
    %v5140 = vld [vmem:[%s5137 + $0x10] sm:$0xff]
    %v5141 = vld [vmem:[%s5137 + $0x18] sm:$0xff]
    %s5142 = scalar_lea.vmem %s4, 6
    %v5143 = vld [vmem:[%s5142] sm:$0x1]
    %v5145 = vlaneseq
    %v5146 = vshrl.u32 %v5145, 7
    %v5147 = vsub.s32 0, %v5146
    %v5148 = vrot.slane %v5143, %v5147
    %5150 = vmatprep.subr.mxu0 0.0
    %5151 = vmatpush1.msra.mxu0 %v5138
    %5152 = vmatprep.subr.mxu0 0.0
    %5153 = vmatpush1.msra.mxu0 %v5139
    %5154 = vmatprep.subr.mxu0 0.0
    %5155 = vmatpush1.msra.mxu0 %v5140
    %5156 = vmatprep.subr.mxu0 0.0
    %5157 = vmatpush1.msra.mxu0 %v5141
    %5158 = vmatprep.subr.mxu0 0.0
    %5159 = vmatpush1.msra.mxu0 0.0
    %5160 = vmatprep.subr.mxu0 0.0
    %5161 = vmatpush1.msra.mxu0 0.0
    %5162 = vmatprep.subr.mxu0 0.0
    %5163 = vmatpush1.msra.mxu0 0.0
    %5164 = vmatprep.subr.mxu0 0.0
    %5165 = vmatpush1.msra.mxu0 0.0
    %5166 = vmatprep.subr.mxu0 0.0
    %5167 = vmatpush1.msra.mxu0 0.0
    %5168 = vmatprep.subr.mxu0 0.0
    %5169 = vmatpush1.msra.mxu0 0.0
    %5170 = vmatprep.subr.mxu0 0.0
    %5171 = vmatpush1.msra.mxu0 0.0
    %5172 = vmatprep.subr.mxu0 0.0
    %5173 = vmatpush1.msra.mxu0 0.0
    %5174 = vmatprep.subr.mxu0 0.0
    %5175 = vmatpush1.msra.mxu0 0.0
    %5176 = vmatprep.subr.mxu0 0.0
    %5177 = vmatpush1.msra.mxu0 0.0
    %5178 = vmatprep.subr.mxu0 0.0
    %5179 = vmatpush1.msra.mxu0 0.0
    %5180 = vmatprep.subr.mxu0 0.0
    %5181 = vmatpush1.msra.mxu0 0.0
    %5182 = vmatprep.subr.mxu0 0.0
    %5183 = vmatpush1.msra.mxu0 0.0
    %5184 = vmatprep.subr.mxu0 0.0
    %5185 = vmatpush1.msra.mxu0 0.0
    %5186 = vmatprep.subr.mxu0 0.0
    %5187 = vmatpush1.msra.mxu0 0.0
    %5188 = vmatprep.subr.mxu0 0.0
    %5189 = vmatpush1.msra.mxu0 0.0
    %5190 = vmatprep.subr.mxu0 0.0
    %5191 = vmatpush1.msra.mxu0 0.0
    %5192 = vmatprep.subr.mxu0 0.0
    %5193 = vmatpush1.msra.mxu0 0.0
    %5194 = vmatprep.subr.mxu0 0.0
    %5195 = vmatpush1.msra.mxu0 0.0
    %5196 = vmatprep.subr.mxu0 0.0
    %5197 = vmatpush1.msra.mxu0 0.0
    %5198 = vmatprep.subr.mxu0 0.0
    %5199 = vmatpush1.msra.mxu0 0.0
    %5200 = vmatprep.subr.mxu0 0.0
    %5201 = vmatpush1.msra.mxu0 0.0
    %5202 = vmatprep.subr.mxu0 0.0
    %5203 = vmatpush1.msra.mxu0 0.0
    %5204 = vmatprep.subr.mxu0 0.0
    %5205 = vmatpush1.msra.mxu0 0.0
    %5206 = vmatprep.subr.mxu0 0.0
    %5207 = vmatpush1.msra.mxu0 0.0
    %5208 = vmatprep.subr.mxu0 0.0
    %5209 = vmatpush1.msra.mxu0 0.0
    %5210 = vmatprep.subr.mxu0 0.0
    %5211 = vmatpush1.msra.mxu0 0.0
    %5212 = vmatprep.subr.mxu0 0.0
    %5213 = vmatpush1.msra.mxu0 0.0
    %5214 = vmatprep.mubr.f32.mxu0 0.0
    %5215 = vmatmul.mubr.f32.gmra.mrb[0].mxu0 %v3711
    %v5216 = vpop.f32.mrb[0].mxu0
    %v5217 = vadd.f32 %v5148, %v5216
    %v5218 = vpop.f32.mrb[0].mxu0
    %5219 = vmatprep.mubr.f32.mxu0 0.0
    %5220 = vmatmul.mubr.f32.gmra.mrb[0].mxu0 %v3714
    %v5221 = vpop.f32.mrb[0].mxu0
    %v5222 = vadd.f32 %v5148, %v5221
    %v5223 = vpop.f32.mrb[0].mxu0
    %5224 = vdwg.mxu0
    %s5225 = scalar_lea.vmem %s5, 192
    %v5226 = vld [vmem:[%s5225] sm:$0xff]
    %v5227 = vld [vmem:[%s5225 + $0x8] sm:$0xff]
    %v5228 = vld [vmem:[%s5225 + $0x10] sm:$0xff]
    %v5229 = vld [vmem:[%s5225 + $0x18] sm:$0xff]
    %s5230 = scalar_lea.vmem %s6, 6
    %v5231 = vld [vmem:[%s5230] sm:$0x1]
    %v5233 = vlaneseq
    %v5234 = vshrl.u32 %v5233, 7
    %v5235 = vsub.s32 0, %v5234
    %v5236 = vrot.slane %v5231, %v5235
    %5238 = vmatprep.subr.mxu0 0.0
    %5239 = vmatpush1.msra.mxu0 %v5226
    %5240 = vmatprep.subr.mxu0 0.0
    %5241 = vmatpush1.msra.mxu0 %v5227
    %5242 = vmatprep.subr.mxu0 0.0
    %5243 = vmatpush1.msra.mxu0 %v5228
    %5244 = vmatprep.subr.mxu0 0.0
    %5245 = vmatpush1.msra.mxu0 %v5229
    %5246 = vmatprep.subr.mxu0 0.0
    %5247 = vmatpush1.msra.mxu0 0.0
    %5248 = vmatprep.subr.mxu0 0.0
    %5249 = vmatpush1.msra.mxu0 0.0
    %5250 = vmatprep.subr.mxu0 0.0
    %5251 = vmatpush1.msra.mxu0 0.0
    %5252 = vmatprep.subr.mxu0 0.0
    %5253 = vmatpush1.msra.mxu0 0.0
    %5254 = vmatprep.subr.mxu0 0.0
    %5255 = vmatpush1.msra.mxu0 0.0
    %5256 = vmatprep.subr.mxu0 0.0
    %5257 = vmatpush1.msra.mxu0 0.0
    %5258 = vmatprep.subr.mxu0 0.0
    %5259 = vmatpush1.msra.mxu0 0.0
    %5260 = vmatprep.subr.mxu0 0.0
    %5261 = vmatpush1.msra.mxu0 0.0
    %5262 = vmatprep.subr.mxu0 0.0
    %5263 = vmatpush1.msra.mxu0 0.0
    %5264 = vmatprep.subr.mxu0 0.0
    %5265 = vmatpush1.msra.mxu0 0.0
    %5266 = vmatprep.subr.mxu0 0.0
    %5267 = vmatpush1.msra.mxu0 0.0
    %5268 = vmatprep.subr.mxu0 0.0
    %5269 = vmatpush1.msra.mxu0 0.0
    %5270 = vmatprep.subr.mxu0 0.0
    %5271 = vmatpush1.msra.mxu0 0.0
    %5272 = vmatprep.subr.mxu0 0.0
    %5273 = vmatpush1.msra.mxu0 0.0
    %5274 = vmatprep.subr.mxu0 0.0
    %5275 = vmatpush1.msra.mxu0 0.0
    %5276 = vmatprep.subr.mxu0 0.0
    %5277 = vmatpush1.msra.mxu0 0.0
    %5278 = vmatprep.subr.mxu0 0.0
    %5279 = vmatpush1.msra.mxu0 0.0
    %5280 = vmatprep.subr.mxu0 0.0
    %5281 = vmatpush1.msra.mxu0 0.0
    %5282 = vmatprep.subr.mxu0 0.0
    %5283 = vmatpush1.msra.mxu0 0.0
    %5284 = vmatprep.subr.mxu0 0.0
    %5285 = vmatpush1.msra.mxu0 0.0
    %5286 = vmatprep.subr.mxu0 0.0
    %5287 = vmatpush1.msra.mxu0 0.0
    %5288 = vmatprep.subr.mxu0 0.0
    %5289 = vmatpush1.msra.mxu0 0.0
    %5290 = vmatprep.subr.mxu0 0.0
    %5291 = vmatpush1.msra.mxu0 0.0
    %5292 = vmatprep.subr.mxu0 0.0
    %5293 = vmatpush1.msra.mxu0 0.0
    %5294 = vmatprep.subr.mxu0 0.0
    %5295 = vmatpush1.msra.mxu0 0.0
    %5296 = vmatprep.subr.mxu0 0.0
    %5297 = vmatpush1.msra.mxu0 0.0
    %5298 = vmatprep.subr.mxu0 0.0
    %5299 = vmatpush1.msra.mxu0 0.0
    %5300 = vmatprep.subr.mxu0 0.0
    %5301 = vmatpush1.msra.mxu0 0.0
    %5302 = vmatprep.mubr.f32.mxu0 0.0
    %5303 = vmatmul.mubr.f32.gmra.mrb[0].mxu0 %v3711
    %v5304 = vpop.f32.mrb[0].mxu0
    %v5305 = vadd.f32 %v5236, %v5304
    %v5306 = vpop.f32.mrb[0].mxu0
    %5307 = vmatprep.mubr.f32.mxu0 0.0
    %5308 = vmatmul.mubr.f32.gmra.mrb[0].mxu0 %v3714
    %v5309 = vpop.f32.mrb[0].mxu0
    %v5310 = vadd.f32 %v5236, %v5309
    %v5311 = vpop.f32.mrb[0].mxu0
    %5312 = vdwg.mxu0
    %v5314 = vsel %vm324, %v5129, 0
    %v5317 = vsel %vm324, %v5217, 0
    %5319 = vmatprep.subr.mxu0 0.0
    %5320 = vmatpush1.xpose.msra.mxu0 %v5317
    %5321 = vmatprep.subr.mxu0 0.0
    %5322 = vmatpush1.xpose.msra.mxu0 0.0
    %5323 = vmatprep.subr.mxu0 0.0
    %5324 = vmatpush1.xpose.msra.mxu0 0.0
    %5325 = vmatprep.subr.mxu0 0.0
    %5326 = vmatpush1.xpose.msra.mxu0 0.0
    %5327 = vmatprep.subr.mxu0 0.0
    %5328 = vmatpush1.xpose.msra.mxu0 0.0
    %5329 = vmatprep.subr.mxu0 0.0
    %5330 = vmatpush1.xpose.msra.mxu0 0.0
    %5331 = vmatprep.subr.mxu0 0.0
    %5332 = vmatpush1.xpose.msra.mxu0 0.0
    %5333 = vmatprep.subr.mxu0 0.0
    %5334 = vmatpush1.xpose.msra.mxu0 0.0
    %5335 = vmatprep.subr.mxu0 0.0
    %5336 = vmatpush1.xpose.msra.mxu0 0.0
    %5337 = vmatprep.subr.mxu0 0.0
    %5338 = vmatpush1.xpose.msra.mxu0 0.0
    %5339 = vmatprep.subr.mxu0 0.0
    %5340 = vmatpush1.xpose.msra.mxu0 0.0
    %5341 = vmatprep.subr.mxu0 0.0
    %5342 = vmatpush1.xpose.msra.mxu0 0.0
    %5343 = vmatprep.subr.mxu0 0.0
    %5344 = vmatpush1.xpose.msra.mxu0 0.0
    %5345 = vmatprep.subr.mxu0 0.0
    %5346 = vmatpush1.xpose.msra.mxu0 0.0
    %5347 = vmatprep.subr.mxu0 0.0
    %5348 = vmatpush1.xpose.msra.mxu0 0.0
    %5349 = vmatprep.subr.mxu0 0.0
    %5350 = vmatpush1.xpose.msra.mxu0 0.0
    %5351 = vmatprep.subr.mxu0 0.0
    %5352 = vmatpush1.xpose.msra.mxu0 0.0
    %5353 = vmatprep.subr.mxu0 0.0
    %5354 = vmatpush1.xpose.msra.mxu0 0.0
    %5355 = vmatprep.subr.mxu0 0.0
    %5356 = vmatpush1.xpose.msra.mxu0 0.0
    %5357 = vmatprep.subr.mxu0 0.0
    %5358 = vmatpush1.xpose.msra.mxu0 0.0
    %5359 = vmatprep.subr.mxu0 0.0
    %5360 = vmatpush1.xpose.msra.mxu0 0.0
    %5361 = vmatprep.subr.mxu0 0.0
    %5362 = vmatpush1.xpose.msra.mxu0 0.0
    %5363 = vmatprep.subr.mxu0 0.0
    %5364 = vmatpush1.xpose.msra.mxu0 0.0
    %5365 = vmatprep.subr.mxu0 0.0
    %5366 = vmatpush1.xpose.msra.mxu0 0.0
    %5367 = vmatprep.subr.mxu0 0.0
    %5368 = vmatpush1.xpose.msra.mxu0 0.0
    %5369 = vmatprep.subr.mxu0 0.0
    %5370 = vmatpush1.xpose.msra.mxu0 0.0
    %5371 = vmatprep.subr.mxu0 0.0
    %5372 = vmatpush1.xpose.msra.mxu0 0.0
    %5373 = vmatprep.subr.mxu0 0.0
    %5374 = vmatpush1.xpose.msra.mxu0 0.0
    %5375 = vmatprep.subr.mxu0 0.0
    %5376 = vmatpush1.xpose.msra.mxu0 0.0
    %5377 = vmatprep.subr.mxu0 0.0
    %5378 = vmatpush1.xpose.msra.mxu0 0.0
    %5379 = vmatprep.subr.mxu0 0.0
    %5380 = vmatpush1.xpose.msra.mxu0 0.0
    %5381 = vmatprep.subr.mxu0 0.0
    %5382 = vmatpush1.xpose.msra.mxu0 0.0
    %5383 = vmatprep.mubr.f32.mxu0 0.0
    %5384 = vmatmul.mubr.f32.gmra.mrb[0].mxu0 %v5314
    %v5385 = vpop.f32.mrb[0].mxu0
    %v5386 = vadd.f32 0.0, %v5385
    %v5387 = vpop.f32.mrb[0].mxu0
    %5388 = vdwg.mxu0
    %v5390 = vsel %vm324, %v5134, 0
    %v5393 = vsel %vm324, %v5222, 0
    %5395 = vmatprep.subr.mxu0 0.0
    %5396 = vmatpush1.xpose.msra.mxu0 %v5393
    %5397 = vmatprep.subr.mxu0 0.0
    %5398 = vmatpush1.xpose.msra.mxu0 0.0
    %5399 = vmatprep.subr.mxu0 0.0
    %5400 = vmatpush1.xpose.msra.mxu0 0.0
    %5401 = vmatprep.subr.mxu0 0.0
    %5402 = vmatpush1.xpose.msra.mxu0 0.0
    %5403 = vmatprep.subr.mxu0 0.0
    %5404 = vmatpush1.xpose.msra.mxu0 0.0
    %5405 = vmatprep.subr.mxu0 0.0
    %5406 = vmatpush1.xpose.msra.mxu0 0.0
    %5407 = vmatprep.subr.mxu0 0.0
    %5408 = vmatpush1.xpose.msra.mxu0 0.0
    %5409 = vmatprep.subr.mxu0 0.0
    %5410 = vmatpush1.xpose.msra.mxu0 0.0
    %5411 = vmatprep.subr.mxu0 0.0
    %5412 = vmatpush1.xpose.msra.mxu0 0.0
    %5413 = vmatprep.subr.mxu0 0.0
    %5414 = vmatpush1.xpose.msra.mxu0 0.0
    %5415 = vmatprep.subr.mxu0 0.0
    %5416 = vmatpush1.xpose.msra.mxu0 0.0
    %5417 = vmatprep.subr.mxu0 0.0
    %5418 = vmatpush1.xpose.msra.mxu0 0.0
    %5419 = vmatprep.subr.mxu0 0.0
    %5420 = vmatpush1.xpose.msra.mxu0 0.0
    %5421 = vmatprep.subr.mxu0 0.0
    %5422 = vmatpush1.xpose.msra.mxu0 0.0
    %5423 = vmatprep.subr.mxu0 0.0
    %5424 = vmatpush1.xpose.msra.mxu0 0.0
    %5425 = vmatprep.subr.mxu0 0.0
    %5426 = vmatpush1.xpose.msra.mxu0 0.0
    %5427 = vmatprep.subr.mxu0 0.0
    %5428 = vmatpush1.xpose.msra.mxu0 0.0
    %5429 = vmatprep.subr.mxu0 0.0
    %5430 = vmatpush1.xpose.msra.mxu0 0.0
    %5431 = vmatprep.subr.mxu0 0.0
    %5432 = vmatpush1.xpose.msra.mxu0 0.0
    %5433 = vmatprep.subr.mxu0 0.0
    %5434 = vmatpush1.xpose.msra.mxu0 0.0
    %5435 = vmatprep.subr.mxu0 0.0
    %5436 = vmatpush1.xpose.msra.mxu0 0.0
    %5437 = vmatprep.subr.mxu0 0.0
    %5438 = vmatpush1.xpose.msra.mxu0 0.0
    %5439 = vmatprep.subr.mxu0 0.0
    %5440 = vmatpush1.xpose.msra.mxu0 0.0
    %5441 = vmatprep.subr.mxu0 0.0
    %5442 = vmatpush1.xpose.msra.mxu0 0.0
    %5443 = vmatprep.subr.mxu0 0.0
    %5444 = vmatpush1.xpose.msra.mxu0 0.0
    %5445 = vmatprep.subr.mxu0 0.0
    %5446 = vmatpush1.xpose.msra.mxu0 0.0
    %5447 = vmatprep.subr.mxu0 0.0
    %5448 = vmatpush1.xpose.msra.mxu0 0.0
    %5449 = vmatprep.subr.mxu0 0.0
    %5450 = vmatpush1.xpose.msra.mxu0 0.0
    %5451 = vmatprep.subr.mxu0 0.0
    %5452 = vmatpush1.xpose.msra.mxu0 0.0
    %5453 = vmatprep.subr.mxu0 0.0
    %5454 = vmatpush1.xpose.msra.mxu0 0.0
    %5455 = vmatprep.subr.mxu0 0.0
    %5456 = vmatpush1.xpose.msra.mxu0 0.0
    %5457 = vmatprep.subr.mxu0 0.0
    %5458 = vmatpush1.xpose.msra.mxu0 0.0
    %5459 = vmatprep.mubr.f32.mxu0 0.0
    %5460 = vmatmul.mubr.f32.gmra.mrb[0].mxu0 %v5390
    %v5461 = vpop.f32.mrb[0].mxu0
    %v5462 = vadd.f32 0.0, %v5461
    %v5463 = vpop.f32.mrb[0].mxu0
    %5464 = vdwg.mxu0
    %v5465 = vsel %vm324, %v5386, -inf
    %5466 = vmax.xlane.f32.xlu0 %v5465
    %v5467 = vpop.xlane.xlu0 %5466
    %v5468 = vsel %vm324, %v5462, -inf
    %5469 = vmax.xlane.f32.xlu0 %v5468
    %v5470 = vpop.xlane.xlu0 %5469
    %v5471 = vsub.f32 %v5386, %v5467
    %v5472 = vsub.f32 %v5462, %v5470
    %v5473 = vmul.f32 %v5471, 1.442695
    %v5474 = vpow.pop %v5473
    %v5475 = vmul.f32 %v5472, 1.442695
    %v5476 = vpow.pop %v5475
    %v5477 = vsel %vm324, %v5474, 0.0
    %5478 = vadd.xlane.f32.xlu0 %v5477
    %v5479 = vpop.xlane.xlu0 %5478
    %v5480 = vsel %vm324, %v5476, 0.0
    %5481 = vadd.xlane.f32.xlu0 %v5480
    %v5482 = vpop.xlane.xlu0 %5481
    %v5483 = vrcp.pop %v5479
    %v5484 = vrcp.pop %v5482
    %v5485 = vmul.f32 %v5479, %v5483
    %v5486 = vmul.f32 %v5482, %v5484
    %v5487 = vsub.f32 2.0, %v5485
    %v5488 = vsub.f32 2.0, %v5486
    %v5489 = vmul.f32 %v5483, %v5487
    %v5490 = vmul.f32 %v5484, %v5488
    %v5491 = vmul.f32 %v5474, %v5489
    %v5492 = vmul.f32 %v5476, %v5490
    %v5494 = vsel %vm324, %v5491, 0
    %5496 = vmatprep.subr.mxu0 0.0
    %5497 = vmatpush1.msra.mxu0 %v5305
    %5498 = vmatprep.subr.mxu0 0.0
    %5499 = vmatpush1.msra.mxu0 0.0
    %5500 = vmatprep.subr.mxu0 0.0
    %5501 = vmatpush1.msra.mxu0 0.0
    %5502 = vmatprep.subr.mxu0 0.0
    %5503 = vmatpush1.msra.mxu0 0.0
    %5504 = vmatprep.subr.mxu0 0.0
    %5505 = vmatpush1.msra.mxu0 0.0
    %5506 = vmatprep.subr.mxu0 0.0
    %5507 = vmatpush1.msra.mxu0 0.0
    %5508 = vmatprep.subr.mxu0 0.0
    %5509 = vmatpush1.msra.mxu0 0.0
    %5510 = vmatprep.subr.mxu0 0.0
    %5511 = vmatpush1.msra.mxu0 0.0
    %5512 = vmatprep.subr.mxu0 0.0
    %5513 = vmatpush1.msra.mxu0 0.0
    %5514 = vmatprep.subr.mxu0 0.0
    %5515 = vmatpush1.msra.mxu0 0.0
    %5516 = vmatprep.subr.mxu0 0.0
    %5517 = vmatpush1.msra.mxu0 0.0
    %5518 = vmatprep.subr.mxu0 0.0
    %5519 = vmatpush1.msra.mxu0 0.0
    %5520 = vmatprep.subr.mxu0 0.0
    %5521 = vmatpush1.msra.mxu0 0.0
    %5522 = vmatprep.subr.mxu0 0.0
    %5523 = vmatpush1.msra.mxu0 0.0
    %5524 = vmatprep.subr.mxu0 0.0
    %5525 = vmatpush1.msra.mxu0 0.0
    %5526 = vmatprep.subr.mxu0 0.0
    %5527 = vmatpush1.msra.mxu0 0.0
    %5528 = vmatprep.subr.mxu0 0.0
    %5529 = vmatpush1.msra.mxu0 0.0
    %5530 = vmatprep.subr.mxu0 0.0
    %5531 = vmatpush1.msra.mxu0 0.0
    %5532 = vmatprep.subr.mxu0 0.0
    %5533 = vmatpush1.msra.mxu0 0.0
    %5534 = vmatprep.subr.mxu0 0.0
    %5535 = vmatpush1.msra.mxu0 0.0
    %5536 = vmatprep.subr.mxu0 0.0
    %5537 = vmatpush1.msra.mxu0 0.0
    %5538 = vmatprep.subr.mxu0 0.0
    %5539 = vmatpush1.msra.mxu0 0.0
    %5540 = vmatprep.subr.mxu0 0.0
    %5541 = vmatpush1.msra.mxu0 0.0
    %5542 = vmatprep.subr.mxu0 0.0
    %5543 = vmatpush1.msra.mxu0 0.0
    %5544 = vmatprep.subr.mxu0 0.0
    %5545 = vmatpush1.msra.mxu0 0.0
    %5546 = vmatprep.subr.mxu0 0.0
    %5547 = vmatpush1.msra.mxu0 0.0
    %5548 = vmatprep.subr.mxu0 0.0
    %5549 = vmatpush1.msra.mxu0 0.0
    %5550 = vmatprep.subr.mxu0 0.0
    %5551 = vmatpush1.msra.mxu0 0.0
    %5552 = vmatprep.subr.mxu0 0.0
    %5553 = vmatpush1.msra.mxu0 0.0
    %5554 = vmatprep.subr.mxu0 0.0
    %5555 = vmatpush1.msra.mxu0 0.0
    %5556 = vmatprep.subr.mxu0 0.0
    %5557 = vmatpush1.msra.mxu0 0.0
    %5558 = vmatprep.subr.mxu0 0.0
    %5559 = vmatpush1.msra.mxu0 0.0
    %5560 = vmatprep.mubr.f32.mxu0 0.0
    %5561 = vmatmul.mubr.f32.gmra.mrb[0].mxu0 %v5494
    %v5562 = vpop.f32.mrb[0].mxu0
    %v5563 = vadd.f32 0.0, %v5562
    %v5564 = vpop.f32.mrb[0].mxu0
    %5565 = vdwg.mxu0
    %v5567 = vsel %vm324, %v5492, 0
    %5569 = vmatprep.subr.mxu0 0.0
    %5570 = vmatpush1.msra.mxu0 %v5310
    %5571 = vmatprep.subr.mxu0 0.0
    %5572 = vmatpush1.msra.mxu0 0.0
    %5573 = vmatprep.subr.mxu0 0.0
    %5574 = vmatpush1.msra.mxu0 0.0
    %5575 = vmatprep.subr.mxu0 0.0
    %5576 = vmatpush1.msra.mxu0 0.0
    %5577 = vmatprep.subr.mxu0 0.0
    %5578 = vmatpush1.msra.mxu0 0.0
    %5579 = vmatprep.subr.mxu0 0.0
    %5580 = vmatpush1.msra.mxu0 0.0
    %5581 = vmatprep.subr.mxu0 0.0
    %5582 = vmatpush1.msra.mxu0 0.0
    %5583 = vmatprep.subr.mxu0 0.0
    %5584 = vmatpush1.msra.mxu0 0.0
    %5585 = vmatprep.subr.mxu0 0.0
    %5586 = vmatpush1.msra.mxu0 0.0
    %5587 = vmatprep.subr.mxu0 0.0
    %5588 = vmatpush1.msra.mxu0 0.0
    %5589 = vmatprep.subr.mxu0 0.0
    %5590 = vmatpush1.msra.mxu0 0.0
    %5591 = vmatprep.subr.mxu0 0.0
    %5592 = vmatpush1.msra.mxu0 0.0
    %5593 = vmatprep.subr.mxu0 0.0
    %5594 = vmatpush1.msra.mxu0 0.0
    %5595 = vmatprep.subr.mxu0 0.0
    %5596 = vmatpush1.msra.mxu0 0.0
    %5597 = vmatprep.subr.mxu0 0.0
    %5598 = vmatpush1.msra.mxu0 0.0
    %5599 = vmatprep.subr.mxu0 0.0
    %5600 = vmatpush1.msra.mxu0 0.0
    %5601 = vmatprep.subr.mxu0 0.0
    %5602 = vmatpush1.msra.mxu0 0.0
    %5603 = vmatprep.subr.mxu0 0.0
    %5604 = vmatpush1.msra.mxu0 0.0
    %5605 = vmatprep.subr.mxu0 0.0
    %5606 = vmatpush1.msra.mxu0 0.0
    %5607 = vmatprep.subr.mxu0 0.0
    %5608 = vmatpush1.msra.mxu0 0.0
    %5609 = vmatprep.subr.mxu0 0.0
    %5610 = vmatpush1.msra.mxu0 0.0
    %5611 = vmatprep.subr.mxu0 0.0
    %5612 = vmatpush1.msra.mxu0 0.0
    %5613 = vmatprep.subr.mxu0 0.0
    %5614 = vmatpush1.msra.mxu0 0.0
    %5615 = vmatprep.subr.mxu0 0.0
    %5616 = vmatpush1.msra.mxu0 0.0
    %5617 = vmatprep.subr.mxu0 0.0
    %5618 = vmatpush1.msra.mxu0 0.0
    %5619 = vmatprep.subr.mxu0 0.0
    %5620 = vmatpush1.msra.mxu0 0.0
    %5621 = vmatprep.subr.mxu0 0.0
    %5622 = vmatpush1.msra.mxu0 0.0
    %5623 = vmatprep.subr.mxu0 0.0
    %5624 = vmatpush1.msra.mxu0 0.0
    %5625 = vmatprep.subr.mxu0 0.0
    %5626 = vmatpush1.msra.mxu0 0.0
    %5627 = vmatprep.subr.mxu0 0.0
    %5628 = vmatpush1.msra.mxu0 0.0
    %5629 = vmatprep.subr.mxu0 0.0
    %5630 = vmatpush1.msra.mxu0 0.0
    %5631 = vmatprep.subr.mxu0 0.0
    %5632 = vmatpush1.msra.mxu0 0.0
    %5633 = vmatprep.mubr.f32.mxu0 0.0
    %5634 = vmatmul.mubr.f32.gmra.mrb[0].mxu0 %v5567
    %v5635 = vpop.f32.mrb[0].mxu0
    %v5636 = vadd.f32 0.0, %v5635
    %v5637 = vpop.f32.mrb[0].mxu0
    %5638 = vdwg.mxu0
    %s5639 = scalar_lea.vmem %s7, 48
    %v5640 = vld [vmem:[%s5639] sm:$0xff]
    %v5642 = vsel %vm324, %v5563, 0
    %v5645 = vsel %vm324, %v5636, 0
    %5647 = vmatprep.subr.mxu0 0.0
    %5648 = vmatpush1.msra.mxu0 %v5640
    %5649 = vmatprep.subr.mxu0 0.0
    %5650 = vmatpush1.msra.mxu0 0.0
    %5651 = vmatprep.subr.mxu0 0.0
    %5652 = vmatpush1.msra.mxu0 0.0
    %5653 = vmatprep.subr.mxu0 0.0
    %5654 = vmatpush1.msra.mxu0 0.0
    %5655 = vmatprep.subr.mxu0 0.0
    %5656 = vmatpush1.msra.mxu0 0.0
    %5657 = vmatprep.subr.mxu0 0.0
    %5658 = vmatpush1.msra.mxu0 0.0
    %5659 = vmatprep.subr.mxu0 0.0
    %5660 = vmatpush1.msra.mxu0 0.0
    %5661 = vmatprep.subr.mxu0 0.0
    %5662 = vmatpush1.msra.mxu0 0.0
    %5663 = vmatprep.subr.mxu0 0.0
    %5664 = vmatpush1.msra.mxu0 0.0
    %5665 = vmatprep.subr.mxu0 0.0
    %5666 = vmatpush1.msra.mxu0 0.0
    %5667 = vmatprep.subr.mxu0 0.0
    %5668 = vmatpush1.msra.mxu0 0.0
    %5669 = vmatprep.subr.mxu0 0.0
    %5670 = vmatpush1.msra.mxu0 0.0
    %5671 = vmatprep.subr.mxu0 0.0
    %5672 = vmatpush1.msra.mxu0 0.0
    %5673 = vmatprep.subr.mxu0 0.0
    %5674 = vmatpush1.msra.mxu0 0.0
    %5675 = vmatprep.subr.mxu0 0.0
    %5676 = vmatpush1.msra.mxu0 0.0
    %5677 = vmatprep.subr.mxu0 0.0
    %5678 = vmatpush1.msra.mxu0 0.0
    %5679 = vmatprep.subr.mxu0 0.0
    %5680 = vmatpush1.msra.mxu0 0.0
    %5681 = vmatprep.subr.mxu0 0.0
    %5682 = vmatpush1.msra.mxu0 0.0
    %5683 = vmatprep.subr.mxu0 0.0
    %5684 = vmatpush1.msra.mxu0 0.0
    %5685 = vmatprep.subr.mxu0 0.0
    %5686 = vmatpush1.msra.mxu0 0.0
    %5687 = vmatprep.subr.mxu0 0.0
    %5688 = vmatpush1.msra.mxu0 0.0
    %5689 = vmatprep.subr.mxu0 0.0
    %5690 = vmatpush1.msra.mxu0 0.0
    %5691 = vmatprep.subr.mxu0 0.0
    %5692 = vmatpush1.msra.mxu0 0.0
    %5693 = vmatprep.subr.mxu0 0.0
    %5694 = vmatpush1.msra.mxu0 0.0
    %5695 = vmatprep.subr.mxu0 0.0
    %5696 = vmatpush1.msra.mxu0 0.0
    %5697 = vmatprep.subr.mxu0 0.0
    %5698 = vmatpush1.msra.mxu0 0.0
    %5699 = vmatprep.subr.mxu0 0.0
    %5700 = vmatpush1.msra.mxu0 0.0
    %5701 = vmatprep.subr.mxu0 0.0
    %5702 = vmatpush1.msra.mxu0 0.0
    %5703 = vmatprep.subr.mxu0 0.0
    %5704 = vmatpush1.msra.mxu0 0.0
    %5705 = vmatprep.subr.mxu0 0.0
    %5706 = vmatpush1.msra.mxu0 0.0
    %5707 = vmatprep.subr.mxu0 0.0
    %5708 = vmatpush1.msra.mxu0 0.0
    %5709 = vmatprep.subr.mxu0 0.0
    %5710 = vmatpush1.msra.mxu0 0.0
    %5711 = vmatprep.mubr.f32.mxu0 0.0
    %5712 = vmatmul.mubr.f32.gmra.mrb[0].mxu0 %v5642
    %v5713 = vpop.f32.mrb[0].mxu0
    %v5714 = vadd.f32 0.0, %v5713
    %v5715 = vpop.f32.mrb[0].mxu0
    %5716 = vmatprep.mubr.f32.mxu0 0.0
    %5717 = vmatmul.mubr.f32.gmra.mrb[0].mxu0 %v5645
    %v5718 = vpop.f32.mrb[0].mxu0
    %v5719 = vadd.f32 0.0, %v5718
    %v5720 = vpop.f32.mrb[0].mxu0
    %5721 = vdwg.mxu0
    %v5722 = vadd.f32 %v5041, %v5714
    %v5723 = vadd.f32 %v5046, %v5719
    %s5724 = scalar_lea.vmem %s1, 224
    %v5725 = vld [vmem:[%s5724] sm:$0xff]
    %v5726 = vld [vmem:[%s5724 + $0x8] sm:$0xff]
    %v5727 = vld [vmem:[%s5724 + $0x10] sm:$0xff]
    %v5728 = vld [vmem:[%s5724 + $0x18] sm:$0xff]
    %s5729 = scalar_lea.vmem %s2, 7
    %v5730 = vld [vmem:[%s5729] sm:$0x1]
    %v5732 = vlaneseq
    %v5733 = vshrl.u32 %v5732, 7
    %v5734 = vsub.s32 0, %v5733
    %v5735 = vrot.slane %v5730, %v5734
    %5737 = vmatprep.subr.mxu0 0.0
    %5738 = vmatpush1.msra.mxu0 %v5725
    %5739 = vmatprep.subr.mxu0 0.0
    %5740 = vmatpush1.msra.mxu0 %v5726
    %5741 = vmatprep.subr.mxu0 0.0
    %5742 = vmatpush1.msra.mxu0 %v5727
    %5743 = vmatprep.subr.mxu0 0.0
    %5744 = vmatpush1.msra.mxu0 %v5728
    %5745 = vmatprep.subr.mxu0 0.0
    %5746 = vmatpush1.msra.mxu0 0.0
    %5747 = vmatprep.subr.mxu0 0.0
    %5748 = vmatpush1.msra.mxu0 0.0
    %5749 = vmatprep.subr.mxu0 0.0
    %5750 = vmatpush1.msra.mxu0 0.0
    %5751 = vmatprep.subr.mxu0 0.0
    %5752 = vmatpush1.msra.mxu0 0.0
    %5753 = vmatprep.subr.mxu0 0.0
    %5754 = vmatpush1.msra.mxu0 0.0
    %5755 = vmatprep.subr.mxu0 0.0
    %5756 = vmatpush1.msra.mxu0 0.0
    %5757 = vmatprep.subr.mxu0 0.0
    %5758 = vmatpush1.msra.mxu0 0.0
    %5759 = vmatprep.subr.mxu0 0.0
    %5760 = vmatpush1.msra.mxu0 0.0
    %5761 = vmatprep.subr.mxu0 0.0
    %5762 = vmatpush1.msra.mxu0 0.0
    %5763 = vmatprep.subr.mxu0 0.0
    %5764 = vmatpush1.msra.mxu0 0.0
    %5765 = vmatprep.subr.mxu0 0.0
    %5766 = vmatpush1.msra.mxu0 0.0
    %5767 = vmatprep.subr.mxu0 0.0
    %5768 = vmatpush1.msra.mxu0 0.0
    %5769 = vmatprep.subr.mxu0 0.0
    %5770 = vmatpush1.msra.mxu0 0.0
    %5771 = vmatprep.subr.mxu0 0.0
    %5772 = vmatpush1.msra.mxu0 0.0
    %5773 = vmatprep.subr.mxu0 0.0
    %5774 = vmatpush1.msra.mxu0 0.0
    %5775 = vmatprep.subr.mxu0 0.0
    %5776 = vmatpush1.msra.mxu0 0.0
    %5777 = vmatprep.subr.mxu0 0.0
    %5778 = vmatpush1.msra.mxu0 0.0
    %5779 = vmatprep.subr.mxu0 0.0
    %5780 = vmatpush1.msra.mxu0 0.0
    %5781 = vmatprep.subr.mxu0 0.0
    %5782 = vmatpush1.msra.mxu0 0.0
    %5783 = vmatprep.subr.mxu0 0.0
    %5784 = vmatpush1.msra.mxu0 0.0
    %5785 = vmatprep.subr.mxu0 0.0
    %5786 = vmatpush1.msra.mxu0 0.0
    %5787 = vmatprep.subr.mxu0 0.0
    %5788 = vmatpush1.msra.mxu0 0.0
    %5789 = vmatprep.subr.mxu0 0.0
    %5790 = vmatpush1.msra.mxu0 0.0
    %5791 = vmatprep.subr.mxu0 0.0
    %5792 = vmatpush1.msra.mxu0 0.0
    %5793 = vmatprep.subr.mxu0 0.0
    %5794 = vmatpush1.msra.mxu0 0.0
    %5795 = vmatprep.subr.mxu0 0.0
    %5796 = vmatpush1.msra.mxu0 0.0
    %5797 = vmatprep.subr.mxu0 0.0
    %5798 = vmatpush1.msra.mxu0 0.0
    %5799 = vmatprep.subr.mxu0 0.0
    %5800 = vmatpush1.msra.mxu0 0.0
    %5801 = vmatprep.mubr.f32.mxu0 0.0
    %5802 = vmatmul.mubr.f32.gmra.mrb[0].mxu0 %v3711
    %v5803 = vpop.f32.mrb[0].mxu0
    %v5804 = vadd.f32 %v5735, %v5803
    %v5805 = vpop.f32.mrb[0].mxu0
    %5806 = vmatprep.mubr.f32.mxu0 0.0
    %5807 = vmatmul.mubr.f32.gmra.mrb[0].mxu0 %v3714
    %v5808 = vpop.f32.mrb[0].mxu0
    %v5809 = vadd.f32 %v5735, %v5808
    %v5810 = vpop.f32.mrb[0].mxu0
    %5811 = vdwg.mxu0
    %s5812 = scalar_lea.vmem %s3, 224
    %v5813 = vld [vmem:[%s5812] sm:$0xff]
    %v5814 = vld [vmem:[%s5812 + $0x8] sm:$0xff]
    %v5815 = vld [vmem:[%s5812 + $0x10] sm:$0xff]
    %v5816 = vld [vmem:[%s5812 + $0x18] sm:$0xff]
    %s5817 = scalar_lea.vmem %s4, 7
    %v5818 = vld [vmem:[%s5817] sm:$0x1]
    %v5820 = vlaneseq
    %v5821 = vshrl.u32 %v5820, 7
    %v5822 = vsub.s32 0, %v5821
    %v5823 = vrot.slane %v5818, %v5822
    %5825 = vmatprep.subr.mxu0 0.0
    %5826 = vmatpush1.msra.mxu0 %v5813
    %5827 = vmatprep.subr.mxu0 0.0
    %5828 = vmatpush1.msra.mxu0 %v5814
    %5829 = vmatprep.subr.mxu0 0.0
    %5830 = vmatpush1.msra.mxu0 %v5815
    %5831 = vmatprep.subr.mxu0 0.0
    %5832 = vmatpush1.msra.mxu0 %v5816
    %5833 = vmatprep.subr.mxu0 0.0
    %5834 = vmatpush1.msra.mxu0 0.0
    %5835 = vmatprep.subr.mxu0 0.0
    %5836 = vmatpush1.msra.mxu0 0.0
    %5837 = vmatprep.subr.mxu0 0.0
    %5838 = vmatpush1.msra.mxu0 0.0
    %5839 = vmatprep.subr.mxu0 0.0
    %5840 = vmatpush1.msra.mxu0 0.0
    %5841 = vmatprep.subr.mxu0 0.0
    %5842 = vmatpush1.msra.mxu0 0.0
    %5843 = vmatprep.subr.mxu0 0.0
    %5844 = vmatpush1.msra.mxu0 0.0
    %5845 = vmatprep.subr.mxu0 0.0
    %5846 = vmatpush1.msra.mxu0 0.0
    %5847 = vmatprep.subr.mxu0 0.0
    %5848 = vmatpush1.msra.mxu0 0.0
    %5849 = vmatprep.subr.mxu0 0.0
    %5850 = vmatpush1.msra.mxu0 0.0
    %5851 = vmatprep.subr.mxu0 0.0
    %5852 = vmatpush1.msra.mxu0 0.0
    %5853 = vmatprep.subr.mxu0 0.0
    %5854 = vmatpush1.msra.mxu0 0.0
    %5855 = vmatprep.subr.mxu0 0.0
    %5856 = vmatpush1.msra.mxu0 0.0
    %5857 = vmatprep.subr.mxu0 0.0
    %5858 = vmatpush1.msra.mxu0 0.0
    %5859 = vmatprep.subr.mxu0 0.0
    %5860 = vmatpush1.msra.mxu0 0.0
    %5861 = vmatprep.subr.mxu0 0.0
    %5862 = vmatpush1.msra.mxu0 0.0
    %5863 = vmatprep.subr.mxu0 0.0
    %5864 = vmatpush1.msra.mxu0 0.0
    %5865 = vmatprep.subr.mxu0 0.0
    %5866 = vmatpush1.msra.mxu0 0.0
    %5867 = vmatprep.subr.mxu0 0.0
    %5868 = vmatpush1.msra.mxu0 0.0
    %5869 = vmatprep.subr.mxu0 0.0
    %5870 = vmatpush1.msra.mxu0 0.0
    %5871 = vmatprep.subr.mxu0 0.0
    %5872 = vmatpush1.msra.mxu0 0.0
    %5873 = vmatprep.subr.mxu0 0.0
    %5874 = vmatpush1.msra.mxu0 0.0
    %5875 = vmatprep.subr.mxu0 0.0
    %5876 = vmatpush1.msra.mxu0 0.0
    %5877 = vmatprep.subr.mxu0 0.0
    %5878 = vmatpush1.msra.mxu0 0.0
    %5879 = vmatprep.subr.mxu0 0.0
    %5880 = vmatpush1.msra.mxu0 0.0
    %5881 = vmatprep.subr.mxu0 0.0
    %5882 = vmatpush1.msra.mxu0 0.0
    %5883 = vmatprep.subr.mxu0 0.0
    %5884 = vmatpush1.msra.mxu0 0.0
    %5885 = vmatprep.subr.mxu0 0.0
    %5886 = vmatpush1.msra.mxu0 0.0
    %5887 = vmatprep.subr.mxu0 0.0
    %5888 = vmatpush1.msra.mxu0 0.0
    %5889 = vmatprep.mubr.f32.mxu0 0.0
    %5890 = vmatmul.mubr.f32.gmra.mrb[0].mxu0 %v3711
    %v5891 = vpop.f32.mrb[0].mxu0
    %v5892 = vadd.f32 %v5823, %v5891
    %v5893 = vpop.f32.mrb[0].mxu0
    %5894 = vmatprep.mubr.f32.mxu0 0.0
    %5895 = vmatmul.mubr.f32.gmra.mrb[0].mxu0 %v3714
    %v5896 = vpop.f32.mrb[0].mxu0
    %v5897 = vadd.f32 %v5823, %v5896
    %v5898 = vpop.f32.mrb[0].mxu0
    %5899 = vdwg.mxu0
    %s5900 = scalar_lea.vmem %s5, 224
    %v5901 = vld [vmem:[%s5900] sm:$0xff]
    %v5902 = vld [vmem:[%s5900 + $0x8] sm:$0xff]
    %v5903 = vld [vmem:[%s5900 + $0x10] sm:$0xff]
    %v5904 = vld [vmem:[%s5900 + $0x18] sm:$0xff]
    %s5905 = scalar_lea.vmem %s6, 7
    %v5906 = vld [vmem:[%s5905] sm:$0x1]
    %v5908 = vlaneseq
    %v5909 = vshrl.u32 %v5908, 7
    %v5910 = vsub.s32 0, %v5909
    %v5911 = vrot.slane %v5906, %v5910
    %5913 = vmatprep.subr.mxu0 0.0
    %5914 = vmatpush1.msra.mxu0 %v5901
    %5915 = vmatprep.subr.mxu0 0.0
    %5916 = vmatpush1.msra.mxu0 %v5902
    %5917 = vmatprep.subr.mxu0 0.0
    %5918 = vmatpush1.msra.mxu0 %v5903
    %5919 = vmatprep.subr.mxu0 0.0
    %5920 = vmatpush1.msra.mxu0 %v5904
    %5921 = vmatprep.subr.mxu0 0.0
    %5922 = vmatpush1.msra.mxu0 0.0
    %5923 = vmatprep.subr.mxu0 0.0
    %5924 = vmatpush1.msra.mxu0 0.0
    %5925 = vmatprep.subr.mxu0 0.0
    %5926 = vmatpush1.msra.mxu0 0.0
    %5927 = vmatprep.subr.mxu0 0.0
    %5928 = vmatpush1.msra.mxu0 0.0
    %5929 = vmatprep.subr.mxu0 0.0
    %5930 = vmatpush1.msra.mxu0 0.0
    %5931 = vmatprep.subr.mxu0 0.0
    %5932 = vmatpush1.msra.mxu0 0.0
    %5933 = vmatprep.subr.mxu0 0.0
    %5934 = vmatpush1.msra.mxu0 0.0
    %5935 = vmatprep.subr.mxu0 0.0
    %5936 = vmatpush1.msra.mxu0 0.0
    %5937 = vmatprep.subr.mxu0 0.0
    %5938 = vmatpush1.msra.mxu0 0.0
    %5939 = vmatprep.subr.mxu0 0.0
    %5940 = vmatpush1.msra.mxu0 0.0
    %5941 = vmatprep.subr.mxu0 0.0
    %5942 = vmatpush1.msra.mxu0 0.0
    %5943 = vmatprep.subr.mxu0 0.0
    %5944 = vmatpush1.msra.mxu0 0.0
    %5945 = vmatprep.subr.mxu0 0.0
    %5946 = vmatpush1.msra.mxu0 0.0
    %5947 = vmatprep.subr.mxu0 0.0
    %5948 = vmatpush1.msra.mxu0 0.0
    %5949 = vmatprep.subr.mxu0 0.0
    %5950 = vmatpush1.msra.mxu0 0.0
    %5951 = vmatprep.subr.mxu0 0.0
    %5952 = vmatpush1.msra.mxu0 0.0
    %5953 = vmatprep.subr.mxu0 0.0
    %5954 = vmatpush1.msra.mxu0 0.0
    %5955 = vmatprep.subr.mxu0 0.0
    %5956 = vmatpush1.msra.mxu0 0.0
    %5957 = vmatprep.subr.mxu0 0.0
    %5958 = vmatpush1.msra.mxu0 0.0
    %5959 = vmatprep.subr.mxu0 0.0
    %5960 = vmatpush1.msra.mxu0 0.0
    %5961 = vmatprep.subr.mxu0 0.0
    %5962 = vmatpush1.msra.mxu0 0.0
    %5963 = vmatprep.subr.mxu0 0.0
    %5964 = vmatpush1.msra.mxu0 0.0
    %5965 = vmatprep.subr.mxu0 0.0
    %5966 = vmatpush1.msra.mxu0 0.0
    %5967 = vmatprep.subr.mxu0 0.0
    %5968 = vmatpush1.msra.mxu0 0.0
    %5969 = vmatprep.subr.mxu0 0.0
    %5970 = vmatpush1.msra.mxu0 0.0
    %5971 = vmatprep.subr.mxu0 0.0
    %5972 = vmatpush1.msra.mxu0 0.0
    %5973 = vmatprep.subr.mxu0 0.0
    %5974 = vmatpush1.msra.mxu0 0.0
    %5975 = vmatprep.subr.mxu0 0.0
    %5976 = vmatpush1.msra.mxu0 0.0
    %5977 = vmatprep.mubr.f32.mxu0 0.0
    %5978 = vmatmul.mubr.f32.gmra.mrb[0].mxu0 %v3711
    %v5979 = vpop.f32.mrb[0].mxu0
    %v5980 = vadd.f32 %v5911, %v5979
    %v5981 = vpop.f32.mrb[0].mxu0
    %5982 = vmatprep.mubr.f32.mxu0 0.0
    %5983 = vmatmul.mubr.f32.gmra.mrb[0].mxu0 %v3714
    %v5984 = vpop.f32.mrb[0].mxu0
    %v5985 = vadd.f32 %v5911, %v5984
    %v5986 = vpop.f32.mrb[0].mxu0
    %5987 = vdwg.mxu0
    %v5989 = vsel %vm324, %v5804, 0
    %v5992 = vsel %vm324, %v5892, 0
    %5994 = vmatprep.subr.mxu0 0.0
    %5995 = vmatpush1.xpose.msra.mxu0 %v5992
    %5996 = vmatprep.subr.mxu0 0.0
    %5997 = vmatpush1.xpose.msra.mxu0 0.0
    %5998 = vmatprep.subr.mxu0 0.0
    %5999 = vmatpush1.xpose.msra.mxu0 0.0
    %6000 = vmatprep.subr.mxu0 0.0
    %6001 = vmatpush1.xpose.msra.mxu0 0.0
    %6002 = vmatprep.subr.mxu0 0.0
    %6003 = vmatpush1.xpose.msra.mxu0 0.0
    %6004 = vmatprep.subr.mxu0 0.0
    %6005 = vmatpush1.xpose.msra.mxu0 0.0
    %6006 = vmatprep.subr.mxu0 0.0
    %6007 = vmatpush1.xpose.msra.mxu0 0.0
    %6008 = vmatprep.subr.mxu0 0.0
    %6009 = vmatpush1.xpose.msra.mxu0 0.0
    %6010 = vmatprep.subr.mxu0 0.0
    %6011 = vmatpush1.xpose.msra.mxu0 0.0
    %6012 = vmatprep.subr.mxu0 0.0
    %6013 = vmatpush1.xpose.msra.mxu0 0.0
    %6014 = vmatprep.subr.mxu0 0.0
    %6015 = vmatpush1.xpose.msra.mxu0 0.0
    %6016 = vmatprep.subr.mxu0 0.0
    %6017 = vmatpush1.xpose.msra.mxu0 0.0
    %6018 = vmatprep.subr.mxu0 0.0
    %6019 = vmatpush1.xpose.msra.mxu0 0.0
    %6020 = vmatprep.subr.mxu0 0.0
    %6021 = vmatpush1.xpose.msra.mxu0 0.0
    %6022 = vmatprep.subr.mxu0 0.0
    %6023 = vmatpush1.xpose.msra.mxu0 0.0
    %6024 = vmatprep.subr.mxu0 0.0
    %6025 = vmatpush1.xpose.msra.mxu0 0.0
    %6026 = vmatprep.subr.mxu0 0.0
    %6027 = vmatpush1.xpose.msra.mxu0 0.0
    %6028 = vmatprep.subr.mxu0 0.0
    %6029 = vmatpush1.xpose.msra.mxu0 0.0
    %6030 = vmatprep.subr.mxu0 0.0
    %6031 = vmatpush1.xpose.msra.mxu0 0.0
    %6032 = vmatprep.subr.mxu0 0.0
    %6033 = vmatpush1.xpose.msra.mxu0 0.0
    %6034 = vmatprep.subr.mxu0 0.0
    %6035 = vmatpush1.xpose.msra.mxu0 0.0
    %6036 = vmatprep.subr.mxu0 0.0
    %6037 = vmatpush1.xpose.msra.mxu0 0.0
    %6038 = vmatprep.subr.mxu0 0.0
    %6039 = vmatpush1.xpose.msra.mxu0 0.0
    %6040 = vmatprep.subr.mxu0 0.0
    %6041 = vmatpush1.xpose.msra.mxu0 0.0
    %6042 = vmatprep.subr.mxu0 0.0
    %6043 = vmatpush1.xpose.msra.mxu0 0.0
    %6044 = vmatprep.subr.mxu0 0.0
    %6045 = vmatpush1.xpose.msra.mxu0 0.0
    %6046 = vmatprep.subr.mxu0 0.0
    %6047 = vmatpush1.xpose.msra.mxu0 0.0
    %6048 = vmatprep.subr.mxu0 0.0
    %6049 = vmatpush1.xpose.msra.mxu0 0.0
    %6050 = vmatprep.subr.mxu0 0.0
    %6051 = vmatpush1.xpose.msra.mxu0 0.0
    %6052 = vmatprep.subr.mxu0 0.0
    %6053 = vmatpush1.xpose.msra.mxu0 0.0
    %6054 = vmatprep.subr.mxu0 0.0
    %6055 = vmatpush1.xpose.msra.mxu0 0.0
    %6056 = vmatprep.subr.mxu0 0.0
    %6057 = vmatpush1.xpose.msra.mxu0 0.0
    %6058 = vmatprep.mubr.f32.mxu0 0.0
    %6059 = vmatmul.mubr.f32.gmra.mrb[0].mxu0 %v5989
    %v6060 = vpop.f32.mrb[0].mxu0
    %v6061 = vadd.f32 0.0, %v6060
    %v6062 = vpop.f32.mrb[0].mxu0
    %6063 = vdwg.mxu0
    %v6065 = vsel %vm324, %v5809, 0
    %v6068 = vsel %vm324, %v5897, 0
    %6070 = vmatprep.subr.mxu0 0.0
    %6071 = vmatpush1.xpose.msra.mxu0 %v6068
    %6072 = vmatprep.subr.mxu0 0.0
    %6073 = vmatpush1.xpose.msra.mxu0 0.0
    %6074 = vmatprep.subr.mxu0 0.0
    %6075 = vmatpush1.xpose.msra.mxu0 0.0
    %6076 = vmatprep.subr.mxu0 0.0
    %6077 = vmatpush1.xpose.msra.mxu0 0.0
    %6078 = vmatprep.subr.mxu0 0.0
    %6079 = vmatpush1.xpose.msra.mxu0 0.0
    %6080 = vmatprep.subr.mxu0 0.0
    %6081 = vmatpush1.xpose.msra.mxu0 0.0
    %6082 = vmatprep.subr.mxu0 0.0
    %6083 = vmatpush1.xpose.msra.mxu0 0.0
    %6084 = vmatprep.subr.mxu0 0.0
    %6085 = vmatpush1.xpose.msra.mxu0 0.0
    %6086 = vmatprep.subr.mxu0 0.0
    %6087 = vmatpush1.xpose.msra.mxu0 0.0
    %6088 = vmatprep.subr.mxu0 0.0
    %6089 = vmatpush1.xpose.msra.mxu0 0.0
    %6090 = vmatprep.subr.mxu0 0.0
    %6091 = vmatpush1.xpose.msra.mxu0 0.0
    %6092 = vmatprep.subr.mxu0 0.0
    %6093 = vmatpush1.xpose.msra.mxu0 0.0
    %6094 = vmatprep.subr.mxu0 0.0
    %6095 = vmatpush1.xpose.msra.mxu0 0.0
    %6096 = vmatprep.subr.mxu0 0.0
    %6097 = vmatpush1.xpose.msra.mxu0 0.0
    %6098 = vmatprep.subr.mxu0 0.0
    %6099 = vmatpush1.xpose.msra.mxu0 0.0
    %6100 = vmatprep.subr.mxu0 0.0
    %6101 = vmatpush1.xpose.msra.mxu0 0.0
    %6102 = vmatprep.subr.mxu0 0.0
    %6103 = vmatpush1.xpose.msra.mxu0 0.0
    %6104 = vmatprep.subr.mxu0 0.0
    %6105 = vmatpush1.xpose.msra.mxu0 0.0
    %6106 = vmatprep.subr.mxu0 0.0
    %6107 = vmatpush1.xpose.msra.mxu0 0.0
    %6108 = vmatprep.subr.mxu0 0.0
    %6109 = vmatpush1.xpose.msra.mxu0 0.0
    %6110 = vmatprep.subr.mxu0 0.0
    %6111 = vmatpush1.xpose.msra.mxu0 0.0
    %6112 = vmatprep.subr.mxu0 0.0
    %6113 = vmatpush1.xpose.msra.mxu0 0.0
    %6114 = vmatprep.subr.mxu0 0.0
    %6115 = vmatpush1.xpose.msra.mxu0 0.0
    %6116 = vmatprep.subr.mxu0 0.0
    %6117 = vmatpush1.xpose.msra.mxu0 0.0
    %6118 = vmatprep.subr.mxu0 0.0
    %6119 = vmatpush1.xpose.msra.mxu0 0.0
    %6120 = vmatprep.subr.mxu0 0.0
    %6121 = vmatpush1.xpose.msra.mxu0 0.0
    %6122 = vmatprep.subr.mxu0 0.0
    %6123 = vmatpush1.xpose.msra.mxu0 0.0
    %6124 = vmatprep.subr.mxu0 0.0
    %6125 = vmatpush1.xpose.msra.mxu0 0.0
    %6126 = vmatprep.subr.mxu0 0.0
    %6127 = vmatpush1.xpose.msra.mxu0 0.0
    %6128 = vmatprep.subr.mxu0 0.0
    %6129 = vmatpush1.xpose.msra.mxu0 0.0
    %6130 = vmatprep.subr.mxu0 0.0
    %6131 = vmatpush1.xpose.msra.mxu0 0.0
    %6132 = vmatprep.subr.mxu0 0.0
    %6133 = vmatpush1.xpose.msra.mxu0 0.0
    %6134 = vmatprep.mubr.f32.mxu0 0.0
    %6135 = vmatmul.mubr.f32.gmra.mrb[0].mxu0 %v6065
    %v6136 = vpop.f32.mrb[0].mxu0
    %v6137 = vadd.f32 0.0, %v6136
    %v6138 = vpop.f32.mrb[0].mxu0
    %6139 = vdwg.mxu0
    %v6140 = vsel %vm324, %v6061, -inf
    %6141 = vmax.xlane.f32.xlu0 %v6140
    %v6142 = vpop.xlane.xlu0 %6141
    %v6143 = vsel %vm324, %v6137, -inf
    %6144 = vmax.xlane.f32.xlu0 %v6143
    %v6145 = vpop.xlane.xlu0 %6144
    %v6146 = vsub.f32 %v6061, %v6142
    %v6147 = vsub.f32 %v6137, %v6145
    %v6148 = vmul.f32 %v6146, 1.442695
    %v6149 = vpow.pop %v6148
    %v6150 = vmul.f32 %v6147, 1.442695
    %v6151 = vpow.pop %v6150
    %v6152 = vsel %vm324, %v6149, 0.0
    %6153 = vadd.xlane.f32.xlu0 %v6152
    %v6154 = vpop.xlane.xlu0 %6153
    %v6155 = vsel %vm324, %v6151, 0.0
    %6156 = vadd.xlane.f32.xlu0 %v6155
    %v6157 = vpop.xlane.xlu0 %6156
    %v6158 = vrcp.pop %v6154
    %v6159 = vrcp.pop %v6157
    %v6160 = vmul.f32 %v6154, %v6158
    %v6161 = vmul.f32 %v6157, %v6159
    %v6162 = vsub.f32 2.0, %v6160
    %v6163 = vsub.f32 2.0, %v6161
    %v6164 = vmul.f32 %v6158, %v6162
    %v6165 = vmul.f32 %v6159, %v6163
    %v6166 = vmul.f32 %v6149, %v6164
    %v6167 = vmul.f32 %v6151, %v6165
    %v6169 = vsel %vm324, %v6166, 0
    %6171 = vmatprep.subr.mxu0 0.0
    %6172 = vmatpush1.msra.mxu0 %v5980
    %6173 = vmatprep.subr.mxu0 0.0
    %6174 = vmatpush1.msra.mxu0 0.0
    %6175 = vmatprep.subr.mxu0 0.0
    %6176 = vmatpush1.msra.mxu0 0.0
    %6177 = vmatprep.subr.mxu0 0.0
    %6178 = vmatpush1.msra.mxu0 0.0
    %6179 = vmatprep.subr.mxu0 0.0
    %6180 = vmatpush1.msra.mxu0 0.0
    %6181 = vmatprep.subr.mxu0 0.0
    %6182 = vmatpush1.msra.mxu0 0.0
    %6183 = vmatprep.subr.mxu0 0.0
    %6184 = vmatpush1.msra.mxu0 0.0
    %6185 = vmatprep.subr.mxu0 0.0
    %6186 = vmatpush1.msra.mxu0 0.0
    %6187 = vmatprep.subr.mxu0 0.0
    %6188 = vmatpush1.msra.mxu0 0.0
    %6189 = vmatprep.subr.mxu0 0.0
    %6190 = vmatpush1.msra.mxu0 0.0
    %6191 = vmatprep.subr.mxu0 0.0
    %6192 = vmatpush1.msra.mxu0 0.0
    %6193 = vmatprep.subr.mxu0 0.0
    %6194 = vmatpush1.msra.mxu0 0.0
    %6195 = vmatprep.subr.mxu0 0.0
    %6196 = vmatpush1.msra.mxu0 0.0
    %6197 = vmatprep.subr.mxu0 0.0
    %6198 = vmatpush1.msra.mxu0 0.0
    %6199 = vmatprep.subr.mxu0 0.0
    %6200 = vmatpush1.msra.mxu0 0.0
    %6201 = vmatprep.subr.mxu0 0.0
    %6202 = vmatpush1.msra.mxu0 0.0
    %6203 = vmatprep.subr.mxu0 0.0
    %6204 = vmatpush1.msra.mxu0 0.0
    %6205 = vmatprep.subr.mxu0 0.0
    %6206 = vmatpush1.msra.mxu0 0.0
    %6207 = vmatprep.subr.mxu0 0.0
    %6208 = vmatpush1.msra.mxu0 0.0
    %6209 = vmatprep.subr.mxu0 0.0
    %6210 = vmatpush1.msra.mxu0 0.0
    %6211 = vmatprep.subr.mxu0 0.0
    %6212 = vmatpush1.msra.mxu0 0.0
    %6213 = vmatprep.subr.mxu0 0.0
    %6214 = vmatpush1.msra.mxu0 0.0
    %6215 = vmatprep.subr.mxu0 0.0
    %6216 = vmatpush1.msra.mxu0 0.0
    %6217 = vmatprep.subr.mxu0 0.0
    %6218 = vmatpush1.msra.mxu0 0.0
    %6219 = vmatprep.subr.mxu0 0.0
    %6220 = vmatpush1.msra.mxu0 0.0
    %6221 = vmatprep.subr.mxu0 0.0
    %6222 = vmatpush1.msra.mxu0 0.0
    %6223 = vmatprep.subr.mxu0 0.0
    %6224 = vmatpush1.msra.mxu0 0.0
    %6225 = vmatprep.subr.mxu0 0.0
    %6226 = vmatpush1.msra.mxu0 0.0
    %6227 = vmatprep.subr.mxu0 0.0
    %6228 = vmatpush1.msra.mxu0 0.0
    %6229 = vmatprep.subr.mxu0 0.0
    %6230 = vmatpush1.msra.mxu0 0.0
    %6231 = vmatprep.subr.mxu0 0.0
    %6232 = vmatpush1.msra.mxu0 0.0
    %6233 = vmatprep.subr.mxu0 0.0
    %6234 = vmatpush1.msra.mxu0 0.0
    %6235 = vmatprep.mubr.f32.mxu0 0.0
    %6236 = vmatmul.mubr.f32.gmra.mrb[0].mxu0 %v6169
    %v6237 = vpop.f32.mrb[0].mxu0
    %v6238 = vadd.f32 0.0, %v6237
    %v6239 = vpop.f32.mrb[0].mxu0
    %6240 = vdwg.mxu0
    %v6242 = vsel %vm324, %v6167, 0
    %6244 = vmatprep.subr.mxu0 0.0
    %6245 = vmatpush1.msra.mxu0 %v5985
    %6246 = vmatprep.subr.mxu0 0.0
    %6247 = vmatpush1.msra.mxu0 0.0
    %6248 = vmatprep.subr.mxu0 0.0
    %6249 = vmatpush1.msra.mxu0 0.0
    %6250 = vmatprep.subr.mxu0 0.0
    %6251 = vmatpush1.msra.mxu0 0.0
    %6252 = vmatprep.subr.mxu0 0.0
    %6253 = vmatpush1.msra.mxu0 0.0
    %6254 = vmatprep.subr.mxu0 0.0
    %6255 = vmatpush1.msra.mxu0 0.0
    %6256 = vmatprep.subr.mxu0 0.0
    %6257 = vmatpush1.msra.mxu0 0.0
    %6258 = vmatprep.subr.mxu0 0.0
    %6259 = vmatpush1.msra.mxu0 0.0
    %6260 = vmatprep.subr.mxu0 0.0
    %6261 = vmatpush1.msra.mxu0 0.0
    %6262 = vmatprep.subr.mxu0 0.0
    %6263 = vmatpush1.msra.mxu0 0.0
    %6264 = vmatprep.subr.mxu0 0.0
    %6265 = vmatpush1.msra.mxu0 0.0
    %6266 = vmatprep.subr.mxu0 0.0
    %6267 = vmatpush1.msra.mxu0 0.0
    %6268 = vmatprep.subr.mxu0 0.0
    %6269 = vmatpush1.msra.mxu0 0.0
    %6270 = vmatprep.subr.mxu0 0.0
    %6271 = vmatpush1.msra.mxu0 0.0
    %6272 = vmatprep.subr.mxu0 0.0
    %6273 = vmatpush1.msra.mxu0 0.0
    %6274 = vmatprep.subr.mxu0 0.0
    %6275 = vmatpush1.msra.mxu0 0.0
    %6276 = vmatprep.subr.mxu0 0.0
    %6277 = vmatpush1.msra.mxu0 0.0
    %6278 = vmatprep.subr.mxu0 0.0
    %6279 = vmatpush1.msra.mxu0 0.0
    %6280 = vmatprep.subr.mxu0 0.0
    %6281 = vmatpush1.msra.mxu0 0.0
    %6282 = vmatprep.subr.mxu0 0.0
    %6283 = vmatpush1.msra.mxu0 0.0
    %6284 = vmatprep.subr.mxu0 0.0
    %6285 = vmatpush1.msra.mxu0 0.0
    %6286 = vmatprep.subr.mxu0 0.0
    %6287 = vmatpush1.msra.mxu0 0.0
    %6288 = vmatprep.subr.mxu0 0.0
    %6289 = vmatpush1.msra.mxu0 0.0
    %6290 = vmatprep.subr.mxu0 0.0
    %6291 = vmatpush1.msra.mxu0 0.0
    %6292 = vmatprep.subr.mxu0 0.0
    %6293 = vmatpush1.msra.mxu0 0.0
    %6294 = vmatprep.subr.mxu0 0.0
    %6295 = vmatpush1.msra.mxu0 0.0
    %6296 = vmatprep.subr.mxu0 0.0
    %6297 = vmatpush1.msra.mxu0 0.0
    %6298 = vmatprep.subr.mxu0 0.0
    %6299 = vmatpush1.msra.mxu0 0.0
    %6300 = vmatprep.subr.mxu0 0.0
    %6301 = vmatpush1.msra.mxu0 0.0
    %6302 = vmatprep.subr.mxu0 0.0
    %6303 = vmatpush1.msra.mxu0 0.0
    %6304 = vmatprep.subr.mxu0 0.0
    %6305 = vmatpush1.msra.mxu0 0.0
    %6306 = vmatprep.subr.mxu0 0.0
    %6307 = vmatpush1.msra.mxu0 0.0
    %6308 = vmatprep.mubr.f32.mxu0 0.0
    %6309 = vmatmul.mubr.f32.gmra.mrb[0].mxu0 %v6242
    %v6310 = vpop.f32.mrb[0].mxu0
    %v6311 = vadd.f32 0.0, %v6310
    %v6312 = vpop.f32.mrb[0].mxu0
    %6313 = vdwg.mxu0
    %s6314 = scalar_lea.vmem %s7, 56
    %v6315 = vld [vmem:[%s6314] sm:$0xff]
    %v6317 = vsel %vm324, %v6238, 0
    %v6320 = vsel %vm324, %v6311, 0
    %6322 = vmatprep.subr.mxu0 0.0
    %6323 = vmatpush1.msra.mxu0 %v6315
    %6324 = vmatprep.subr.mxu0 0.0
    %6325 = vmatpush1.msra.mxu0 0.0
    %6326 = vmatprep.subr.mxu0 0.0
    %6327 = vmatpush1.msra.mxu0 0.0
    %6328 = vmatprep.subr.mxu0 0.0
    %6329 = vmatpush1.msra.mxu0 0.0
    %6330 = vmatprep.subr.mxu0 0.0
    %6331 = vmatpush1.msra.mxu0 0.0
    %6332 = vmatprep.subr.mxu0 0.0
    %6333 = vmatpush1.msra.mxu0 0.0
    %6334 = vmatprep.subr.mxu0 0.0
    %6335 = vmatpush1.msra.mxu0 0.0
    %6336 = vmatprep.subr.mxu0 0.0
    %6337 = vmatpush1.msra.mxu0 0.0
    %6338 = vmatprep.subr.mxu0 0.0
    %6339 = vmatpush1.msra.mxu0 0.0
    %6340 = vmatprep.subr.mxu0 0.0
    %6341 = vmatpush1.msra.mxu0 0.0
    %6342 = vmatprep.subr.mxu0 0.0
    %6343 = vmatpush1.msra.mxu0 0.0
    %6344 = vmatprep.subr.mxu0 0.0
    %6345 = vmatpush1.msra.mxu0 0.0
    %6346 = vmatprep.subr.mxu0 0.0
    %6347 = vmatpush1.msra.mxu0 0.0
    %6348 = vmatprep.subr.mxu0 0.0
    %6349 = vmatpush1.msra.mxu0 0.0
    %6350 = vmatprep.subr.mxu0 0.0
    %6351 = vmatpush1.msra.mxu0 0.0
    %6352 = vmatprep.subr.mxu0 0.0
    %6353 = vmatpush1.msra.mxu0 0.0
    %6354 = vmatprep.subr.mxu0 0.0
    %6355 = vmatpush1.msra.mxu0 0.0
    %6356 = vmatprep.subr.mxu0 0.0
    %6357 = vmatpush1.msra.mxu0 0.0
    %6358 = vmatprep.subr.mxu0 0.0
    %6359 = vmatpush1.msra.mxu0 0.0
    %6360 = vmatprep.subr.mxu0 0.0
    %6361 = vmatpush1.msra.mxu0 0.0
    %6362 = vmatprep.subr.mxu0 0.0
    %6363 = vmatpush1.msra.mxu0 0.0
    %6364 = vmatprep.subr.mxu0 0.0
    %6365 = vmatpush1.msra.mxu0 0.0
    %6366 = vmatprep.subr.mxu0 0.0
    %6367 = vmatpush1.msra.mxu0 0.0
    %6368 = vmatprep.subr.mxu0 0.0
    %6369 = vmatpush1.msra.mxu0 0.0
    %6370 = vmatprep.subr.mxu0 0.0
    %6371 = vmatpush1.msra.mxu0 0.0
    %6372 = vmatprep.subr.mxu0 0.0
    %6373 = vmatpush1.msra.mxu0 0.0
    %6374 = vmatprep.subr.mxu0 0.0
    %6375 = vmatpush1.msra.mxu0 0.0
    %6376 = vmatprep.subr.mxu0 0.0
    %6377 = vmatpush1.msra.mxu0 0.0
    %6378 = vmatprep.subr.mxu0 0.0
    %6379 = vmatpush1.msra.mxu0 0.0
    %6380 = vmatprep.subr.mxu0 0.0
    %6381 = vmatpush1.msra.mxu0 0.0
    %6382 = vmatprep.subr.mxu0 0.0
    %6383 = vmatpush1.msra.mxu0 0.0
    %6384 = vmatprep.subr.mxu0 0.0
    %6385 = vmatpush1.msra.mxu0 0.0
    %6386 = vmatprep.mubr.f32.mxu0 0.0
    %6387 = vmatmul.mubr.f32.gmra.mrb[0].mxu0 %v6317
    %v6388 = vpop.f32.mrb[0].mxu0
    %v6389 = vadd.f32 0.0, %v6388
    %v6390 = vpop.f32.mrb[0].mxu0
    %6391 = vmatprep.mubr.f32.mxu0 0.0
    %6392 = vmatmul.mubr.f32.gmra.mrb[0].mxu0 %v6320
    %v6393 = vpop.f32.mrb[0].mxu0
    %v6394 = vadd.f32 0.0, %v6393
    %v6395 = vpop.f32.mrb[0].mxu0
    %6396 = vdwg.mxu0
    %v6397 = vadd.f32 %v5722, %v6389
    %v6398 = vadd.f32 %v5723, %v6394
    %s6399 = scalar_lea.vmem %s8, 1
    %v6400 = vld [vmem:[%s6399] sm:$0x1]
    %v6402 = vlaneseq
    %v6403 = vshrl.u32 %v6402, 7
    %v6404 = vsub.s32 0, %v6403
    %v6405 = vrot.slane %v6400, %v6404
    %v6407 = vadd.f32 %v6397, %v6405
    %v6408 = vadd.f32 %v6398, %v6405
    %v6409 = vadd.f32 %v3695, %v6407
    %v6410 = vadd.f32 %v3696, %v6408
    %s6411 = scalar_lea.vmem %s9, 1
    %v6412 = vld [vmem:[%s6411] sm:$0x1]
    %s6413 = scalar_lea.vmem %s10, 1
    %v6414 = vld [vmem:[%s6413] sm:$0x1]
    %v6415 = vsel %vm70, %v6409, 0.0
    %6416 = vadd.xlane.f32.xlu0 %v6415
    %v6417 = vpop.xlane.xlu0 %6416
    %v6418 = vsel %vm70, %v6410, 0.0
    %6419 = vadd.xlane.f32.xlu0 %v6418
    %v6420 = vpop.xlane.xlu0 %6419
    %v6421 = vmul.f32 %v6417, %v2775
    %v6422 = vmul.f32 %v6420, %v2775
    %v6423 = vsub.f32 %v6409, %v6421
    %v6424 = vsub.f32 %v6410, %v6422
    %v6425 = vmul.f32 %v6423, %v6423
    %v6426 = vmul.f32 %v6424, %v6424
    %v6427 = vsel %vm70, %v6425, 0.0
    %6428 = vadd.xlane.f32.xlu0 %v6427
    %v6429 = vpop.xlane.xlu0 %6428
    %v6430 = vsel %vm70, %v6426, 0.0
    %6431 = vadd.xlane.f32.xlu0 %v6430
    %v6432 = vpop.xlane.xlu0 %6431
    %v6433 = vmul.f32 %v6429, %v2775
    %v6434 = vmul.f32 %v6432, %v2775
    %v6435 = vadd.f32 %v6433, 1e-05
    %v6436 = vadd.f32 %v6434, 1e-05
    %v6437 = vrsqrt.pop %v6435
    %v6438 = vrsqrt.pop %v6436
    %v6439 = vmul.f32 %v6423, %v6437
    %v6440 = vmul.f32 %v6424, %v6438
    %v6442 = vlaneseq
    %v6443 = vshrl.u32 %v6442, 7
    %v6444 = vsub.s32 0, %v6443
    %v6445 = vrot.slane %v6412, %v6444
    %v6447 = vmul.f32 %v6439, %v6445
    %v6448 = vmul.f32 %v6440, %v6445
    %v6450 = vlaneseq
    %v6451 = vshrl.u32 %v6450, 7
    %v6452 = vsub.s32 0, %v6451
    %v6453 = vrot.slane %v6414, %v6452
    %v6455 = vadd.f32 %v6447, %v6453
    %v6456 = vadd.f32 %v6448, %v6453
    %s6457 = scalar_lea.vmem %s13, 256
    %v6458 = vld [vmem:[%s6457] sm:$0xff]
    %v6459 = vld [vmem:[%s6457 + $0x8] sm:$0xff]
    %v6460 = vld [vmem:[%s6457 + $0x10] sm:$0xff]
    %v6461 = vld [vmem:[%s6457 + $0x18] sm:$0xff]
    %v6462 = vld [vmem:[%s6457 + $0x20] sm:$0xff]
    %v6463 = vld [vmem:[%s6457 + $0x28] sm:$0xff]
    %v6464 = vld [vmem:[%s6457 + $0x30] sm:$0xff]
    %v6465 = vld [vmem:[%s6457 + $0x38] sm:$0xff]
    %v6466 = vld [vmem:[%s6457 + $0x40] sm:$0xff]
    %v6467 = vld [vmem:[%s6457 + $0x48] sm:$0xff]
    %v6468 = vld [vmem:[%s6457 + $0x50] sm:$0xff]
    %v6469 = vld [vmem:[%s6457 + $0x58] sm:$0xff]
    %v6470 = vld [vmem:[%s6457 + $0x60] sm:$0xff]
    %v6471 = vld [vmem:[%s6457 + $0x68] sm:$0xff]
    %v6472 = vld [vmem:[%s6457 + $0x70] sm:$0xff]
    %v6473 = vld [vmem:[%s6457 + $0x78] sm:$0xff]
    %v6474 = vld [vmem:[%s6457 + $0x80] sm:$0xff]
    %v6475 = vld [vmem:[%s6457 + $0x88] sm:$0xff]
    %v6476 = vld [vmem:[%s6457 + $0x90] sm:$0xff]
    %v6477 = vld [vmem:[%s6457 + $0x98] sm:$0xff]
    %v6478 = vld [vmem:[%s6457 + $0xa0] sm:$0xff]
    %v6479 = vld [vmem:[%s6457 + $0xa8] sm:$0xff]
    %v6480 = vld [vmem:[%s6457 + $0xb0] sm:$0xff]
    %v6481 = vld [vmem:[%s6457 + $0xb8] sm:$0xff]
    %v6482 = vld [vmem:[%s6457 + $0xc0] sm:$0xff]
    %v6483 = vld [vmem:[%s6457 + $0xc8] sm:$0xff]
    %v6484 = vld [vmem:[%s6457 + $0xd0] sm:$0xff]
    %v6485 = vld [vmem:[%s6457 + $0xd8] sm:$0xff]
    %v6486 = vld [vmem:[%s6457 + $0xe0] sm:$0xff]
    %v6487 = vld [vmem:[%s6457 + $0xe8] sm:$0xff]
    %v6488 = vld [vmem:[%s6457 + $0xf0] sm:$0xff]
    %v6489 = vld [vmem:[%s6457 + $0xf8] sm:$0xff]
    %s6490 = scalar_lea.vmem %s14, 8
    %v6491 = vld [vmem:[%s6490] sm:$0xff]
    %v6493 = vlaneseq
    %v6494 = vshrl.u32 %v6493, 7
    %v6495 = vsub.s32 0, %v6494
    %v6496 = vrot.slane %v6491, %v6495
    %v6497 = vlaneseq
    %v6498 = vshrl.u32 %v6497, 7
    %v6499 = vsub.s32 1, %v6498
    %v6500 = vrot.slane %v6491, %v6499
    %v6501 = vlaneseq
    %v6502 = vshrl.u32 %v6501, 7
    %v6503 = vsub.s32 2, %v6502
    %v6504 = vrot.slane %v6491, %v6503
    %v6505 = vlaneseq
    %v6506 = vshrl.u32 %v6505, 7
    %v6507 = vsub.s32 3, %v6506
    %v6508 = vrot.slane %v6491, %v6507
    %v6509 = vlaneseq
    %v6510 = vshrl.u32 %v6509, 7
    %v6511 = vsub.s32 4, %v6510
    %v6512 = vrot.slane %v6491, %v6511
    %v6513 = vlaneseq
    %v6514 = vshrl.u32 %v6513, 7
    %v6515 = vsub.s32 5, %v6514
    %v6516 = vrot.slane %v6491, %v6515
    %v6517 = vlaneseq
    %v6518 = vshrl.u32 %v6517, 7
    %v6519 = vsub.s32 6, %v6518
    %v6520 = vrot.slane %v6491, %v6519
    %v6521 = vlaneseq
    %v6522 = vshrl.u32 %v6521, 7
    %v6523 = vsub.s32 7, %v6522
    %v6524 = vrot.slane %v6491, %v6523
    %v6534 = vsel %vm70, %v6455, 0
    %v6537 = vsel %vm70, %v6456, 0
    %6539 = vmatprep.subr.mxu0 %v6459
    %6540 = vmatpush1.msra.mxu0 %v6458
    %6541 = vmatprep.subr.mxu0 %v6467
    %6542 = vmatpush1.msra.mxu0 %v6466
    %6543 = vmatprep.subr.mxu0 %v6475
    %6544 = vmatpush1.msra.mxu0 %v6474
    %6545 = vmatprep.subr.mxu0 %v6483
    %6546 = vmatpush1.msra.mxu0 %v6482
    %6547 = vmatprep.subr.mxu0 0.0
    %6548 = vmatpush1.msra.mxu0 0.0
    %6549 = vmatprep.subr.mxu0 0.0
    %6550 = vmatpush1.msra.mxu0 0.0
    %6551 = vmatprep.subr.mxu0 0.0
    %6552 = vmatpush1.msra.mxu0 0.0
    %6553 = vmatprep.subr.mxu0 0.0
    %6554 = vmatpush1.msra.mxu0 0.0
    %6555 = vmatprep.subr.mxu0 0.0
    %6556 = vmatpush1.msra.mxu0 0.0
    %6557 = vmatprep.subr.mxu0 0.0
    %6558 = vmatpush1.msra.mxu0 0.0
    %6559 = vmatprep.subr.mxu0 0.0
    %6560 = vmatpush1.msra.mxu0 0.0
    %6561 = vmatprep.subr.mxu0 0.0
    %6562 = vmatpush1.msra.mxu0 0.0
    %6563 = vmatprep.subr.mxu0 0.0
    %6564 = vmatpush1.msra.mxu0 0.0
    %6565 = vmatprep.subr.mxu0 0.0
    %6566 = vmatpush1.msra.mxu0 0.0
    %6567 = vmatprep.subr.mxu0 0.0
    %6568 = vmatpush1.msra.mxu0 0.0
    %6569 = vmatprep.subr.mxu0 0.0
    %6570 = vmatpush1.msra.mxu0 0.0
    %6571 = vmatprep.subr.mxu0 0.0
    %6572 = vmatpush1.msra.mxu0 0.0
    %6573 = vmatprep.subr.mxu0 0.0
    %6574 = vmatpush1.msra.mxu0 0.0
    %6575 = vmatprep.subr.mxu0 0.0
    %6576 = vmatpush1.msra.mxu0 0.0
    %6577 = vmatprep.subr.mxu0 0.0
    %6578 = vmatpush1.msra.mxu0 0.0
    %6579 = vmatprep.subr.mxu0 0.0
    %6580 = vmatpush1.msra.mxu0 0.0
    %6581 = vmatprep.subr.mxu0 0.0
    %6582 = vmatpush1.msra.mxu0 0.0
    %6583 = vmatprep.subr.mxu0 0.0
    %6584 = vmatpush1.msra.mxu0 0.0
    %6585 = vmatprep.subr.mxu0 0.0
    %6586 = vmatpush1.msra.mxu0 0.0
    %6587 = vmatprep.subr.mxu0 0.0
    %6588 = vmatpush1.msra.mxu0 0.0
    %6589 = vmatprep.subr.mxu0 0.0
    %6590 = vmatpush1.msra.mxu0 0.0
    %6591 = vmatprep.subr.mxu0 0.0
    %6592 = vmatpush1.msra.mxu0 0.0
    %6593 = vmatprep.subr.mxu0 0.0
    %6594 = vmatpush1.msra.mxu0 0.0
    %6595 = vmatprep.subr.mxu0 0.0
    %6596 = vmatpush1.msra.mxu0 0.0
    %6597 = vmatprep.subr.mxu0 0.0
    %6598 = vmatpush1.msra.mxu0 0.0
    %6599 = vmatprep.subr.mxu0 0.0
    %6600 = vmatpush1.msra.mxu0 0.0
    %6601 = vmatprep.subr.mxu0 0.0
    %6602 = vmatpush1.msra.mxu0 0.0
    %6603 = vmatprep.mubr.f32.mxu0 0.0
    %6604 = vmatmul.mubr.f32.gmra.mrb[0].mxu0 %v6534
    %v6605 = vpop.f32.mrb[0].mxu0
    %v6606 = vadd.f32 %v6496, %v6605
    %v6607 = vpop.f32.mrb[0].mxu0
    %v6608 = vadd.f32 %v6500, %v6607
    %6609 = vmatprep.mubr.f32.mxu0 0.0
    %6610 = vmatmul.mubr.f32.gmra.mrb[0].mxu0 %v6537
    %v6611 = vpop.f32.mrb[0].mxu0
    %v6612 = vadd.f32 %v6496, %v6611
    %v6613 = vpop.f32.mrb[0].mxu0
    %v6614 = vadd.f32 %v6500, %v6613
    %6615 = vdwg.mxu0
    %6616 = vmatprep.subr.mxu0 %v6461
    %6617 = vmatpush1.msra.mxu0 %v6460
    %6618 = vmatprep.subr.mxu0 %v6469
    %6619 = vmatpush1.msra.mxu0 %v6468
    %6620 = vmatprep.subr.mxu0 %v6477
    %6621 = vmatpush1.msra.mxu0 %v6476
    %6622 = vmatprep.subr.mxu0 %v6485
    %6623 = vmatpush1.msra.mxu0 %v6484
    %6624 = vmatprep.subr.mxu0 0.0
    %6625 = vmatpush1.msra.mxu0 0.0
    %6626 = vmatprep.subr.mxu0 0.0
    %6627 = vmatpush1.msra.mxu0 0.0
    %6628 = vmatprep.subr.mxu0 0.0
    %6629 = vmatpush1.msra.mxu0 0.0
    %6630 = vmatprep.subr.mxu0 0.0
    %6631 = vmatpush1.msra.mxu0 0.0
    %6632 = vmatprep.subr.mxu0 0.0
    %6633 = vmatpush1.msra.mxu0 0.0
    %6634 = vmatprep.subr.mxu0 0.0
    %6635 = vmatpush1.msra.mxu0 0.0
    %6636 = vmatprep.subr.mxu0 0.0
    %6637 = vmatpush1.msra.mxu0 0.0
    %6638 = vmatprep.subr.mxu0 0.0
    %6639 = vmatpush1.msra.mxu0 0.0
    %6640 = vmatprep.subr.mxu0 0.0
    %6641 = vmatpush1.msra.mxu0 0.0
    %6642 = vmatprep.subr.mxu0 0.0
    %6643 = vmatpush1.msra.mxu0 0.0
    %6644 = vmatprep.subr.mxu0 0.0
    %6645 = vmatpush1.msra.mxu0 0.0
    %6646 = vmatprep.subr.mxu0 0.0
    %6647 = vmatpush1.msra.mxu0 0.0
    %6648 = vmatprep.subr.mxu0 0.0
    %6649 = vmatpush1.msra.mxu0 0.0
    %6650 = vmatprep.subr.mxu0 0.0
    %6651 = vmatpush1.msra.mxu0 0.0
    %6652 = vmatprep.subr.mxu0 0.0
    %6653 = vmatpush1.msra.mxu0 0.0
    %6654 = vmatprep.subr.mxu0 0.0
    %6655 = vmatpush1.msra.mxu0 0.0
    %6656 = vmatprep.subr.mxu0 0.0
    %6657 = vmatpush1.msra.mxu0 0.0
    %6658 = vmatprep.subr.mxu0 0.0
    %6659 = vmatpush1.msra.mxu0 0.0
    %6660 = vmatprep.subr.mxu0 0.0
    %6661 = vmatpush1.msra.mxu0 0.0
    %6662 = vmatprep.subr.mxu0 0.0
    %6663 = vmatpush1.msra.mxu0 0.0
    %6664 = vmatprep.subr.mxu0 0.0
    %6665 = vmatpush1.msra.mxu0 0.0
    %6666 = vmatprep.subr.mxu0 0.0
    %6667 = vmatpush1.msra.mxu0 0.0
    %6668 = vmatprep.subr.mxu0 0.0
    %6669 = vmatpush1.msra.mxu0 0.0
    %6670 = vmatprep.subr.mxu0 0.0
    %6671 = vmatpush1.msra.mxu0 0.0
    %6672 = vmatprep.subr.mxu0 0.0
    %6673 = vmatpush1.msra.mxu0 0.0
    %6674 = vmatprep.subr.mxu0 0.0
    %6675 = vmatpush1.msra.mxu0 0.0
    %6676 = vmatprep.subr.mxu0 0.0
    %6677 = vmatpush1.msra.mxu0 0.0
    %6678 = vmatprep.subr.mxu0 0.0
    %6679 = vmatpush1.msra.mxu0 0.0
    %6680 = vmatprep.mubr.f32.mxu0 0.0
    %6681 = vmatmul.mubr.f32.gmra.mrb[0].mxu0 %v6534
    %v6682 = vpop.f32.mrb[0].mxu0
    %v6683 = vadd.f32 %v6504, %v6682
    %v6684 = vpop.f32.mrb[0].mxu0
    %v6685 = vadd.f32 %v6508, %v6684
    %6686 = vmatprep.mubr.f32.mxu0 0.0
    %6687 = vmatmul.mubr.f32.gmra.mrb[0].mxu0 %v6537
    %v6688 = vpop.f32.mrb[0].mxu0
    %v6689 = vadd.f32 %v6504, %v6688
    %v6690 = vpop.f32.mrb[0].mxu0
    %v6691 = vadd.f32 %v6508, %v6690
    %6692 = vdwg.mxu0
    %6693 = vmatprep.subr.mxu0 %v6463
    %6694 = vmatpush1.msra.mxu0 %v6462
    %6695 = vmatprep.subr.mxu0 %v6471
    %6696 = vmatpush1.msra.mxu0 %v6470
    %6697 = vmatprep.subr.mxu0 %v6479
    %6698 = vmatpush1.msra.mxu0 %v6478
    %6699 = vmatprep.subr.mxu0 %v6487
    %6700 = vmatpush1.msra.mxu0 %v6486
    %6701 = vmatprep.subr.mxu0 0.0
    %6702 = vmatpush1.msra.mxu0 0.0
    %6703 = vmatprep.subr.mxu0 0.0
    %6704 = vmatpush1.msra.mxu0 0.0
    %6705 = vmatprep.subr.mxu0 0.0
    %6706 = vmatpush1.msra.mxu0 0.0
    %6707 = vmatprep.subr.mxu0 0.0
    %6708 = vmatpush1.msra.mxu0 0.0
    %6709 = vmatprep.subr.mxu0 0.0
    %6710 = vmatpush1.msra.mxu0 0.0
    %6711 = vmatprep.subr.mxu0 0.0
    %6712 = vmatpush1.msra.mxu0 0.0
    %6713 = vmatprep.subr.mxu0 0.0
    %6714 = vmatpush1.msra.mxu0 0.0
    %6715 = vmatprep.subr.mxu0 0.0
    %6716 = vmatpush1.msra.mxu0 0.0
    %6717 = vmatprep.subr.mxu0 0.0
    %6718 = vmatpush1.msra.mxu0 0.0
    %6719 = vmatprep.subr.mxu0 0.0
    %6720 = vmatpush1.msra.mxu0 0.0
    %6721 = vmatprep.subr.mxu0 0.0
    %6722 = vmatpush1.msra.mxu0 0.0
    %6723 = vmatprep.subr.mxu0 0.0
    %6724 = vmatpush1.msra.mxu0 0.0
    %6725 = vmatprep.subr.mxu0 0.0
    %6726 = vmatpush1.msra.mxu0 0.0
    %6727 = vmatprep.subr.mxu0 0.0
    %6728 = vmatpush1.msra.mxu0 0.0
    %6729 = vmatprep.subr.mxu0 0.0
    %6730 = vmatpush1.msra.mxu0 0.0
    %6731 = vmatprep.subr.mxu0 0.0
    %6732 = vmatpush1.msra.mxu0 0.0
    %6733 = vmatprep.subr.mxu0 0.0
    %6734 = vmatpush1.msra.mxu0 0.0
    %6735 = vmatprep.subr.mxu0 0.0
    %6736 = vmatpush1.msra.mxu0 0.0
    %6737 = vmatprep.subr.mxu0 0.0
    %6738 = vmatpush1.msra.mxu0 0.0
    %6739 = vmatprep.subr.mxu0 0.0
    %6740 = vmatpush1.msra.mxu0 0.0
    %6741 = vmatprep.subr.mxu0 0.0
    %6742 = vmatpush1.msra.mxu0 0.0
    %6743 = vmatprep.subr.mxu0 0.0
    %6744 = vmatpush1.msra.mxu0 0.0
    %6745 = vmatprep.subr.mxu0 0.0
    %6746 = vmatpush1.msra.mxu0 0.0
    %6747 = vmatprep.subr.mxu0 0.0
    %6748 = vmatpush1.msra.mxu0 0.0
    %6749 = vmatprep.subr.mxu0 0.0
    %6750 = vmatpush1.msra.mxu0 0.0
    %6751 = vmatprep.subr.mxu0 0.0
    %6752 = vmatpush1.msra.mxu0 0.0
    %6753 = vmatprep.subr.mxu0 0.0
    %6754 = vmatpush1.msra.mxu0 0.0
    %6755 = vmatprep.subr.mxu0 0.0
    %6756 = vmatpush1.msra.mxu0 0.0
    %6757 = vmatprep.mubr.f32.mxu0 0.0
    %6758 = vmatmul.mubr.f32.gmra.mrb[0].mxu0 %v6534
    %v6759 = vpop.f32.mrb[0].mxu0
    %v6760 = vadd.f32 %v6512, %v6759
    %v6761 = vpop.f32.mrb[0].mxu0
    %v6762 = vadd.f32 %v6516, %v6761
    %6763 = vmatprep.mubr.f32.mxu0 0.0
    %6764 = vmatmul.mubr.f32.gmra.mrb[0].mxu0 %v6537
    %v6765 = vpop.f32.mrb[0].mxu0
    %v6766 = vadd.f32 %v6512, %v6765
    %v6767 = vpop.f32.mrb[0].mxu0
    %v6768 = vadd.f32 %v6516, %v6767
    %6769 = vdwg.mxu0
    %6770 = vmatprep.subr.mxu0 %v6465
    %6771 = vmatpush1.msra.mxu0 %v6464
    %6772 = vmatprep.subr.mxu0 %v6473
    %6773 = vmatpush1.msra.mxu0 %v6472
    %6774 = vmatprep.subr.mxu0 %v6481
    %6775 = vmatpush1.msra.mxu0 %v6480
    %6776 = vmatprep.subr.mxu0 %v6489
    %6777 = vmatpush1.msra.mxu0 %v6488
    %6778 = vmatprep.subr.mxu0 0.0
    %6779 = vmatpush1.msra.mxu0 0.0
    %6780 = vmatprep.subr.mxu0 0.0
    %6781 = vmatpush1.msra.mxu0 0.0
    %6782 = vmatprep.subr.mxu0 0.0
    %6783 = vmatpush1.msra.mxu0 0.0
    %6784 = vmatprep.subr.mxu0 0.0
    %6785 = vmatpush1.msra.mxu0 0.0
    %6786 = vmatprep.subr.mxu0 0.0
    %6787 = vmatpush1.msra.mxu0 0.0
    %6788 = vmatprep.subr.mxu0 0.0
    %6789 = vmatpush1.msra.mxu0 0.0
    %6790 = vmatprep.subr.mxu0 0.0
    %6791 = vmatpush1.msra.mxu0 0.0
    %6792 = vmatprep.subr.mxu0 0.0
    %6793 = vmatpush1.msra.mxu0 0.0
    %6794 = vmatprep.subr.mxu0 0.0
    %6795 = vmatpush1.msra.mxu0 0.0
    %6796 = vmatprep.subr.mxu0 0.0
    %6797 = vmatpush1.msra.mxu0 0.0
    %6798 = vmatprep.subr.mxu0 0.0
    %6799 = vmatpush1.msra.mxu0 0.0
    %6800 = vmatprep.subr.mxu0 0.0
    %6801 = vmatpush1.msra.mxu0 0.0
    %6802 = vmatprep.subr.mxu0 0.0
    %6803 = vmatpush1.msra.mxu0 0.0
    %6804 = vmatprep.subr.mxu0 0.0
    %6805 = vmatpush1.msra.mxu0 0.0
    %6806 = vmatprep.subr.mxu0 0.0
    %6807 = vmatpush1.msra.mxu0 0.0
    %6808 = vmatprep.subr.mxu0 0.0
    %6809 = vmatpush1.msra.mxu0 0.0
    %6810 = vmatprep.subr.mxu0 0.0
    %6811 = vmatpush1.msra.mxu0 0.0
    %6812 = vmatprep.subr.mxu0 0.0
    %6813 = vmatpush1.msra.mxu0 0.0
    %6814 = vmatprep.subr.mxu0 0.0
    %6815 = vmatpush1.msra.mxu0 0.0
    %6816 = vmatprep.subr.mxu0 0.0
    %6817 = vmatpush1.msra.mxu0 0.0
    %6818 = vmatprep.subr.mxu0 0.0
    %6819 = vmatpush1.msra.mxu0 0.0
    %6820 = vmatprep.subr.mxu0 0.0
    %6821 = vmatpush1.msra.mxu0 0.0
    %6822 = vmatprep.subr.mxu0 0.0
    %6823 = vmatpush1.msra.mxu0 0.0
    %6824 = vmatprep.subr.mxu0 0.0
    %6825 = vmatpush1.msra.mxu0 0.0
    %6826 = vmatprep.subr.mxu0 0.0
    %6827 = vmatpush1.msra.mxu0 0.0
    %6828 = vmatprep.subr.mxu0 0.0
    %6829 = vmatpush1.msra.mxu0 0.0
    %6830 = vmatprep.subr.mxu0 0.0
    %6831 = vmatpush1.msra.mxu0 0.0
    %6832 = vmatprep.subr.mxu0 0.0
    %6833 = vmatpush1.msra.mxu0 0.0
    %6834 = vmatprep.mubr.f32.mxu0 0.0
    %6835 = vmatmul.mubr.f32.gmra.mrb[0].mxu0 %v6534
    %v6836 = vpop.f32.mrb[0].mxu0
    %v6837 = vadd.f32 %v6520, %v6836
    %v6838 = vpop.f32.mrb[0].mxu0
    %v6839 = vadd.f32 %v6524, %v6838
    %6840 = vmatprep.mubr.f32.mxu0 0.0
    %6841 = vmatmul.mubr.f32.gmra.mrb[0].mxu0 %v6537
    %v6842 = vpop.f32.mrb[0].mxu0
    %v6843 = vadd.f32 %v6520, %v6842
    %v6844 = vpop.f32.mrb[0].mxu0
    %v6845 = vadd.f32 %v6524, %v6844
    %6846 = vdwg.mxu0
    %v6847 = vmax.f32 %v6606, 0.0
    %v6848 = vmax.f32 %v6608, 0.0
    %v6849 = vmax.f32 %v6683, 0.0
    %v6850 = vmax.f32 %v6685, 0.0
    %v6851 = vmax.f32 %v6760, 0.0
    %v6852 = vmax.f32 %v6762, 0.0
    %v6853 = vmax.f32 %v6837, 0.0
    %v6854 = vmax.f32 %v6839, 0.0
    %v6855 = vmax.f32 %v6612, 0.0
    %v6856 = vmax.f32 %v6614, 0.0
    %v6857 = vmax.f32 %v6689, 0.0
    %v6858 = vmax.f32 %v6691, 0.0
    %v6859 = vmax.f32 %v6766, 0.0
    %v6860 = vmax.f32 %v6768, 0.0
    %v6861 = vmax.f32 %v6843, 0.0
    %v6862 = vmax.f32 %v6845, 0.0
    %s6863 = scalar_lea.vmem %s15, 1024
    %v6864 = vld [vmem:[%s6863] sm:$0xff]
    %v6865 = vld [vmem:[%s6863 + $0x8] sm:$0xff]
    %v6866 = vld [vmem:[%s6863 + $0x10] sm:$0xff]
    %v6867 = vld [vmem:[%s6863 + $0x18] sm:$0xff]
    %v6868 = vld [vmem:[%s6863 + $0x20] sm:$0xff]
    %v6869 = vld [vmem:[%s6863 + $0x28] sm:$0xff]
    %v6870 = vld [vmem:[%s6863 + $0x30] sm:$0xff]
    %v6871 = vld [vmem:[%s6863 + $0x38] sm:$0xff]
    %v6872 = vld [vmem:[%s6863 + $0x40] sm:$0xff]
    %v6873 = vld [vmem:[%s6863 + $0x48] sm:$0xff]
    %v6874 = vld [vmem:[%s6863 + $0x50] sm:$0xff]
    %v6875 = vld [vmem:[%s6863 + $0x58] sm:$0xff]
    %v6876 = vld [vmem:[%s6863 + $0x60] sm:$0xff]
    %v6877 = vld [vmem:[%s6863 + $0x68] sm:$0xff]
    %v6878 = vld [vmem:[%s6863 + $0x70] sm:$0xff]
    %v6879 = vld [vmem:[%s6863 + $0x78] sm:$0xff]
    %v6880 = vld [vmem:[%s6863 + $0x80] sm:$0xff]
    %v6881 = vld [vmem:[%s6863 + $0x88] sm:$0xff]
    %v6882 = vld [vmem:[%s6863 + $0x90] sm:$0xff]
    %v6883 = vld [vmem:[%s6863 + $0x98] sm:$0xff]
    %v6884 = vld [vmem:[%s6863 + $0xa0] sm:$0xff]
    %v6885 = vld [vmem:[%s6863 + $0xa8] sm:$0xff]
    %v6886 = vld [vmem:[%s6863 + $0xb0] sm:$0xff]
    %v6887 = vld [vmem:[%s6863 + $0xb8] sm:$0xff]
    %v6888 = vld [vmem:[%s6863 + $0xc0] sm:$0xff]
    %v6889 = vld [vmem:[%s6863 + $0xc8] sm:$0xff]
    %v6890 = vld [vmem:[%s6863 + $0xd0] sm:$0xff]
    %v6891 = vld [vmem:[%s6863 + $0xd8] sm:$0xff]
    %v6892 = vld [vmem:[%s6863 + $0xe0] sm:$0xff]
    %v6893 = vld [vmem:[%s6863 + $0xe8] sm:$0xff]
    %v6894 = vld [vmem:[%s6863 + $0xf0] sm:$0xff]
    %v6895 = vld [vmem:[%s6863 + $0xf8] sm:$0xff]
    %v6896 = vld [vmem:[%s6863 + $0x100] sm:$0xff]
    %v6897 = vld [vmem:[%s6863 + $0x108] sm:$0xff]
    %v6898 = vld [vmem:[%s6863 + $0x110] sm:$0xff]
    %v6899 = vld [vmem:[%s6863 + $0x118] sm:$0xff]
    %v6900 = vld [vmem:[%s6863 + $0x120] sm:$0xff]
    %v6901 = vld [vmem:[%s6863 + $0x128] sm:$0xff]
    %v6902 = vld [vmem:[%s6863 + $0x130] sm:$0xff]
    %v6903 = vld [vmem:[%s6863 + $0x138] sm:$0xff]
    %v6904 = vld [vmem:[%s6863 + $0x140] sm:$0xff]
    %v6905 = vld [vmem:[%s6863 + $0x148] sm:$0xff]
    %v6906 = vld [vmem:[%s6863 + $0x150] sm:$0xff]
    %v6907 = vld [vmem:[%s6863 + $0x158] sm:$0xff]
    %v6908 = vld [vmem:[%s6863 + $0x160] sm:$0xff]
    %v6909 = vld [vmem:[%s6863 + $0x168] sm:$0xff]
    %v6910 = vld [vmem:[%s6863 + $0x170] sm:$0xff]
    %v6911 = vld [vmem:[%s6863 + $0x178] sm:$0xff]
    %v6912 = vld [vmem:[%s6863 + $0x180] sm:$0xff]
    %v6913 = vld [vmem:[%s6863 + $0x188] sm:$0xff]
    %v6914 = vld [vmem:[%s6863 + $0x190] sm:$0xff]
    %v6915 = vld [vmem:[%s6863 + $0x198] sm:$0xff]
    %v6916 = vld [vmem:[%s6863 + $0x1a0] sm:$0xff]
    %v6917 = vld [vmem:[%s6863 + $0x1a8] sm:$0xff]
    %v6918 = vld [vmem:[%s6863 + $0x1b0] sm:$0xff]
    %v6919 = vld [vmem:[%s6863 + $0x1b8] sm:$0xff]
    %v6920 = vld [vmem:[%s6863 + $0x1c0] sm:$0xff]
    %v6921 = vld [vmem:[%s6863 + $0x1c8] sm:$0xff]
    %v6922 = vld [vmem:[%s6863 + $0x1d0] sm:$0xff]
    %v6923 = vld [vmem:[%s6863 + $0x1d8] sm:$0xff]
    %v6924 = vld [vmem:[%s6863 + $0x1e0] sm:$0xff]
    %v6925 = vld [vmem:[%s6863 + $0x1e8] sm:$0xff]
    %v6926 = vld [vmem:[%s6863 + $0x1f0] sm:$0xff]
    %v6927 = vld [vmem:[%s6863 + $0x1f8] sm:$0xff]
    %v6928 = vld [vmem:[%s6863 + $0x200] sm:$0xff]
    %v6929 = vld [vmem:[%s6863 + $0x208] sm:$0xff]
    %v6930 = vld [vmem:[%s6863 + $0x210] sm:$0xff]
    %v6931 = vld [vmem:[%s6863 + $0x218] sm:$0xff]
    %v6932 = vld [vmem:[%s6863 + $0x220] sm:$0xff]
    %v6933 = vld [vmem:[%s6863 + $0x228] sm:$0xff]
    %v6934 = vld [vmem:[%s6863 + $0x230] sm:$0xff]
    %v6935 = vld [vmem:[%s6863 + $0x238] sm:$0xff]
    %v6936 = vld [vmem:[%s6863 + $0x240] sm:$0xff]
    %v6937 = vld [vmem:[%s6863 + $0x248] sm:$0xff]
    %v6938 = vld [vmem:[%s6863 + $0x250] sm:$0xff]
    %v6939 = vld [vmem:[%s6863 + $0x258] sm:$0xff]
    %v6940 = vld [vmem:[%s6863 + $0x260] sm:$0xff]
    %v6941 = vld [vmem:[%s6863 + $0x268] sm:$0xff]
    %v6942 = vld [vmem:[%s6863 + $0x270] sm:$0xff]
    %v6943 = vld [vmem:[%s6863 + $0x278] sm:$0xff]
    %v6944 = vld [vmem:[%s6863 + $0x280] sm:$0xff]
    %v6945 = vld [vmem:[%s6863 + $0x288] sm:$0xff]
    %v6946 = vld [vmem:[%s6863 + $0x290] sm:$0xff]
    %v6947 = vld [vmem:[%s6863 + $0x298] sm:$0xff]
    %v6948 = vld [vmem:[%s6863 + $0x2a0] sm:$0xff]
    %v6949 = vld [vmem:[%s6863 + $0x2a8] sm:$0xff]
    %v6950 = vld [vmem:[%s6863 + $0x2b0] sm:$0xff]
    %v6951 = vld [vmem:[%s6863 + $0x2b8] sm:$0xff]
    %v6952 = vld [vmem:[%s6863 + $0x2c0] sm:$0xff]
    %v6953 = vld [vmem:[%s6863 + $0x2c8] sm:$0xff]
    %v6954 = vld [vmem:[%s6863 + $0x2d0] sm:$0xff]
    %v6955 = vld [vmem:[%s6863 + $0x2d8] sm:$0xff]
    %v6956 = vld [vmem:[%s6863 + $0x2e0] sm:$0xff]
    %v6957 = vld [vmem:[%s6863 + $0x2e8] sm:$0xff]
    %v6958 = vld [vmem:[%s6863 + $0x2f0] sm:$0xff]
    %v6959 = vld [vmem:[%s6863 + $0x2f8] sm:$0xff]
    %v6960 = vld [vmem:[%s6863 + $0x300] sm:$0xff]
    %v6961 = vld [vmem:[%s6863 + $0x308] sm:$0xff]
    %v6962 = vld [vmem:[%s6863 + $0x310] sm:$0xff]
    %v6963 = vld [vmem:[%s6863 + $0x318] sm:$0xff]
    %v6964 = vld [vmem:[%s6863 + $0x320] sm:$0xff]
    %v6965 = vld [vmem:[%s6863 + $0x328] sm:$0xff]
    %v6966 = vld [vmem:[%s6863 + $0x330] sm:$0xff]
    %v6967 = vld [vmem:[%s6863 + $0x338] sm:$0xff]
    %v6968 = vld [vmem:[%s6863 + $0x340] sm:$0xff]
    %v6969 = vld [vmem:[%s6863 + $0x348] sm:$0xff]
    %v6970 = vld [vmem:[%s6863 + $0x350] sm:$0xff]
    %v6971 = vld [vmem:[%s6863 + $0x358] sm:$0xff]
    %v6972 = vld [vmem:[%s6863 + $0x360] sm:$0xff]
    %v6973 = vld [vmem:[%s6863 + $0x368] sm:$0xff]
    %v6974 = vld [vmem:[%s6863 + $0x370] sm:$0xff]
    %v6975 = vld [vmem:[%s6863 + $0x378] sm:$0xff]
    %v6976 = vld [vmem:[%s6863 + $0x380] sm:$0xff]
    %v6977 = vld [vmem:[%s6863 + $0x388] sm:$0xff]
    %v6978 = vld [vmem:[%s6863 + $0x390] sm:$0xff]
    %v6979 = vld [vmem:[%s6863 + $0x398] sm:$0xff]
    %v6980 = vld [vmem:[%s6863 + $0x3a0] sm:$0xff]
    %v6981 = vld [vmem:[%s6863 + $0x3a8] sm:$0xff]
    %v6982 = vld [vmem:[%s6863 + $0x3b0] sm:$0xff]
    %v6983 = vld [vmem:[%s6863 + $0x3b8] sm:$0xff]
    %v6984 = vld [vmem:[%s6863 + $0x3c0] sm:$0xff]
    %v6985 = vld [vmem:[%s6863 + $0x3c8] sm:$0xff]
    %v6986 = vld [vmem:[%s6863 + $0x3d0] sm:$0xff]
    %v6987 = vld [vmem:[%s6863 + $0x3d8] sm:$0xff]
    %v6988 = vld [vmem:[%s6863 + $0x3e0] sm:$0xff]
    %v6989 = vld [vmem:[%s6863 + $0x3e8] sm:$0xff]
    %v6990 = vld [vmem:[%s6863 + $0x3f0] sm:$0xff]
    %v6991 = vld [vmem:[%s6863 + $0x3f8] sm:$0xff]
    %s6992 = scalar_lea.vmem %s16, 1
    %v6993 = vld [vmem:[%s6992] sm:$0x1]
    %v6995 = vlaneseq
    %v6996 = vshrl.u32 %v6995, 7
    %v6997 = vsub.s32 0, %v6996
    %v6998 = vrot.slane %v6993, %v6997
    %7000 = vmatprep.subr.mxu0 0.0
    %7001 = vmatpush1.msra.mxu0 %v6864
    %7002 = vmatprep.subr.mxu0 0.0
    %7003 = vmatpush1.msra.mxu0 %v6865
    %7004 = vmatprep.subr.mxu0 0.0
    %7005 = vmatpush1.msra.mxu0 %v6866
    %7006 = vmatprep.subr.mxu0 0.0
    %7007 = vmatpush1.msra.mxu0 %v6867
    %7008 = vmatprep.subr.mxu0 0.0
    %7009 = vmatpush1.msra.mxu0 %v6868
    %7010 = vmatprep.subr.mxu0 0.0
    %7011 = vmatpush1.msra.mxu0 %v6869
    %7012 = vmatprep.subr.mxu0 0.0
    %7013 = vmatpush1.msra.mxu0 %v6870
    %7014 = vmatprep.subr.mxu0 0.0
    %7015 = vmatpush1.msra.mxu0 %v6871
    %7016 = vmatprep.subr.mxu0 0.0
    %7017 = vmatpush1.msra.mxu0 %v6872
    %7018 = vmatprep.subr.mxu0 0.0
    %7019 = vmatpush1.msra.mxu0 %v6873
    %7020 = vmatprep.subr.mxu0 0.0
    %7021 = vmatpush1.msra.mxu0 %v6874
    %7022 = vmatprep.subr.mxu0 0.0
    %7023 = vmatpush1.msra.mxu0 %v6875
    %7024 = vmatprep.subr.mxu0 0.0
    %7025 = vmatpush1.msra.mxu0 %v6876
    %7026 = vmatprep.subr.mxu0 0.0
    %7027 = vmatpush1.msra.mxu0 %v6877
    %7028 = vmatprep.subr.mxu0 0.0
    %7029 = vmatpush1.msra.mxu0 %v6878
    %7030 = vmatprep.subr.mxu0 0.0
    %7031 = vmatpush1.msra.mxu0 %v6879
    %7032 = vmatprep.subr.mxu0 0.0
    %7033 = vmatpush1.msra.mxu0 %v6880
    %7034 = vmatprep.subr.mxu0 0.0
    %7035 = vmatpush1.msra.mxu0 %v6881
    %7036 = vmatprep.subr.mxu0 0.0
    %7037 = vmatpush1.msra.mxu0 %v6882
    %7038 = vmatprep.subr.mxu0 0.0
    %7039 = vmatpush1.msra.mxu0 %v6883
    %7040 = vmatprep.subr.mxu0 0.0
    %7041 = vmatpush1.msra.mxu0 %v6884
    %7042 = vmatprep.subr.mxu0 0.0
    %7043 = vmatpush1.msra.mxu0 %v6885
    %7044 = vmatprep.subr.mxu0 0.0
    %7045 = vmatpush1.msra.mxu0 %v6886
    %7046 = vmatprep.subr.mxu0 0.0
    %7047 = vmatpush1.msra.mxu0 %v6887
    %7048 = vmatprep.subr.mxu0 0.0
    %7049 = vmatpush1.msra.mxu0 %v6888
    %7050 = vmatprep.subr.mxu0 0.0
    %7051 = vmatpush1.msra.mxu0 %v6889
    %7052 = vmatprep.subr.mxu0 0.0
    %7053 = vmatpush1.msra.mxu0 %v6890
    %7054 = vmatprep.subr.mxu0 0.0
    %7055 = vmatpush1.msra.mxu0 %v6891
    %7056 = vmatprep.subr.mxu0 0.0
    %7057 = vmatpush1.msra.mxu0 %v6892
    %7058 = vmatprep.subr.mxu0 0.0
    %7059 = vmatpush1.msra.mxu0 %v6893
    %7060 = vmatprep.subr.mxu0 0.0
    %7061 = vmatpush1.msra.mxu0 %v6894
    %7062 = vmatprep.subr.mxu0 0.0
    %7063 = vmatpush1.msra.mxu0 %v6895
    %7064 = vmatprep.mubr.f32.mxu0 %v6848
    %7065 = vmatmul.mubr.f32.gmra.mrb[0].mxu0 %v6847
    %v7066 = vpop.f32.mrb[0].mxu0
    %v7067 = vadd.f32 %v6998, %v7066
    %v7068 = vpop.f32.mrb[0].mxu0
    %7069 = vmatprep.mubr.f32.mxu0 %v6856
    %7070 = vmatmul.mubr.f32.gmra.mrb[0].mxu0 %v6855
    %v7071 = vpop.f32.mrb[0].mxu0
    %v7072 = vadd.f32 %v6998, %v7071
    %v7073 = vpop.f32.mrb[0].mxu0
    %7074 = vdwg.mxu0
    %7075 = vmatprep.subr.mxu0 0.0
    %7076 = vmatpush1.msra.mxu0 %v6896
    %7077 = vmatprep.subr.mxu0 0.0
    %7078 = vmatpush1.msra.mxu0 %v6897
    %7079 = vmatprep.subr.mxu0 0.0
    %7080 = vmatpush1.msra.mxu0 %v6898
    %7081 = vmatprep.subr.mxu0 0.0
    %7082 = vmatpush1.msra.mxu0 %v6899
    %7083 = vmatprep.subr.mxu0 0.0
    %7084 = vmatpush1.msra.mxu0 %v6900
    %7085 = vmatprep.subr.mxu0 0.0
    %7086 = vmatpush1.msra.mxu0 %v6901
    %7087 = vmatprep.subr.mxu0 0.0
    %7088 = vmatpush1.msra.mxu0 %v6902
    %7089 = vmatprep.subr.mxu0 0.0
    %7090 = vmatpush1.msra.mxu0 %v6903
    %7091 = vmatprep.subr.mxu0 0.0
    %7092 = vmatpush1.msra.mxu0 %v6904
    %7093 = vmatprep.subr.mxu0 0.0
    %7094 = vmatpush1.msra.mxu0 %v6905
    %7095 = vmatprep.subr.mxu0 0.0
    %7096 = vmatpush1.msra.mxu0 %v6906
    %7097 = vmatprep.subr.mxu0 0.0
    %7098 = vmatpush1.msra.mxu0 %v6907
    %7099 = vmatprep.subr.mxu0 0.0
    %7100 = vmatpush1.msra.mxu0 %v6908
    %7101 = vmatprep.subr.mxu0 0.0
    %7102 = vmatpush1.msra.mxu0 %v6909
    %7103 = vmatprep.subr.mxu0 0.0
    %7104 = vmatpush1.msra.mxu0 %v6910
    %7105 = vmatprep.subr.mxu0 0.0
    %7106 = vmatpush1.msra.mxu0 %v6911
    %7107 = vmatprep.subr.mxu0 0.0
    %7108 = vmatpush1.msra.mxu0 %v6912
    %7109 = vmatprep.subr.mxu0 0.0
    %7110 = vmatpush1.msra.mxu0 %v6913
    %7111 = vmatprep.subr.mxu0 0.0
    %7112 = vmatpush1.msra.mxu0 %v6914
    %7113 = vmatprep.subr.mxu0 0.0
    %7114 = vmatpush1.msra.mxu0 %v6915
    %7115 = vmatprep.subr.mxu0 0.0
    %7116 = vmatpush1.msra.mxu0 %v6916
    %7117 = vmatprep.subr.mxu0 0.0
    %7118 = vmatpush1.msra.mxu0 %v6917
    %7119 = vmatprep.subr.mxu0 0.0
    %7120 = vmatpush1.msra.mxu0 %v6918
    %7121 = vmatprep.subr.mxu0 0.0
    %7122 = vmatpush1.msra.mxu0 %v6919
    %7123 = vmatprep.subr.mxu0 0.0
    %7124 = vmatpush1.msra.mxu0 %v6920
    %7125 = vmatprep.subr.mxu0 0.0
    %7126 = vmatpush1.msra.mxu0 %v6921
    %7127 = vmatprep.subr.mxu0 0.0
    %7128 = vmatpush1.msra.mxu0 %v6922
    %7129 = vmatprep.subr.mxu0 0.0
    %7130 = vmatpush1.msra.mxu0 %v6923
    %7131 = vmatprep.subr.mxu0 0.0
    %7132 = vmatpush1.msra.mxu0 %v6924
    %7133 = vmatprep.subr.mxu0 0.0
    %7134 = vmatpush1.msra.mxu0 %v6925
    %7135 = vmatprep.subr.mxu0 0.0
    %7136 = vmatpush1.msra.mxu0 %v6926
    %7137 = vmatprep.subr.mxu0 0.0
    %7138 = vmatpush1.msra.mxu0 %v6927
    %7139 = vmatprep.mubr.f32.mxu0 %v6850
    %7140 = vmatmul.mubr.f32.gmra.mrb[0].mxu0 %v6849
    %v7141 = vpop.f32.mrb[0].mxu0
    %v7142 = vadd.f32 %v7067, %v7141
    %v7143 = vpop.f32.mrb[0].mxu0
    %7144 = vmatprep.mubr.f32.mxu0 %v6858
    %7145 = vmatmul.mubr.f32.gmra.mrb[0].mxu0 %v6857
    %v7146 = vpop.f32.mrb[0].mxu0
    %v7147 = vadd.f32 %v7072, %v7146
    %v7148 = vpop.f32.mrb[0].mxu0
    %7149 = vdwg.mxu0
    %7150 = vmatprep.subr.mxu0 0.0
    %7151 = vmatpush1.msra.mxu0 %v6928
    %7152 = vmatprep.subr.mxu0 0.0
    %7153 = vmatpush1.msra.mxu0 %v6929
    %7154 = vmatprep.subr.mxu0 0.0
    %7155 = vmatpush1.msra.mxu0 %v6930
    %7156 = vmatprep.subr.mxu0 0.0
    %7157 = vmatpush1.msra.mxu0 %v6931
    %7158 = vmatprep.subr.mxu0 0.0
    %7159 = vmatpush1.msra.mxu0 %v6932
    %7160 = vmatprep.subr.mxu0 0.0
    %7161 = vmatpush1.msra.mxu0 %v6933
    %7162 = vmatprep.subr.mxu0 0.0
    %7163 = vmatpush1.msra.mxu0 %v6934
    %7164 = vmatprep.subr.mxu0 0.0
    %7165 = vmatpush1.msra.mxu0 %v6935
    %7166 = vmatprep.subr.mxu0 0.0
    %7167 = vmatpush1.msra.mxu0 %v6936
    %7168 = vmatprep.subr.mxu0 0.0
    %7169 = vmatpush1.msra.mxu0 %v6937
    %7170 = vmatprep.subr.mxu0 0.0
    %7171 = vmatpush1.msra.mxu0 %v6938
    %7172 = vmatprep.subr.mxu0 0.0
    %7173 = vmatpush1.msra.mxu0 %v6939
    %7174 = vmatprep.subr.mxu0 0.0
    %7175 = vmatpush1.msra.mxu0 %v6940
    %7176 = vmatprep.subr.mxu0 0.0
    %7177 = vmatpush1.msra.mxu0 %v6941
    %7178 = vmatprep.subr.mxu0 0.0
    %7179 = vmatpush1.msra.mxu0 %v6942
    %7180 = vmatprep.subr.mxu0 0.0
    %7181 = vmatpush1.msra.mxu0 %v6943
    %7182 = vmatprep.subr.mxu0 0.0
    %7183 = vmatpush1.msra.mxu0 %v6944
    %7184 = vmatprep.subr.mxu0 0.0
    %7185 = vmatpush1.msra.mxu0 %v6945
    %7186 = vmatprep.subr.mxu0 0.0
    %7187 = vmatpush1.msra.mxu0 %v6946
    %7188 = vmatprep.subr.mxu0 0.0
    %7189 = vmatpush1.msra.mxu0 %v6947
    %7190 = vmatprep.subr.mxu0 0.0
    %7191 = vmatpush1.msra.mxu0 %v6948
    %7192 = vmatprep.subr.mxu0 0.0
    %7193 = vmatpush1.msra.mxu0 %v6949
    %7194 = vmatprep.subr.mxu0 0.0
    %7195 = vmatpush1.msra.mxu0 %v6950
    %7196 = vmatprep.subr.mxu0 0.0
    %7197 = vmatpush1.msra.mxu0 %v6951
    %7198 = vmatprep.subr.mxu0 0.0
    %7199 = vmatpush1.msra.mxu0 %v6952
    %7200 = vmatprep.subr.mxu0 0.0
    %7201 = vmatpush1.msra.mxu0 %v6953
    %7202 = vmatprep.subr.mxu0 0.0
    %7203 = vmatpush1.msra.mxu0 %v6954
    %7204 = vmatprep.subr.mxu0 0.0
    %7205 = vmatpush1.msra.mxu0 %v6955
    %7206 = vmatprep.subr.mxu0 0.0
    %7207 = vmatpush1.msra.mxu0 %v6956
    %7208 = vmatprep.subr.mxu0 0.0
    %7209 = vmatpush1.msra.mxu0 %v6957
    %7210 = vmatprep.subr.mxu0 0.0
    %7211 = vmatpush1.msra.mxu0 %v6958
    %7212 = vmatprep.subr.mxu0 0.0
    %7213 = vmatpush1.msra.mxu0 %v6959
    %7214 = vmatprep.mubr.f32.mxu0 %v6852
    %7215 = vmatmul.mubr.f32.gmra.mrb[0].mxu0 %v6851
    %v7216 = vpop.f32.mrb[0].mxu0
    %v7217 = vadd.f32 %v7142, %v7216
    %v7218 = vpop.f32.mrb[0].mxu0
    %7219 = vmatprep.mubr.f32.mxu0 %v6860
    %7220 = vmatmul.mubr.f32.gmra.mrb[0].mxu0 %v6859
    %v7221 = vpop.f32.mrb[0].mxu0
    %v7222 = vadd.f32 %v7147, %v7221
    %v7223 = vpop.f32.mrb[0].mxu0
    %7224 = vdwg.mxu0
    %7225 = vmatprep.subr.mxu0 0.0
    %7226 = vmatpush1.msra.mxu0 %v6960
    %7227 = vmatprep.subr.mxu0 0.0
    %7228 = vmatpush1.msra.mxu0 %v6961
    %7229 = vmatprep.subr.mxu0 0.0
    %7230 = vmatpush1.msra.mxu0 %v6962
    %7231 = vmatprep.subr.mxu0 0.0
    %7232 = vmatpush1.msra.mxu0 %v6963
    %7233 = vmatprep.subr.mxu0 0.0
    %7234 = vmatpush1.msra.mxu0 %v6964
    %7235 = vmatprep.subr.mxu0 0.0
    %7236 = vmatpush1.msra.mxu0 %v6965
    %7237 = vmatprep.subr.mxu0 0.0
    %7238 = vmatpush1.msra.mxu0 %v6966
    %7239 = vmatprep.subr.mxu0 0.0
    %7240 = vmatpush1.msra.mxu0 %v6967
    %7241 = vmatprep.subr.mxu0 0.0
    %7242 = vmatpush1.msra.mxu0 %v6968
    %7243 = vmatprep.subr.mxu0 0.0
    %7244 = vmatpush1.msra.mxu0 %v6969
    %7245 = vmatprep.subr.mxu0 0.0
    %7246 = vmatpush1.msra.mxu0 %v6970
    %7247 = vmatprep.subr.mxu0 0.0
    %7248 = vmatpush1.msra.mxu0 %v6971
    %7249 = vmatprep.subr.mxu0 0.0
    %7250 = vmatpush1.msra.mxu0 %v6972
    %7251 = vmatprep.subr.mxu0 0.0
    %7252 = vmatpush1.msra.mxu0 %v6973
    %7253 = vmatprep.subr.mxu0 0.0
    %7254 = vmatpush1.msra.mxu0 %v6974
    %7255 = vmatprep.subr.mxu0 0.0
    %7256 = vmatpush1.msra.mxu0 %v6975
    %7257 = vmatprep.subr.mxu0 0.0
    %7258 = vmatpush1.msra.mxu0 %v6976
    %7259 = vmatprep.subr.mxu0 0.0
    %7260 = vmatpush1.msra.mxu0 %v6977
    %7261 = vmatprep.subr.mxu0 0.0
    %7262 = vmatpush1.msra.mxu0 %v6978
    %7263 = vmatprep.subr.mxu0 0.0
    %7264 = vmatpush1.msra.mxu0 %v6979
    %7265 = vmatprep.subr.mxu0 0.0
    %7266 = vmatpush1.msra.mxu0 %v6980
    %7267 = vmatprep.subr.mxu0 0.0
    %7268 = vmatpush1.msra.mxu0 %v6981
    %7269 = vmatprep.subr.mxu0 0.0
    %7270 = vmatpush1.msra.mxu0 %v6982
    %7271 = vmatprep.subr.mxu0 0.0
    %7272 = vmatpush1.msra.mxu0 %v6983
    %7273 = vmatprep.subr.mxu0 0.0
    %7274 = vmatpush1.msra.mxu0 %v6984
    %7275 = vmatprep.subr.mxu0 0.0
    %7276 = vmatpush1.msra.mxu0 %v6985
    %7277 = vmatprep.subr.mxu0 0.0
    %7278 = vmatpush1.msra.mxu0 %v6986
    %7279 = vmatprep.subr.mxu0 0.0
    %7280 = vmatpush1.msra.mxu0 %v6987
    %7281 = vmatprep.subr.mxu0 0.0
    %7282 = vmatpush1.msra.mxu0 %v6988
    %7283 = vmatprep.subr.mxu0 0.0
    %7284 = vmatpush1.msra.mxu0 %v6989
    %7285 = vmatprep.subr.mxu0 0.0
    %7286 = vmatpush1.msra.mxu0 %v6990
    %7287 = vmatprep.subr.mxu0 0.0
    %7288 = vmatpush1.msra.mxu0 %v6991
    %7289 = vmatprep.mubr.f32.mxu0 %v6854
    %7290 = vmatmul.mubr.f32.gmra.mrb[0].mxu0 %v6853
    %v7291 = vpop.f32.mrb[0].mxu0
    %v7292 = vadd.f32 %v7217, %v7291
    %v7293 = vpop.f32.mrb[0].mxu0
    %7294 = vmatprep.mubr.f32.mxu0 %v6862
    %7295 = vmatmul.mubr.f32.gmra.mrb[0].mxu0 %v6861
    %v7296 = vpop.f32.mrb[0].mxu0
    %v7297 = vadd.f32 %v7222, %v7296
    %v7298 = vpop.f32.mrb[0].mxu0
    %7299 = vdwg.mxu0
    %v7300 = vadd.f32 %v6455, %v7292
    %v7301 = vadd.f32 %v6456, %v7297
    %s7302 = scalar_lea.vmem %s11, 1
    %v7303 = vld [vmem:[%s7302] sm:$0x1]
    %s7304 = scalar_lea.vmem %s12, 1
    %v7305 = vld [vmem:[%s7304] sm:$0x1]
    %v7306 = vsel %vm70, %v7300, 0.0
    %7307 = vadd.xlane.f32.xlu0 %v7306
    %v7308 = vpop.xlane.xlu0 %7307
    %v7309 = vsel %vm70, %v7301, 0.0
    %7310 = vadd.xlane.f32.xlu0 %v7309
    %v7311 = vpop.xlane.xlu0 %7310
    %v7312 = vmul.f32 %v7308, %v2775
    %v7313 = vmul.f32 %v7311, %v2775
    %v7314 = vsub.f32 %v7300, %v7312
    %v7315 = vsub.f32 %v7301, %v7313
    %v7316 = vmul.f32 %v7314, %v7314
    %v7317 = vmul.f32 %v7315, %v7315
    %v7318 = vsel %vm70, %v7316, 0.0
    %7319 = vadd.xlane.f32.xlu0 %v7318
    %v7320 = vpop.xlane.xlu0 %7319
    %v7321 = vsel %vm70, %v7317, 0.0
    %7322 = vadd.xlane.f32.xlu0 %v7321
    %v7323 = vpop.xlane.xlu0 %7322
    %v7324 = vmul.f32 %v7320, %v2775
    %v7325 = vmul.f32 %v7323, %v2775
    %v7326 = vadd.f32 %v7324, 1e-05
    %v7327 = vadd.f32 %v7325, 1e-05
    %v7328 = vrsqrt.pop %v7326
    %v7329 = vrsqrt.pop %v7327
    %v7330 = vmul.f32 %v7314, %v7328
    %v7331 = vmul.f32 %v7315, %v7329
    %v7333 = vlaneseq
    %v7334 = vshrl.u32 %v7333, 7
    %v7335 = vsub.s32 0, %v7334
    %v7336 = vrot.slane %v7303, %v7335
    %v7338 = vmul.f32 %v7330, %v7336
    %v7339 = vmul.f32 %v7331, %v7336
    %v7341 = vlaneseq
    %v7342 = vshrl.u32 %v7341, 7
    %v7343 = vsub.s32 0, %v7342
    %v7344 = vrot.slane %v7305, %v7343
    %v7346 = vadd.f32 %v7338, %v7344
    %v7347 = vadd.f32 %v7339, %v7344
    %7348 = vst.msk [vmem:[#allocation2] sm:$0xff] %vm70, %v7346
    %7349 = vst.msk [vmem:[#allocation2 + $0x8] sm:$0xff] %vm70, %v7347
    // Predicated region
    $region70: #{decoder_pallas.1} parent=1 // pred_check
      _
    $region71: #{decoder_pallas.1} parent=1 // pred_check_branch
      %7351 = sbr.rel (0) target = $region73
    $region72: #{decoder_pallas.1} parent=1 // pred_region
      %s7353 = ssub.s32 256, 256
      %7354 = vsyncadd [#allocation3], %s7353
      %s7355 = sshll.u32 [#allocation2], 4
      %s7356 = int_to_ptr.vmem [resolvable:$true] %s7355
      %7361 = dma.vmem_to_hbm [thread:$0]  %s7356, 256, %s17, [#allocation3], 128, 128, 8
    $region73: #{decoder_pallas.1} parent=1 // pred_fallthru
      _
    // Predicated region
    $region74: #{decoder_pallas.1} parent=1 // pred_check
      _
    $region75: #{decoder_pallas.1} parent=1 // pred_check_branch
      %7363 = sbr.rel (0) target = $region77
    $region76: #{decoder_pallas.1} parent=1 // pred_region
      %7364 = dma.done [#allocation3], 256
    $region77: #{decoder_pallas.1} parent=1 // pred_fallthru
      _
    %7365 = vsyncpa [#allocation3], 1

</llo_original>
